<compile_context>
chip_gen: v6e
topology: v6e:2x2x1
jax: 0.10.0
libtpu: 0.0.40
codegen_flags: <defaults>
</compile_context>

<pallas_src>
import numpy as np
import jax
import jax.numpy as jnp
from jax.experimental import pallas as pl
from jax.experimental.pallas import tpu as pltpu

BN_EPS = 1e-5
H1 = W1 = 32          # conv1 grid (input is 32x32, forced by Linear(2*8*8) + flatten())
H2 = W2 = 16          # pooled grid seen by conv2 (lives on the 32x32 grid at stride 2)
C_IN, C1, C2 = 3, 10, 2
N_LANES = H1 * W1     # 1024 lanes: every activation is (channels, 1024), lane = h*32 + w
N_HID, N_OUT = 32, 10


def _build_masks():
    """Host-side border-validity masks for the 3x3 taps and the bn2 real-lane mask."""
    lane = np.arange(N_LANES)
    h = lane // W1
    w = lane % W1
    m1 = np.zeros((9, N_LANES), np.float32)
    m2 = np.zeros((9, N_LANES), np.float32)
    for dy in range(3):
        for dx in range(3):
            t = dy * 3 + dx
            sh, sw = h + (dy - 1), w + (dx - 1)
            m1[t] = ((sh >= 0) & (sh < H1) & (sw >= 0) & (sw < W1)).astype(np.float32)
            sa, sb = h // 2 + (dy - 1), w // 2 + (dx - 1)
            m2[t] = ((sa >= 0) & (sa < H2) & (sb >= 0) & (sb < W2)).astype(np.float32)
    real2 = ((h % 2 == 0) & (w % 2 == 0)).astype(np.float32).reshape(1, N_LANES)
    return m1, m2, real2


_MASK1_NP, _MASK2_NP, _REAL2_NP = _build_masks()


def _shift(x, offset):
    """result[:, i] = x[:, (i + offset) % n] — one XLU lane rotate (wrap lanes are masked
    or never read by the caller)."""
    n = x.shape[-1]
    k = (-offset) % n
    if k == 0:
        return x
    return pltpu.roll(x, k, 1)


def _fused_forward_kernel(x_ref, w1_ref, g1_ref, be1_ref,
                          w2_ref, g2_ref, be2_ref,
                          m1_ref, m2_ref, real2_ref,
                          wl1_hbm, bl1_ref, wl2_ref, bl2_ref,
                          o_ref, wl1_vmem, dma_sem):
    """Whole TestModel1 forward, fused.

    x_ref   : (3, 1024)       input, channel rows, lane index = h*32 + w
    w1_ref  : (9, 10, 3)      conv1 weight, per-tap (Cout, Cin), tap = dy*3 + dx
    g1/be1  : (10, 1)         bn1 gamma / beta
    w2_ref  : (9, 2, 10)      conv2 weight, per-tap (Cout, Cin)
    g2/be2  : (2, 1)          bn2 gamma / beta
    m1/m2   : (9, 1024)       precomputed border-validity masks for conv1 / conv2 taps
    real2   : (1, 1024)       1.0 on the 256 lanes carrying real conv2 outputs
    wl1_hbm : (2, 1024, 32)   linear1 weight on the virtual lane grid (HBM, DMA'd manually)
    bl1     : (1, 32)         linear1 bias
    wl2     : (32, 10)        linear2 weight (in, out)
    bl2     : (1, 10)         linear2 bias
    o_ref   : (1, 10)         logits
    """
    # Start the big (256 KiB) linear1-weight DMA immediately; it overlaps with the convs.
    wl1_copy = pltpu.make_async_copy(wl1_hbm, wl1_vmem, dma_sem)
    wl1_copy.start()

    # ---------------- conv1: 3x3 / stride 1 / pad 1, as 9 accumulated MXU matmuls ----------------
    x = x_ref[...]                                            # (3, 1024)
    y1 = None
    for dy in range(3):
        for dx in range(3):
            t = dy * 3 + dx
            off = (dy - 1) * W1 + (dx - 1)
            shifted = _shift(x, off)                          # (3, 1024)
            if not _MASK1_NP[t].all():                        # center tap needs no mask
                shifted = shifted * m1_ref[t:t + 1, :]
            part = jnp.dot(w1_ref[t], shifted,
                           preferred_element_type=jnp.float32)  # (10, 1024)
            y1 = part if y1 is None else y1 + part
    # conv1 bias omitted: training-mode BN removes the per-channel mean -> bias cancels exactly.

    # ---------------- bn1 (training-mode, single-pass stats) + relu ----------------
    inv_n1 = 1.0 / float(N_LANES)
    s1 = jnp.sum(y1, axis=1, keepdims=True)
    q1 = jnp.sum(y1 * y1, axis=1, keepdims=True)
    mu1 = s1 * inv_n1
    var1 = jnp.maximum(q1 * inv_n1 - mu1 * mu1, 0.0)
    y1 = (y1 - mu1) * (jax.lax.rsqrt(var1 + BN_EPS) * g1_ref[...]) + be1_ref[...]
    y1 = jnp.maximum(y1, 0.0)

    # ---------------- maxpool1 2x2 (kept on the 32x32 virtual grid) ----------------
    t1 = jnp.maximum(y1, _shift(y1, 1))                       # pair (w, w+1)
    p1 = jnp.maximum(t1, _shift(t1, W1))                      # pair (h, h+1)
    # p1[c, (2a)*32 + 2b] == pool1[c, a, b]; other lanes are don't-care.

    # ---------------- conv2 on the virtual grid (stride-2 taps), 9 accumulated matmuls ----------------
    y2 = None
    for dy in range(3):
        for dx in range(3):
            t = dy * 3 + dx
            off = (dy - 1) * 2 * W1 + (dx - 1) * 2
            shifted = _shift(p1, off)                         # (10, 1024)
            if not _MASK2_NP[t].all():
                shifted = shifted * m2_ref[t:t + 1, :]
            part = jnp.dot(w2_ref[t], shifted,
                           preferred_element_type=jnp.float32)  # (2, 1024)
            y2 = part if y2 is None else y2 + part
    # y2 is real only at lanes with h%2==0 and w%2==0.

    # ---------------- bn2 over the 256 real lanes (single-pass stats) + relu ----------------
    real2 = real2_ref[...]                                    # (1, 1024), 0/1
    inv_n2 = 1.0 / float(H2 * W2)
    y2m = y2 * real2
    s2 = jnp.sum(y2m, axis=1, keepdims=True)
    q2 = jnp.sum(y2m * y2m, axis=1, keepdims=True)
    mu2 = s2 * inv_n2
    var2 = jnp.maximum(q2 * inv_n2 - mu2 * mu2, 0.0)
    y2 = (y2 - mu2) * (jax.lax.rsqrt(var2 + BN_EPS) * g2_ref[...]) + be2_ref[...]
    y2 = jnp.maximum(y2, 0.0)

    # ---------------- maxpool2 2x2 on the virtual grid ----------------
    t2 = jnp.maximum(y2, _shift(y2, 2))                       # pooled-grid pair (b, b+1)
    p2 = jnp.maximum(t2, _shift(t2, 2 * W1))                  # pooled-grid pair (a, a+1)
    # p2[c, (4ho)*32 + 4wo] == pool2[c, ho, wo]; other lanes hit zero rows of wl1.

    # ---------------- flatten + linear1 + linear2 ----------------
    # C-major flatten and the gather of the 64 valid lanes per channel are folded into
    # wl1 (zero rows elsewhere), so no compaction / transpose / reshape is needed here.
    wl1_copy.wait()                                           # weight DMA finished by now
    h_vec = (jnp.dot(p2[0:1, :], wl1_vmem[0], preferred_element_type=jnp.float32)
             + jnp.dot(p2[1:2, :], wl1_vmem[1], preferred_element_type=jnp.float32)
             + bl1_ref[...])                                  # (1, 32)
    o_ref[...] = jnp.dot(h_vec, wl2_ref[...],
                         preferred_element_type=jnp.float32) + bl2_ref[...]


def _vmem():
    return pl.BlockSpec(memory_space=pltpu.MemorySpace.VMEM)


@jax.jit
def test_model1_forward(x_nchw, params):
    # Input shape (1, 3, 32, 32) is forced by the module (flatten() feeding Linear(2*8*8)).
    x = x_nchw.reshape(C_IN, N_LANES)                         # (3, 1024), lane = h*32 + w
    out = pl.pallas_call(
        _fused_forward_kernel,
        out_shape=jax.ShapeDtypeStruct((1, N_OUT), jnp.float32),
        in_specs=[_vmem()] * 10
                 + [pl.BlockSpec(memory_space=pl.ANY)]        # wl1_exp stays in HBM; manual DMA
                 + [_vmem()] * 3,
        out_specs=_vmem(),
        scratch_shapes=[
            pltpu.VMEM((C2, N_LANES, N_HID), jnp.float32),    # wl1 landing buffer (256 KiB)
            pltpu.SemaphoreType.DMA,
        ],
    )(x,
      params["w1"], params["g1"], params["beta1"],
      params["w2"], params["g2"], params["beta2"],
      params["mask1"], params["mask2"], params["real2"],
      params["wl1_exp"], params["bl1"], params["wl2"], params["bl2"])
    return out[0]                                             # (10,), like PyTorch


def _expand_lin1(w_lin1_torch):
    """(32, 128) PyTorch linear1 weight -> (2, 1024, 32) on the virtual lane grid.

    Row (c, lane=(4*ho)*32 + 4*wo) holds w_lin1[:, c*64 + ho*8 + wo] (PyTorch's C-major
    flatten order); all other rows are zero so garbage lanes never contribute.
    """
    wt = np.asarray(w_lin1_torch, dtype=np.float32)           # (32, 128)
    wexp = np.zeros((C2, N_LANES, N_HID), np.float32)
    for c in range(C2):
        for ho in range(8):
            for wo in range(8):
                wexp[c, (4 * ho) * W1 + 4 * wo, :] = wt[:, c * 64 + ho * 8 + wo]
    return jnp.asarray(wexp)


def init_params(key):
    ks = jax.random.split(key, 6)

    def u(k, shape, fan_in):
        bound = (1.0 / fan_in) ** 0.5
        return jax.random.uniform(k, shape, jnp.float32, -bound, bound)

    # Weights generated in PyTorch layouts, then re-laid-out ONCE for the kernel.
    w_conv1 = u(ks[0], (C1, C_IN, 3, 3), C_IN * 9)            # (10, 3, 3, 3)
    w_conv2 = u(ks[1], (C2, C1, 3, 3), C1 * 9)                # (2, 10, 3, 3)
    w_lin1 = u(ks[2], (N_HID, C2 * 8 * 8), C2 * 8 * 8)        # (32, 128)
    w_lin2 = u(ks[3], (N_OUT, N_HID), N_HID)                  # (10, 32)
    b_lin1 = u(ks[4], (N_HID,), C2 * 8 * 8)
    b_lin2 = u(ks[5], (N_OUT,), N_HID)
    # Conv biases are not generated: under training-mode BatchNorm the per-channel mean
    # subtraction cancels them exactly, so they never affect the forward output.

    return {
        # per-tap conv weights: index [dy*3+dx, cout, cin]
        "w1": jnp.transpose(w_conv1, (2, 3, 0, 1)).reshape(9, C1, C_IN),    # (9, 10, 3)
        "g1": jnp.ones((C1, 1), jnp.float32),                 # PyTorch BN default init
        "beta1": jnp.zeros((C1, 1), jnp.float32),
        "w2": jnp.transpose(w_conv2, (2, 3, 0, 1)).reshape(9, C2, C1),      # (9, 2, 10)
        "g2": jnp.ones((C2, 1), jnp.float32),
        "beta2": jnp.zeros((C2, 1), jnp.float32),
        "mask1": jnp.asarray(_MASK1_NP),                      # (9, 1024)
        "mask2": jnp.asarray(_MASK2_NP),                      # (9, 1024)
        "real2": jnp.asarray(_REAL2_NP),                      # (1, 1024)
        "wl1_exp": _expand_lin1(w_lin1),                      # (2, 1024, 32)
        "bl1": b_lin1.reshape(1, N_HID),
        "wl2": jnp.transpose(w_lin2),                         # (32, 10)
        "bl2": b_lin2.reshape(1, N_OUT),
    }


if __name__ == "__main__":
    key = jax.random.PRNGKey(0)
    k_x, k_p = jax.random.split(key)
    x = jax.random.normal(k_x, (1, C_IN, H1, W1), jnp.float32)
    params = init_params(k_p)

    out = jax.block_until_ready(test_model1_forward(x, params))
    assert out.shape == (N_OUT,) and out.dtype == jnp.float32
    assert bool(jnp.all(jnp.isfinite(out)))
    # TODO(synk): BatchNorm running-statistics update (training side effect) is not modeled;
    # it does not change the forward output.
    print("KERNEL_OK")
</pallas_src>

<mosaic_0001>
module attributes {stable_mosaic.version = 11 : i64} {
  func.func @_fused_forward_kernel(%arg0: memref<3x1024xf32, #tpu.memory_space<vmem>>, %arg1: memref<9x10x3xf32, #tpu.memory_space<vmem>>, %arg2: memref<10x1xf32, #tpu.memory_space<vmem>>, %arg3: memref<10x1xf32, #tpu.memory_space<vmem>>, %arg4: memref<9x2x10xf32, #tpu.memory_space<vmem>>, %arg5: memref<2x1xf32, #tpu.memory_space<vmem>>, %arg6: memref<2x1xf32, #tpu.memory_space<vmem>>, %arg7: memref<9x1024xf32, #tpu.memory_space<vmem>>, %arg8: memref<9x1024xf32, #tpu.memory_space<vmem>>, %arg9: memref<1x1024xf32, #tpu.memory_space<vmem>>, %arg10: memref<2x1024x32xf32, #tpu.memory_space<any>>, %arg11: memref<1x32xf32, #tpu.memory_space<vmem>>, %arg12: memref<32x10xf32, #tpu.memory_space<vmem>>, %arg13: memref<1x10xf32, #tpu.memory_space<vmem>>, %arg14: memref<1x10xf32, #tpu.memory_space<vmem>>, %arg15: memref<2x1024x32xf32, #tpu.memory_space<vmem>>, %arg16: memref<!tpu.dma_semaphore, #tpu.memory_space<semaphore_mem>>) attributes {dimension_semantics = [], scalar_prefetch = 0 : i64, scratch_operands = 2 : i64, tpu.core_type = #tpu.core_type<tc>} {
    tpu.enqueue_dma source(%arg10 : memref<2x1024x32xf32, #tpu.memory_space<any>>) target(%arg15 : memref<2x1024x32xf32, #tpu.memory_space<vmem>>) target_semaphore(%arg16 : memref<!tpu.dma_semaphore, #tpu.memory_space<semaphore_mem>>)
    %c0 = arith.constant 0 : index
    %c0_0 = arith.constant 0 : index
    %0 = vector.load %arg0[%c0, %c0_0] : memref<3x1024xf32, #tpu.memory_space<vmem>>, vector<3x1024xf32>
    %c33_i32 = arith.constant 33 : i32
    %1 = tpu.dynamic_rotate %0 by %c33_i32 dim 1 : vector<3x1024xf32>, i32 -> vector<3x1024xf32>
    %c0_1 = arith.constant 0 : index
    %c0_2 = arith.constant 0 : index
    %2 = vector.load %arg7[%c0_1, %c0_2] : memref<9x1024xf32, #tpu.memory_space<vmem>>, vector<1x1024xf32>
    %3 = vector.broadcast %2 : vector<1x1024xf32> to vector<3x1024xf32>
    %4 = arith.mulf %1, %3 : vector<3x1024xf32>
    %c0_3 = arith.constant 0 : index
    %c0_4 = arith.constant 0 : index
    %c0_5 = arith.constant 0 : index
    %5 = vector.load %arg1[%c0_3, %c0_4, %c0_5] : memref<9x10x3xf32, #tpu.memory_space<vmem>>, vector<1x10x3xf32>
    %6 = vector.shape_cast %5 : vector<1x10x3xf32> to vector<10x3xf32>
    %cst = arith.constant dense<0.000000e+00> : vector<10x1024xf32>
    %7 = tpu.matmul %6, %4, %cst {dimension_numbers = #tpu.dot_dimension_numbers<[1], [0], [0], [1], [0, 0, 1, 1], [], []>} : vector<10x3xf32>, vector<3x1024xf32>, vector<10x1024xf32> -> vector<10x1024xf32>
    %c32_i32 = arith.constant 32 : i32
    %8 = tpu.dynamic_rotate %0 by %c32_i32 dim 1 : vector<3x1024xf32>, i32 -> vector<3x1024xf32>
    %c1 = arith.constant 1 : index
    %c0_6 = arith.constant 0 : index
    %9 = vector.load %arg7[%c1, %c0_6] : memref<9x1024xf32, #tpu.memory_space<vmem>>, vector<1x1024xf32>
    %10 = vector.broadcast %9 : vector<1x1024xf32> to vector<3x1024xf32>
    %11 = arith.mulf %8, %10 : vector<3x1024xf32>
    %c1_7 = arith.constant 1 : index
    %c0_8 = arith.constant 0 : index
    %c0_9 = arith.constant 0 : index
    %12 = vector.load %arg1[%c1_7, %c0_8, %c0_9] : memref<9x10x3xf32, #tpu.memory_space<vmem>>, vector<1x10x3xf32>
    %13 = vector.shape_cast %12 : vector<1x10x3xf32> to vector<10x3xf32>
    %cst_10 = arith.constant dense<0.000000e+00> : vector<10x1024xf32>
    %14 = tpu.matmul %13, %11, %cst_10 {dimension_numbers = #tpu.dot_dimension_numbers<[1], [0], [0], [1], [0, 0, 1, 1], [], []>} : vector<10x3xf32>, vector<3x1024xf32>, vector<10x1024xf32> -> vector<10x1024xf32>
    %15 = arith.addf %7, %14 : vector<10x1024xf32>
    %c31_i32 = arith.constant 31 : i32
    %16 = tpu.dynamic_rotate %0 by %c31_i32 dim 1 : vector<3x1024xf32>, i32 -> vector<3x1024xf32>
    %c2 = arith.constant 2 : index
    %c0_11 = arith.constant 0 : index
    %17 = vector.load %arg7[%c2, %c0_11] : memref<9x1024xf32, #tpu.memory_space<vmem>>, vector<1x1024xf32>
    %18 = vector.broadcast %17 : vector<1x1024xf32> to vector<3x1024xf32>
    %19 = arith.mulf %16, %18 : vector<3x1024xf32>
    %c2_12 = arith.constant 2 : index
    %c0_13 = arith.constant 0 : index
    %c0_14 = arith.constant 0 : index
    %20 = vector.load %arg1[%c2_12, %c0_13, %c0_14] : memref<9x10x3xf32, #tpu.memory_space<vmem>>, vector<1x10x3xf32>
    %21 = vector.shape_cast %20 : vector<1x10x3xf32> to vector<10x3xf32>
    %cst_15 = arith.constant dense<0.000000e+00> : vector<10x1024xf32>
    %22 = tpu.matmul %21, %19, %cst_15 {dimension_numbers = #tpu.dot_dimension_numbers<[1], [0], [0], [1], [0, 0, 1, 1], [], []>} : vector<10x3xf32>, vector<3x1024xf32>, vector<10x1024xf32> -> vector<10x1024xf32>
    %23 = arith.addf %15, %22 : vector<10x1024xf32>
    %c1_i32 = arith.constant 1 : i32
    %24 = tpu.dynamic_rotate %0 by %c1_i32 dim 1 : vector<3x1024xf32>, i32 -> vector<3x1024xf32>
    %c3 = arith.constant 3 : index
    %c0_16 = arith.constant 0 : index
    %25 = vector.load %arg7[%c3, %c0_16] : memref<9x1024xf32, #tpu.memory_space<vmem>>, vector<1x1024xf32>
    %26 = vector.broadcast %25 : vector<1x1024xf32> to vector<3x1024xf32>
    %27 = arith.mulf %24, %26 : vector<3x1024xf32>
    %c3_17 = arith.constant 3 : index
    %c0_18 = arith.constant 0 : index
    %c0_19 = arith.constant 0 : index
    %28 = vector.load %arg1[%c3_17, %c0_18, %c0_19] : memref<9x10x3xf32, #tpu.memory_space<vmem>>, vector<1x10x3xf32>
    %29 = vector.shape_cast %28 : vector<1x10x3xf32> to vector<10x3xf32>
    %cst_20 = arith.constant dense<0.000000e+00> : vector<10x1024xf32>
    %30 = tpu.matmul %29, %27, %cst_20 {dimension_numbers = #tpu.dot_dimension_numbers<[1], [0], [0], [1], [0, 0, 1, 1], [], []>} : vector<10x3xf32>, vector<3x1024xf32>, vector<10x1024xf32> -> vector<10x1024xf32>
    %31 = arith.addf %23, %30 : vector<10x1024xf32>
    %c4 = arith.constant 4 : index
    %c0_21 = arith.constant 0 : index
    %c0_22 = arith.constant 0 : index
    %32 = vector.load %arg1[%c4, %c0_21, %c0_22] : memref<9x10x3xf32, #tpu.memory_space<vmem>>, vector<1x10x3xf32>
    %33 = vector.shape_cast %32 : vector<1x10x3xf32> to vector<10x3xf32>
    %cst_23 = arith.constant dense<0.000000e+00> : vector<10x1024xf32>
    %34 = tpu.matmul %33, %0, %cst_23 {dimension_numbers = #tpu.dot_dimension_numbers<[1], [0], [0], [1], [0, 0, 1, 1], [], []>} : vector<10x3xf32>, vector<3x1024xf32>, vector<10x1024xf32> -> vector<10x1024xf32>
    %35 = arith.addf %31, %34 : vector<10x1024xf32>
    %c1023_i32 = arith.constant 1023 : i32
    %36 = tpu.dynamic_rotate %0 by %c1023_i32 dim 1 : vector<3x1024xf32>, i32 -> vector<3x1024xf32>
    %c5 = arith.constant 5 : index
    %c0_24 = arith.constant 0 : index
    %37 = vector.load %arg7[%c5, %c0_24] : memref<9x1024xf32, #tpu.memory_space<vmem>>, vector<1x1024xf32>
    %38 = vector.broadcast %37 : vector<1x1024xf32> to vector<3x1024xf32>
    %39 = arith.mulf %36, %38 : vector<3x1024xf32>
    %c5_25 = arith.constant 5 : index
    %c0_26 = arith.constant 0 : index
    %c0_27 = arith.constant 0 : index
    %40 = vector.load %arg1[%c5_25, %c0_26, %c0_27] : memref<9x10x3xf32, #tpu.memory_space<vmem>>, vector<1x10x3xf32>
    %41 = vector.shape_cast %40 : vector<1x10x3xf32> to vector<10x3xf32>
    %cst_28 = arith.constant dense<0.000000e+00> : vector<10x1024xf32>
    %42 = tpu.matmul %41, %39, %cst_28 {dimension_numbers = #tpu.dot_dimension_numbers<[1], [0], [0], [1], [0, 0, 1, 1], [], []>} : vector<10x3xf32>, vector<3x1024xf32>, vector<10x1024xf32> -> vector<10x1024xf32>
    %43 = arith.addf %35, %42 : vector<10x1024xf32>
    %c993_i32 = arith.constant 993 : i32
    %44 = tpu.dynamic_rotate %0 by %c993_i32 dim 1 : vector<3x1024xf32>, i32 -> vector<3x1024xf32>
    %c6 = arith.constant 6 : index
    %c0_29 = arith.constant 0 : index
    %45 = vector.load %arg7[%c6, %c0_29] : memref<9x1024xf32, #tpu.memory_space<vmem>>, vector<1x1024xf32>
    %46 = vector.broadcast %45 : vector<1x1024xf32> to vector<3x1024xf32>
    %47 = arith.mulf %44, %46 : vector<3x1024xf32>
    %c6_30 = arith.constant 6 : index
    %c0_31 = arith.constant 0 : index
    %c0_32 = arith.constant 0 : index
    %48 = vector.load %arg1[%c6_30, %c0_31, %c0_32] : memref<9x10x3xf32, #tpu.memory_space<vmem>>, vector<1x10x3xf32>
    %49 = vector.shape_cast %48 : vector<1x10x3xf32> to vector<10x3xf32>
    %cst_33 = arith.constant dense<0.000000e+00> : vector<10x1024xf32>
    %50 = tpu.matmul %49, %47, %cst_33 {dimension_numbers = #tpu.dot_dimension_numbers<[1], [0], [0], [1], [0, 0, 1, 1], [], []>} : vector<10x3xf32>, vector<3x1024xf32>, vector<10x1024xf32> -> vector<10x1024xf32>
    %51 = arith.addf %43, %50 : vector<10x1024xf32>
    %c992_i32 = arith.constant 992 : i32
    %52 = tpu.dynamic_rotate %0 by %c992_i32 dim 1 : vector<3x1024xf32>, i32 -> vector<3x1024xf32>
    %c7 = arith.constant 7 : index
    %c0_34 = arith.constant 0 : index
    %53 = vector.load %arg7[%c7, %c0_34] : memref<9x1024xf32, #tpu.memory_space<vmem>>, vector<1x1024xf32>
    %54 = vector.broadcast %53 : vector<1x1024xf32> to vector<3x1024xf32>
    %55 = arith.mulf %52, %54 : vector<3x1024xf32>
    %c7_35 = arith.constant 7 : index
    %c0_36 = arith.constant 0 : index
    %c0_37 = arith.constant 0 : index
    %56 = vector.load %arg1[%c7_35, %c0_36, %c0_37] : memref<9x10x3xf32, #tpu.memory_space<vmem>>, vector<1x10x3xf32>
    %57 = vector.shape_cast %56 : vector<1x10x3xf32> to vector<10x3xf32>
    %cst_38 = arith.constant dense<0.000000e+00> : vector<10x1024xf32>
    %58 = tpu.matmul %57, %55, %cst_38 {dimension_numbers = #tpu.dot_dimension_numbers<[1], [0], [0], [1], [0, 0, 1, 1], [], []>} : vector<10x3xf32>, vector<3x1024xf32>, vector<10x1024xf32> -> vector<10x1024xf32>
    %59 = arith.addf %51, %58 : vector<10x1024xf32>
    %c991_i32 = arith.constant 991 : i32
    %60 = tpu.dynamic_rotate %0 by %c991_i32 dim 1 : vector<3x1024xf32>, i32 -> vector<3x1024xf32>
    %c8 = arith.constant 8 : index
    %c0_39 = arith.constant 0 : index
    %61 = vector.load %arg7[%c8, %c0_39] : memref<9x1024xf32, #tpu.memory_space<vmem>>, vector<1x1024xf32>
    %62 = vector.broadcast %61 : vector<1x1024xf32> to vector<3x1024xf32>
    %63 = arith.mulf %60, %62 : vector<3x1024xf32>
    %c8_40 = arith.constant 8 : index
    %c0_41 = arith.constant 0 : index
    %c0_42 = arith.constant 0 : index
    %64 = vector.load %arg1[%c8_40, %c0_41, %c0_42] : memref<9x10x3xf32, #tpu.memory_space<vmem>>, vector<1x10x3xf32>
    %65 = vector.shape_cast %64 : vector<1x10x3xf32> to vector<10x3xf32>
    %cst_43 = arith.constant dense<0.000000e+00> : vector<10x1024xf32>
    %66 = tpu.matmul %65, %63, %cst_43 {dimension_numbers = #tpu.dot_dimension_numbers<[1], [0], [0], [1], [0, 0, 1, 1], [], []>} : vector<10x3xf32>, vector<3x1024xf32>, vector<10x1024xf32> -> vector<10x1024xf32>
    %67 = arith.addf %59, %66 : vector<10x1024xf32>
    %cst_44 = arith.constant dense<0.000000e+00> : vector<10xf32>
    %68 = vector.multi_reduction <add>, %67, %cst_44 [1] : vector<10x1024xf32> to vector<10xf32>
    %69 = vector.shape_cast %68 : vector<10xf32> to vector<10x1xf32>
    %70 = arith.mulf %67, %67 : vector<10x1024xf32>
    %cst_45 = arith.constant dense<0.000000e+00> : vector<10xf32>
    %71 = vector.multi_reduction <add>, %70, %cst_45 [1] : vector<10x1024xf32> to vector<10xf32>
    %72 = vector.shape_cast %71 : vector<10xf32> to vector<10x1xf32>
    %cst_46 = arith.constant 9.765625E-4 : f32
    %73 = vector.broadcast %cst_46 : f32 to vector<10x1xf32>
    %74 = arith.mulf %69, %73 : vector<10x1xf32>
    %cst_47 = arith.constant 9.765625E-4 : f32
    %75 = vector.broadcast %cst_47 : f32 to vector<10x1xf32>
    %76 = arith.mulf %72, %75 : vector<10x1xf32>
    %77 = arith.mulf %74, %74 : vector<10x1xf32>
    %78 = arith.subf %76, %77 : vector<10x1xf32>
    %cst_48 = arith.constant 0.000000e+00 : f32
    %79 = vector.broadcast %cst_48 : f32 to vector<10x1xf32>
    %80 = arith.maximumf %78, %79 : vector<10x1xf32>
    %81 = vector.broadcast %74 : vector<10x1xf32> to vector<10x1024xf32>
    %82 = arith.subf %67, %81 : vector<10x1024xf32>
    %cst_49 = arith.constant 9.99999974E-6 : f32
    %83 = vector.broadcast %cst_49 : f32 to vector<10x1xf32>
    %84 = arith.addf %80, %83 : vector<10x1xf32>
    %85 = math.rsqrt %84 : vector<10x1xf32>
    %c0_50 = arith.constant 0 : index
    %c0_51 = arith.constant 0 : index
    %86 = vector.load %arg2[%c0_50, %c0_51] : memref<10x1xf32, #tpu.memory_space<vmem>>, vector<10x1xf32>
    %87 = arith.mulf %85, %86 : vector<10x1xf32>
    %88 = vector.broadcast %87 : vector<10x1xf32> to vector<10x1024xf32>
    %89 = arith.mulf %82, %88 : vector<10x1024xf32>
    %c0_52 = arith.constant 0 : index
    %c0_53 = arith.constant 0 : index
    %90 = vector.load %arg3[%c0_52, %c0_53] : memref<10x1xf32, #tpu.memory_space<vmem>>, vector<10x1xf32>
    %91 = vector.broadcast %90 : vector<10x1xf32> to vector<10x1024xf32>
    %92 = arith.addf %89, %91 : vector<10x1024xf32>
    %cst_54 = arith.constant 0.000000e+00 : f32
    %93 = vector.broadcast %cst_54 : f32 to vector<10x1024xf32>
    %94 = arith.maximumf %92, %93 : vector<10x1024xf32>
    %c1023_i32_55 = arith.constant 1023 : i32
    %95 = tpu.dynamic_rotate %94 by %c1023_i32_55 dim 1 : vector<10x1024xf32>, i32 -> vector<10x1024xf32>
    %96 = arith.maximumf %94, %95 : vector<10x1024xf32>
    %c992_i32_56 = arith.constant 992 : i32
    %97 = tpu.dynamic_rotate %96 by %c992_i32_56 dim 1 : vector<10x1024xf32>, i32 -> vector<10x1024xf32>
    %98 = arith.maximumf %96, %97 : vector<10x1024xf32>
    %c66_i32 = arith.constant 66 : i32
    %99 = tpu.dynamic_rotate %98 by %c66_i32 dim 1 : vector<10x1024xf32>, i32 -> vector<10x1024xf32>
    %c0_57 = arith.constant 0 : index
    %c0_58 = arith.constant 0 : index
    %100 = vector.load %arg8[%c0_57, %c0_58] : memref<9x1024xf32, #tpu.memory_space<vmem>>, vector<1x1024xf32>
    %101 = vector.broadcast %100 : vector<1x1024xf32> to vector<10x1024xf32>
    %102 = arith.mulf %99, %101 : vector<10x1024xf32>
    %c0_59 = arith.constant 0 : index
    %c0_60 = arith.constant 0 : index
    %c0_61 = arith.constant 0 : index
    %103 = vector.load %arg4[%c0_59, %c0_60, %c0_61] : memref<9x2x10xf32, #tpu.memory_space<vmem>>, vector<1x2x10xf32>
    %104 = vector.shape_cast %103 : vector<1x2x10xf32> to vector<2x10xf32>
    %cst_62 = arith.constant dense<0.000000e+00> : vector<2x1024xf32>
    %105 = tpu.matmul %104, %102, %cst_62 {dimension_numbers = #tpu.dot_dimension_numbers<[1], [0], [0], [1], [0, 0, 1, 1], [], []>} : vector<2x10xf32>, vector<10x1024xf32>, vector<2x1024xf32> -> vector<2x1024xf32>
    %c64_i32 = arith.constant 64 : i32
    %106 = tpu.dynamic_rotate %98 by %c64_i32 dim 1 : vector<10x1024xf32>, i32 -> vector<10x1024xf32>
    %c1_63 = arith.constant 1 : index
    %c0_64 = arith.constant 0 : index
    %107 = vector.load %arg8[%c1_63, %c0_64] : memref<9x1024xf32, #tpu.memory_space<vmem>>, vector<1x1024xf32>
    %108 = vector.broadcast %107 : vector<1x1024xf32> to vector<10x1024xf32>
    %109 = arith.mulf %106, %108 : vector<10x1024xf32>
    %c1_65 = arith.constant 1 : index
    %c0_66 = arith.constant 0 : index
    %c0_67 = arith.constant 0 : index
    %110 = vector.load %arg4[%c1_65, %c0_66, %c0_67] : memref<9x2x10xf32, #tpu.memory_space<vmem>>, vector<1x2x10xf32>
    %111 = vector.shape_cast %110 : vector<1x2x10xf32> to vector<2x10xf32>
    %cst_68 = arith.constant dense<0.000000e+00> : vector<2x1024xf32>
    %112 = tpu.matmul %111, %109, %cst_68 {dimension_numbers = #tpu.dot_dimension_numbers<[1], [0], [0], [1], [0, 0, 1, 1], [], []>} : vector<2x10xf32>, vector<10x1024xf32>, vector<2x1024xf32> -> vector<2x1024xf32>
    %113 = arith.addf %105, %112 : vector<2x1024xf32>
    %c62_i32 = arith.constant 62 : i32
    %114 = tpu.dynamic_rotate %98 by %c62_i32 dim 1 : vector<10x1024xf32>, i32 -> vector<10x1024xf32>
    %c2_69 = arith.constant 2 : index
    %c0_70 = arith.constant 0 : index
    %115 = vector.load %arg8[%c2_69, %c0_70] : memref<9x1024xf32, #tpu.memory_space<vmem>>, vector<1x1024xf32>
    %116 = vector.broadcast %115 : vector<1x1024xf32> to vector<10x1024xf32>
    %117 = arith.mulf %114, %116 : vector<10x1024xf32>
    %c2_71 = arith.constant 2 : index
    %c0_72 = arith.constant 0 : index
    %c0_73 = arith.constant 0 : index
    %118 = vector.load %arg4[%c2_71, %c0_72, %c0_73] : memref<9x2x10xf32, #tpu.memory_space<vmem>>, vector<1x2x10xf32>
    %119 = vector.shape_cast %118 : vector<1x2x10xf32> to vector<2x10xf32>
    %cst_74 = arith.constant dense<0.000000e+00> : vector<2x1024xf32>
    %120 = tpu.matmul %119, %117, %cst_74 {dimension_numbers = #tpu.dot_dimension_numbers<[1], [0], [0], [1], [0, 0, 1, 1], [], []>} : vector<2x10xf32>, vector<10x1024xf32>, vector<2x1024xf32> -> vector<2x1024xf32>
    %121 = arith.addf %113, %120 : vector<2x1024xf32>
    %c2_i32 = arith.constant 2 : i32
    %122 = tpu.dynamic_rotate %98 by %c2_i32 dim 1 : vector<10x1024xf32>, i32 -> vector<10x1024xf32>
    %c3_75 = arith.constant 3 : index
    %c0_76 = arith.constant 0 : index
    %123 = vector.load %arg8[%c3_75, %c0_76] : memref<9x1024xf32, #tpu.memory_space<vmem>>, vector<1x1024xf32>
    %124 = vector.broadcast %123 : vector<1x1024xf32> to vector<10x1024xf32>
    %125 = arith.mulf %122, %124 : vector<10x1024xf32>
    %c3_77 = arith.constant 3 : index
    %c0_78 = arith.constant 0 : index
    %c0_79 = arith.constant 0 : index
    %126 = vector.load %arg4[%c3_77, %c0_78, %c0_79] : memref<9x2x10xf32, #tpu.memory_space<vmem>>, vector<1x2x10xf32>
    %127 = vector.shape_cast %126 : vector<1x2x10xf32> to vector<2x10xf32>
    %cst_80 = arith.constant dense<0.000000e+00> : vector<2x1024xf32>
    %128 = tpu.matmul %127, %125, %cst_80 {dimension_numbers = #tpu.dot_dimension_numbers<[1], [0], [0], [1], [0, 0, 1, 1], [], []>} : vector<2x10xf32>, vector<10x1024xf32>, vector<2x1024xf32> -> vector<2x1024xf32>
    %129 = arith.addf %121, %128 : vector<2x1024xf32>
    %c4_81 = arith.constant 4 : index
    %c0_82 = arith.constant 0 : index
    %c0_83 = arith.constant 0 : index
    %130 = vector.load %arg4[%c4_81, %c0_82, %c0_83] : memref<9x2x10xf32, #tpu.memory_space<vmem>>, vector<1x2x10xf32>
    %131 = vector.shape_cast %130 : vector<1x2x10xf32> to vector<2x10xf32>
    %cst_84 = arith.constant dense<0.000000e+00> : vector<2x1024xf32>
    %132 = tpu.matmul %131, %98, %cst_84 {dimension_numbers = #tpu.dot_dimension_numbers<[1], [0], [0], [1], [0, 0, 1, 1], [], []>} : vector<2x10xf32>, vector<10x1024xf32>, vector<2x1024xf32> -> vector<2x1024xf32>
    %133 = arith.addf %129, %132 : vector<2x1024xf32>
    %c1022_i32 = arith.constant 1022 : i32
    %134 = tpu.dynamic_rotate %98 by %c1022_i32 dim 1 : vector<10x1024xf32>, i32 -> vector<10x1024xf32>
    %c5_85 = arith.constant 5 : index
    %c0_86 = arith.constant 0 : index
    %135 = vector.load %arg8[%c5_85, %c0_86] : memref<9x1024xf32, #tpu.memory_space<vmem>>, vector<1x1024xf32>
    %136 = vector.broadcast %135 : vector<1x1024xf32> to vector<10x1024xf32>
    %137 = arith.mulf %134, %136 : vector<10x1024xf32>
    %c5_87 = arith.constant 5 : index
    %c0_88 = arith.constant 0 : index
    %c0_89 = arith.constant 0 : index
    %138 = vector.load %arg4[%c5_87, %c0_88, %c0_89] : memref<9x2x10xf32, #tpu.memory_space<vmem>>, vector<1x2x10xf32>
    %139 = vector.shape_cast %138 : vector<1x2x10xf32> to vector<2x10xf32>
    %cst_90 = arith.constant dense<0.000000e+00> : vector<2x1024xf32>
    %140 = tpu.matmul %139, %137, %cst_90 {dimension_numbers = #tpu.dot_dimension_numbers<[1], [0], [0], [1], [0, 0, 1, 1], [], []>} : vector<2x10xf32>, vector<10x1024xf32>, vector<2x1024xf32> -> vector<2x1024xf32>
    %141 = arith.addf %133, %140 : vector<2x1024xf32>
    %c962_i32 = arith.constant 962 : i32
    %142 = tpu.dynamic_rotate %98 by %c962_i32 dim 1 : vector<10x1024xf32>, i32 -> vector<10x1024xf32>
    %c6_91 = arith.constant 6 : index
    %c0_92 = arith.constant 0 : index
    %143 = vector.load %arg8[%c6_91, %c0_92] : memref<9x1024xf32, #tpu.memory_space<vmem>>, vector<1x1024xf32>
    %144 = vector.broadcast %143 : vector<1x1024xf32> to vector<10x1024xf32>
    %145 = arith.mulf %142, %144 : vector<10x1024xf32>
    %c6_93 = arith.constant 6 : index
    %c0_94 = arith.constant 0 : index
    %c0_95 = arith.constant 0 : index
    %146 = vector.load %arg4[%c6_93, %c0_94, %c0_95] : memref<9x2x10xf32, #tpu.memory_space<vmem>>, vector<1x2x10xf32>
    %147 = vector.shape_cast %146 : vector<1x2x10xf32> to vector<2x10xf32>
    %cst_96 = arith.constant dense<0.000000e+00> : vector<2x1024xf32>
    %148 = tpu.matmul %147, %145, %cst_96 {dimension_numbers = #tpu.dot_dimension_numbers<[1], [0], [0], [1], [0, 0, 1, 1], [], []>} : vector<2x10xf32>, vector<10x1024xf32>, vector<2x1024xf32> -> vector<2x1024xf32>
    %149 = arith.addf %141, %148 : vector<2x1024xf32>
    %c960_i32 = arith.constant 960 : i32
    %150 = tpu.dynamic_rotate %98 by %c960_i32 dim 1 : vector<10x1024xf32>, i32 -> vector<10x1024xf32>
    %c7_97 = arith.constant 7 : index
    %c0_98 = arith.constant 0 : index
    %151 = vector.load %arg8[%c7_97, %c0_98] : memref<9x1024xf32, #tpu.memory_space<vmem>>, vector<1x1024xf32>
    %152 = vector.broadcast %151 : vector<1x1024xf32> to vector<10x1024xf32>
    %153 = arith.mulf %150, %152 : vector<10x1024xf32>
    %c7_99 = arith.constant 7 : index
    %c0_100 = arith.constant 0 : index
    %c0_101 = arith.constant 0 : index
    %154 = vector.load %arg4[%c7_99, %c0_100, %c0_101] : memref<9x2x10xf32, #tpu.memory_space<vmem>>, vector<1x2x10xf32>
    %155 = vector.shape_cast %154 : vector<1x2x10xf32> to vector<2x10xf32>
    %cst_102 = arith.constant dense<0.000000e+00> : vector<2x1024xf32>
    %156 = tpu.matmul %155, %153, %cst_102 {dimension_numbers = #tpu.dot_dimension_numbers<[1], [0], [0], [1], [0, 0, 1, 1], [], []>} : vector<2x10xf32>, vector<10x1024xf32>, vector<2x1024xf32> -> vector<2x1024xf32>
    %157 = arith.addf %149, %156 : vector<2x1024xf32>
    %c958_i32 = arith.constant 958 : i32
    %158 = tpu.dynamic_rotate %98 by %c958_i32 dim 1 : vector<10x1024xf32>, i32 -> vector<10x1024xf32>
    %c8_103 = arith.constant 8 : index
    %c0_104 = arith.constant 0 : index
    %159 = vector.load %arg8[%c8_103, %c0_104] : memref<9x1024xf32, #tpu.memory_space<vmem>>, vector<1x1024xf32>
    %160 = vector.broadcast %159 : vector<1x1024xf32> to vector<10x1024xf32>
    %161 = arith.mulf %158, %160 : vector<10x1024xf32>
    %c8_105 = arith.constant 8 : index
    %c0_106 = arith.constant 0 : index
    %c0_107 = arith.constant 0 : index
    %162 = vector.load %arg4[%c8_105, %c0_106, %c0_107] : memref<9x2x10xf32, #tpu.memory_space<vmem>>, vector<1x2x10xf32>
    %163 = vector.shape_cast %162 : vector<1x2x10xf32> to vector<2x10xf32>
    %cst_108 = arith.constant dense<0.000000e+00> : vector<2x1024xf32>
    %164 = tpu.matmul %163, %161, %cst_108 {dimension_numbers = #tpu.dot_dimension_numbers<[1], [0], [0], [1], [0, 0, 1, 1], [], []>} : vector<2x10xf32>, vector<10x1024xf32>, vector<2x1024xf32> -> vector<2x1024xf32>
    %165 = arith.addf %157, %164 : vector<2x1024xf32>
    %c0_109 = arith.constant 0 : index
    %c0_110 = arith.constant 0 : index
    %166 = vector.load %arg9[%c0_109, %c0_110] : memref<1x1024xf32, #tpu.memory_space<vmem>>, vector<1x1024xf32>
    %167 = vector.broadcast %166 : vector<1x1024xf32> to vector<2x1024xf32>
    %168 = arith.mulf %165, %167 : vector<2x1024xf32>
    %cst_111 = arith.constant dense<0.000000e+00> : vector<2xf32>
    %169 = vector.multi_reduction <add>, %168, %cst_111 [1] : vector<2x1024xf32> to vector<2xf32>
    %170 = vector.shape_cast %169 : vector<2xf32> to vector<2x1xf32>
    %171 = arith.mulf %168, %168 : vector<2x1024xf32>
    %cst_112 = arith.constant dense<0.000000e+00> : vector<2xf32>
    %172 = vector.multi_reduction <add>, %171, %cst_112 [1] : vector<2x1024xf32> to vector<2xf32>
    %173 = vector.shape_cast %172 : vector<2xf32> to vector<2x1xf32>
    %cst_113 = arith.constant 3.906250e-03 : f32
    %174 = vector.broadcast %cst_113 : f32 to vector<2x1xf32>
    %175 = arith.mulf %170, %174 : vector<2x1xf32>
    %cst_114 = arith.constant 3.906250e-03 : f32
    %176 = vector.broadcast %cst_114 : f32 to vector<2x1xf32>
    %177 = arith.mulf %173, %176 : vector<2x1xf32>
    %178 = arith.mulf %175, %175 : vector<2x1xf32>
    %179 = arith.subf %177, %178 : vector<2x1xf32>
    %cst_115 = arith.constant 0.000000e+00 : f32
    %180 = vector.broadcast %cst_115 : f32 to vector<2x1xf32>
    %181 = arith.maximumf %179, %180 : vector<2x1xf32>
    %182 = vector.broadcast %175 : vector<2x1xf32> to vector<2x1024xf32>
    %183 = arith.subf %165, %182 : vector<2x1024xf32>
    %cst_116 = arith.constant 9.99999974E-6 : f32
    %184 = vector.broadcast %cst_116 : f32 to vector<2x1xf32>
    %185 = arith.addf %181, %184 : vector<2x1xf32>
    %186 = math.rsqrt %185 : vector<2x1xf32>
    %c0_117 = arith.constant 0 : index
    %c0_118 = arith.constant 0 : index
    %187 = vector.load %arg5[%c0_117, %c0_118] : memref<2x1xf32, #tpu.memory_space<vmem>>, vector<2x1xf32>
    %188 = arith.mulf %186, %187 : vector<2x1xf32>
    %189 = vector.broadcast %188 : vector<2x1xf32> to vector<2x1024xf32>
    %190 = arith.mulf %183, %189 : vector<2x1024xf32>
    %c0_119 = arith.constant 0 : index
    %c0_120 = arith.constant 0 : index
    %191 = vector.load %arg6[%c0_119, %c0_120] : memref<2x1xf32, #tpu.memory_space<vmem>>, vector<2x1xf32>
    %192 = vector.broadcast %191 : vector<2x1xf32> to vector<2x1024xf32>
    %193 = arith.addf %190, %192 : vector<2x1024xf32>
    %cst_121 = arith.constant 0.000000e+00 : f32
    %194 = vector.broadcast %cst_121 : f32 to vector<2x1024xf32>
    %195 = arith.maximumf %193, %194 : vector<2x1024xf32>
    %c1022_i32_122 = arith.constant 1022 : i32
    %196 = tpu.dynamic_rotate %195 by %c1022_i32_122 dim 1 : vector<2x1024xf32>, i32 -> vector<2x1024xf32>
    %197 = arith.maximumf %195, %196 : vector<2x1024xf32>
    %c960_i32_123 = arith.constant 960 : i32
    %198 = tpu.dynamic_rotate %197 by %c960_i32_123 dim 1 : vector<2x1024xf32>, i32 -> vector<2x1024xf32>
    %199 = arith.maximumf %197, %198 : vector<2x1024xf32>
    tpu.wait_dma2 semaphore(%arg16 : memref<!tpu.dma_semaphore, #tpu.memory_space<semaphore_mem>>) src(%arg10 : memref<2x1024x32xf32, #tpu.memory_space<any>>) dst(%arg15 : memref<2x1024x32xf32, #tpu.memory_space<vmem>>)
    %200 = vector.extract_strided_slice %199 {offsets = [0, 0], sizes = [1, 1024], strides = [1, 1]} : vector<2x1024xf32> to vector<1x1024xf32>
    %c0_124 = arith.constant 0 : index
    %c0_125 = arith.constant 0 : index
    %c0_126 = arith.constant 0 : index
    %201 = vector.load %arg15[%c0_124, %c0_125, %c0_126] : memref<2x1024x32xf32, #tpu.memory_space<vmem>>, vector<1x1024x32xf32>
    %202 = vector.shape_cast %201 : vector<1x1024x32xf32> to vector<1024x32xf32>
    %cst_127 = arith.constant dense<0.000000e+00> : vector<1x32xf32>
    %203 = tpu.matmul %200, %202, %cst_127 {dimension_numbers = #tpu.dot_dimension_numbers<[1], [0], [0], [1], [0, 0, 1, 1], [], []>} : vector<1x1024xf32>, vector<1024x32xf32>, vector<1x32xf32> -> vector<1x32xf32>
    %204 = vector.extract_strided_slice %199 {offsets = [1, 0], sizes = [1, 1024], strides = [1, 1]} : vector<2x1024xf32> to vector<1x1024xf32>
    %c1_128 = arith.constant 1 : index
    %c0_129 = arith.constant 0 : index
    %c0_130 = arith.constant 0 : index
    %205 = vector.load %arg15[%c1_128, %c0_129, %c0_130] : memref<2x1024x32xf32, #tpu.memory_space<vmem>>, vector<1x1024x32xf32>
    %206 = vector.shape_cast %205 : vector<1x1024x32xf32> to vector<1024x32xf32>
    %cst_131 = arith.constant dense<0.000000e+00> : vector<1x32xf32>
    %207 = tpu.matmul %204, %206, %cst_131 {dimension_numbers = #tpu.dot_dimension_numbers<[1], [0], [0], [1], [0, 0, 1, 1], [], []>} : vector<1x1024xf32>, vector<1024x32xf32>, vector<1x32xf32> -> vector<1x32xf32>
    %208 = arith.addf %203, %207 : vector<1x32xf32>
    %c0_132 = arith.constant 0 : index
    %c0_133 = arith.constant 0 : index
    %209 = vector.load %arg11[%c0_132, %c0_133] : memref<1x32xf32, #tpu.memory_space<vmem>>, vector<1x32xf32>
    %210 = arith.addf %208, %209 : vector<1x32xf32>
    %c0_134 = arith.constant 0 : index
    %c0_135 = arith.constant 0 : index
    %211 = vector.load %arg12[%c0_134, %c0_135] : memref<32x10xf32, #tpu.memory_space<vmem>>, vector<32x10xf32>
    %cst_136 = arith.constant dense<0.000000e+00> : vector<1x10xf32>
    %212 = tpu.matmul %210, %211, %cst_136 {dimension_numbers = #tpu.dot_dimension_numbers<[1], [0], [0], [1], [0, 0, 1, 1], [], []>} : vector<1x32xf32>, vector<32x10xf32>, vector<1x10xf32> -> vector<1x10xf32>
    %c0_137 = arith.constant 0 : index
    %c0_138 = arith.constant 0 : index
    %213 = vector.load %arg13[%c0_137, %c0_138] : memref<1x10xf32, #tpu.memory_space<vmem>>, vector<1x10xf32>
    %214 = arith.addf %212, %213 : vector<1x10xf32>
    %c0_139 = arith.constant 0 : index
    %c0_140 = arith.constant 0 : index
    %215 = vector.load %arg14[%c0_139, %c0_140] : memref<1x10xf32, #tpu.memory_space<vmem>>, vector<1x10xf32>
    tpu.vector_store %arg14[%c0_139, %c0_140], %214 {strides = array<i32>} : memref<1x10xf32, #tpu.memory_space<vmem>>, vector<1x10xf32>,
    return
  }
}

</mosaic_0001>

<llo_original>
// kernel: test_model1_forward.1
$region0: #{test_model1_forward.1}
  #allocation0 [shape = 'u32[]', space=smem, size = 0x4, offset = 0x4, fixed_abs, tag = 'smem constant byte address 0x4 - core index']
  #allocation1 [shape = 'u32[144,128]{1,0:T(1,128)}', space=vmem, size = 0x12000, scoped, tag = 'internal scratch']
  #allocation2 [shape = 'f32[2,1024,32]{2,1,0:T(8,128)}', space=vmem, size = 0x100000, scoped, tag = 'scratch operand']
  #allocation3 [shape = 's32[1]{0}', space=sflag, size = 0x4, scoped, tag = 'scratch operand']
  #allocation6 [shape = 's32[]', space=sflag, size = 0x4, offset = 0, fixed_abs, tag = 'sflag constant byte address 0x0 - dummy sync flag']
  %s0 = inlined_call_operand.vmem [shape: f32[3,1024], index: 0, kind: input, shape index: {}]
  %s1 = inlined_call_operand.vmem [shape: f32[9,10,3], index: 1, kind: input, shape index: {}]
  %s2 = inlined_call_operand.vmem [shape: f32[10,1], index: 2, kind: input, shape index: {}]
  %s3 = inlined_call_operand.vmem [shape: f32[10,1], index: 3, kind: input, shape index: {}]
  %s4 = inlined_call_operand.vmem [shape: f32[9,2,10], index: 4, kind: input, shape index: {}]
  %s5 = inlined_call_operand.vmem [shape: f32[2,1], index: 5, kind: input, shape index: {}]
  %s6 = inlined_call_operand.vmem [shape: f32[2,1], index: 6, kind: input, shape index: {}]
  %s7 = inlined_call_operand.vmem [shape: f32[9,1024], index: 7, kind: input, shape index: {}]
  %s8 = inlined_call_operand.vmem [shape: f32[9,1024], index: 8, kind: input, shape index: {}]
  %s9 = inlined_call_operand.vmem [shape: f32[1,1024], index: 9, kind: input, shape index: {}]
  %s10 = inlined_call_operand.vmem [shape: f32[2,1024,32], index: 10, kind: input, shape index: {}]
  %s11 = inlined_call_operand.vmem [shape: f32[1,32], index: 11, kind: input, shape index: {}]
  %s12 = inlined_call_operand.vmem [shape: f32[32,10], index: 12, kind: input, shape index: {}]
  %s13 = inlined_call_operand.vmem [shape: f32[1,10], index: 13, kind: input, shape index: {}]
  %s14 = inlined_call_operand.hbm [shape: f32[1,10], index: 14, kind: output, shape index: {}]
  %s15 = sld [smem:[#allocation0]]
  $region96: #{test_model1_forward.1} parent=0
    _
  %s17 = ssub.s32 1, %s15
  %s18 = scalar_select 0, %s17, %s15
  $region1: #{test_model1_forward.1} parent=0
    #allocation4 [shape = 'u8[512]{0}', space=vmem, size = 0x400, scoped, tag = 'output window, operand 0, single buffered']
    #allocation5 [shape = 's32[1]{0}', space=sflag, size = 0x4, scoped, tag = 'scoped memory for test_model1_forward.1']
    %19 = vsyncpa [#allocation5], 0
    // Predicated region
    $region2: #{test_model1_forward.1} parent=1 // pred_check
      _
    $region3: #{test_model1_forward.1} parent=1 // pred_check_branch
      %21 = sbr.rel (0) target = $region5
    $region4: #{test_model1_forward.1} parent=1 // pred_region
      _
    $region5: #{test_model1_forward.1} parent=1 // pred_fallthru
      _
    // Predicated region
    $region6: #{test_model1_forward.1} parent=1 // pred_check
      _
    $region7: #{test_model1_forward.1} parent=1 // pred_check_branch
      %23 = sbr.rel (0) target = $region9
    $region8: #{test_model1_forward.1} parent=1 // pred_region
      _
    $region9: #{test_model1_forward.1} parent=1 // pred_fallthru
      _
    // Predicated region
    $region10: #{test_model1_forward.1} parent=1 // pred_check
      _
    $region11: #{test_model1_forward.1} parent=1 // pred_check_branch
      %25 = sbr.rel (0) target = $region13
    $region12: #{test_model1_forward.1} parent=1 // pred_region
      _
    $region13: #{test_model1_forward.1} parent=1 // pred_fallthru
      _
    // Predicated region
    $region14: #{test_model1_forward.1} parent=1 // pred_check
      _
    $region15: #{test_model1_forward.1} parent=1 // pred_check_branch
      %27 = sbr.rel (0) target = $region17
    $region16: #{test_model1_forward.1} parent=1 // pred_region
      _
    $region17: #{test_model1_forward.1} parent=1 // pred_fallthru
      _
    // Predicated region
    $region18: #{test_model1_forward.1} parent=1 // pred_check
      _
    $region19: #{test_model1_forward.1} parent=1 // pred_check_branch
      %29 = sbr.rel (0) target = $region21
    $region20: #{test_model1_forward.1} parent=1 // pred_region
      _
    $region21: #{test_model1_forward.1} parent=1 // pred_fallthru
      _
    // Predicated region
    $region22: #{test_model1_forward.1} parent=1 // pred_check
      _
    $region23: #{test_model1_forward.1} parent=1 // pred_check_branch
      %31 = sbr.rel (0) target = $region25
    $region24: #{test_model1_forward.1} parent=1 // pred_region
      _
    $region25: #{test_model1_forward.1} parent=1 // pred_fallthru
      _
    // Predicated region
    $region26: #{test_model1_forward.1} parent=1 // pred_check
      _
    $region27: #{test_model1_forward.1} parent=1 // pred_check_branch
      %33 = sbr.rel (0) target = $region29
    $region28: #{test_model1_forward.1} parent=1 // pred_region
      _
    $region29: #{test_model1_forward.1} parent=1 // pred_fallthru
      _
    // Predicated region
    $region30: #{test_model1_forward.1} parent=1 // pred_check
      _
    $region31: #{test_model1_forward.1} parent=1 // pred_check_branch
      %35 = sbr.rel (0) target = $region33
    $region32: #{test_model1_forward.1} parent=1 // pred_region
      _
    $region33: #{test_model1_forward.1} parent=1 // pred_fallthru
      _
    // Predicated region
    $region34: #{test_model1_forward.1} parent=1 // pred_check
      _
    $region35: #{test_model1_forward.1} parent=1 // pred_check_branch
      %37 = sbr.rel (0) target = $region37
    $region36: #{test_model1_forward.1} parent=1 // pred_region
      _
    $region37: #{test_model1_forward.1} parent=1 // pred_fallthru
      _
    // Predicated region
    $region38: #{test_model1_forward.1} parent=1 // pred_check
      _
    $region39: #{test_model1_forward.1} parent=1 // pred_check_branch
      %39 = sbr.rel (0) target = $region41
    $region40: #{test_model1_forward.1} parent=1 // pred_region
      _
    $region41: #{test_model1_forward.1} parent=1 // pred_fallthru
      _
    // Predicated region
    $region42: #{test_model1_forward.1} parent=1 // pred_check
      _
    $region43: #{test_model1_forward.1} parent=1 // pred_check_branch
      %41 = sbr.rel (0) target = $region45
    $region44: #{test_model1_forward.1} parent=1 // pred_region
      _
    $region45: #{test_model1_forward.1} parent=1 // pred_fallthru
      _
    // Predicated region
    $region46: #{test_model1_forward.1} parent=1 // pred_check
      _
    $region47: #{test_model1_forward.1} parent=1 // pred_check_branch
      %43 = sbr.rel (0) target = $region49
    $region48: #{test_model1_forward.1} parent=1 // pred_region
      _
    $region49: #{test_model1_forward.1} parent=1 // pred_fallthru
      _
    // Predicated region
    $region50: #{test_model1_forward.1} parent=1 // pred_check
      _
    $region51: #{test_model1_forward.1} parent=1 // pred_check_branch
      %45 = sbr.rel (0) target = $region53
    $region52: #{test_model1_forward.1} parent=1 // pred_region
      _
    $region53: #{test_model1_forward.1} parent=1 // pred_fallthru
      _
    %p47 = scmp.lt.u32.totalorder 2048, 8
    %p48 = pneg %p47
    // Predicated region
    $region54: #{test_model1_forward.1} parent=1 // pred_check
      _
    $region55: #{test_model1_forward.1} parent=1 // pred_check_branch
      %50 = sbr.rel (%p47) target = $region57
    $region56: #{test_model1_forward.1} parent=1 // pred_region
      %s66 = sand.u32 2048, 7
      %p67 = scmp.eq.s32.totalorder %s66, 0
      // Predicated region
      $region69: #{test_model1_forward.1} parent=56 // pred_check
        %p68 = pneg %p67
      $region70: #{test_model1_forward.1} parent=56 // pred_check_branch
        %70 = sbr.rel (%p68) target = $region72
      $region71: #{test_model1_forward.1} parent=56 // pred_region
        loop: start=0, step=1, limit=1
        $region73: #{test_model1_forward.1} parent=71 // loop_pre_header
          _
        $region74: #{test_model1_forward.1} parent=71 // loop_header
          %s72 = sphi 0, %s76
          %p73 = scmp.ge.s32.totalorder %s72, 1
          %s77 = sphi %s10, %s10
          %s78 = sphi [#allocation2], [#allocation2]
        $region75: #{test_model1_forward.1} parent=71 // loop_header_branch
          %75 = sbr.rel (%p73) target = $region79
        $region76: #{test_model1_forward.1} parent=71 // loop_body
          %v79 = vld [vmem:[%s77] sm:$0xff]
          %80 = vst [vmem:[%s78] sm:$0xff] %v79
          %v81 = vld [vmem:[%s77 + $0x8] sm:$0xff]
          %82 = vst [vmem:[%s78 + $0x8] sm:$0xff] %v81
          %v83 = vld [vmem:[%s77 + $0x10] sm:$0xff]
          %84 = vst [vmem:[%s78 + $0x10] sm:$0xff] %v83
          %v85 = vld [vmem:[%s77 + $0x18] sm:$0xff]
          %86 = vst [vmem:[%s78 + $0x18] sm:$0xff] %v85
          %v87 = vld [vmem:[%s77 + $0x20] sm:$0xff]
          %88 = vst [vmem:[%s78 + $0x20] sm:$0xff] %v87
          %v89 = vld [vmem:[%s77 + $0x28] sm:$0xff]
          %90 = vst [vmem:[%s78 + $0x28] sm:$0xff] %v89
          %v91 = vld [vmem:[%s77 + $0x30] sm:$0xff]
          %92 = vst [vmem:[%s78 + $0x30] sm:$0xff] %v91
          %v93 = vld [vmem:[%s77 + $0x38] sm:$0xff]
          %94 = vst [vmem:[%s78 + $0x38] sm:$0xff] %v93
          %v95 = vld [vmem:[%s77 + $0x40] sm:$0xff]
          %96 = vst [vmem:[%s78 + $0x40] sm:$0xff] %v95
          %v97 = vld [vmem:[%s77 + $0x48] sm:$0xff]
          %98 = vst [vmem:[%s78 + $0x48] sm:$0xff] %v97
          %v99 = vld [vmem:[%s77 + $0x50] sm:$0xff]
          %100 = vst [vmem:[%s78 + $0x50] sm:$0xff] %v99
          %v101 = vld [vmem:[%s77 + $0x58] sm:$0xff]
          %102 = vst [vmem:[%s78 + $0x58] sm:$0xff] %v101
          %v103 = vld [vmem:[%s77 + $0x60] sm:$0xff]
          %104 = vst [vmem:[%s78 + $0x60] sm:$0xff] %v103
          %v105 = vld [vmem:[%s77 + $0x68] sm:$0xff]
          %106 = vst [vmem:[%s78 + $0x68] sm:$0xff] %v105
          %v107 = vld [vmem:[%s77 + $0x70] sm:$0xff]
          %108 = vst [vmem:[%s78 + $0x70] sm:$0xff] %v107
          %v109 = vld [vmem:[%s77 + $0x78] sm:$0xff]
          %110 = vst [vmem:[%s78 + $0x78] sm:$0xff] %v109
          %v111 = vld [vmem:[%s77 + $0x80] sm:$0xff]
          %112 = vst [vmem:[%s78 + $0x80] sm:$0xff] %v111
          %v113 = vld [vmem:[%s77 + $0x88] sm:$0xff]
          %114 = vst [vmem:[%s78 + $0x88] sm:$0xff] %v113
          %v115 = vld [vmem:[%s77 + $0x90] sm:$0xff]
          %116 = vst [vmem:[%s78 + $0x90] sm:$0xff] %v115
          %v117 = vld [vmem:[%s77 + $0x98] sm:$0xff]
          %118 = vst [vmem:[%s78 + $0x98] sm:$0xff] %v117
          %v119 = vld [vmem:[%s77 + $0xa0] sm:$0xff]
          %120 = vst [vmem:[%s78 + $0xa0] sm:$0xff] %v119
          %v121 = vld [vmem:[%s77 + $0xa8] sm:$0xff]
          %122 = vst [vmem:[%s78 + $0xa8] sm:$0xff] %v121
          %v123 = vld [vmem:[%s77 + $0xb0] sm:$0xff]
          %124 = vst [vmem:[%s78 + $0xb0] sm:$0xff] %v123
          %v125 = vld [vmem:[%s77 + $0xb8] sm:$0xff]
          %126 = vst [vmem:[%s78 + $0xb8] sm:$0xff] %v125
          %v127 = vld [vmem:[%s77 + $0xc0] sm:$0xff]
          %128 = vst [vmem:[%s78 + $0xc0] sm:$0xff] %v127
          %v129 = vld [vmem:[%s77 + $0xc8] sm:$0xff]
          %130 = vst [vmem:[%s78 + $0xc8] sm:$0xff] %v129
          %v131 = vld [vmem:[%s77 + $0xd0] sm:$0xff]
          %132 = vst [vmem:[%s78 + $0xd0] sm:$0xff] %v131
          %v133 = vld [vmem:[%s77 + $0xd8] sm:$0xff]
          %134 = vst [vmem:[%s78 + $0xd8] sm:$0xff] %v133
          %v135 = vld [vmem:[%s77 + $0xe0] sm:$0xff]
          %136 = vst [vmem:[%s78 + $0xe0] sm:$0xff] %v135
          %v137 = vld [vmem:[%s77 + $0xe8] sm:$0xff]
          %138 = vst [vmem:[%s78 + $0xe8] sm:$0xff] %v137
          %v139 = vld [vmem:[%s77 + $0xf0] sm:$0xff]
          %140 = vst [vmem:[%s78 + $0xf0] sm:$0xff] %v139
          %v141 = vld [vmem:[%s77 + $0xf8] sm:$0xff]
          %142 = vst [vmem:[%s78 + $0xf8] sm:$0xff] %v141
          %v143 = vld [vmem:[%s77 + $0x100] sm:$0xff]
          %144 = vst [vmem:[%s78 + $0x100] sm:$0xff] %v143
          %v145 = vld [vmem:[%s77 + $0x108] sm:$0xff]
          %146 = vst [vmem:[%s78 + $0x108] sm:$0xff] %v145
          %v147 = vld [vmem:[%s77 + $0x110] sm:$0xff]
          %148 = vst [vmem:[%s78 + $0x110] sm:$0xff] %v147
          %v149 = vld [vmem:[%s77 + $0x118] sm:$0xff]
          %150 = vst [vmem:[%s78 + $0x118] sm:$0xff] %v149
          %v151 = vld [vmem:[%s77 + $0x120] sm:$0xff]
          %152 = vst [vmem:[%s78 + $0x120] sm:$0xff] %v151
          %v153 = vld [vmem:[%s77 + $0x128] sm:$0xff]
          %154 = vst [vmem:[%s78 + $0x128] sm:$0xff] %v153
          %v155 = vld [vmem:[%s77 + $0x130] sm:$0xff]
          %156 = vst [vmem:[%s78 + $0x130] sm:$0xff] %v155
          %v157 = vld [vmem:[%s77 + $0x138] sm:$0xff]
          %158 = vst [vmem:[%s78 + $0x138] sm:$0xff] %v157
          %v159 = vld [vmem:[%s77 + $0x140] sm:$0xff]
          %160 = vst [vmem:[%s78 + $0x140] sm:$0xff] %v159
          %v161 = vld [vmem:[%s77 + $0x148] sm:$0xff]
          %162 = vst [vmem:[%s78 + $0x148] sm:$0xff] %v161
          %v163 = vld [vmem:[%s77 + $0x150] sm:$0xff]
          %164 = vst [vmem:[%s78 + $0x150] sm:$0xff] %v163
          %v165 = vld [vmem:[%s77 + $0x158] sm:$0xff]
          %166 = vst [vmem:[%s78 + $0x158] sm:$0xff] %v165
          %v167 = vld [vmem:[%s77 + $0x160] sm:$0xff]
          %168 = vst [vmem:[%s78 + $0x160] sm:$0xff] %v167
          %v169 = vld [vmem:[%s77 + $0x168] sm:$0xff]
          %170 = vst [vmem:[%s78 + $0x168] sm:$0xff] %v169
          %v171 = vld [vmem:[%s77 + $0x170] sm:$0xff]
          %172 = vst [vmem:[%s78 + $0x170] sm:$0xff] %v171
          %v173 = vld [vmem:[%s77 + $0x178] sm:$0xff]
          %174 = vst [vmem:[%s78 + $0x178] sm:$0xff] %v173
          %v175 = vld [vmem:[%s77 + $0x180] sm:$0xff]
          %176 = vst [vmem:[%s78 + $0x180] sm:$0xff] %v175
          %v177 = vld [vmem:[%s77 + $0x188] sm:$0xff]
          %178 = vst [vmem:[%s78 + $0x188] sm:$0xff] %v177
          %v179 = vld [vmem:[%s77 + $0x190] sm:$0xff]
          %180 = vst [vmem:[%s78 + $0x190] sm:$0xff] %v179
          %v181 = vld [vmem:[%s77 + $0x198] sm:$0xff]
          %182 = vst [vmem:[%s78 + $0x198] sm:$0xff] %v181
          %v183 = vld [vmem:[%s77 + $0x1a0] sm:$0xff]
          %184 = vst [vmem:[%s78 + $0x1a0] sm:$0xff] %v183
          %v185 = vld [vmem:[%s77 + $0x1a8] sm:$0xff]
          %186 = vst [vmem:[%s78 + $0x1a8] sm:$0xff] %v185
          %v187 = vld [vmem:[%s77 + $0x1b0] sm:$0xff]
          %188 = vst [vmem:[%s78 + $0x1b0] sm:$0xff] %v187
          %v189 = vld [vmem:[%s77 + $0x1b8] sm:$0xff]
          %190 = vst [vmem:[%s78 + $0x1b8] sm:$0xff] %v189
          %v191 = vld [vmem:[%s77 + $0x1c0] sm:$0xff]
          %192 = vst [vmem:[%s78 + $0x1c0] sm:$0xff] %v191
          %v193 = vld [vmem:[%s77 + $0x1c8] sm:$0xff]
          %194 = vst [vmem:[%s78 + $0x1c8] sm:$0xff] %v193
          %v195 = vld [vmem:[%s77 + $0x1d0] sm:$0xff]
          %196 = vst [vmem:[%s78 + $0x1d0] sm:$0xff] %v195
          %v197 = vld [vmem:[%s77 + $0x1d8] sm:$0xff]
          %198 = vst [vmem:[%s78 + $0x1d8] sm:$0xff] %v197
          %v199 = vld [vmem:[%s77 + $0x1e0] sm:$0xff]
          %200 = vst [vmem:[%s78 + $0x1e0] sm:$0xff] %v199
          %v201 = vld [vmem:[%s77 + $0x1e8] sm:$0xff]
          %202 = vst [vmem:[%s78 + $0x1e8] sm:$0xff] %v201
          %v203 = vld [vmem:[%s77 + $0x1f0] sm:$0xff]
          %204 = vst [vmem:[%s78 + $0x1f0] sm:$0xff] %v203
          %v205 = vld [vmem:[%s77 + $0x1f8] sm:$0xff]
          %206 = vst [vmem:[%s78 + $0x1f8] sm:$0xff] %v205
          %v207 = vld [vmem:[%s77 + $0x200] sm:$0xff]
          %208 = vst [vmem:[%s78 + $0x200] sm:$0xff] %v207
          %v209 = vld [vmem:[%s77 + $0x208] sm:$0xff]
          %210 = vst [vmem:[%s78 + $0x208] sm:$0xff] %v209
          %v211 = vld [vmem:[%s77 + $0x210] sm:$0xff]
          %212 = vst [vmem:[%s78 + $0x210] sm:$0xff] %v211
          %v213 = vld [vmem:[%s77 + $0x218] sm:$0xff]
          %214 = vst [vmem:[%s78 + $0x218] sm:$0xff] %v213
          %v215 = vld [vmem:[%s77 + $0x220] sm:$0xff]
          %216 = vst [vmem:[%s78 + $0x220] sm:$0xff] %v215
          %v217 = vld [vmem:[%s77 + $0x228] sm:$0xff]
          %218 = vst [vmem:[%s78 + $0x228] sm:$0xff] %v217
          %v219 = vld [vmem:[%s77 + $0x230] sm:$0xff]
          %220 = vst [vmem:[%s78 + $0x230] sm:$0xff] %v219
          %v221 = vld [vmem:[%s77 + $0x238] sm:$0xff]
          %222 = vst [vmem:[%s78 + $0x238] sm:$0xff] %v221
          %v223 = vld [vmem:[%s77 + $0x240] sm:$0xff]
          %224 = vst [vmem:[%s78 + $0x240] sm:$0xff] %v223
          %v225 = vld [vmem:[%s77 + $0x248] sm:$0xff]
          %226 = vst [vmem:[%s78 + $0x248] sm:$0xff] %v225
          %v227 = vld [vmem:[%s77 + $0x250] sm:$0xff]
          %228 = vst [vmem:[%s78 + $0x250] sm:$0xff] %v227
          %v229 = vld [vmem:[%s77 + $0x258] sm:$0xff]
          %230 = vst [vmem:[%s78 + $0x258] sm:$0xff] %v229
          %v231 = vld [vmem:[%s77 + $0x260] sm:$0xff]
          %232 = vst [vmem:[%s78 + $0x260] sm:$0xff] %v231
          %v233 = vld [vmem:[%s77 + $0x268] sm:$0xff]
          %234 = vst [vmem:[%s78 + $0x268] sm:$0xff] %v233
          %v235 = vld [vmem:[%s77 + $0x270] sm:$0xff]
          %236 = vst [vmem:[%s78 + $0x270] sm:$0xff] %v235
          %v237 = vld [vmem:[%s77 + $0x278] sm:$0xff]
          %238 = vst [vmem:[%s78 + $0x278] sm:$0xff] %v237
          %v239 = vld [vmem:[%s77 + $0x280] sm:$0xff]
          %240 = vst [vmem:[%s78 + $0x280] sm:$0xff] %v239
          %v241 = vld [vmem:[%s77 + $0x288] sm:$0xff]
          %242 = vst [vmem:[%s78 + $0x288] sm:$0xff] %v241
          %v243 = vld [vmem:[%s77 + $0x290] sm:$0xff]
          %244 = vst [vmem:[%s78 + $0x290] sm:$0xff] %v243
          %v245 = vld [vmem:[%s77 + $0x298] sm:$0xff]
          %246 = vst [vmem:[%s78 + $0x298] sm:$0xff] %v245
          %v247 = vld [vmem:[%s77 + $0x2a0] sm:$0xff]
          %248 = vst [vmem:[%s78 + $0x2a0] sm:$0xff] %v247
          %v249 = vld [vmem:[%s77 + $0x2a8] sm:$0xff]
          %250 = vst [vmem:[%s78 + $0x2a8] sm:$0xff] %v249
          %v251 = vld [vmem:[%s77 + $0x2b0] sm:$0xff]
          %252 = vst [vmem:[%s78 + $0x2b0] sm:$0xff] %v251
          %v253 = vld [vmem:[%s77 + $0x2b8] sm:$0xff]
          %254 = vst [vmem:[%s78 + $0x2b8] sm:$0xff] %v253
          %v255 = vld [vmem:[%s77 + $0x2c0] sm:$0xff]
          %256 = vst [vmem:[%s78 + $0x2c0] sm:$0xff] %v255
          %v257 = vld [vmem:[%s77 + $0x2c8] sm:$0xff]
          %258 = vst [vmem:[%s78 + $0x2c8] sm:$0xff] %v257
          %v259 = vld [vmem:[%s77 + $0x2d0] sm:$0xff]
          %260 = vst [vmem:[%s78 + $0x2d0] sm:$0xff] %v259
          %v261 = vld [vmem:[%s77 + $0x2d8] sm:$0xff]
          %262 = vst [vmem:[%s78 + $0x2d8] sm:$0xff] %v261
          %v263 = vld [vmem:[%s77 + $0x2e0] sm:$0xff]
          %264 = vst [vmem:[%s78 + $0x2e0] sm:$0xff] %v263
          %v265 = vld [vmem:[%s77 + $0x2e8] sm:$0xff]
          %266 = vst [vmem:[%s78 + $0x2e8] sm:$0xff] %v265
          %v267 = vld [vmem:[%s77 + $0x2f0] sm:$0xff]
          %268 = vst [vmem:[%s78 + $0x2f0] sm:$0xff] %v267
          %v269 = vld [vmem:[%s77 + $0x2f8] sm:$0xff]
          %270 = vst [vmem:[%s78 + $0x2f8] sm:$0xff] %v269
          %v271 = vld [vmem:[%s77 + $0x300] sm:$0xff]
          %272 = vst [vmem:[%s78 + $0x300] sm:$0xff] %v271
          %v273 = vld [vmem:[%s77 + $0x308] sm:$0xff]
          %274 = vst [vmem:[%s78 + $0x308] sm:$0xff] %v273
          %v275 = vld [vmem:[%s77 + $0x310] sm:$0xff]
          %276 = vst [vmem:[%s78 + $0x310] sm:$0xff] %v275
          %v277 = vld [vmem:[%s77 + $0x318] sm:$0xff]
          %278 = vst [vmem:[%s78 + $0x318] sm:$0xff] %v277
          %v279 = vld [vmem:[%s77 + $0x320] sm:$0xff]
          %280 = vst [vmem:[%s78 + $0x320] sm:$0xff] %v279
          %v281 = vld [vmem:[%s77 + $0x328] sm:$0xff]
          %282 = vst [vmem:[%s78 + $0x328] sm:$0xff] %v281
          %v283 = vld [vmem:[%s77 + $0x330] sm:$0xff]
          %284 = vst [vmem:[%s78 + $0x330] sm:$0xff] %v283
          %v285 = vld [vmem:[%s77 + $0x338] sm:$0xff]
          %286 = vst [vmem:[%s78 + $0x338] sm:$0xff] %v285
          %v287 = vld [vmem:[%s77 + $0x340] sm:$0xff]
          %288 = vst [vmem:[%s78 + $0x340] sm:$0xff] %v287
          %v289 = vld [vmem:[%s77 + $0x348] sm:$0xff]
          %290 = vst [vmem:[%s78 + $0x348] sm:$0xff] %v289
          %v291 = vld [vmem:[%s77 + $0x350] sm:$0xff]
          %292 = vst [vmem:[%s78 + $0x350] sm:$0xff] %v291
          %v293 = vld [vmem:[%s77 + $0x358] sm:$0xff]
          %294 = vst [vmem:[%s78 + $0x358] sm:$0xff] %v293
          %v295 = vld [vmem:[%s77 + $0x360] sm:$0xff]
          %296 = vst [vmem:[%s78 + $0x360] sm:$0xff] %v295
          %v297 = vld [vmem:[%s77 + $0x368] sm:$0xff]
          %298 = vst [vmem:[%s78 + $0x368] sm:$0xff] %v297
          %v299 = vld [vmem:[%s77 + $0x370] sm:$0xff]
          %300 = vst [vmem:[%s78 + $0x370] sm:$0xff] %v299
          %v301 = vld [vmem:[%s77 + $0x378] sm:$0xff]
          %302 = vst [vmem:[%s78 + $0x378] sm:$0xff] %v301
          %v303 = vld [vmem:[%s77 + $0x380] sm:$0xff]
          %304 = vst [vmem:[%s78 + $0x380] sm:$0xff] %v303
          %v305 = vld [vmem:[%s77 + $0x388] sm:$0xff]
          %306 = vst [vmem:[%s78 + $0x388] sm:$0xff] %v305
          %v307 = vld [vmem:[%s77 + $0x390] sm:$0xff]
          %308 = vst [vmem:[%s78 + $0x390] sm:$0xff] %v307
          %v309 = vld [vmem:[%s77 + $0x398] sm:$0xff]
          %310 = vst [vmem:[%s78 + $0x398] sm:$0xff] %v309
          %v311 = vld [vmem:[%s77 + $0x3a0] sm:$0xff]
          %312 = vst [vmem:[%s78 + $0x3a0] sm:$0xff] %v311
          %v313 = vld [vmem:[%s77 + $0x3a8] sm:$0xff]
          %314 = vst [vmem:[%s78 + $0x3a8] sm:$0xff] %v313
          %v315 = vld [vmem:[%s77 + $0x3b0] sm:$0xff]
          %316 = vst [vmem:[%s78 + $0x3b0] sm:$0xff] %v315
          %v317 = vld [vmem:[%s77 + $0x3b8] sm:$0xff]
          %318 = vst [vmem:[%s78 + $0x3b8] sm:$0xff] %v317
          %v319 = vld [vmem:[%s77 + $0x3c0] sm:$0xff]
          %320 = vst [vmem:[%s78 + $0x3c0] sm:$0xff] %v319
          %v321 = vld [vmem:[%s77 + $0x3c8] sm:$0xff]
          %322 = vst [vmem:[%s78 + $0x3c8] sm:$0xff] %v321
          %v323 = vld [vmem:[%s77 + $0x3d0] sm:$0xff]
          %324 = vst [vmem:[%s78 + $0x3d0] sm:$0xff] %v323
          %v325 = vld [vmem:[%s77 + $0x3d8] sm:$0xff]
          %326 = vst [vmem:[%s78 + $0x3d8] sm:$0xff] %v325
          %v327 = vld [vmem:[%s77 + $0x3e0] sm:$0xff]
          %328 = vst [vmem:[%s78 + $0x3e0] sm:$0xff] %v327
          %v329 = vld [vmem:[%s77 + $0x3e8] sm:$0xff]
          %330 = vst [vmem:[%s78 + $0x3e8] sm:$0xff] %v329
          %v331 = vld [vmem:[%s77 + $0x3f0] sm:$0xff]
          %332 = vst [vmem:[%s78 + $0x3f0] sm:$0xff] %v331
          %v333 = vld [vmem:[%s77 + $0x3f8] sm:$0xff]
          %334 = vst [vmem:[%s78 + $0x3f8] sm:$0xff] %v333
          %v335 = vld [vmem:[%s77 + $0x400] sm:$0xff]
          %336 = vst [vmem:[%s78 + $0x400] sm:$0xff] %v335
          %v337 = vld [vmem:[%s77 + $0x408] sm:$0xff]
          %338 = vst [vmem:[%s78 + $0x408] sm:$0xff] %v337
          %v339 = vld [vmem:[%s77 + $0x410] sm:$0xff]
          %340 = vst [vmem:[%s78 + $0x410] sm:$0xff] %v339
          %v341 = vld [vmem:[%s77 + $0x418] sm:$0xff]
          %342 = vst [vmem:[%s78 + $0x418] sm:$0xff] %v341
          %v343 = vld [vmem:[%s77 + $0x420] sm:$0xff]
          %344 = vst [vmem:[%s78 + $0x420] sm:$0xff] %v343
          %v345 = vld [vmem:[%s77 + $0x428] sm:$0xff]
          %346 = vst [vmem:[%s78 + $0x428] sm:$0xff] %v345
          %v347 = vld [vmem:[%s77 + $0x430] sm:$0xff]
          %348 = vst [vmem:[%s78 + $0x430] sm:$0xff] %v347
          %v349 = vld [vmem:[%s77 + $0x438] sm:$0xff]
          %350 = vst [vmem:[%s78 + $0x438] sm:$0xff] %v349
          %v351 = vld [vmem:[%s77 + $0x440] sm:$0xff]
          %352 = vst [vmem:[%s78 + $0x440] sm:$0xff] %v351
          %v353 = vld [vmem:[%s77 + $0x448] sm:$0xff]
          %354 = vst [vmem:[%s78 + $0x448] sm:$0xff] %v353
          %v355 = vld [vmem:[%s77 + $0x450] sm:$0xff]
          %356 = vst [vmem:[%s78 + $0x450] sm:$0xff] %v355
          %v357 = vld [vmem:[%s77 + $0x458] sm:$0xff]
          %358 = vst [vmem:[%s78 + $0x458] sm:$0xff] %v357
          %v359 = vld [vmem:[%s77 + $0x460] sm:$0xff]
          %360 = vst [vmem:[%s78 + $0x460] sm:$0xff] %v359
          %v361 = vld [vmem:[%s77 + $0x468] sm:$0xff]
          %362 = vst [vmem:[%s78 + $0x468] sm:$0xff] %v361
          %v363 = vld [vmem:[%s77 + $0x470] sm:$0xff]
          %364 = vst [vmem:[%s78 + $0x470] sm:$0xff] %v363
          %v365 = vld [vmem:[%s77 + $0x478] sm:$0xff]
          %366 = vst [vmem:[%s78 + $0x478] sm:$0xff] %v365
          %v367 = vld [vmem:[%s77 + $0x480] sm:$0xff]
          %368 = vst [vmem:[%s78 + $0x480] sm:$0xff] %v367
          %v369 = vld [vmem:[%s77 + $0x488] sm:$0xff]
          %370 = vst [vmem:[%s78 + $0x488] sm:$0xff] %v369
          %v371 = vld [vmem:[%s77 + $0x490] sm:$0xff]
          %372 = vst [vmem:[%s78 + $0x490] sm:$0xff] %v371
          %v373 = vld [vmem:[%s77 + $0x498] sm:$0xff]
          %374 = vst [vmem:[%s78 + $0x498] sm:$0xff] %v373
          %v375 = vld [vmem:[%s77 + $0x4a0] sm:$0xff]
          %376 = vst [vmem:[%s78 + $0x4a0] sm:$0xff] %v375
          %v377 = vld [vmem:[%s77 + $0x4a8] sm:$0xff]
          %378 = vst [vmem:[%s78 + $0x4a8] sm:$0xff] %v377
          %v379 = vld [vmem:[%s77 + $0x4b0] sm:$0xff]
          %380 = vst [vmem:[%s78 + $0x4b0] sm:$0xff] %v379
          %v381 = vld [vmem:[%s77 + $0x4b8] sm:$0xff]
          %382 = vst [vmem:[%s78 + $0x4b8] sm:$0xff] %v381
          %v383 = vld [vmem:[%s77 + $0x4c0] sm:$0xff]
          %384 = vst [vmem:[%s78 + $0x4c0] sm:$0xff] %v383
          %v385 = vld [vmem:[%s77 + $0x4c8] sm:$0xff]
          %386 = vst [vmem:[%s78 + $0x4c8] sm:$0xff] %v385
          %v387 = vld [vmem:[%s77 + $0x4d0] sm:$0xff]
          %388 = vst [vmem:[%s78 + $0x4d0] sm:$0xff] %v387
          %v389 = vld [vmem:[%s77 + $0x4d8] sm:$0xff]
          %390 = vst [vmem:[%s78 + $0x4d8] sm:$0xff] %v389
          %v391 = vld [vmem:[%s77 + $0x4e0] sm:$0xff]
          %392 = vst [vmem:[%s78 + $0x4e0] sm:$0xff] %v391
          %v393 = vld [vmem:[%s77 + $0x4e8] sm:$0xff]
          %394 = vst [vmem:[%s78 + $0x4e8] sm:$0xff] %v393
          %v395 = vld [vmem:[%s77 + $0x4f0] sm:$0xff]
          %396 = vst [vmem:[%s78 + $0x4f0] sm:$0xff] %v395
          %v397 = vld [vmem:[%s77 + $0x4f8] sm:$0xff]
          %398 = vst [vmem:[%s78 + $0x4f8] sm:$0xff] %v397
          %v399 = vld [vmem:[%s77 + $0x500] sm:$0xff]
          %400 = vst [vmem:[%s78 + $0x500] sm:$0xff] %v399
          %v401 = vld [vmem:[%s77 + $0x508] sm:$0xff]
          %402 = vst [vmem:[%s78 + $0x508] sm:$0xff] %v401
          %v403 = vld [vmem:[%s77 + $0x510] sm:$0xff]
          %404 = vst [vmem:[%s78 + $0x510] sm:$0xff] %v403
          %v405 = vld [vmem:[%s77 + $0x518] sm:$0xff]
          %406 = vst [vmem:[%s78 + $0x518] sm:$0xff] %v405
          %v407 = vld [vmem:[%s77 + $0x520] sm:$0xff]
          %408 = vst [vmem:[%s78 + $0x520] sm:$0xff] %v407
          %v409 = vld [vmem:[%s77 + $0x528] sm:$0xff]
          %410 = vst [vmem:[%s78 + $0x528] sm:$0xff] %v409
          %v411 = vld [vmem:[%s77 + $0x530] sm:$0xff]
          %412 = vst [vmem:[%s78 + $0x530] sm:$0xff] %v411
          %v413 = vld [vmem:[%s77 + $0x538] sm:$0xff]
          %414 = vst [vmem:[%s78 + $0x538] sm:$0xff] %v413
          %v415 = vld [vmem:[%s77 + $0x540] sm:$0xff]
          %416 = vst [vmem:[%s78 + $0x540] sm:$0xff] %v415
          %v417 = vld [vmem:[%s77 + $0x548] sm:$0xff]
          %418 = vst [vmem:[%s78 + $0x548] sm:$0xff] %v417
          %v419 = vld [vmem:[%s77 + $0x550] sm:$0xff]
          %420 = vst [vmem:[%s78 + $0x550] sm:$0xff] %v419
          %v421 = vld [vmem:[%s77 + $0x558] sm:$0xff]
          %422 = vst [vmem:[%s78 + $0x558] sm:$0xff] %v421
          %v423 = vld [vmem:[%s77 + $0x560] sm:$0xff]
          %424 = vst [vmem:[%s78 + $0x560] sm:$0xff] %v423
          %v425 = vld [vmem:[%s77 + $0x568] sm:$0xff]
          %426 = vst [vmem:[%s78 + $0x568] sm:$0xff] %v425
          %v427 = vld [vmem:[%s77 + $0x570] sm:$0xff]
          %428 = vst [vmem:[%s78 + $0x570] sm:$0xff] %v427
          %v429 = vld [vmem:[%s77 + $0x578] sm:$0xff]
          %430 = vst [vmem:[%s78 + $0x578] sm:$0xff] %v429
          %v431 = vld [vmem:[%s77 + $0x580] sm:$0xff]
          %432 = vst [vmem:[%s78 + $0x580] sm:$0xff] %v431
          %v433 = vld [vmem:[%s77 + $0x588] sm:$0xff]
          %434 = vst [vmem:[%s78 + $0x588] sm:$0xff] %v433
          %v435 = vld [vmem:[%s77 + $0x590] sm:$0xff]
          %436 = vst [vmem:[%s78 + $0x590] sm:$0xff] %v435
          %v437 = vld [vmem:[%s77 + $0x598] sm:$0xff]
          %438 = vst [vmem:[%s78 + $0x598] sm:$0xff] %v437
          %v439 = vld [vmem:[%s77 + $0x5a0] sm:$0xff]
          %440 = vst [vmem:[%s78 + $0x5a0] sm:$0xff] %v439
          %v441 = vld [vmem:[%s77 + $0x5a8] sm:$0xff]
          %442 = vst [vmem:[%s78 + $0x5a8] sm:$0xff] %v441
          %v443 = vld [vmem:[%s77 + $0x5b0] sm:$0xff]
          %444 = vst [vmem:[%s78 + $0x5b0] sm:$0xff] %v443
          %v445 = vld [vmem:[%s77 + $0x5b8] sm:$0xff]
          %446 = vst [vmem:[%s78 + $0x5b8] sm:$0xff] %v445
          %v447 = vld [vmem:[%s77 + $0x5c0] sm:$0xff]
          %448 = vst [vmem:[%s78 + $0x5c0] sm:$0xff] %v447
          %v449 = vld [vmem:[%s77 + $0x5c8] sm:$0xff]
          %450 = vst [vmem:[%s78 + $0x5c8] sm:$0xff] %v449
          %v451 = vld [vmem:[%s77 + $0x5d0] sm:$0xff]
          %452 = vst [vmem:[%s78 + $0x5d0] sm:$0xff] %v451
          %v453 = vld [vmem:[%s77 + $0x5d8] sm:$0xff]
          %454 = vst [vmem:[%s78 + $0x5d8] sm:$0xff] %v453
          %v455 = vld [vmem:[%s77 + $0x5e0] sm:$0xff]
          %456 = vst [vmem:[%s78 + $0x5e0] sm:$0xff] %v455
          %v457 = vld [vmem:[%s77 + $0x5e8] sm:$0xff]
          %458 = vst [vmem:[%s78 + $0x5e8] sm:$0xff] %v457
          %v459 = vld [vmem:[%s77 + $0x5f0] sm:$0xff]
          %460 = vst [vmem:[%s78 + $0x5f0] sm:$0xff] %v459
          %v461 = vld [vmem:[%s77 + $0x5f8] sm:$0xff]
          %462 = vst [vmem:[%s78 + $0x5f8] sm:$0xff] %v461
          %v463 = vld [vmem:[%s77 + $0x600] sm:$0xff]
          %464 = vst [vmem:[%s78 + $0x600] sm:$0xff] %v463
          %v465 = vld [vmem:[%s77 + $0x608] sm:$0xff]
          %466 = vst [vmem:[%s78 + $0x608] sm:$0xff] %v465
          %v467 = vld [vmem:[%s77 + $0x610] sm:$0xff]
          %468 = vst [vmem:[%s78 + $0x610] sm:$0xff] %v467
          %v469 = vld [vmem:[%s77 + $0x618] sm:$0xff]
          %470 = vst [vmem:[%s78 + $0x618] sm:$0xff] %v469
          %v471 = vld [vmem:[%s77 + $0x620] sm:$0xff]
          %472 = vst [vmem:[%s78 + $0x620] sm:$0xff] %v471
          %v473 = vld [vmem:[%s77 + $0x628] sm:$0xff]
          %474 = vst [vmem:[%s78 + $0x628] sm:$0xff] %v473
          %v475 = vld [vmem:[%s77 + $0x630] sm:$0xff]
          %476 = vst [vmem:[%s78 + $0x630] sm:$0xff] %v475
          %v477 = vld [vmem:[%s77 + $0x638] sm:$0xff]
          %478 = vst [vmem:[%s78 + $0x638] sm:$0xff] %v477
          %v479 = vld [vmem:[%s77 + $0x640] sm:$0xff]
          %480 = vst [vmem:[%s78 + $0x640] sm:$0xff] %v479
          %v481 = vld [vmem:[%s77 + $0x648] sm:$0xff]
          %482 = vst [vmem:[%s78 + $0x648] sm:$0xff] %v481
          %v483 = vld [vmem:[%s77 + $0x650] sm:$0xff]
          %484 = vst [vmem:[%s78 + $0x650] sm:$0xff] %v483
          %v485 = vld [vmem:[%s77 + $0x658] sm:$0xff]
          %486 = vst [vmem:[%s78 + $0x658] sm:$0xff] %v485
          %v487 = vld [vmem:[%s77 + $0x660] sm:$0xff]
          %488 = vst [vmem:[%s78 + $0x660] sm:$0xff] %v487
          %v489 = vld [vmem:[%s77 + $0x668] sm:$0xff]
          %490 = vst [vmem:[%s78 + $0x668] sm:$0xff] %v489
          %v491 = vld [vmem:[%s77 + $0x670] sm:$0xff]
          %492 = vst [vmem:[%s78 + $0x670] sm:$0xff] %v491
          %v493 = vld [vmem:[%s77 + $0x678] sm:$0xff]
          %494 = vst [vmem:[%s78 + $0x678] sm:$0xff] %v493
          %v495 = vld [vmem:[%s77 + $0x680] sm:$0xff]
          %496 = vst [vmem:[%s78 + $0x680] sm:$0xff] %v495
          %v497 = vld [vmem:[%s77 + $0x688] sm:$0xff]
          %498 = vst [vmem:[%s78 + $0x688] sm:$0xff] %v497
          %v499 = vld [vmem:[%s77 + $0x690] sm:$0xff]
          %500 = vst [vmem:[%s78 + $0x690] sm:$0xff] %v499
          %v501 = vld [vmem:[%s77 + $0x698] sm:$0xff]
          %502 = vst [vmem:[%s78 + $0x698] sm:$0xff] %v501
          %v503 = vld [vmem:[%s77 + $0x6a0] sm:$0xff]
          %504 = vst [vmem:[%s78 + $0x6a0] sm:$0xff] %v503
          %v505 = vld [vmem:[%s77 + $0x6a8] sm:$0xff]
          %506 = vst [vmem:[%s78 + $0x6a8] sm:$0xff] %v505
          %v507 = vld [vmem:[%s77 + $0x6b0] sm:$0xff]
          %508 = vst [vmem:[%s78 + $0x6b0] sm:$0xff] %v507
          %v509 = vld [vmem:[%s77 + $0x6b8] sm:$0xff]
          %510 = vst [vmem:[%s78 + $0x6b8] sm:$0xff] %v509
          %v511 = vld [vmem:[%s77 + $0x6c0] sm:$0xff]
          %512 = vst [vmem:[%s78 + $0x6c0] sm:$0xff] %v511
          %v513 = vld [vmem:[%s77 + $0x6c8] sm:$0xff]
          %514 = vst [vmem:[%s78 + $0x6c8] sm:$0xff] %v513
          %v515 = vld [vmem:[%s77 + $0x6d0] sm:$0xff]
          %516 = vst [vmem:[%s78 + $0x6d0] sm:$0xff] %v515
          %v517 = vld [vmem:[%s77 + $0x6d8] sm:$0xff]
          %518 = vst [vmem:[%s78 + $0x6d8] sm:$0xff] %v517
          %v519 = vld [vmem:[%s77 + $0x6e0] sm:$0xff]
          %520 = vst [vmem:[%s78 + $0x6e0] sm:$0xff] %v519
          %v521 = vld [vmem:[%s77 + $0x6e8] sm:$0xff]
          %522 = vst [vmem:[%s78 + $0x6e8] sm:$0xff] %v521
          %v523 = vld [vmem:[%s77 + $0x6f0] sm:$0xff]
          %524 = vst [vmem:[%s78 + $0x6f0] sm:$0xff] %v523
          %v525 = vld [vmem:[%s77 + $0x6f8] sm:$0xff]
          %526 = vst [vmem:[%s78 + $0x6f8] sm:$0xff] %v525
          %v527 = vld [vmem:[%s77 + $0x700] sm:$0xff]
          %528 = vst [vmem:[%s78 + $0x700] sm:$0xff] %v527
          %v529 = vld [vmem:[%s77 + $0x708] sm:$0xff]
          %530 = vst [vmem:[%s78 + $0x708] sm:$0xff] %v529
          %v531 = vld [vmem:[%s77 + $0x710] sm:$0xff]
          %532 = vst [vmem:[%s78 + $0x710] sm:$0xff] %v531
          %v533 = vld [vmem:[%s77 + $0x718] sm:$0xff]
          %534 = vst [vmem:[%s78 + $0x718] sm:$0xff] %v533
          %v535 = vld [vmem:[%s77 + $0x720] sm:$0xff]
          %536 = vst [vmem:[%s78 + $0x720] sm:$0xff] %v535
          %v537 = vld [vmem:[%s77 + $0x728] sm:$0xff]
          %538 = vst [vmem:[%s78 + $0x728] sm:$0xff] %v537
          %v539 = vld [vmem:[%s77 + $0x730] sm:$0xff]
          %540 = vst [vmem:[%s78 + $0x730] sm:$0xff] %v539
          %v541 = vld [vmem:[%s77 + $0x738] sm:$0xff]
          %542 = vst [vmem:[%s78 + $0x738] sm:$0xff] %v541
          %v543 = vld [vmem:[%s77 + $0x740] sm:$0xff]
          %544 = vst [vmem:[%s78 + $0x740] sm:$0xff] %v543
          %v545 = vld [vmem:[%s77 + $0x748] sm:$0xff]
          %546 = vst [vmem:[%s78 + $0x748] sm:$0xff] %v545
          %v547 = vld [vmem:[%s77 + $0x750] sm:$0xff]
          %548 = vst [vmem:[%s78 + $0x750] sm:$0xff] %v547
          %v549 = vld [vmem:[%s77 + $0x758] sm:$0xff]
          %550 = vst [vmem:[%s78 + $0x758] sm:$0xff] %v549
          %v551 = vld [vmem:[%s77 + $0x760] sm:$0xff]
          %552 = vst [vmem:[%s78 + $0x760] sm:$0xff] %v551
          %v553 = vld [vmem:[%s77 + $0x768] sm:$0xff]
          %554 = vst [vmem:[%s78 + $0x768] sm:$0xff] %v553
          %v555 = vld [vmem:[%s77 + $0x770] sm:$0xff]
          %556 = vst [vmem:[%s78 + $0x770] sm:$0xff] %v555
          %v557 = vld [vmem:[%s77 + $0x778] sm:$0xff]
          %558 = vst [vmem:[%s78 + $0x778] sm:$0xff] %v557
          %v559 = vld [vmem:[%s77 + $0x780] sm:$0xff]
          %560 = vst [vmem:[%s78 + $0x780] sm:$0xff] %v559
          %v561 = vld [vmem:[%s77 + $0x788] sm:$0xff]
          %562 = vst [vmem:[%s78 + $0x788] sm:$0xff] %v561
          %v563 = vld [vmem:[%s77 + $0x790] sm:$0xff]
          %564 = vst [vmem:[%s78 + $0x790] sm:$0xff] %v563
          %v565 = vld [vmem:[%s77 + $0x798] sm:$0xff]
          %566 = vst [vmem:[%s78 + $0x798] sm:$0xff] %v565
          %v567 = vld [vmem:[%s77 + $0x7a0] sm:$0xff]
          %568 = vst [vmem:[%s78 + $0x7a0] sm:$0xff] %v567
          %v569 = vld [vmem:[%s77 + $0x7a8] sm:$0xff]
          %570 = vst [vmem:[%s78 + $0x7a8] sm:$0xff] %v569
          %v571 = vld [vmem:[%s77 + $0x7b0] sm:$0xff]
          %572 = vst [vmem:[%s78 + $0x7b0] sm:$0xff] %v571
          %v573 = vld [vmem:[%s77 + $0x7b8] sm:$0xff]
          %574 = vst [vmem:[%s78 + $0x7b8] sm:$0xff] %v573
          %v575 = vld [vmem:[%s77 + $0x7c0] sm:$0xff]
          %576 = vst [vmem:[%s78 + $0x7c0] sm:$0xff] %v575
          %v577 = vld [vmem:[%s77 + $0x7c8] sm:$0xff]
          %578 = vst [vmem:[%s78 + $0x7c8] sm:$0xff] %v577
          %v579 = vld [vmem:[%s77 + $0x7d0] sm:$0xff]
          %580 = vst [vmem:[%s78 + $0x7d0] sm:$0xff] %v579
          %v581 = vld [vmem:[%s77 + $0x7d8] sm:$0xff]
          %582 = vst [vmem:[%s78 + $0x7d8] sm:$0xff] %v581
          %v583 = vld [vmem:[%s77 + $0x7e0] sm:$0xff]
          %584 = vst [vmem:[%s78 + $0x7e0] sm:$0xff] %v583
          %v585 = vld [vmem:[%s77 + $0x7e8] sm:$0xff]
          %586 = vst [vmem:[%s78 + $0x7e8] sm:$0xff] %v585
          %v587 = vld [vmem:[%s77 + $0x7f0] sm:$0xff]
          %588 = vst [vmem:[%s78 + $0x7f0] sm:$0xff] %v587
          %v589 = vld [vmem:[%s77 + $0x7f8] sm:$0xff]
          %590 = vst [vmem:[%s78 + $0x7f8] sm:$0xff] %v589
        $region77: #{test_model1_forward.1} parent=71 // loop_footer
          %s76 = sadd.s32 1, %s72
        $region78: #{test_model1_forward.1} parent=71 // loop_footer_branch
          %71 = sbr.rel target = $region74
        $region79: #{test_model1_forward.1} parent=71 // loop_exit
          _
      $region72: #{test_model1_forward.1} parent=56 // pred_fallthru
        _
      %p591 = pneg %p67
      // Predicated region
      $region80: #{test_model1_forward.1} parent=56 // pred_check
        _
      $region81: #{test_model1_forward.1} parent=56 // pred_check_branch
        %593 = sbr.rel (%p67) target = $region83
      $region82: #{test_model1_forward.1} parent=56 // pred_region
        %s594 = sand.u32 2048, 7
      $region83: #{test_model1_forward.1} parent=56 // pred_fallthru
        _
    $region57: #{test_model1_forward.1} parent=1 // pred_fallthru
      _
    // Predicated region
    $region58: #{test_model1_forward.1} parent=1 // pred_check
      %p51 = pneg %p47
    $region59: #{test_model1_forward.1} parent=1 // pred_check_branch
      %53 = sbr.rel (%p51) target = $region61
    $region60: #{test_model1_forward.1} parent=1 // pred_region
      %s54 = sshll.u32 1, 2048
      %s55 = ssub.s32 %s54, 1
      loop: start=0, step=1, limit=1
      $region62: #{test_model1_forward.1} parent=60 // loop_pre_header
        _
      $region63: #{test_model1_forward.1} parent=60 // loop_header
        %s57 = sphi 0, %s61
        %p58 = scmp.ge.s32.totalorder %s57, 1
        %s62 = sphi %s10, %s10
        %s63 = sphi [#allocation2], [#allocation2]
      $region64: #{test_model1_forward.1} parent=60 // loop_header_branch
        %60 = sbr.rel (%p58) target = $region68
      $region65: #{test_model1_forward.1} parent=60 // loop_body
        %v64 = vld [vmem:[%s62] sm:%s55]
        %65 = vst [vmem:[%s63] sm:%s55] %v64
      $region66: #{test_model1_forward.1} parent=60 // loop_footer
        %s61 = sadd.s32 1, %s57
      $region67: #{test_model1_forward.1} parent=60 // loop_footer_branch
        %56 = sbr.rel target = $region63
      $region68: #{test_model1_forward.1} parent=60 // loop_exit
        _
    $region61: #{test_model1_forward.1} parent=1 // pred_fallthru
      _
    // Predicated region
    $region84: #{test_model1_forward.1} parent=1 // pred_check
      _
    $region85: #{test_model1_forward.1} parent=1 // pred_check_branch
      %597 = sbr.rel (0) target = $region87
    $region86: #{test_model1_forward.1} parent=1 // pred_region
      %598 = vsyncadd [#allocation3], 32768
    $region87: #{test_model1_forward.1} parent=1 // pred_fallthru
      _
    %v599 = vld [vmem:[%s0] sm:$0x77]
    %v600 = vld [vmem:[%s0 + $0x8] sm:$0x77]
    %v601 = vld [vmem:[%s0 + $0x10] sm:$0x77]
    %v602 = vld [vmem:[%s0 + $0x18] sm:$0x77]
    %v607 = vcombine.high %v599, %v599
    %v608 = vcombine.high %v600, %v600
    %v609 = vcombine.high %v601, %v601
    %v610 = vcombine.high %v602, %v602
    %615 = vrot.lane.b32.xlu0 %v599, 33
    %v616 = vpop.permute.xlu0 %615
    %617 = vrot.lane.b32.xlu0 %v607, 33
    %v618 = vpop.permute.xlu0 %617
    %619 = vrot.lane.b32.xlu0 %v600, 33
    %v620 = vpop.permute.xlu0 %619
    %621 = vrot.lane.b32.xlu0 %v608, 33
    %v622 = vpop.permute.xlu0 %621
    %623 = vrot.lane.b32.xlu0 %v601, 33
    %v624 = vpop.permute.xlu0 %623
    %625 = vrot.lane.b32.xlu0 %v609, 33
    %v626 = vpop.permute.xlu0 %625
    %627 = vrot.lane.b32.xlu0 %v602, 33
    %v628 = vpop.permute.xlu0 %627
    %629 = vrot.lane.b32.xlu0 %v610, 33
    %v630 = vpop.permute.xlu0 %629
    %v631 = vlaneseq
    %v632 = vand.u32 %v631, 127
    %vm633 = vcmp.lt.s32.totalorder %v632, 33
    %v634 = vsel %vm633, %v628, %v630
    %v635 = vsel %vm633, %v626, %v628
    %v636 = vsel %vm633, %v624, %v626
    %v637 = vsel %vm633, %v622, %v624
    %v638 = vsel %vm633, %v620, %v622
    %v639 = vsel %vm633, %v618, %v620
    %v640 = vsel %vm633, %v616, %v618
    %v641 = vsel %vm633, %v630, %v616
    %v642 = vld [vmem:[%s7] ss:$8 sm:$0xf]
    %v643 = vld [vmem:[%s7] ss:$8 sm:$0xf0]
    %v644 = vor.u32 %v642, %v643
    %v646 = vlaneseq
    %v647 = vshrl.u32 %v646, 7
    %v648 = vsub.s32 0, %v647
    %v649 = vrot.slane %v644, %v648
    %v650 = vlaneseq
    %v651 = vshrl.u32 %v650, 7
    %v652 = vsub.s32 1, %v651
    %v653 = vrot.slane %v644, %v652
    %v654 = vlaneseq
    %v655 = vshrl.u32 %v654, 7
    %v656 = vsub.s32 2, %v655
    %v657 = vrot.slane %v644, %v656
    %v658 = vlaneseq
    %v659 = vshrl.u32 %v658, 7
    %v660 = vsub.s32 3, %v659
    %v661 = vrot.slane %v644, %v660
    %v662 = vlaneseq
    %v663 = vshrl.u32 %v662, 7
    %v664 = vsub.s32 4, %v663
    %v665 = vrot.slane %v644, %v664
    %v666 = vlaneseq
    %v667 = vshrl.u32 %v666, 7
    %v668 = vsub.s32 5, %v667
    %v669 = vrot.slane %v644, %v668
    %v670 = vlaneseq
    %v671 = vshrl.u32 %v670, 7
    %v672 = vsub.s32 6, %v671
    %v673 = vrot.slane %v644, %v672
    %v674 = vlaneseq
    %v675 = vshrl.u32 %v674, 7
    %v676 = vsub.s32 7, %v675
    %v677 = vrot.slane %v644, %v676
    %v686 = vmul.f32 %v641, %v649
    %v687 = vmul.f32 %v640, %v653
    %v688 = vmul.f32 %v639, %v657
    %v689 = vmul.f32 %v638, %v661
    %v690 = vmul.f32 %v637, %v665
    %v691 = vmul.f32 %v636, %v669
    %v692 = vmul.f32 %v635, %v673
    %v693 = vmul.f32 %v634, %v677
    %v694 = vld [vmem:[%s1] sm:$0xff]
    %v695 = vld [vmem:[%s1 + $0x8] sm:$0x3]
    %696 = vrot.lane.b32.xlu0 %v599, 32
    %v697 = vpop.permute.xlu0 %696
    %698 = vrot.lane.b32.xlu0 %v607, 32
    %v699 = vpop.permute.xlu0 %698
    %700 = vrot.lane.b32.xlu0 %v600, 32
    %v701 = vpop.permute.xlu0 %700
    %702 = vrot.lane.b32.xlu0 %v608, 32
    %v703 = vpop.permute.xlu0 %702
    %704 = vrot.lane.b32.xlu0 %v601, 32
    %v705 = vpop.permute.xlu0 %704
    %706 = vrot.lane.b32.xlu0 %v609, 32
    %v707 = vpop.permute.xlu0 %706
    %708 = vrot.lane.b32.xlu0 %v602, 32
    %v709 = vpop.permute.xlu0 %708
    %710 = vrot.lane.b32.xlu0 %v610, 32
    %v711 = vpop.permute.xlu0 %710
    %vm712 = vcmp.lt.s32.totalorder %v632, 32
    %v713 = vsel %vm712, %v709, %v711
    %v714 = vsel %vm712, %v707, %v709
    %v715 = vsel %vm712, %v705, %v707
    %v716 = vsel %vm712, %v703, %v705
    %v717 = vsel %vm712, %v701, %v703
    %v718 = vsel %vm712, %v699, %v701
    %v719 = vsel %vm712, %v697, %v699
    %v720 = vsel %vm712, %v711, %v697
    %s721 = scalar_lea.vmem %s7, 1
    %v722 = vld [vmem:[%s721] ss:$8 sm:$0xf]
    %v723 = vld [vmem:[%s721] ss:$8 sm:$0xf0]
    %v724 = vor.u32 %v722, %v723
    %v726 = vlaneseq
    %v727 = vshrl.u32 %v726, 7
    %v728 = vsub.s32 0, %v727
    %v729 = vrot.slane %v724, %v728
    %v730 = vlaneseq
    %v731 = vshrl.u32 %v730, 7
    %v732 = vsub.s32 1, %v731
    %v733 = vrot.slane %v724, %v732
    %v734 = vlaneseq
    %v735 = vshrl.u32 %v734, 7
    %v736 = vsub.s32 2, %v735
    %v737 = vrot.slane %v724, %v736
    %v738 = vlaneseq
    %v739 = vshrl.u32 %v738, 7
    %v740 = vsub.s32 3, %v739
    %v741 = vrot.slane %v724, %v740
    %v742 = vlaneseq
    %v743 = vshrl.u32 %v742, 7
    %v744 = vsub.s32 4, %v743
    %v745 = vrot.slane %v724, %v744
    %v746 = vlaneseq
    %v747 = vshrl.u32 %v746, 7
    %v748 = vsub.s32 5, %v747
    %v749 = vrot.slane %v724, %v748
    %v750 = vlaneseq
    %v751 = vshrl.u32 %v750, 7
    %v752 = vsub.s32 6, %v751
    %v753 = vrot.slane %v724, %v752
    %v754 = vlaneseq
    %v755 = vshrl.u32 %v754, 7
    %v756 = vsub.s32 7, %v755
    %v757 = vrot.slane %v724, %v756
    %v766 = vmul.f32 %v720, %v729
    %v767 = vmul.f32 %v719, %v733
    %v768 = vmul.f32 %v718, %v737
    %v769 = vmul.f32 %v717, %v741
    %v770 = vmul.f32 %v716, %v745
    %v771 = vmul.f32 %v715, %v749
    %v772 = vmul.f32 %v714, %v753
    %v773 = vmul.f32 %v713, %v757
    %s774 = scalar_lea.vmem %s1, 16
    %v775 = vld [vmem:[%s774] sm:$0xff]
    %v776 = vld [vmem:[%s774 + $0x8] sm:$0x3]
    %vm777 = vcmask 23552
    %v779 = vsel %vm777, %v775, 0
    %v782 = vsel %vm777, %v776, 0
    %vm784 = vcmask 1042432
    %v786 = vsel %vm784, %v766, 0
    %v789 = vsel %vm784, %v767, 0
    %v792 = vsel %vm784, %v768, 0
    %v795 = vsel %vm784, %v769, 0
    %v798 = vsel %vm784, %v770, 0
    %v801 = vsel %vm784, %v771, 0
    %v804 = vsel %vm784, %v772, 0
    %v807 = vsel %vm784, %v773, 0
    %809 = vmatprep.subr.mxu0 0.0
    %810 = vmatpush1.msra.mxu0 0.0
    %811 = vmatprep.subr.mxu0 0.0
    %812 = vmatpush1.msra.mxu0 0.0
    %813 = vmatprep.subr.mxu0 0.0
    %814 = vmatpush1.msra.mxu0 0.0
    %815 = vmatprep.subr.mxu0 0.0
    %816 = vmatpush1.msra.mxu0 0.0
    %817 = vmatprep.subr.mxu0 0.0
    %818 = vmatpush1.msra.mxu0 0.0
    %819 = vmatprep.subr.mxu0 0.0
    %820 = vmatpush1.msra.mxu0 0.0
    %821 = vmatprep.subr.mxu0 0.0
    %822 = vmatpush1.msra.mxu0 0.0
    %823 = vmatprep.subr.mxu0 0.0
    %824 = vmatpush1.msra.mxu0 0.0
    %825 = vmatprep.subr.mxu0 0.0
    %826 = vmatpush1.msra.mxu0 0.0
    %827 = vmatprep.subr.mxu0 0.0
    %828 = vmatpush1.msra.mxu0 0.0
    %829 = vmatprep.subr.mxu0 0.0
    %830 = vmatpush1.msra.mxu0 0.0
    %831 = vmatprep.subr.mxu0 0.0
    %832 = vmatpush1.msra.mxu0 0.0
    %833 = vmatprep.subr.mxu0 0.0
    %834 = vmatpush1.msra.mxu0 0.0
    %835 = vmatprep.subr.mxu0 0.0
    %836 = vmatpush1.msra.mxu0 0.0
    %837 = vmatprep.subr.mxu0 0.0
    %838 = vmatpush1.msra.mxu0 0.0
    %839 = vmatprep.subr.mxu0 %v789
    %840 = vmatpush1.msra.mxu0 %v786
    %841 = vmatprep.subr.mxu0 0.0
    %842 = vmatpush2.msra.mxu0 0.0
    %843 = vmatprep.subr.mxu0 0.0
    %844 = vmatpush2.msra.mxu0 0.0
    %845 = vmatprep.subr.mxu0 0.0
    %846 = vmatpush2.msra.mxu0 0.0
    %847 = vmatprep.subr.mxu0 0.0
    %848 = vmatpush2.msra.mxu0 0.0
    %849 = vmatprep.subr.mxu0 0.0
    %850 = vmatpush2.msra.mxu0 0.0
    %851 = vmatprep.subr.mxu0 0.0
    %852 = vmatpush2.msra.mxu0 0.0
    %853 = vmatprep.subr.mxu0 0.0
    %854 = vmatpush2.msra.mxu0 0.0
    %855 = vmatprep.subr.mxu0 0.0
    %856 = vmatpush2.msra.mxu0 0.0
    %857 = vmatprep.subr.mxu0 0.0
    %858 = vmatpush2.msra.mxu0 0.0
    %859 = vmatprep.subr.mxu0 0.0
    %860 = vmatpush2.msra.mxu0 0.0
    %861 = vmatprep.subr.mxu0 0.0
    %862 = vmatpush2.msra.mxu0 0.0
    %863 = vmatprep.subr.mxu0 0.0
    %864 = vmatpush2.msra.mxu0 0.0
    %865 = vmatprep.subr.mxu0 0.0
    %866 = vmatpush2.msra.mxu0 0.0
    %867 = vmatprep.subr.mxu0 0.0
    %868 = vmatpush2.msra.mxu0 0.0
    %869 = vmatprep.subr.mxu0 0.0
    %870 = vmatpush2.msra.mxu0 0.0
    %871 = vmatprep.subr.mxu0 0.0
    %872 = vmatpush2.msra.mxu0 0.0
    %873 = vmatprep.mubr.f32.mxu0 0.0
    %874 = vmatmul.mubr.f32.gmra.mxu0 %v779
    %v875 = vpop.f32.mrf.mxu0
    %v876 = vadd.f32 0.0, %v875
    %v877 = vpop.f32.mrf.mxu0
    %v878 = vadd.f32 0.0, %v877
    %879 = vmatprep.mubr.f32.mxu0 0.0
    %880 = vmatmul.mubr.f32.gmra.mxu0 %v782
    %v881 = vpop.f32.mrf.mxu0
    %v882 = vadd.f32 0.0, %v881
    %v883 = vpop.f32.mrf.mxu0
    %v884 = vadd.f32 0.0, %v883
    %885 = vdwg.mxu0
    %886 = vmatprep.subr.mxu0 0.0
    %887 = vmatpush1.msra.mxu0 0.0
    %888 = vmatprep.subr.mxu0 0.0
    %889 = vmatpush1.msra.mxu0 0.0
    %890 = vmatprep.subr.mxu0 0.0
    %891 = vmatpush1.msra.mxu0 0.0
    %892 = vmatprep.subr.mxu0 0.0
    %893 = vmatpush1.msra.mxu0 0.0
    %894 = vmatprep.subr.mxu0 0.0
    %895 = vmatpush1.msra.mxu0 0.0
    %896 = vmatprep.subr.mxu0 0.0
    %897 = vmatpush1.msra.mxu0 0.0
    %898 = vmatprep.subr.mxu0 0.0
    %899 = vmatpush1.msra.mxu0 0.0
    %900 = vmatprep.subr.mxu0 0.0
    %901 = vmatpush1.msra.mxu0 0.0
    %902 = vmatprep.subr.mxu0 0.0
    %903 = vmatpush1.msra.mxu0 0.0
    %904 = vmatprep.subr.mxu0 0.0
    %905 = vmatpush1.msra.mxu0 0.0
    %906 = vmatprep.subr.mxu0 0.0
    %907 = vmatpush1.msra.mxu0 0.0
    %908 = vmatprep.subr.mxu0 0.0
    %909 = vmatpush1.msra.mxu0 0.0
    %910 = vmatprep.subr.mxu0 0.0
    %911 = vmatpush1.msra.mxu0 0.0
    %912 = vmatprep.subr.mxu0 0.0
    %913 = vmatpush1.msra.mxu0 0.0
    %914 = vmatprep.subr.mxu0 0.0
    %915 = vmatpush1.msra.mxu0 0.0
    %916 = vmatprep.subr.mxu0 %v795
    %917 = vmatpush1.msra.mxu0 %v792
    %918 = vmatprep.subr.mxu0 0.0
    %919 = vmatpush2.msra.mxu0 0.0
    %920 = vmatprep.subr.mxu0 0.0
    %921 = vmatpush2.msra.mxu0 0.0
    %922 = vmatprep.subr.mxu0 0.0
    %923 = vmatpush2.msra.mxu0 0.0
    %924 = vmatprep.subr.mxu0 0.0
    %925 = vmatpush2.msra.mxu0 0.0
    %926 = vmatprep.subr.mxu0 0.0
    %927 = vmatpush2.msra.mxu0 0.0
    %928 = vmatprep.subr.mxu0 0.0
    %929 = vmatpush2.msra.mxu0 0.0
    %930 = vmatprep.subr.mxu0 0.0
    %931 = vmatpush2.msra.mxu0 0.0
    %932 = vmatprep.subr.mxu0 0.0
    %933 = vmatpush2.msra.mxu0 0.0
    %934 = vmatprep.subr.mxu0 0.0
    %935 = vmatpush2.msra.mxu0 0.0
    %936 = vmatprep.subr.mxu0 0.0
    %937 = vmatpush2.msra.mxu0 0.0
    %938 = vmatprep.subr.mxu0 0.0
    %939 = vmatpush2.msra.mxu0 0.0
    %940 = vmatprep.subr.mxu0 0.0
    %941 = vmatpush2.msra.mxu0 0.0
    %942 = vmatprep.subr.mxu0 0.0
    %943 = vmatpush2.msra.mxu0 0.0
    %944 = vmatprep.subr.mxu0 0.0
    %945 = vmatpush2.msra.mxu0 0.0
    %946 = vmatprep.subr.mxu0 0.0
    %947 = vmatpush2.msra.mxu0 0.0
    %948 = vmatprep.subr.mxu0 0.0
    %949 = vmatpush2.msra.mxu0 0.0
    %950 = vmatprep.mubr.f32.mxu0 0.0
    %951 = vmatmul.mubr.f32.gmra.mxu0 %v779
    %v952 = vpop.f32.mrf.mxu0
    %v953 = vadd.f32 0.0, %v952
    %v954 = vpop.f32.mrf.mxu0
    %v955 = vadd.f32 0.0, %v954
    %956 = vmatprep.mubr.f32.mxu0 0.0
    %957 = vmatmul.mubr.f32.gmra.mxu0 %v782
    %v958 = vpop.f32.mrf.mxu0
    %v959 = vadd.f32 0.0, %v958
    %v960 = vpop.f32.mrf.mxu0
    %v961 = vadd.f32 0.0, %v960
    %962 = vdwg.mxu0
    %963 = vmatprep.subr.mxu0 0.0
    %964 = vmatpush1.msra.mxu0 0.0
    %965 = vmatprep.subr.mxu0 0.0
    %966 = vmatpush1.msra.mxu0 0.0
    %967 = vmatprep.subr.mxu0 0.0
    %968 = vmatpush1.msra.mxu0 0.0
    %969 = vmatprep.subr.mxu0 0.0
    %970 = vmatpush1.msra.mxu0 0.0
    %971 = vmatprep.subr.mxu0 0.0
    %972 = vmatpush1.msra.mxu0 0.0
    %973 = vmatprep.subr.mxu0 0.0
    %974 = vmatpush1.msra.mxu0 0.0
    %975 = vmatprep.subr.mxu0 0.0
    %976 = vmatpush1.msra.mxu0 0.0
    %977 = vmatprep.subr.mxu0 0.0
    %978 = vmatpush1.msra.mxu0 0.0
    %979 = vmatprep.subr.mxu0 0.0
    %980 = vmatpush1.msra.mxu0 0.0
    %981 = vmatprep.subr.mxu0 0.0
    %982 = vmatpush1.msra.mxu0 0.0
    %983 = vmatprep.subr.mxu0 0.0
    %984 = vmatpush1.msra.mxu0 0.0
    %985 = vmatprep.subr.mxu0 0.0
    %986 = vmatpush1.msra.mxu0 0.0
    %987 = vmatprep.subr.mxu0 0.0
    %988 = vmatpush1.msra.mxu0 0.0
    %989 = vmatprep.subr.mxu0 0.0
    %990 = vmatpush1.msra.mxu0 0.0
    %991 = vmatprep.subr.mxu0 0.0
    %992 = vmatpush1.msra.mxu0 0.0
    %993 = vmatprep.subr.mxu0 %v801
    %994 = vmatpush1.msra.mxu0 %v798
    %995 = vmatprep.subr.mxu0 0.0
    %996 = vmatpush2.msra.mxu0 0.0
    %997 = vmatprep.subr.mxu0 0.0
    %998 = vmatpush2.msra.mxu0 0.0
    %999 = vmatprep.subr.mxu0 0.0
    %1000 = vmatpush2.msra.mxu0 0.0
    %1001 = vmatprep.subr.mxu0 0.0
    %1002 = vmatpush2.msra.mxu0 0.0
    %1003 = vmatprep.subr.mxu0 0.0
    %1004 = vmatpush2.msra.mxu0 0.0
    %1005 = vmatprep.subr.mxu0 0.0
    %1006 = vmatpush2.msra.mxu0 0.0
    %1007 = vmatprep.subr.mxu0 0.0
    %1008 = vmatpush2.msra.mxu0 0.0
    %1009 = vmatprep.subr.mxu0 0.0
    %1010 = vmatpush2.msra.mxu0 0.0
    %1011 = vmatprep.subr.mxu0 0.0
    %1012 = vmatpush2.msra.mxu0 0.0
    %1013 = vmatprep.subr.mxu0 0.0
    %1014 = vmatpush2.msra.mxu0 0.0
    %1015 = vmatprep.subr.mxu0 0.0
    %1016 = vmatpush2.msra.mxu0 0.0
    %1017 = vmatprep.subr.mxu0 0.0
    %1018 = vmatpush2.msra.mxu0 0.0
    %1019 = vmatprep.subr.mxu0 0.0
    %1020 = vmatpush2.msra.mxu0 0.0
    %1021 = vmatprep.subr.mxu0 0.0
    %1022 = vmatpush2.msra.mxu0 0.0
    %1023 = vmatprep.subr.mxu0 0.0
    %1024 = vmatpush2.msra.mxu0 0.0
    %1025 = vmatprep.subr.mxu0 0.0
    %1026 = vmatpush2.msra.mxu0 0.0
    %1027 = vmatprep.mubr.f32.mxu0 0.0
    %1028 = vmatmul.mubr.f32.gmra.mxu0 %v779
    %v1029 = vpop.f32.mrf.mxu0
    %v1030 = vadd.f32 0.0, %v1029
    %v1031 = vpop.f32.mrf.mxu0
    %v1032 = vadd.f32 0.0, %v1031
    %1033 = vmatprep.mubr.f32.mxu0 0.0
    %1034 = vmatmul.mubr.f32.gmra.mxu0 %v782
    %v1035 = vpop.f32.mrf.mxu0
    %v1036 = vadd.f32 0.0, %v1035
    %v1037 = vpop.f32.mrf.mxu0
    %v1038 = vadd.f32 0.0, %v1037
    %1039 = vdwg.mxu0
    %1040 = vmatprep.subr.mxu0 0.0
    %1041 = vmatpush1.msra.mxu0 0.0
    %1042 = vmatprep.subr.mxu0 0.0
    %1043 = vmatpush1.msra.mxu0 0.0
    %1044 = vmatprep.subr.mxu0 0.0
    %1045 = vmatpush1.msra.mxu0 0.0
    %1046 = vmatprep.subr.mxu0 0.0
    %1047 = vmatpush1.msra.mxu0 0.0
    %1048 = vmatprep.subr.mxu0 0.0
    %1049 = vmatpush1.msra.mxu0 0.0
    %1050 = vmatprep.subr.mxu0 0.0
    %1051 = vmatpush1.msra.mxu0 0.0
    %1052 = vmatprep.subr.mxu0 0.0
    %1053 = vmatpush1.msra.mxu0 0.0
    %1054 = vmatprep.subr.mxu0 0.0
    %1055 = vmatpush1.msra.mxu0 0.0
    %1056 = vmatprep.subr.mxu0 0.0
    %1057 = vmatpush1.msra.mxu0 0.0
    %1058 = vmatprep.subr.mxu0 0.0
    %1059 = vmatpush1.msra.mxu0 0.0
    %1060 = vmatprep.subr.mxu0 0.0
    %1061 = vmatpush1.msra.mxu0 0.0
    %1062 = vmatprep.subr.mxu0 0.0
    %1063 = vmatpush1.msra.mxu0 0.0
    %1064 = vmatprep.subr.mxu0 0.0
    %1065 = vmatpush1.msra.mxu0 0.0
    %1066 = vmatprep.subr.mxu0 0.0
    %1067 = vmatpush1.msra.mxu0 0.0
    %1068 = vmatprep.subr.mxu0 0.0
    %1069 = vmatpush1.msra.mxu0 0.0
    %1070 = vmatprep.subr.mxu0 %v807
    %1071 = vmatpush1.msra.mxu0 %v804
    %1072 = vmatprep.subr.mxu0 0.0
    %1073 = vmatpush2.msra.mxu0 0.0
    %1074 = vmatprep.subr.mxu0 0.0
    %1075 = vmatpush2.msra.mxu0 0.0
    %1076 = vmatprep.subr.mxu0 0.0
    %1077 = vmatpush2.msra.mxu0 0.0
    %1078 = vmatprep.subr.mxu0 0.0
    %1079 = vmatpush2.msra.mxu0 0.0
    %1080 = vmatprep.subr.mxu0 0.0
    %1081 = vmatpush2.msra.mxu0 0.0
    %1082 = vmatprep.subr.mxu0 0.0
    %1083 = vmatpush2.msra.mxu0 0.0
    %1084 = vmatprep.subr.mxu0 0.0
    %1085 = vmatpush2.msra.mxu0 0.0
    %1086 = vmatprep.subr.mxu0 0.0
    %1087 = vmatpush2.msra.mxu0 0.0
    %1088 = vmatprep.subr.mxu0 0.0
    %1089 = vmatpush2.msra.mxu0 0.0
    %1090 = vmatprep.subr.mxu0 0.0
    %1091 = vmatpush2.msra.mxu0 0.0
    %1092 = vmatprep.subr.mxu0 0.0
    %1093 = vmatpush2.msra.mxu0 0.0
    %1094 = vmatprep.subr.mxu0 0.0
    %1095 = vmatpush2.msra.mxu0 0.0
    %1096 = vmatprep.subr.mxu0 0.0
    %1097 = vmatpush2.msra.mxu0 0.0
    %1098 = vmatprep.subr.mxu0 0.0
    %1099 = vmatpush2.msra.mxu0 0.0
    %1100 = vmatprep.subr.mxu0 0.0
    %1101 = vmatpush2.msra.mxu0 0.0
    %1102 = vmatprep.subr.mxu0 0.0
    %1103 = vmatpush2.msra.mxu0 0.0
    %1104 = vmatprep.mubr.f32.mxu0 0.0
    %1105 = vmatmul.mubr.f32.gmra.mxu0 %v779
    %v1106 = vpop.f32.mrf.mxu0
    %v1107 = vadd.f32 0.0, %v1106
    %v1108 = vpop.f32.mrf.mxu0
    %v1109 = vadd.f32 0.0, %v1108
    %1110 = vmatprep.mubr.f32.mxu0 0.0
    %1111 = vmatmul.mubr.f32.gmra.mxu0 %v782
    %v1112 = vpop.f32.mrf.mxu0
    %v1113 = vadd.f32 0.0, %v1112
    %v1114 = vpop.f32.mrf.mxu0
    %v1115 = vadd.f32 0.0, %v1114
    %1116 = vdwg.mxu0
    %v1118 = vsel %vm777, %v694, 0
    %v1121 = vsel %vm777, %v695, 0
    %v1124 = vsel %vm784, %v686, 0
    %v1127 = vsel %vm784, %v687, 0
    %v1130 = vsel %vm784, %v688, 0
    %v1133 = vsel %vm784, %v689, 0
    %v1136 = vsel %vm784, %v690, 0
    %v1139 = vsel %vm784, %v691, 0
    %v1142 = vsel %vm784, %v692, 0
    %v1145 = vsel %vm784, %v693, 0
    %1147 = vmatprep.subr.mxu0 0.0
    %1148 = vmatpush1.msra.mxu0 0.0
    %1149 = vmatprep.subr.mxu0 0.0
    %1150 = vmatpush1.msra.mxu0 0.0
    %1151 = vmatprep.subr.mxu0 0.0
    %1152 = vmatpush1.msra.mxu0 0.0
    %1153 = vmatprep.subr.mxu0 0.0
    %1154 = vmatpush1.msra.mxu0 0.0
    %1155 = vmatprep.subr.mxu0 0.0
    %1156 = vmatpush1.msra.mxu0 0.0
    %1157 = vmatprep.subr.mxu0 0.0
    %1158 = vmatpush1.msra.mxu0 0.0
    %1159 = vmatprep.subr.mxu0 0.0
    %1160 = vmatpush1.msra.mxu0 0.0
    %1161 = vmatprep.subr.mxu0 0.0
    %1162 = vmatpush1.msra.mxu0 0.0
    %1163 = vmatprep.subr.mxu0 0.0
    %1164 = vmatpush1.msra.mxu0 0.0
    %1165 = vmatprep.subr.mxu0 0.0
    %1166 = vmatpush1.msra.mxu0 0.0
    %1167 = vmatprep.subr.mxu0 0.0
    %1168 = vmatpush1.msra.mxu0 0.0
    %1169 = vmatprep.subr.mxu0 0.0
    %1170 = vmatpush1.msra.mxu0 0.0
    %1171 = vmatprep.subr.mxu0 0.0
    %1172 = vmatpush1.msra.mxu0 0.0
    %1173 = vmatprep.subr.mxu0 0.0
    %1174 = vmatpush1.msra.mxu0 0.0
    %1175 = vmatprep.subr.mxu0 0.0
    %1176 = vmatpush1.msra.mxu0 0.0
    %1177 = vmatprep.subr.mxu0 %v1127
    %1178 = vmatpush1.msra.mxu0 %v1124
    %1179 = vmatprep.subr.mxu0 0.0
    %1180 = vmatpush2.msra.mxu0 0.0
    %1181 = vmatprep.subr.mxu0 0.0
    %1182 = vmatpush2.msra.mxu0 0.0
    %1183 = vmatprep.subr.mxu0 0.0
    %1184 = vmatpush2.msra.mxu0 0.0
    %1185 = vmatprep.subr.mxu0 0.0
    %1186 = vmatpush2.msra.mxu0 0.0
    %1187 = vmatprep.subr.mxu0 0.0
    %1188 = vmatpush2.msra.mxu0 0.0
    %1189 = vmatprep.subr.mxu0 0.0
    %1190 = vmatpush2.msra.mxu0 0.0
    %1191 = vmatprep.subr.mxu0 0.0
    %1192 = vmatpush2.msra.mxu0 0.0
    %1193 = vmatprep.subr.mxu0 0.0
    %1194 = vmatpush2.msra.mxu0 0.0
    %1195 = vmatprep.subr.mxu0 0.0
    %1196 = vmatpush2.msra.mxu0 0.0
    %1197 = vmatprep.subr.mxu0 0.0
    %1198 = vmatpush2.msra.mxu0 0.0
    %1199 = vmatprep.subr.mxu0 0.0
    %1200 = vmatpush2.msra.mxu0 0.0
    %1201 = vmatprep.subr.mxu0 0.0
    %1202 = vmatpush2.msra.mxu0 0.0
    %1203 = vmatprep.subr.mxu0 0.0
    %1204 = vmatpush2.msra.mxu0 0.0
    %1205 = vmatprep.subr.mxu0 0.0
    %1206 = vmatpush2.msra.mxu0 0.0
    %1207 = vmatprep.subr.mxu0 0.0
    %1208 = vmatpush2.msra.mxu0 0.0
    %1209 = vmatprep.subr.mxu0 0.0
    %1210 = vmatpush2.msra.mxu0 0.0
    %1211 = vmatprep.mubr.f32.mxu0 0.0
    %1212 = vmatmul.mubr.f32.gmra.mxu0 %v1118
    %v1213 = vpop.f32.mrf.mxu0
    %v1214 = vadd.f32 %v876, %v1213
    %v1215 = vpop.f32.mrf.mxu0
    %v1216 = vadd.f32 %v878, %v1215
    %1217 = vmatprep.mubr.f32.mxu0 0.0
    %1218 = vmatmul.mubr.f32.gmra.mxu0 %v1121
    %v1219 = vpop.f32.mrf.mxu0
    %v1220 = vadd.f32 %v882, %v1219
    %v1221 = vpop.f32.mrf.mxu0
    %v1222 = vadd.f32 %v884, %v1221
    %1223 = vdwg.mxu0
    %1224 = vmatprep.subr.mxu0 0.0
    %1225 = vmatpush1.msra.mxu0 0.0
    %1226 = vmatprep.subr.mxu0 0.0
    %1227 = vmatpush1.msra.mxu0 0.0
    %1228 = vmatprep.subr.mxu0 0.0
    %1229 = vmatpush1.msra.mxu0 0.0
    %1230 = vmatprep.subr.mxu0 0.0
    %1231 = vmatpush1.msra.mxu0 0.0
    %1232 = vmatprep.subr.mxu0 0.0
    %1233 = vmatpush1.msra.mxu0 0.0
    %1234 = vmatprep.subr.mxu0 0.0
    %1235 = vmatpush1.msra.mxu0 0.0
    %1236 = vmatprep.subr.mxu0 0.0
    %1237 = vmatpush1.msra.mxu0 0.0
    %1238 = vmatprep.subr.mxu0 0.0
    %1239 = vmatpush1.msra.mxu0 0.0
    %1240 = vmatprep.subr.mxu0 0.0
    %1241 = vmatpush1.msra.mxu0 0.0
    %1242 = vmatprep.subr.mxu0 0.0
    %1243 = vmatpush1.msra.mxu0 0.0
    %1244 = vmatprep.subr.mxu0 0.0
    %1245 = vmatpush1.msra.mxu0 0.0
    %1246 = vmatprep.subr.mxu0 0.0
    %1247 = vmatpush1.msra.mxu0 0.0
    %1248 = vmatprep.subr.mxu0 0.0
    %1249 = vmatpush1.msra.mxu0 0.0
    %1250 = vmatprep.subr.mxu0 0.0
    %1251 = vmatpush1.msra.mxu0 0.0
    %1252 = vmatprep.subr.mxu0 0.0
    %1253 = vmatpush1.msra.mxu0 0.0
    %1254 = vmatprep.subr.mxu0 %v1133
    %1255 = vmatpush1.msra.mxu0 %v1130
    %1256 = vmatprep.subr.mxu0 0.0
    %1257 = vmatpush2.msra.mxu0 0.0
    %1258 = vmatprep.subr.mxu0 0.0
    %1259 = vmatpush2.msra.mxu0 0.0
    %1260 = vmatprep.subr.mxu0 0.0
    %1261 = vmatpush2.msra.mxu0 0.0
    %1262 = vmatprep.subr.mxu0 0.0
    %1263 = vmatpush2.msra.mxu0 0.0
    %1264 = vmatprep.subr.mxu0 0.0
    %1265 = vmatpush2.msra.mxu0 0.0
    %1266 = vmatprep.subr.mxu0 0.0
    %1267 = vmatpush2.msra.mxu0 0.0
    %1268 = vmatprep.subr.mxu0 0.0
    %1269 = vmatpush2.msra.mxu0 0.0
    %1270 = vmatprep.subr.mxu0 0.0
    %1271 = vmatpush2.msra.mxu0 0.0
    %1272 = vmatprep.subr.mxu0 0.0
    %1273 = vmatpush2.msra.mxu0 0.0
    %1274 = vmatprep.subr.mxu0 0.0
    %1275 = vmatpush2.msra.mxu0 0.0
    %1276 = vmatprep.subr.mxu0 0.0
    %1277 = vmatpush2.msra.mxu0 0.0
    %1278 = vmatprep.subr.mxu0 0.0
    %1279 = vmatpush2.msra.mxu0 0.0
    %1280 = vmatprep.subr.mxu0 0.0
    %1281 = vmatpush2.msra.mxu0 0.0
    %1282 = vmatprep.subr.mxu0 0.0
    %1283 = vmatpush2.msra.mxu0 0.0
    %1284 = vmatprep.subr.mxu0 0.0
    %1285 = vmatpush2.msra.mxu0 0.0
    %1286 = vmatprep.subr.mxu0 0.0
    %1287 = vmatpush2.msra.mxu0 0.0
    %1288 = vmatprep.mubr.f32.mxu0 0.0
    %1289 = vmatmul.mubr.f32.gmra.mxu0 %v1118
    %v1290 = vpop.f32.mrf.mxu0
    %v1291 = vadd.f32 %v953, %v1290
    %v1292 = vpop.f32.mrf.mxu0
    %v1293 = vadd.f32 %v955, %v1292
    %1294 = vmatprep.mubr.f32.mxu0 0.0
    %1295 = vmatmul.mubr.f32.gmra.mxu0 %v1121
    %v1296 = vpop.f32.mrf.mxu0
    %v1297 = vadd.f32 %v959, %v1296
    %v1298 = vpop.f32.mrf.mxu0
    %v1299 = vadd.f32 %v961, %v1298
    %1300 = vdwg.mxu0
    %1301 = vmatprep.subr.mxu0 0.0
    %1302 = vmatpush1.msra.mxu0 0.0
    %1303 = vmatprep.subr.mxu0 0.0
    %1304 = vmatpush1.msra.mxu0 0.0
    %1305 = vmatprep.subr.mxu0 0.0
    %1306 = vmatpush1.msra.mxu0 0.0
    %1307 = vmatprep.subr.mxu0 0.0
    %1308 = vmatpush1.msra.mxu0 0.0
    %1309 = vmatprep.subr.mxu0 0.0
    %1310 = vmatpush1.msra.mxu0 0.0
    %1311 = vmatprep.subr.mxu0 0.0
    %1312 = vmatpush1.msra.mxu0 0.0
    %1313 = vmatprep.subr.mxu0 0.0
    %1314 = vmatpush1.msra.mxu0 0.0
    %1315 = vmatprep.subr.mxu0 0.0
    %1316 = vmatpush1.msra.mxu0 0.0
    %1317 = vmatprep.subr.mxu0 0.0
    %1318 = vmatpush1.msra.mxu0 0.0
    %1319 = vmatprep.subr.mxu0 0.0
    %1320 = vmatpush1.msra.mxu0 0.0
    %1321 = vmatprep.subr.mxu0 0.0
    %1322 = vmatpush1.msra.mxu0 0.0
    %1323 = vmatprep.subr.mxu0 0.0
    %1324 = vmatpush1.msra.mxu0 0.0
    %1325 = vmatprep.subr.mxu0 0.0
    %1326 = vmatpush1.msra.mxu0 0.0
    %1327 = vmatprep.subr.mxu0 0.0
    %1328 = vmatpush1.msra.mxu0 0.0
    %1329 = vmatprep.subr.mxu0 0.0
    %1330 = vmatpush1.msra.mxu0 0.0
    %1331 = vmatprep.subr.mxu0 %v1139
    %1332 = vmatpush1.msra.mxu0 %v1136
    %1333 = vmatprep.subr.mxu0 0.0
    %1334 = vmatpush2.msra.mxu0 0.0
    %1335 = vmatprep.subr.mxu0 0.0
    %1336 = vmatpush2.msra.mxu0 0.0
    %1337 = vmatprep.subr.mxu0 0.0
    %1338 = vmatpush2.msra.mxu0 0.0
    %1339 = vmatprep.subr.mxu0 0.0
    %1340 = vmatpush2.msra.mxu0 0.0
    %1341 = vmatprep.subr.mxu0 0.0
    %1342 = vmatpush2.msra.mxu0 0.0
    %1343 = vmatprep.subr.mxu0 0.0
    %1344 = vmatpush2.msra.mxu0 0.0
    %1345 = vmatprep.subr.mxu0 0.0
    %1346 = vmatpush2.msra.mxu0 0.0
    %1347 = vmatprep.subr.mxu0 0.0
    %1348 = vmatpush2.msra.mxu0 0.0
    %1349 = vmatprep.subr.mxu0 0.0
    %1350 = vmatpush2.msra.mxu0 0.0
    %1351 = vmatprep.subr.mxu0 0.0
    %1352 = vmatpush2.msra.mxu0 0.0
    %1353 = vmatprep.subr.mxu0 0.0
    %1354 = vmatpush2.msra.mxu0 0.0
    %1355 = vmatprep.subr.mxu0 0.0
    %1356 = vmatpush2.msra.mxu0 0.0
    %1357 = vmatprep.subr.mxu0 0.0
    %1358 = vmatpush2.msra.mxu0 0.0
    %1359 = vmatprep.subr.mxu0 0.0
    %1360 = vmatpush2.msra.mxu0 0.0
    %1361 = vmatprep.subr.mxu0 0.0
    %1362 = vmatpush2.msra.mxu0 0.0
    %1363 = vmatprep.subr.mxu0 0.0
    %1364 = vmatpush2.msra.mxu0 0.0
    %1365 = vmatprep.mubr.f32.mxu0 0.0
    %1366 = vmatmul.mubr.f32.gmra.mxu0 %v1118
    %v1367 = vpop.f32.mrf.mxu0
    %v1368 = vadd.f32 %v1030, %v1367
    %v1369 = vpop.f32.mrf.mxu0
    %v1370 = vadd.f32 %v1032, %v1369
    %1371 = vmatprep.mubr.f32.mxu0 0.0
    %1372 = vmatmul.mubr.f32.gmra.mxu0 %v1121
    %v1373 = vpop.f32.mrf.mxu0
    %v1374 = vadd.f32 %v1036, %v1373
    %v1375 = vpop.f32.mrf.mxu0
    %v1376 = vadd.f32 %v1038, %v1375
    %1377 = vdwg.mxu0
    %1378 = vmatprep.subr.mxu0 0.0
    %1379 = vmatpush1.msra.mxu0 0.0
    %1380 = vmatprep.subr.mxu0 0.0
    %1381 = vmatpush1.msra.mxu0 0.0
    %1382 = vmatprep.subr.mxu0 0.0
    %1383 = vmatpush1.msra.mxu0 0.0
    %1384 = vmatprep.subr.mxu0 0.0
    %1385 = vmatpush1.msra.mxu0 0.0
    %1386 = vmatprep.subr.mxu0 0.0
    %1387 = vmatpush1.msra.mxu0 0.0
    %1388 = vmatprep.subr.mxu0 0.0
    %1389 = vmatpush1.msra.mxu0 0.0
    %1390 = vmatprep.subr.mxu0 0.0
    %1391 = vmatpush1.msra.mxu0 0.0
    %1392 = vmatprep.subr.mxu0 0.0
    %1393 = vmatpush1.msra.mxu0 0.0
    %1394 = vmatprep.subr.mxu0 0.0
    %1395 = vmatpush1.msra.mxu0 0.0
    %1396 = vmatprep.subr.mxu0 0.0
    %1397 = vmatpush1.msra.mxu0 0.0
    %1398 = vmatprep.subr.mxu0 0.0
    %1399 = vmatpush1.msra.mxu0 0.0
    %1400 = vmatprep.subr.mxu0 0.0
    %1401 = vmatpush1.msra.mxu0 0.0
    %1402 = vmatprep.subr.mxu0 0.0
    %1403 = vmatpush1.msra.mxu0 0.0
    %1404 = vmatprep.subr.mxu0 0.0
    %1405 = vmatpush1.msra.mxu0 0.0
    %1406 = vmatprep.subr.mxu0 0.0
    %1407 = vmatpush1.msra.mxu0 0.0
    %1408 = vmatprep.subr.mxu0 %v1145
    %1409 = vmatpush1.msra.mxu0 %v1142
    %1410 = vmatprep.subr.mxu0 0.0
    %1411 = vmatpush2.msra.mxu0 0.0
    %1412 = vmatprep.subr.mxu0 0.0
    %1413 = vmatpush2.msra.mxu0 0.0
    %1414 = vmatprep.subr.mxu0 0.0
    %1415 = vmatpush2.msra.mxu0 0.0
    %1416 = vmatprep.subr.mxu0 0.0
    %1417 = vmatpush2.msra.mxu0 0.0
    %1418 = vmatprep.subr.mxu0 0.0
    %1419 = vmatpush2.msra.mxu0 0.0
    %1420 = vmatprep.subr.mxu0 0.0
    %1421 = vmatpush2.msra.mxu0 0.0
    %1422 = vmatprep.subr.mxu0 0.0
    %1423 = vmatpush2.msra.mxu0 0.0
    %1424 = vmatprep.subr.mxu0 0.0
    %1425 = vmatpush2.msra.mxu0 0.0
    %1426 = vmatprep.subr.mxu0 0.0
    %1427 = vmatpush2.msra.mxu0 0.0
    %1428 = vmatprep.subr.mxu0 0.0
    %1429 = vmatpush2.msra.mxu0 0.0
    %1430 = vmatprep.subr.mxu0 0.0
    %1431 = vmatpush2.msra.mxu0 0.0
    %1432 = vmatprep.subr.mxu0 0.0
    %1433 = vmatpush2.msra.mxu0 0.0
    %1434 = vmatprep.subr.mxu0 0.0
    %1435 = vmatpush2.msra.mxu0 0.0
    %1436 = vmatprep.subr.mxu0 0.0
    %1437 = vmatpush2.msra.mxu0 0.0
    %1438 = vmatprep.subr.mxu0 0.0
    %1439 = vmatpush2.msra.mxu0 0.0
    %1440 = vmatprep.subr.mxu0 0.0
    %1441 = vmatpush2.msra.mxu0 0.0
    %1442 = vmatprep.mubr.f32.mxu0 0.0
    %1443 = vmatmul.mubr.f32.gmra.mxu0 %v1118
    %v1444 = vpop.f32.mrf.mxu0
    %v1445 = vadd.f32 %v1107, %v1444
    %v1446 = vpop.f32.mrf.mxu0
    %v1447 = vadd.f32 %v1109, %v1446
    %1448 = vmatprep.mubr.f32.mxu0 0.0
    %1449 = vmatmul.mubr.f32.gmra.mxu0 %v1121
    %v1450 = vpop.f32.mrf.mxu0
    %v1451 = vadd.f32 %v1113, %v1450
    %v1452 = vpop.f32.mrf.mxu0
    %v1453 = vadd.f32 %v1115, %v1452
    %1454 = vdwg.mxu0
    %1455 = vrot.lane.b32.xlu0 %v599, 31
    %v1456 = vpop.permute.xlu0 %1455
    %1457 = vrot.lane.b32.xlu0 %v607, 31
    %v1458 = vpop.permute.xlu0 %1457
    %1459 = vrot.lane.b32.xlu0 %v600, 31
    %v1460 = vpop.permute.xlu0 %1459
    %1461 = vrot.lane.b32.xlu0 %v608, 31
    %v1462 = vpop.permute.xlu0 %1461
    %1463 = vrot.lane.b32.xlu0 %v601, 31
    %v1464 = vpop.permute.xlu0 %1463
    %1465 = vrot.lane.b32.xlu0 %v609, 31
    %v1466 = vpop.permute.xlu0 %1465
    %1467 = vrot.lane.b32.xlu0 %v602, 31
    %v1468 = vpop.permute.xlu0 %1467
    %1469 = vrot.lane.b32.xlu0 %v610, 31
    %v1470 = vpop.permute.xlu0 %1469
    %vm1471 = vcmp.lt.s32.totalorder %v632, 31
    %v1472 = vsel %vm1471, %v1468, %v1470
    %v1473 = vsel %vm1471, %v1466, %v1468
    %v1474 = vsel %vm1471, %v1464, %v1466
    %v1475 = vsel %vm1471, %v1462, %v1464
    %v1476 = vsel %vm1471, %v1460, %v1462
    %v1477 = vsel %vm1471, %v1458, %v1460
    %v1478 = vsel %vm1471, %v1456, %v1458
    %v1479 = vsel %vm1471, %v1470, %v1456
    %s1480 = scalar_lea.vmem %s7, 2
    %v1481 = vld [vmem:[%s1480] ss:$8 sm:$0xf]
    %v1482 = vld [vmem:[%s1480] ss:$8 sm:$0xf0]
    %v1483 = vor.u32 %v1481, %v1482
    %v1485 = vlaneseq
    %v1486 = vshrl.u32 %v1485, 7
    %v1487 = vsub.s32 0, %v1486
    %v1488 = vrot.slane %v1483, %v1487
    %v1489 = vlaneseq
    %v1490 = vshrl.u32 %v1489, 7
    %v1491 = vsub.s32 1, %v1490
    %v1492 = vrot.slane %v1483, %v1491
    %v1493 = vlaneseq
    %v1494 = vshrl.u32 %v1493, 7
    %v1495 = vsub.s32 2, %v1494
    %v1496 = vrot.slane %v1483, %v1495
    %v1497 = vlaneseq
    %v1498 = vshrl.u32 %v1497, 7
    %v1499 = vsub.s32 3, %v1498
    %v1500 = vrot.slane %v1483, %v1499
    %v1501 = vlaneseq
    %v1502 = vshrl.u32 %v1501, 7
    %v1503 = vsub.s32 4, %v1502
    %v1504 = vrot.slane %v1483, %v1503
    %v1505 = vlaneseq
    %v1506 = vshrl.u32 %v1505, 7
    %v1507 = vsub.s32 5, %v1506
    %v1508 = vrot.slane %v1483, %v1507
    %v1509 = vlaneseq
    %v1510 = vshrl.u32 %v1509, 7
    %v1511 = vsub.s32 6, %v1510
    %v1512 = vrot.slane %v1483, %v1511
    %v1513 = vlaneseq
    %v1514 = vshrl.u32 %v1513, 7
    %v1515 = vsub.s32 7, %v1514
    %v1516 = vrot.slane %v1483, %v1515
    %v1525 = vmul.f32 %v1479, %v1488
    %v1526 = vmul.f32 %v1478, %v1492
    %v1527 = vmul.f32 %v1477, %v1496
    %v1528 = vmul.f32 %v1476, %v1500
    %v1529 = vmul.f32 %v1475, %v1504
    %v1530 = vmul.f32 %v1474, %v1508
    %v1531 = vmul.f32 %v1473, %v1512
    %v1532 = vmul.f32 %v1472, %v1516
    %s1533 = scalar_lea.vmem %s1, 32
    %v1534 = vld [vmem:[%s1533] sm:$0xff]
    %v1535 = vld [vmem:[%s1533 + $0x8] sm:$0x3]
    %v1537 = vsel %vm777, %v1534, 0
    %v1540 = vsel %vm777, %v1535, 0
    %v1543 = vsel %vm784, %v1525, 0
    %v1546 = vsel %vm784, %v1526, 0
    %v1549 = vsel %vm784, %v1527, 0
    %v1552 = vsel %vm784, %v1528, 0
    %v1555 = vsel %vm784, %v1529, 0
    %v1558 = vsel %vm784, %v1530, 0
    %v1561 = vsel %vm784, %v1531, 0
    %v1564 = vsel %vm784, %v1532, 0
    %1566 = vmatprep.subr.mxu0 0.0
    %1567 = vmatpush1.msra.mxu0 0.0
    %1568 = vmatprep.subr.mxu0 0.0
    %1569 = vmatpush1.msra.mxu0 0.0
    %1570 = vmatprep.subr.mxu0 0.0
    %1571 = vmatpush1.msra.mxu0 0.0
    %1572 = vmatprep.subr.mxu0 0.0
    %1573 = vmatpush1.msra.mxu0 0.0
    %1574 = vmatprep.subr.mxu0 0.0
    %1575 = vmatpush1.msra.mxu0 0.0
    %1576 = vmatprep.subr.mxu0 0.0
    %1577 = vmatpush1.msra.mxu0 0.0
    %1578 = vmatprep.subr.mxu0 0.0
    %1579 = vmatpush1.msra.mxu0 0.0
    %1580 = vmatprep.subr.mxu0 0.0
    %1581 = vmatpush1.msra.mxu0 0.0
    %1582 = vmatprep.subr.mxu0 0.0
    %1583 = vmatpush1.msra.mxu0 0.0
    %1584 = vmatprep.subr.mxu0 0.0
    %1585 = vmatpush1.msra.mxu0 0.0
    %1586 = vmatprep.subr.mxu0 0.0
    %1587 = vmatpush1.msra.mxu0 0.0
    %1588 = vmatprep.subr.mxu0 0.0
    %1589 = vmatpush1.msra.mxu0 0.0
    %1590 = vmatprep.subr.mxu0 0.0
    %1591 = vmatpush1.msra.mxu0 0.0
    %1592 = vmatprep.subr.mxu0 0.0
    %1593 = vmatpush1.msra.mxu0 0.0
    %1594 = vmatprep.subr.mxu0 0.0
    %1595 = vmatpush1.msra.mxu0 0.0
    %1596 = vmatprep.subr.mxu0 %v1546
    %1597 = vmatpush1.msra.mxu0 %v1543
    %1598 = vmatprep.subr.mxu0 0.0
    %1599 = vmatpush2.msra.mxu0 0.0
    %1600 = vmatprep.subr.mxu0 0.0
    %1601 = vmatpush2.msra.mxu0 0.0
    %1602 = vmatprep.subr.mxu0 0.0
    %1603 = vmatpush2.msra.mxu0 0.0
    %1604 = vmatprep.subr.mxu0 0.0
    %1605 = vmatpush2.msra.mxu0 0.0
    %1606 = vmatprep.subr.mxu0 0.0
    %1607 = vmatpush2.msra.mxu0 0.0
    %1608 = vmatprep.subr.mxu0 0.0
    %1609 = vmatpush2.msra.mxu0 0.0
    %1610 = vmatprep.subr.mxu0 0.0
    %1611 = vmatpush2.msra.mxu0 0.0
    %1612 = vmatprep.subr.mxu0 0.0
    %1613 = vmatpush2.msra.mxu0 0.0
    %1614 = vmatprep.subr.mxu0 0.0
    %1615 = vmatpush2.msra.mxu0 0.0
    %1616 = vmatprep.subr.mxu0 0.0
    %1617 = vmatpush2.msra.mxu0 0.0
    %1618 = vmatprep.subr.mxu0 0.0
    %1619 = vmatpush2.msra.mxu0 0.0
    %1620 = vmatprep.subr.mxu0 0.0
    %1621 = vmatpush2.msra.mxu0 0.0
    %1622 = vmatprep.subr.mxu0 0.0
    %1623 = vmatpush2.msra.mxu0 0.0
    %1624 = vmatprep.subr.mxu0 0.0
    %1625 = vmatpush2.msra.mxu0 0.0
    %1626 = vmatprep.subr.mxu0 0.0
    %1627 = vmatpush2.msra.mxu0 0.0
    %1628 = vmatprep.subr.mxu0 0.0
    %1629 = vmatpush2.msra.mxu0 0.0
    %1630 = vmatprep.mubr.f32.mxu0 0.0
    %1631 = vmatmul.mubr.f32.gmra.mxu0 %v1537
    %v1632 = vpop.f32.mrf.mxu0
    %v1633 = vadd.f32 0.0, %v1632
    %v1634 = vpop.f32.mrf.mxu0
    %v1635 = vadd.f32 0.0, %v1634
    %1636 = vmatprep.mubr.f32.mxu0 0.0
    %1637 = vmatmul.mubr.f32.gmra.mxu0 %v1540
    %v1638 = vpop.f32.mrf.mxu0
    %v1639 = vadd.f32 0.0, %v1638
    %v1640 = vpop.f32.mrf.mxu0
    %v1641 = vadd.f32 0.0, %v1640
    %1642 = vdwg.mxu0
    %1643 = vmatprep.subr.mxu0 0.0
    %1644 = vmatpush1.msra.mxu0 0.0
    %1645 = vmatprep.subr.mxu0 0.0
    %1646 = vmatpush1.msra.mxu0 0.0
    %1647 = vmatprep.subr.mxu0 0.0
    %1648 = vmatpush1.msra.mxu0 0.0
    %1649 = vmatprep.subr.mxu0 0.0
    %1650 = vmatpush1.msra.mxu0 0.0
    %1651 = vmatprep.subr.mxu0 0.0
    %1652 = vmatpush1.msra.mxu0 0.0
    %1653 = vmatprep.subr.mxu0 0.0
    %1654 = vmatpush1.msra.mxu0 0.0
    %1655 = vmatprep.subr.mxu0 0.0
    %1656 = vmatpush1.msra.mxu0 0.0
    %1657 = vmatprep.subr.mxu0 0.0
    %1658 = vmatpush1.msra.mxu0 0.0
    %1659 = vmatprep.subr.mxu0 0.0
    %1660 = vmatpush1.msra.mxu0 0.0
    %1661 = vmatprep.subr.mxu0 0.0
    %1662 = vmatpush1.msra.mxu0 0.0
    %1663 = vmatprep.subr.mxu0 0.0
    %1664 = vmatpush1.msra.mxu0 0.0
    %1665 = vmatprep.subr.mxu0 0.0
    %1666 = vmatpush1.msra.mxu0 0.0
    %1667 = vmatprep.subr.mxu0 0.0
    %1668 = vmatpush1.msra.mxu0 0.0
    %1669 = vmatprep.subr.mxu0 0.0
    %1670 = vmatpush1.msra.mxu0 0.0
    %1671 = vmatprep.subr.mxu0 0.0
    %1672 = vmatpush1.msra.mxu0 0.0
    %1673 = vmatprep.subr.mxu0 %v1552
    %1674 = vmatpush1.msra.mxu0 %v1549
    %1675 = vmatprep.subr.mxu0 0.0
    %1676 = vmatpush2.msra.mxu0 0.0
    %1677 = vmatprep.subr.mxu0 0.0
    %1678 = vmatpush2.msra.mxu0 0.0
    %1679 = vmatprep.subr.mxu0 0.0
    %1680 = vmatpush2.msra.mxu0 0.0
    %1681 = vmatprep.subr.mxu0 0.0
    %1682 = vmatpush2.msra.mxu0 0.0
    %1683 = vmatprep.subr.mxu0 0.0
    %1684 = vmatpush2.msra.mxu0 0.0
    %1685 = vmatprep.subr.mxu0 0.0
    %1686 = vmatpush2.msra.mxu0 0.0
    %1687 = vmatprep.subr.mxu0 0.0
    %1688 = vmatpush2.msra.mxu0 0.0
    %1689 = vmatprep.subr.mxu0 0.0
    %1690 = vmatpush2.msra.mxu0 0.0
    %1691 = vmatprep.subr.mxu0 0.0
    %1692 = vmatpush2.msra.mxu0 0.0
    %1693 = vmatprep.subr.mxu0 0.0
    %1694 = vmatpush2.msra.mxu0 0.0
    %1695 = vmatprep.subr.mxu0 0.0
    %1696 = vmatpush2.msra.mxu0 0.0
    %1697 = vmatprep.subr.mxu0 0.0
    %1698 = vmatpush2.msra.mxu0 0.0
    %1699 = vmatprep.subr.mxu0 0.0
    %1700 = vmatpush2.msra.mxu0 0.0
    %1701 = vmatprep.subr.mxu0 0.0
    %1702 = vmatpush2.msra.mxu0 0.0
    %1703 = vmatprep.subr.mxu0 0.0
    %1704 = vmatpush2.msra.mxu0 0.0
    %1705 = vmatprep.subr.mxu0 0.0
    %1706 = vmatpush2.msra.mxu0 0.0
    %1707 = vmatprep.mubr.f32.mxu0 0.0
    %1708 = vmatmul.mubr.f32.gmra.mxu0 %v1537
    %v1709 = vpop.f32.mrf.mxu0
    %v1710 = vadd.f32 0.0, %v1709
    %v1711 = vpop.f32.mrf.mxu0
    %v1712 = vadd.f32 0.0, %v1711
    %1713 = vmatprep.mubr.f32.mxu0 0.0
    %1714 = vmatmul.mubr.f32.gmra.mxu0 %v1540
    %v1715 = vpop.f32.mrf.mxu0
    %v1716 = vadd.f32 0.0, %v1715
    %v1717 = vpop.f32.mrf.mxu0
    %v1718 = vadd.f32 0.0, %v1717
    %1719 = vdwg.mxu0
    %1720 = vmatprep.subr.mxu0 0.0
    %1721 = vmatpush1.msra.mxu0 0.0
    %1722 = vmatprep.subr.mxu0 0.0
    %1723 = vmatpush1.msra.mxu0 0.0
    %1724 = vmatprep.subr.mxu0 0.0
    %1725 = vmatpush1.msra.mxu0 0.0
    %1726 = vmatprep.subr.mxu0 0.0
    %1727 = vmatpush1.msra.mxu0 0.0
    %1728 = vmatprep.subr.mxu0 0.0
    %1729 = vmatpush1.msra.mxu0 0.0
    %1730 = vmatprep.subr.mxu0 0.0
    %1731 = vmatpush1.msra.mxu0 0.0
    %1732 = vmatprep.subr.mxu0 0.0
    %1733 = vmatpush1.msra.mxu0 0.0
    %1734 = vmatprep.subr.mxu0 0.0
    %1735 = vmatpush1.msra.mxu0 0.0
    %1736 = vmatprep.subr.mxu0 0.0
    %1737 = vmatpush1.msra.mxu0 0.0
    %1738 = vmatprep.subr.mxu0 0.0
    %1739 = vmatpush1.msra.mxu0 0.0
    %1740 = vmatprep.subr.mxu0 0.0
    %1741 = vmatpush1.msra.mxu0 0.0
    %1742 = vmatprep.subr.mxu0 0.0
    %1743 = vmatpush1.msra.mxu0 0.0
    %1744 = vmatprep.subr.mxu0 0.0
    %1745 = vmatpush1.msra.mxu0 0.0
    %1746 = vmatprep.subr.mxu0 0.0
    %1747 = vmatpush1.msra.mxu0 0.0
    %1748 = vmatprep.subr.mxu0 0.0
    %1749 = vmatpush1.msra.mxu0 0.0
    %1750 = vmatprep.subr.mxu0 %v1558
    %1751 = vmatpush1.msra.mxu0 %v1555
    %1752 = vmatprep.subr.mxu0 0.0
    %1753 = vmatpush2.msra.mxu0 0.0
    %1754 = vmatprep.subr.mxu0 0.0
    %1755 = vmatpush2.msra.mxu0 0.0
    %1756 = vmatprep.subr.mxu0 0.0
    %1757 = vmatpush2.msra.mxu0 0.0
    %1758 = vmatprep.subr.mxu0 0.0
    %1759 = vmatpush2.msra.mxu0 0.0
    %1760 = vmatprep.subr.mxu0 0.0
    %1761 = vmatpush2.msra.mxu0 0.0
    %1762 = vmatprep.subr.mxu0 0.0
    %1763 = vmatpush2.msra.mxu0 0.0
    %1764 = vmatprep.subr.mxu0 0.0
    %1765 = vmatpush2.msra.mxu0 0.0
    %1766 = vmatprep.subr.mxu0 0.0
    %1767 = vmatpush2.msra.mxu0 0.0
    %1768 = vmatprep.subr.mxu0 0.0
    %1769 = vmatpush2.msra.mxu0 0.0
    %1770 = vmatprep.subr.mxu0 0.0
    %1771 = vmatpush2.msra.mxu0 0.0
    %1772 = vmatprep.subr.mxu0 0.0
    %1773 = vmatpush2.msra.mxu0 0.0
    %1774 = vmatprep.subr.mxu0 0.0
    %1775 = vmatpush2.msra.mxu0 0.0
    %1776 = vmatprep.subr.mxu0 0.0
    %1777 = vmatpush2.msra.mxu0 0.0
    %1778 = vmatprep.subr.mxu0 0.0
    %1779 = vmatpush2.msra.mxu0 0.0
    %1780 = vmatprep.subr.mxu0 0.0
    %1781 = vmatpush2.msra.mxu0 0.0
    %1782 = vmatprep.subr.mxu0 0.0
    %1783 = vmatpush2.msra.mxu0 0.0
    %1784 = vmatprep.mubr.f32.mxu0 0.0
    %1785 = vmatmul.mubr.f32.gmra.mxu0 %v1537
    %v1786 = vpop.f32.mrf.mxu0
    %v1787 = vadd.f32 0.0, %v1786
    %v1788 = vpop.f32.mrf.mxu0
    %v1789 = vadd.f32 0.0, %v1788
    %1790 = vmatprep.mubr.f32.mxu0 0.0
    %1791 = vmatmul.mubr.f32.gmra.mxu0 %v1540
    %v1792 = vpop.f32.mrf.mxu0
    %v1793 = vadd.f32 0.0, %v1792
    %v1794 = vpop.f32.mrf.mxu0
    %v1795 = vadd.f32 0.0, %v1794
    %1796 = vdwg.mxu0
    %1797 = vmatprep.subr.mxu0 0.0
    %1798 = vmatpush1.msra.mxu0 0.0
    %1799 = vmatprep.subr.mxu0 0.0
    %1800 = vmatpush1.msra.mxu0 0.0
    %1801 = vmatprep.subr.mxu0 0.0
    %1802 = vmatpush1.msra.mxu0 0.0
    %1803 = vmatprep.subr.mxu0 0.0
    %1804 = vmatpush1.msra.mxu0 0.0
    %1805 = vmatprep.subr.mxu0 0.0
    %1806 = vmatpush1.msra.mxu0 0.0
    %1807 = vmatprep.subr.mxu0 0.0
    %1808 = vmatpush1.msra.mxu0 0.0
    %1809 = vmatprep.subr.mxu0 0.0
    %1810 = vmatpush1.msra.mxu0 0.0
    %1811 = vmatprep.subr.mxu0 0.0
    %1812 = vmatpush1.msra.mxu0 0.0
    %1813 = vmatprep.subr.mxu0 0.0
    %1814 = vmatpush1.msra.mxu0 0.0
    %1815 = vmatprep.subr.mxu0 0.0
    %1816 = vmatpush1.msra.mxu0 0.0
    %1817 = vmatprep.subr.mxu0 0.0
    %1818 = vmatpush1.msra.mxu0 0.0
    %1819 = vmatprep.subr.mxu0 0.0
    %1820 = vmatpush1.msra.mxu0 0.0
    %1821 = vmatprep.subr.mxu0 0.0
    %1822 = vmatpush1.msra.mxu0 0.0
    %1823 = vmatprep.subr.mxu0 0.0
    %1824 = vmatpush1.msra.mxu0 0.0
    %1825 = vmatprep.subr.mxu0 0.0
    %1826 = vmatpush1.msra.mxu0 0.0
    %1827 = vmatprep.subr.mxu0 %v1564
    %1828 = vmatpush1.msra.mxu0 %v1561
    %1829 = vmatprep.subr.mxu0 0.0
    %1830 = vmatpush2.msra.mxu0 0.0
    %1831 = vmatprep.subr.mxu0 0.0
    %1832 = vmatpush2.msra.mxu0 0.0
    %1833 = vmatprep.subr.mxu0 0.0
    %1834 = vmatpush2.msra.mxu0 0.0
    %1835 = vmatprep.subr.mxu0 0.0
    %1836 = vmatpush2.msra.mxu0 0.0
    %1837 = vmatprep.subr.mxu0 0.0
    %1838 = vmatpush2.msra.mxu0 0.0
    %1839 = vmatprep.subr.mxu0 0.0
    %1840 = vmatpush2.msra.mxu0 0.0
    %1841 = vmatprep.subr.mxu0 0.0
    %1842 = vmatpush2.msra.mxu0 0.0
    %1843 = vmatprep.subr.mxu0 0.0
    %1844 = vmatpush2.msra.mxu0 0.0
    %1845 = vmatprep.subr.mxu0 0.0
    %1846 = vmatpush2.msra.mxu0 0.0
    %1847 = vmatprep.subr.mxu0 0.0
    %1848 = vmatpush2.msra.mxu0 0.0
    %1849 = vmatprep.subr.mxu0 0.0
    %1850 = vmatpush2.msra.mxu0 0.0
    %1851 = vmatprep.subr.mxu0 0.0
    %1852 = vmatpush2.msra.mxu0 0.0
    %1853 = vmatprep.subr.mxu0 0.0
    %1854 = vmatpush2.msra.mxu0 0.0
    %1855 = vmatprep.subr.mxu0 0.0
    %1856 = vmatpush2.msra.mxu0 0.0
    %1857 = vmatprep.subr.mxu0 0.0
    %1858 = vmatpush2.msra.mxu0 0.0
    %1859 = vmatprep.subr.mxu0 0.0
    %1860 = vmatpush2.msra.mxu0 0.0
    %1861 = vmatprep.mubr.f32.mxu0 0.0
    %1862 = vmatmul.mubr.f32.gmra.mxu0 %v1537
    %v1863 = vpop.f32.mrf.mxu0
    %v1864 = vadd.f32 0.0, %v1863
    %v1865 = vpop.f32.mrf.mxu0
    %v1866 = vadd.f32 0.0, %v1865
    %1867 = vmatprep.mubr.f32.mxu0 0.0
    %1868 = vmatmul.mubr.f32.gmra.mxu0 %v1540
    %v1869 = vpop.f32.mrf.mxu0
    %v1870 = vadd.f32 0.0, %v1869
    %v1871 = vpop.f32.mrf.mxu0
    %v1872 = vadd.f32 0.0, %v1871
    %1873 = vdwg.mxu0
    %v1874 = vadd.f32 %v1214, %v1633
    %v1875 = vadd.f32 %v1216, %v1635
    %v1876 = vadd.f32 %v1291, %v1710
    %v1877 = vadd.f32 %v1293, %v1712
    %v1878 = vadd.f32 %v1368, %v1787
    %v1879 = vadd.f32 %v1370, %v1789
    %v1880 = vadd.f32 %v1445, %v1864
    %v1881 = vadd.f32 %v1447, %v1866
    %v1882 = vadd.f32 %v1220, %v1639
    %v1883 = vadd.f32 %v1222, %v1641
    %v1884 = vadd.f32 %v1297, %v1716
    %v1885 = vadd.f32 %v1299, %v1718
    %v1886 = vadd.f32 %v1374, %v1793
    %v1887 = vadd.f32 %v1376, %v1795
    %v1888 = vadd.f32 %v1451, %v1870
    %v1889 = vadd.f32 %v1453, %v1872
    %1890 = vrot.lane.b32.xlu0 %v599, 1
    %v1891 = vpop.permute.xlu0 %1890
    %1892 = vrot.lane.b32.xlu0 %v607, 1
    %v1893 = vpop.permute.xlu0 %1892
    %1894 = vrot.lane.b32.xlu0 %v600, 1
    %v1895 = vpop.permute.xlu0 %1894
    %1896 = vrot.lane.b32.xlu0 %v608, 1
    %v1897 = vpop.permute.xlu0 %1896
    %1898 = vrot.lane.b32.xlu0 %v601, 1
    %v1899 = vpop.permute.xlu0 %1898
    %1900 = vrot.lane.b32.xlu0 %v609, 1
    %v1901 = vpop.permute.xlu0 %1900
    %1902 = vrot.lane.b32.xlu0 %v602, 1
    %v1903 = vpop.permute.xlu0 %1902
    %1904 = vrot.lane.b32.xlu0 %v610, 1
    %v1905 = vpop.permute.xlu0 %1904
    %vm1906 = vcmp.lt.s32.totalorder %v632, 1
    %v1907 = vsel %vm1906, %v1903, %v1905
    %v1908 = vsel %vm1906, %v1901, %v1903
    %v1909 = vsel %vm1906, %v1899, %v1901
    %v1910 = vsel %vm1906, %v1897, %v1899
    %v1911 = vsel %vm1906, %v1895, %v1897
    %v1912 = vsel %vm1906, %v1893, %v1895
    %v1913 = vsel %vm1906, %v1891, %v1893
    %v1914 = vsel %vm1906, %v1905, %v1891
    %s1915 = scalar_lea.vmem %s7, 3
    %v1916 = vld [vmem:[%s1915] ss:$8 sm:$0xf]
    %v1917 = vld [vmem:[%s1915] ss:$8 sm:$0xf0]
    %v1918 = vor.u32 %v1916, %v1917
    %v1920 = vlaneseq
    %v1921 = vshrl.u32 %v1920, 7
    %v1922 = vsub.s32 0, %v1921
    %v1923 = vrot.slane %v1918, %v1922
    %v1924 = vlaneseq
    %v1925 = vshrl.u32 %v1924, 7
    %v1926 = vsub.s32 1, %v1925
    %v1927 = vrot.slane %v1918, %v1926
    %v1928 = vlaneseq
    %v1929 = vshrl.u32 %v1928, 7
    %v1930 = vsub.s32 2, %v1929
    %v1931 = vrot.slane %v1918, %v1930
    %v1932 = vlaneseq
    %v1933 = vshrl.u32 %v1932, 7
    %v1934 = vsub.s32 3, %v1933
    %v1935 = vrot.slane %v1918, %v1934
    %v1936 = vlaneseq
    %v1937 = vshrl.u32 %v1936, 7
    %v1938 = vsub.s32 4, %v1937
    %v1939 = vrot.slane %v1918, %v1938
    %v1940 = vlaneseq
    %v1941 = vshrl.u32 %v1940, 7
    %v1942 = vsub.s32 5, %v1941
    %v1943 = vrot.slane %v1918, %v1942
    %v1944 = vlaneseq
    %v1945 = vshrl.u32 %v1944, 7
    %v1946 = vsub.s32 6, %v1945
    %v1947 = vrot.slane %v1918, %v1946
    %v1948 = vlaneseq
    %v1949 = vshrl.u32 %v1948, 7
    %v1950 = vsub.s32 7, %v1949
    %v1951 = vrot.slane %v1918, %v1950
    %v1960 = vmul.f32 %v1914, %v1923
    %v1961 = vmul.f32 %v1913, %v1927
    %v1962 = vmul.f32 %v1912, %v1931
    %v1963 = vmul.f32 %v1911, %v1935
    %v1964 = vmul.f32 %v1910, %v1939
    %v1965 = vmul.f32 %v1909, %v1943
    %v1966 = vmul.f32 %v1908, %v1947
    %v1967 = vmul.f32 %v1907, %v1951
    %s1968 = scalar_lea.vmem %s1, 48
    %v1969 = vld [vmem:[%s1968] sm:$0xff]
    %v1970 = vld [vmem:[%s1968 + $0x8] sm:$0x3]
    %v1972 = vsel %vm777, %v1969, 0
    %v1975 = vsel %vm777, %v1970, 0
    %v1978 = vsel %vm784, %v1960, 0
    %v1981 = vsel %vm784, %v1961, 0
    %v1984 = vsel %vm784, %v1962, 0
    %v1987 = vsel %vm784, %v1963, 0
    %v1990 = vsel %vm784, %v1964, 0
    %v1993 = vsel %vm784, %v1965, 0
    %v1996 = vsel %vm784, %v1966, 0
    %v1999 = vsel %vm784, %v1967, 0
    %2001 = vmatprep.subr.mxu0 0.0
    %2002 = vmatpush1.msra.mxu0 0.0
    %2003 = vmatprep.subr.mxu0 0.0
    %2004 = vmatpush1.msra.mxu0 0.0
    %2005 = vmatprep.subr.mxu0 0.0
    %2006 = vmatpush1.msra.mxu0 0.0
    %2007 = vmatprep.subr.mxu0 0.0
    %2008 = vmatpush1.msra.mxu0 0.0
    %2009 = vmatprep.subr.mxu0 0.0
    %2010 = vmatpush1.msra.mxu0 0.0
    %2011 = vmatprep.subr.mxu0 0.0
    %2012 = vmatpush1.msra.mxu0 0.0
    %2013 = vmatprep.subr.mxu0 0.0
    %2014 = vmatpush1.msra.mxu0 0.0
    %2015 = vmatprep.subr.mxu0 0.0
    %2016 = vmatpush1.msra.mxu0 0.0
    %2017 = vmatprep.subr.mxu0 0.0
    %2018 = vmatpush1.msra.mxu0 0.0
    %2019 = vmatprep.subr.mxu0 0.0
    %2020 = vmatpush1.msra.mxu0 0.0
    %2021 = vmatprep.subr.mxu0 0.0
    %2022 = vmatpush1.msra.mxu0 0.0
    %2023 = vmatprep.subr.mxu0 0.0
    %2024 = vmatpush1.msra.mxu0 0.0
    %2025 = vmatprep.subr.mxu0 0.0
    %2026 = vmatpush1.msra.mxu0 0.0
    %2027 = vmatprep.subr.mxu0 0.0
    %2028 = vmatpush1.msra.mxu0 0.0
    %2029 = vmatprep.subr.mxu0 0.0
    %2030 = vmatpush1.msra.mxu0 0.0
    %2031 = vmatprep.subr.mxu0 %v1981
    %2032 = vmatpush1.msra.mxu0 %v1978
    %2033 = vmatprep.subr.mxu0 0.0
    %2034 = vmatpush2.msra.mxu0 0.0
    %2035 = vmatprep.subr.mxu0 0.0
    %2036 = vmatpush2.msra.mxu0 0.0
    %2037 = vmatprep.subr.mxu0 0.0
    %2038 = vmatpush2.msra.mxu0 0.0
    %2039 = vmatprep.subr.mxu0 0.0
    %2040 = vmatpush2.msra.mxu0 0.0
    %2041 = vmatprep.subr.mxu0 0.0
    %2042 = vmatpush2.msra.mxu0 0.0
    %2043 = vmatprep.subr.mxu0 0.0
    %2044 = vmatpush2.msra.mxu0 0.0
    %2045 = vmatprep.subr.mxu0 0.0
    %2046 = vmatpush2.msra.mxu0 0.0
    %2047 = vmatprep.subr.mxu0 0.0
    %2048 = vmatpush2.msra.mxu0 0.0
    %2049 = vmatprep.subr.mxu0 0.0
    %2050 = vmatpush2.msra.mxu0 0.0
    %2051 = vmatprep.subr.mxu0 0.0
    %2052 = vmatpush2.msra.mxu0 0.0
    %2053 = vmatprep.subr.mxu0 0.0
    %2054 = vmatpush2.msra.mxu0 0.0
    %2055 = vmatprep.subr.mxu0 0.0
    %2056 = vmatpush2.msra.mxu0 0.0
    %2057 = vmatprep.subr.mxu0 0.0
    %2058 = vmatpush2.msra.mxu0 0.0
    %2059 = vmatprep.subr.mxu0 0.0
    %2060 = vmatpush2.msra.mxu0 0.0
    %2061 = vmatprep.subr.mxu0 0.0
    %2062 = vmatpush2.msra.mxu0 0.0
    %2063 = vmatprep.subr.mxu0 0.0
    %2064 = vmatpush2.msra.mxu0 0.0
    %2065 = vmatprep.mubr.f32.mxu0 0.0
    %2066 = vmatmul.mubr.f32.gmra.mxu0 %v1972
    %v2067 = vpop.f32.mrf.mxu0
    %v2068 = vadd.f32 0.0, %v2067
    %v2069 = vpop.f32.mrf.mxu0
    %v2070 = vadd.f32 0.0, %v2069
    %2071 = vmatprep.mubr.f32.mxu0 0.0
    %2072 = vmatmul.mubr.f32.gmra.mxu0 %v1975
    %v2073 = vpop.f32.mrf.mxu0
    %v2074 = vadd.f32 0.0, %v2073
    %v2075 = vpop.f32.mrf.mxu0
    %v2076 = vadd.f32 0.0, %v2075
    %2077 = vdwg.mxu0
    %2078 = vmatprep.subr.mxu0 0.0
    %2079 = vmatpush1.msra.mxu0 0.0
    %2080 = vmatprep.subr.mxu0 0.0
    %2081 = vmatpush1.msra.mxu0 0.0
    %2082 = vmatprep.subr.mxu0 0.0
    %2083 = vmatpush1.msra.mxu0 0.0
    %2084 = vmatprep.subr.mxu0 0.0
    %2085 = vmatpush1.msra.mxu0 0.0
    %2086 = vmatprep.subr.mxu0 0.0
    %2087 = vmatpush1.msra.mxu0 0.0
    %2088 = vmatprep.subr.mxu0 0.0
    %2089 = vmatpush1.msra.mxu0 0.0
    %2090 = vmatprep.subr.mxu0 0.0
    %2091 = vmatpush1.msra.mxu0 0.0
    %2092 = vmatprep.subr.mxu0 0.0
    %2093 = vmatpush1.msra.mxu0 0.0
    %2094 = vmatprep.subr.mxu0 0.0
    %2095 = vmatpush1.msra.mxu0 0.0
    %2096 = vmatprep.subr.mxu0 0.0
    %2097 = vmatpush1.msra.mxu0 0.0
    %2098 = vmatprep.subr.mxu0 0.0
    %2099 = vmatpush1.msra.mxu0 0.0
    %2100 = vmatprep.subr.mxu0 0.0
    %2101 = vmatpush1.msra.mxu0 0.0
    %2102 = vmatprep.subr.mxu0 0.0
    %2103 = vmatpush1.msra.mxu0 0.0
    %2104 = vmatprep.subr.mxu0 0.0
    %2105 = vmatpush1.msra.mxu0 0.0
    %2106 = vmatprep.subr.mxu0 0.0
    %2107 = vmatpush1.msra.mxu0 0.0
    %2108 = vmatprep.subr.mxu0 %v1987
    %2109 = vmatpush1.msra.mxu0 %v1984
    %2110 = vmatprep.subr.mxu0 0.0
    %2111 = vmatpush2.msra.mxu0 0.0
    %2112 = vmatprep.subr.mxu0 0.0
    %2113 = vmatpush2.msra.mxu0 0.0
    %2114 = vmatprep.subr.mxu0 0.0
    %2115 = vmatpush2.msra.mxu0 0.0
    %2116 = vmatprep.subr.mxu0 0.0
    %2117 = vmatpush2.msra.mxu0 0.0
    %2118 = vmatprep.subr.mxu0 0.0
    %2119 = vmatpush2.msra.mxu0 0.0
    %2120 = vmatprep.subr.mxu0 0.0
    %2121 = vmatpush2.msra.mxu0 0.0
    %2122 = vmatprep.subr.mxu0 0.0
    %2123 = vmatpush2.msra.mxu0 0.0
    %2124 = vmatprep.subr.mxu0 0.0
    %2125 = vmatpush2.msra.mxu0 0.0
    %2126 = vmatprep.subr.mxu0 0.0
    %2127 = vmatpush2.msra.mxu0 0.0
    %2128 = vmatprep.subr.mxu0 0.0
    %2129 = vmatpush2.msra.mxu0 0.0
    %2130 = vmatprep.subr.mxu0 0.0
    %2131 = vmatpush2.msra.mxu0 0.0
    %2132 = vmatprep.subr.mxu0 0.0
    %2133 = vmatpush2.msra.mxu0 0.0
    %2134 = vmatprep.subr.mxu0 0.0
    %2135 = vmatpush2.msra.mxu0 0.0
    %2136 = vmatprep.subr.mxu0 0.0
    %2137 = vmatpush2.msra.mxu0 0.0
    %2138 = vmatprep.subr.mxu0 0.0
    %2139 = vmatpush2.msra.mxu0 0.0
    %2140 = vmatprep.subr.mxu0 0.0
    %2141 = vmatpush2.msra.mxu0 0.0
    %2142 = vmatprep.mubr.f32.mxu0 0.0
    %2143 = vmatmul.mubr.f32.gmra.mxu0 %v1972
    %v2144 = vpop.f32.mrf.mxu0
    %v2145 = vadd.f32 0.0, %v2144
    %v2146 = vpop.f32.mrf.mxu0
    %v2147 = vadd.f32 0.0, %v2146
    %2148 = vmatprep.mubr.f32.mxu0 0.0
    %2149 = vmatmul.mubr.f32.gmra.mxu0 %v1975
    %v2150 = vpop.f32.mrf.mxu0
    %v2151 = vadd.f32 0.0, %v2150
    %v2152 = vpop.f32.mrf.mxu0
    %v2153 = vadd.f32 0.0, %v2152
    %2154 = vdwg.mxu0
    %2155 = vmatprep.subr.mxu0 0.0
    %2156 = vmatpush1.msra.mxu0 0.0
    %2157 = vmatprep.subr.mxu0 0.0
    %2158 = vmatpush1.msra.mxu0 0.0
    %2159 = vmatprep.subr.mxu0 0.0
    %2160 = vmatpush1.msra.mxu0 0.0
    %2161 = vmatprep.subr.mxu0 0.0
    %2162 = vmatpush1.msra.mxu0 0.0
    %2163 = vmatprep.subr.mxu0 0.0
    %2164 = vmatpush1.msra.mxu0 0.0
    %2165 = vmatprep.subr.mxu0 0.0
    %2166 = vmatpush1.msra.mxu0 0.0
    %2167 = vmatprep.subr.mxu0 0.0
    %2168 = vmatpush1.msra.mxu0 0.0
    %2169 = vmatprep.subr.mxu0 0.0
    %2170 = vmatpush1.msra.mxu0 0.0
    %2171 = vmatprep.subr.mxu0 0.0
    %2172 = vmatpush1.msra.mxu0 0.0
    %2173 = vmatprep.subr.mxu0 0.0
    %2174 = vmatpush1.msra.mxu0 0.0
    %2175 = vmatprep.subr.mxu0 0.0
    %2176 = vmatpush1.msra.mxu0 0.0
    %2177 = vmatprep.subr.mxu0 0.0
    %2178 = vmatpush1.msra.mxu0 0.0
    %2179 = vmatprep.subr.mxu0 0.0
    %2180 = vmatpush1.msra.mxu0 0.0
    %2181 = vmatprep.subr.mxu0 0.0
    %2182 = vmatpush1.msra.mxu0 0.0
    %2183 = vmatprep.subr.mxu0 0.0
    %2184 = vmatpush1.msra.mxu0 0.0
    %2185 = vmatprep.subr.mxu0 %v1993
    %2186 = vmatpush1.msra.mxu0 %v1990
    %2187 = vmatprep.subr.mxu0 0.0
    %2188 = vmatpush2.msra.mxu0 0.0
    %2189 = vmatprep.subr.mxu0 0.0
    %2190 = vmatpush2.msra.mxu0 0.0
    %2191 = vmatprep.subr.mxu0 0.0
    %2192 = vmatpush2.msra.mxu0 0.0
    %2193 = vmatprep.subr.mxu0 0.0
    %2194 = vmatpush2.msra.mxu0 0.0
    %2195 = vmatprep.subr.mxu0 0.0
    %2196 = vmatpush2.msra.mxu0 0.0
    %2197 = vmatprep.subr.mxu0 0.0
    %2198 = vmatpush2.msra.mxu0 0.0
    %2199 = vmatprep.subr.mxu0 0.0
    %2200 = vmatpush2.msra.mxu0 0.0
    %2201 = vmatprep.subr.mxu0 0.0
    %2202 = vmatpush2.msra.mxu0 0.0
    %2203 = vmatprep.subr.mxu0 0.0
    %2204 = vmatpush2.msra.mxu0 0.0
    %2205 = vmatprep.subr.mxu0 0.0
    %2206 = vmatpush2.msra.mxu0 0.0
    %2207 = vmatprep.subr.mxu0 0.0
    %2208 = vmatpush2.msra.mxu0 0.0
    %2209 = vmatprep.subr.mxu0 0.0
    %2210 = vmatpush2.msra.mxu0 0.0
    %2211 = vmatprep.subr.mxu0 0.0
    %2212 = vmatpush2.msra.mxu0 0.0
    %2213 = vmatprep.subr.mxu0 0.0
    %2214 = vmatpush2.msra.mxu0 0.0
    %2215 = vmatprep.subr.mxu0 0.0
    %2216 = vmatpush2.msra.mxu0 0.0
    %2217 = vmatprep.subr.mxu0 0.0
    %2218 = vmatpush2.msra.mxu0 0.0
    %2219 = vmatprep.mubr.f32.mxu0 0.0
    %2220 = vmatmul.mubr.f32.gmra.mxu0 %v1972
    %v2221 = vpop.f32.mrf.mxu0
    %v2222 = vadd.f32 0.0, %v2221
    %v2223 = vpop.f32.mrf.mxu0
    %v2224 = vadd.f32 0.0, %v2223
    %2225 = vmatprep.mubr.f32.mxu0 0.0
    %2226 = vmatmul.mubr.f32.gmra.mxu0 %v1975
    %v2227 = vpop.f32.mrf.mxu0
    %v2228 = vadd.f32 0.0, %v2227
    %v2229 = vpop.f32.mrf.mxu0
    %v2230 = vadd.f32 0.0, %v2229
    %2231 = vdwg.mxu0
    %2232 = vmatprep.subr.mxu0 0.0
    %2233 = vmatpush1.msra.mxu0 0.0
    %2234 = vmatprep.subr.mxu0 0.0
    %2235 = vmatpush1.msra.mxu0 0.0
    %2236 = vmatprep.subr.mxu0 0.0
    %2237 = vmatpush1.msra.mxu0 0.0
    %2238 = vmatprep.subr.mxu0 0.0
    %2239 = vmatpush1.msra.mxu0 0.0
    %2240 = vmatprep.subr.mxu0 0.0
    %2241 = vmatpush1.msra.mxu0 0.0
    %2242 = vmatprep.subr.mxu0 0.0
    %2243 = vmatpush1.msra.mxu0 0.0
    %2244 = vmatprep.subr.mxu0 0.0
    %2245 = vmatpush1.msra.mxu0 0.0
    %2246 = vmatprep.subr.mxu0 0.0
    %2247 = vmatpush1.msra.mxu0 0.0
    %2248 = vmatprep.subr.mxu0 0.0
    %2249 = vmatpush1.msra.mxu0 0.0
    %2250 = vmatprep.subr.mxu0 0.0
    %2251 = vmatpush1.msra.mxu0 0.0
    %2252 = vmatprep.subr.mxu0 0.0
    %2253 = vmatpush1.msra.mxu0 0.0
    %2254 = vmatprep.subr.mxu0 0.0
    %2255 = vmatpush1.msra.mxu0 0.0
    %2256 = vmatprep.subr.mxu0 0.0
    %2257 = vmatpush1.msra.mxu0 0.0
    %2258 = vmatprep.subr.mxu0 0.0
    %2259 = vmatpush1.msra.mxu0 0.0
    %2260 = vmatprep.subr.mxu0 0.0
    %2261 = vmatpush1.msra.mxu0 0.0
    %2262 = vmatprep.subr.mxu0 %v1999
    %2263 = vmatpush1.msra.mxu0 %v1996
    %2264 = vmatprep.subr.mxu0 0.0
    %2265 = vmatpush2.msra.mxu0 0.0
    %2266 = vmatprep.subr.mxu0 0.0
    %2267 = vmatpush2.msra.mxu0 0.0
    %2268 = vmatprep.subr.mxu0 0.0
    %2269 = vmatpush2.msra.mxu0 0.0
    %2270 = vmatprep.subr.mxu0 0.0
    %2271 = vmatpush2.msra.mxu0 0.0
    %2272 = vmatprep.subr.mxu0 0.0
    %2273 = vmatpush2.msra.mxu0 0.0
    %2274 = vmatprep.subr.mxu0 0.0
    %2275 = vmatpush2.msra.mxu0 0.0
    %2276 = vmatprep.subr.mxu0 0.0
    %2277 = vmatpush2.msra.mxu0 0.0
    %2278 = vmatprep.subr.mxu0 0.0
    %2279 = vmatpush2.msra.mxu0 0.0
    %2280 = vmatprep.subr.mxu0 0.0
    %2281 = vmatpush2.msra.mxu0 0.0
    %2282 = vmatprep.subr.mxu0 0.0
    %2283 = vmatpush2.msra.mxu0 0.0
    %2284 = vmatprep.subr.mxu0 0.0
    %2285 = vmatpush2.msra.mxu0 0.0
    %2286 = vmatprep.subr.mxu0 0.0
    %2287 = vmatpush2.msra.mxu0 0.0
    %2288 = vmatprep.subr.mxu0 0.0
    %2289 = vmatpush2.msra.mxu0 0.0
    %2290 = vmatprep.subr.mxu0 0.0
    %2291 = vmatpush2.msra.mxu0 0.0
    %2292 = vmatprep.subr.mxu0 0.0
    %2293 = vmatpush2.msra.mxu0 0.0
    %2294 = vmatprep.subr.mxu0 0.0
    %2295 = vmatpush2.msra.mxu0 0.0
    %2296 = vmatprep.mubr.f32.mxu0 0.0
    %2297 = vmatmul.mubr.f32.gmra.mxu0 %v1972
    %v2298 = vpop.f32.mrf.mxu0
    %v2299 = vadd.f32 0.0, %v2298
    %v2300 = vpop.f32.mrf.mxu0
    %v2301 = vadd.f32 0.0, %v2300
    %2302 = vmatprep.mubr.f32.mxu0 0.0
    %2303 = vmatmul.mubr.f32.gmra.mxu0 %v1975
    %v2304 = vpop.f32.mrf.mxu0
    %v2305 = vadd.f32 0.0, %v2304
    %v2306 = vpop.f32.mrf.mxu0
    %v2307 = vadd.f32 0.0, %v2306
    %2308 = vdwg.mxu0
    %v2309 = vadd.f32 %v1874, %v2068
    %v2310 = vadd.f32 %v1875, %v2070
    %v2311 = vadd.f32 %v1876, %v2145
    %v2312 = vadd.f32 %v1877, %v2147
    %v2313 = vadd.f32 %v1878, %v2222
    %v2314 = vadd.f32 %v1879, %v2224
    %v2315 = vadd.f32 %v1880, %v2299
    %v2316 = vadd.f32 %v1881, %v2301
    %v2317 = vadd.f32 %v1882, %v2074
    %v2318 = vadd.f32 %v1883, %v2076
    %v2319 = vadd.f32 %v1884, %v2151
    %v2320 = vadd.f32 %v1885, %v2153
    %v2321 = vadd.f32 %v1886, %v2228
    %v2322 = vadd.f32 %v1887, %v2230
    %v2323 = vadd.f32 %v1888, %v2305
    %v2324 = vadd.f32 %v1889, %v2307
    %s2325 = scalar_lea.vmem %s1, 64
    %v2326 = vld [vmem:[%s2325] sm:$0xff]
    %v2327 = vld [vmem:[%s2325 + $0x8] sm:$0x3]
    %v2329 = vsel %vm777, %v2326, 0
    %v2332 = vsel %vm777, %v2327, 0
    %v2334 = vsel %vm784, %v599, 0
    %v2336 = vsel %vm784, %v607, 0
    %v2338 = vsel %vm784, %v600, 0
    %v2340 = vsel %vm784, %v608, 0
    %v2342 = vsel %vm784, %v601, 0
    %v2344 = vsel %vm784, %v609, 0
    %v2346 = vsel %vm784, %v602, 0
    %v2348 = vsel %vm784, %v610, 0
    %2350 = vmatprep.subr.mxu0 0.0
    %2351 = vmatpush1.msra.mxu0 0.0
    %2352 = vmatprep.subr.mxu0 0.0
    %2353 = vmatpush1.msra.mxu0 0.0
    %2354 = vmatprep.subr.mxu0 0.0
    %2355 = vmatpush1.msra.mxu0 0.0
    %2356 = vmatprep.subr.mxu0 0.0
    %2357 = vmatpush1.msra.mxu0 0.0
    %2358 = vmatprep.subr.mxu0 0.0
    %2359 = vmatpush1.msra.mxu0 0.0
    %2360 = vmatprep.subr.mxu0 0.0
    %2361 = vmatpush1.msra.mxu0 0.0
    %2362 = vmatprep.subr.mxu0 0.0
    %2363 = vmatpush1.msra.mxu0 0.0
    %2364 = vmatprep.subr.mxu0 0.0
    %2365 = vmatpush1.msra.mxu0 0.0
    %2366 = vmatprep.subr.mxu0 0.0
    %2367 = vmatpush1.msra.mxu0 0.0
    %2368 = vmatprep.subr.mxu0 0.0
    %2369 = vmatpush1.msra.mxu0 0.0
    %2370 = vmatprep.subr.mxu0 0.0
    %2371 = vmatpush1.msra.mxu0 0.0
    %2372 = vmatprep.subr.mxu0 0.0
    %2373 = vmatpush1.msra.mxu0 0.0
    %2374 = vmatprep.subr.mxu0 0.0
    %2375 = vmatpush1.msra.mxu0 0.0
    %2376 = vmatprep.subr.mxu0 0.0
    %2377 = vmatpush1.msra.mxu0 0.0
    %2378 = vmatprep.subr.mxu0 0.0
    %2379 = vmatpush1.msra.mxu0 0.0
    %2380 = vmatprep.subr.mxu0 %v2336
    %2381 = vmatpush1.msra.mxu0 %v2334
    %2382 = vmatprep.subr.mxu0 0.0
    %2383 = vmatpush2.msra.mxu0 0.0
    %2384 = vmatprep.subr.mxu0 0.0
    %2385 = vmatpush2.msra.mxu0 0.0
    %2386 = vmatprep.subr.mxu0 0.0
    %2387 = vmatpush2.msra.mxu0 0.0
    %2388 = vmatprep.subr.mxu0 0.0
    %2389 = vmatpush2.msra.mxu0 0.0
    %2390 = vmatprep.subr.mxu0 0.0
    %2391 = vmatpush2.msra.mxu0 0.0
    %2392 = vmatprep.subr.mxu0 0.0
    %2393 = vmatpush2.msra.mxu0 0.0
    %2394 = vmatprep.subr.mxu0 0.0
    %2395 = vmatpush2.msra.mxu0 0.0
    %2396 = vmatprep.subr.mxu0 0.0
    %2397 = vmatpush2.msra.mxu0 0.0
    %2398 = vmatprep.subr.mxu0 0.0
    %2399 = vmatpush2.msra.mxu0 0.0
    %2400 = vmatprep.subr.mxu0 0.0
    %2401 = vmatpush2.msra.mxu0 0.0
    %2402 = vmatprep.subr.mxu0 0.0
    %2403 = vmatpush2.msra.mxu0 0.0
    %2404 = vmatprep.subr.mxu0 0.0
    %2405 = vmatpush2.msra.mxu0 0.0
    %2406 = vmatprep.subr.mxu0 0.0
    %2407 = vmatpush2.msra.mxu0 0.0
    %2408 = vmatprep.subr.mxu0 0.0
    %2409 = vmatpush2.msra.mxu0 0.0
    %2410 = vmatprep.subr.mxu0 0.0
    %2411 = vmatpush2.msra.mxu0 0.0
    %2412 = vmatprep.subr.mxu0 0.0
    %2413 = vmatpush2.msra.mxu0 0.0
    %2414 = vmatprep.mubr.f32.mxu0 0.0
    %2415 = vmatmul.mubr.f32.gmra.mxu0 %v2329
    %v2416 = vpop.f32.mrf.mxu0
    %v2417 = vadd.f32 0.0, %v2416
    %v2418 = vpop.f32.mrf.mxu0
    %v2419 = vadd.f32 0.0, %v2418
    %2420 = vmatprep.mubr.f32.mxu0 0.0
    %2421 = vmatmul.mubr.f32.gmra.mxu0 %v2332
    %v2422 = vpop.f32.mrf.mxu0
    %v2423 = vadd.f32 0.0, %v2422
    %v2424 = vpop.f32.mrf.mxu0
    %v2425 = vadd.f32 0.0, %v2424
    %2426 = vdwg.mxu0
    %2427 = vmatprep.subr.mxu0 0.0
    %2428 = vmatpush1.msra.mxu0 0.0
    %2429 = vmatprep.subr.mxu0 0.0
    %2430 = vmatpush1.msra.mxu0 0.0
    %2431 = vmatprep.subr.mxu0 0.0
    %2432 = vmatpush1.msra.mxu0 0.0
    %2433 = vmatprep.subr.mxu0 0.0
    %2434 = vmatpush1.msra.mxu0 0.0
    %2435 = vmatprep.subr.mxu0 0.0
    %2436 = vmatpush1.msra.mxu0 0.0
    %2437 = vmatprep.subr.mxu0 0.0
    %2438 = vmatpush1.msra.mxu0 0.0
    %2439 = vmatprep.subr.mxu0 0.0
    %2440 = vmatpush1.msra.mxu0 0.0
    %2441 = vmatprep.subr.mxu0 0.0
    %2442 = vmatpush1.msra.mxu0 0.0
    %2443 = vmatprep.subr.mxu0 0.0
    %2444 = vmatpush1.msra.mxu0 0.0
    %2445 = vmatprep.subr.mxu0 0.0
    %2446 = vmatpush1.msra.mxu0 0.0
    %2447 = vmatprep.subr.mxu0 0.0
    %2448 = vmatpush1.msra.mxu0 0.0
    %2449 = vmatprep.subr.mxu0 0.0
    %2450 = vmatpush1.msra.mxu0 0.0
    %2451 = vmatprep.subr.mxu0 0.0
    %2452 = vmatpush1.msra.mxu0 0.0
    %2453 = vmatprep.subr.mxu0 0.0
    %2454 = vmatpush1.msra.mxu0 0.0
    %2455 = vmatprep.subr.mxu0 0.0
    %2456 = vmatpush1.msra.mxu0 0.0
    %2457 = vmatprep.subr.mxu0 %v2340
    %2458 = vmatpush1.msra.mxu0 %v2338
    %2459 = vmatprep.subr.mxu0 0.0
    %2460 = vmatpush2.msra.mxu0 0.0
    %2461 = vmatprep.subr.mxu0 0.0
    %2462 = vmatpush2.msra.mxu0 0.0
    %2463 = vmatprep.subr.mxu0 0.0
    %2464 = vmatpush2.msra.mxu0 0.0
    %2465 = vmatprep.subr.mxu0 0.0
    %2466 = vmatpush2.msra.mxu0 0.0
    %2467 = vmatprep.subr.mxu0 0.0
    %2468 = vmatpush2.msra.mxu0 0.0
    %2469 = vmatprep.subr.mxu0 0.0
    %2470 = vmatpush2.msra.mxu0 0.0
    %2471 = vmatprep.subr.mxu0 0.0
    %2472 = vmatpush2.msra.mxu0 0.0
    %2473 = vmatprep.subr.mxu0 0.0
    %2474 = vmatpush2.msra.mxu0 0.0
    %2475 = vmatprep.subr.mxu0 0.0
    %2476 = vmatpush2.msra.mxu0 0.0
    %2477 = vmatprep.subr.mxu0 0.0
    %2478 = vmatpush2.msra.mxu0 0.0
    %2479 = vmatprep.subr.mxu0 0.0
    %2480 = vmatpush2.msra.mxu0 0.0
    %2481 = vmatprep.subr.mxu0 0.0
    %2482 = vmatpush2.msra.mxu0 0.0
    %2483 = vmatprep.subr.mxu0 0.0
    %2484 = vmatpush2.msra.mxu0 0.0
    %2485 = vmatprep.subr.mxu0 0.0
    %2486 = vmatpush2.msra.mxu0 0.0
    %2487 = vmatprep.subr.mxu0 0.0
    %2488 = vmatpush2.msra.mxu0 0.0
    %2489 = vmatprep.subr.mxu0 0.0
    %2490 = vmatpush2.msra.mxu0 0.0
    %2491 = vmatprep.mubr.f32.mxu0 0.0
    %2492 = vmatmul.mubr.f32.gmra.mxu0 %v2329
    %v2493 = vpop.f32.mrf.mxu0
    %v2494 = vadd.f32 0.0, %v2493
    %v2495 = vpop.f32.mrf.mxu0
    %v2496 = vadd.f32 0.0, %v2495
    %2497 = vmatprep.mubr.f32.mxu0 0.0
    %2498 = vmatmul.mubr.f32.gmra.mxu0 %v2332
    %v2499 = vpop.f32.mrf.mxu0
    %v2500 = vadd.f32 0.0, %v2499
    %v2501 = vpop.f32.mrf.mxu0
    %v2502 = vadd.f32 0.0, %v2501
    %2503 = vdwg.mxu0
    %2504 = vmatprep.subr.mxu0 0.0
    %2505 = vmatpush1.msra.mxu0 0.0
    %2506 = vmatprep.subr.mxu0 0.0
    %2507 = vmatpush1.msra.mxu0 0.0
    %2508 = vmatprep.subr.mxu0 0.0
    %2509 = vmatpush1.msra.mxu0 0.0
    %2510 = vmatprep.subr.mxu0 0.0
    %2511 = vmatpush1.msra.mxu0 0.0
    %2512 = vmatprep.subr.mxu0 0.0
    %2513 = vmatpush1.msra.mxu0 0.0
    %2514 = vmatprep.subr.mxu0 0.0
    %2515 = vmatpush1.msra.mxu0 0.0
    %2516 = vmatprep.subr.mxu0 0.0
    %2517 = vmatpush1.msra.mxu0 0.0
    %2518 = vmatprep.subr.mxu0 0.0
    %2519 = vmatpush1.msra.mxu0 0.0
    %2520 = vmatprep.subr.mxu0 0.0
    %2521 = vmatpush1.msra.mxu0 0.0
    %2522 = vmatprep.subr.mxu0 0.0
    %2523 = vmatpush1.msra.mxu0 0.0
    %2524 = vmatprep.subr.mxu0 0.0
    %2525 = vmatpush1.msra.mxu0 0.0
    %2526 = vmatprep.subr.mxu0 0.0
    %2527 = vmatpush1.msra.mxu0 0.0
    %2528 = vmatprep.subr.mxu0 0.0
    %2529 = vmatpush1.msra.mxu0 0.0
    %2530 = vmatprep.subr.mxu0 0.0
    %2531 = vmatpush1.msra.mxu0 0.0
    %2532 = vmatprep.subr.mxu0 0.0
    %2533 = vmatpush1.msra.mxu0 0.0
    %2534 = vmatprep.subr.mxu0 %v2344
    %2535 = vmatpush1.msra.mxu0 %v2342
    %2536 = vmatprep.subr.mxu0 0.0
    %2537 = vmatpush2.msra.mxu0 0.0
    %2538 = vmatprep.subr.mxu0 0.0
    %2539 = vmatpush2.msra.mxu0 0.0
    %2540 = vmatprep.subr.mxu0 0.0
    %2541 = vmatpush2.msra.mxu0 0.0
    %2542 = vmatprep.subr.mxu0 0.0
    %2543 = vmatpush2.msra.mxu0 0.0
    %2544 = vmatprep.subr.mxu0 0.0
    %2545 = vmatpush2.msra.mxu0 0.0
    %2546 = vmatprep.subr.mxu0 0.0
    %2547 = vmatpush2.msra.mxu0 0.0
    %2548 = vmatprep.subr.mxu0 0.0
    %2549 = vmatpush2.msra.mxu0 0.0
    %2550 = vmatprep.subr.mxu0 0.0
    %2551 = vmatpush2.msra.mxu0 0.0
    %2552 = vmatprep.subr.mxu0 0.0
    %2553 = vmatpush2.msra.mxu0 0.0
    %2554 = vmatprep.subr.mxu0 0.0
    %2555 = vmatpush2.msra.mxu0 0.0
    %2556 = vmatprep.subr.mxu0 0.0
    %2557 = vmatpush2.msra.mxu0 0.0
    %2558 = vmatprep.subr.mxu0 0.0
    %2559 = vmatpush2.msra.mxu0 0.0
    %2560 = vmatprep.subr.mxu0 0.0
    %2561 = vmatpush2.msra.mxu0 0.0
    %2562 = vmatprep.subr.mxu0 0.0
    %2563 = vmatpush2.msra.mxu0 0.0
    %2564 = vmatprep.subr.mxu0 0.0
    %2565 = vmatpush2.msra.mxu0 0.0
    %2566 = vmatprep.subr.mxu0 0.0
    %2567 = vmatpush2.msra.mxu0 0.0
    %2568 = vmatprep.mubr.f32.mxu0 0.0
    %2569 = vmatmul.mubr.f32.gmra.mxu0 %v2329
    %v2570 = vpop.f32.mrf.mxu0
    %v2571 = vadd.f32 0.0, %v2570
    %v2572 = vpop.f32.mrf.mxu0
    %v2573 = vadd.f32 0.0, %v2572
    %2574 = vmatprep.mubr.f32.mxu0 0.0
    %2575 = vmatmul.mubr.f32.gmra.mxu0 %v2332
    %v2576 = vpop.f32.mrf.mxu0
    %v2577 = vadd.f32 0.0, %v2576
    %v2578 = vpop.f32.mrf.mxu0
    %v2579 = vadd.f32 0.0, %v2578
    %2580 = vdwg.mxu0
    %2581 = vmatprep.subr.mxu0 0.0
    %2582 = vmatpush1.msra.mxu0 0.0
    %2583 = vmatprep.subr.mxu0 0.0
    %2584 = vmatpush1.msra.mxu0 0.0
    %2585 = vmatprep.subr.mxu0 0.0
    %2586 = vmatpush1.msra.mxu0 0.0
    %2587 = vmatprep.subr.mxu0 0.0
    %2588 = vmatpush1.msra.mxu0 0.0
    %2589 = vmatprep.subr.mxu0 0.0
    %2590 = vmatpush1.msra.mxu0 0.0
    %2591 = vmatprep.subr.mxu0 0.0
    %2592 = vmatpush1.msra.mxu0 0.0
    %2593 = vmatprep.subr.mxu0 0.0
    %2594 = vmatpush1.msra.mxu0 0.0
    %2595 = vmatprep.subr.mxu0 0.0
    %2596 = vmatpush1.msra.mxu0 0.0
    %2597 = vmatprep.subr.mxu0 0.0
    %2598 = vmatpush1.msra.mxu0 0.0
    %2599 = vmatprep.subr.mxu0 0.0
    %2600 = vmatpush1.msra.mxu0 0.0
    %2601 = vmatprep.subr.mxu0 0.0
    %2602 = vmatpush1.msra.mxu0 0.0
    %2603 = vmatprep.subr.mxu0 0.0
    %2604 = vmatpush1.msra.mxu0 0.0
    %2605 = vmatprep.subr.mxu0 0.0
    %2606 = vmatpush1.msra.mxu0 0.0
    %2607 = vmatprep.subr.mxu0 0.0
    %2608 = vmatpush1.msra.mxu0 0.0
    %2609 = vmatprep.subr.mxu0 0.0
    %2610 = vmatpush1.msra.mxu0 0.0
    %2611 = vmatprep.subr.mxu0 %v2348
    %2612 = vmatpush1.msra.mxu0 %v2346
    %2613 = vmatprep.subr.mxu0 0.0
    %2614 = vmatpush2.msra.mxu0 0.0
    %2615 = vmatprep.subr.mxu0 0.0
    %2616 = vmatpush2.msra.mxu0 0.0
    %2617 = vmatprep.subr.mxu0 0.0
    %2618 = vmatpush2.msra.mxu0 0.0
    %2619 = vmatprep.subr.mxu0 0.0
    %2620 = vmatpush2.msra.mxu0 0.0
    %2621 = vmatprep.subr.mxu0 0.0
    %2622 = vmatpush2.msra.mxu0 0.0
    %2623 = vmatprep.subr.mxu0 0.0
    %2624 = vmatpush2.msra.mxu0 0.0
    %2625 = vmatprep.subr.mxu0 0.0
    %2626 = vmatpush2.msra.mxu0 0.0
    %2627 = vmatprep.subr.mxu0 0.0
    %2628 = vmatpush2.msra.mxu0 0.0
    %2629 = vmatprep.subr.mxu0 0.0
    %2630 = vmatpush2.msra.mxu0 0.0
    %2631 = vmatprep.subr.mxu0 0.0
    %2632 = vmatpush2.msra.mxu0 0.0
    %2633 = vmatprep.subr.mxu0 0.0
    %2634 = vmatpush2.msra.mxu0 0.0
    %2635 = vmatprep.subr.mxu0 0.0
    %2636 = vmatpush2.msra.mxu0 0.0
    %2637 = vmatprep.subr.mxu0 0.0
    %2638 = vmatpush2.msra.mxu0 0.0
    %2639 = vmatprep.subr.mxu0 0.0
    %2640 = vmatpush2.msra.mxu0 0.0
    %2641 = vmatprep.subr.mxu0 0.0
    %2642 = vmatpush2.msra.mxu0 0.0
    %2643 = vmatprep.subr.mxu0 0.0
    %2644 = vmatpush2.msra.mxu0 0.0
    %2645 = vmatprep.mubr.f32.mxu0 0.0
    %2646 = vmatmul.mubr.f32.gmra.mxu0 %v2329
    %v2647 = vpop.f32.mrf.mxu0
    %v2648 = vadd.f32 0.0, %v2647
    %v2649 = vpop.f32.mrf.mxu0
    %v2650 = vadd.f32 0.0, %v2649
    %2651 = vmatprep.mubr.f32.mxu0 0.0
    %2652 = vmatmul.mubr.f32.gmra.mxu0 %v2332
    %v2653 = vpop.f32.mrf.mxu0
    %v2654 = vadd.f32 0.0, %v2653
    %v2655 = vpop.f32.mrf.mxu0
    %v2656 = vadd.f32 0.0, %v2655
    %2657 = vdwg.mxu0
    %v2658 = vadd.f32 %v2309, %v2417
    %v2659 = vadd.f32 %v2310, %v2419
    %v2660 = vadd.f32 %v2311, %v2494
    %v2661 = vadd.f32 %v2312, %v2496
    %v2662 = vadd.f32 %v2313, %v2571
    %v2663 = vadd.f32 %v2314, %v2573
    %v2664 = vadd.f32 %v2315, %v2648
    %v2665 = vadd.f32 %v2316, %v2650
    %v2666 = vadd.f32 %v2317, %v2423
    %v2667 = vadd.f32 %v2318, %v2425
    %v2668 = vadd.f32 %v2319, %v2500
    %v2669 = vadd.f32 %v2320, %v2502
    %v2670 = vadd.f32 %v2321, %v2577
    %v2671 = vadd.f32 %v2322, %v2579
    %v2672 = vadd.f32 %v2323, %v2654
    %v2673 = vadd.f32 %v2324, %v2656
    %2674 = vrot.lane.b32.xlu0 %v599, 127
    %v2675 = vpop.permute.xlu0 %2674
    %2676 = vrot.lane.b32.xlu0 %v607, 127
    %v2677 = vpop.permute.xlu0 %2676
    %2678 = vrot.lane.b32.xlu0 %v600, 127
    %v2679 = vpop.permute.xlu0 %2678
    %2680 = vrot.lane.b32.xlu0 %v608, 127
    %v2681 = vpop.permute.xlu0 %2680
    %2682 = vrot.lane.b32.xlu0 %v601, 127
    %v2683 = vpop.permute.xlu0 %2682
    %2684 = vrot.lane.b32.xlu0 %v609, 127
    %v2685 = vpop.permute.xlu0 %2684
    %2686 = vrot.lane.b32.xlu0 %v602, 127
    %v2687 = vpop.permute.xlu0 %2686
    %2688 = vrot.lane.b32.xlu0 %v610, 127
    %v2689 = vpop.permute.xlu0 %2688
    %vm2690 = vcmp.lt.s32.totalorder %v632, 127
    %v2691 = vsel %vm2690, %v2687, %v2689
    %v2692 = vsel %vm2690, %v2685, %v2687
    %v2693 = vsel %vm2690, %v2683, %v2685
    %v2694 = vsel %vm2690, %v2681, %v2683
    %v2695 = vsel %vm2690, %v2679, %v2681
    %v2696 = vsel %vm2690, %v2677, %v2679
    %v2697 = vsel %vm2690, %v2675, %v2677
    %v2698 = vsel %vm2690, %v2689, %v2675
    %s2699 = scalar_lea.vmem %s7, 5
    %v2700 = vld [vmem:[%s2699] ss:$8 sm:$0xf]
    %v2701 = vld [vmem:[%s2699] ss:$8 sm:$0xf0]
    %v2702 = vor.u32 %v2700, %v2701
    %v2704 = vlaneseq
    %v2705 = vshrl.u32 %v2704, 7
    %v2706 = vsub.s32 0, %v2705
    %v2707 = vrot.slane %v2702, %v2706
    %v2708 = vlaneseq
    %v2709 = vshrl.u32 %v2708, 7
    %v2710 = vsub.s32 1, %v2709
    %v2711 = vrot.slane %v2702, %v2710
    %v2712 = vlaneseq
    %v2713 = vshrl.u32 %v2712, 7
    %v2714 = vsub.s32 2, %v2713
    %v2715 = vrot.slane %v2702, %v2714
    %v2716 = vlaneseq
    %v2717 = vshrl.u32 %v2716, 7
    %v2718 = vsub.s32 3, %v2717
    %v2719 = vrot.slane %v2702, %v2718
    %v2720 = vlaneseq
    %v2721 = vshrl.u32 %v2720, 7
    %v2722 = vsub.s32 4, %v2721
    %v2723 = vrot.slane %v2702, %v2722
    %v2724 = vlaneseq
    %v2725 = vshrl.u32 %v2724, 7
    %v2726 = vsub.s32 5, %v2725
    %v2727 = vrot.slane %v2702, %v2726
    %v2728 = vlaneseq
    %v2729 = vshrl.u32 %v2728, 7
    %v2730 = vsub.s32 6, %v2729
    %v2731 = vrot.slane %v2702, %v2730
    %v2732 = vlaneseq
    %v2733 = vshrl.u32 %v2732, 7
    %v2734 = vsub.s32 7, %v2733
    %v2735 = vrot.slane %v2702, %v2734
    %v2744 = vmul.f32 %v2697, %v2707
    %v2745 = vmul.f32 %v2696, %v2711
    %v2746 = vmul.f32 %v2695, %v2715
    %v2747 = vmul.f32 %v2694, %v2719
    %v2748 = vmul.f32 %v2693, %v2723
    %v2749 = vmul.f32 %v2692, %v2727
    %v2750 = vmul.f32 %v2691, %v2731
    %v2751 = vmul.f32 %v2698, %v2735
    %s2752 = scalar_lea.vmem %s1, 80
    %v2753 = vld [vmem:[%s2752] sm:$0xff]
    %v2754 = vld [vmem:[%s2752 + $0x8] sm:$0x3]
    %v2756 = vsel %vm777, %v2753, 0
    %v2759 = vsel %vm777, %v2754, 0
    %v2762 = vsel %vm784, %v2744, 0
    %v2765 = vsel %vm784, %v2745, 0
    %v2768 = vsel %vm784, %v2746, 0
    %v2771 = vsel %vm784, %v2747, 0
    %v2774 = vsel %vm784, %v2748, 0
    %v2777 = vsel %vm784, %v2749, 0
    %v2780 = vsel %vm784, %v2750, 0
    %v2783 = vsel %vm784, %v2751, 0
    %2785 = vmatprep.subr.mxu0 0.0
    %2786 = vmatpush1.msra.mxu0 0.0
    %2787 = vmatprep.subr.mxu0 0.0
    %2788 = vmatpush1.msra.mxu0 0.0
    %2789 = vmatprep.subr.mxu0 0.0
    %2790 = vmatpush1.msra.mxu0 0.0
    %2791 = vmatprep.subr.mxu0 0.0
    %2792 = vmatpush1.msra.mxu0 0.0
    %2793 = vmatprep.subr.mxu0 0.0
    %2794 = vmatpush1.msra.mxu0 0.0
    %2795 = vmatprep.subr.mxu0 0.0
    %2796 = vmatpush1.msra.mxu0 0.0
    %2797 = vmatprep.subr.mxu0 0.0
    %2798 = vmatpush1.msra.mxu0 0.0
    %2799 = vmatprep.subr.mxu0 0.0
    %2800 = vmatpush1.msra.mxu0 0.0
    %2801 = vmatprep.subr.mxu0 0.0
    %2802 = vmatpush1.msra.mxu0 0.0
    %2803 = vmatprep.subr.mxu0 0.0
    %2804 = vmatpush1.msra.mxu0 0.0
    %2805 = vmatprep.subr.mxu0 0.0
    %2806 = vmatpush1.msra.mxu0 0.0
    %2807 = vmatprep.subr.mxu0 0.0
    %2808 = vmatpush1.msra.mxu0 0.0
    %2809 = vmatprep.subr.mxu0 0.0
    %2810 = vmatpush1.msra.mxu0 0.0
    %2811 = vmatprep.subr.mxu0 0.0
    %2812 = vmatpush1.msra.mxu0 0.0
    %2813 = vmatprep.subr.mxu0 0.0
    %2814 = vmatpush1.msra.mxu0 0.0
    %2815 = vmatprep.subr.mxu0 %v2765
    %2816 = vmatpush1.msra.mxu0 %v2762
    %2817 = vmatprep.subr.mxu0 0.0
    %2818 = vmatpush2.msra.mxu0 0.0
    %2819 = vmatprep.subr.mxu0 0.0
    %2820 = vmatpush2.msra.mxu0 0.0
    %2821 = vmatprep.subr.mxu0 0.0
    %2822 = vmatpush2.msra.mxu0 0.0
    %2823 = vmatprep.subr.mxu0 0.0
    %2824 = vmatpush2.msra.mxu0 0.0
    %2825 = vmatprep.subr.mxu0 0.0
    %2826 = vmatpush2.msra.mxu0 0.0
    %2827 = vmatprep.subr.mxu0 0.0
    %2828 = vmatpush2.msra.mxu0 0.0
    %2829 = vmatprep.subr.mxu0 0.0
    %2830 = vmatpush2.msra.mxu0 0.0
    %2831 = vmatprep.subr.mxu0 0.0
    %2832 = vmatpush2.msra.mxu0 0.0
    %2833 = vmatprep.subr.mxu0 0.0
    %2834 = vmatpush2.msra.mxu0 0.0
    %2835 = vmatprep.subr.mxu0 0.0
    %2836 = vmatpush2.msra.mxu0 0.0
    %2837 = vmatprep.subr.mxu0 0.0
    %2838 = vmatpush2.msra.mxu0 0.0
    %2839 = vmatprep.subr.mxu0 0.0
    %2840 = vmatpush2.msra.mxu0 0.0
    %2841 = vmatprep.subr.mxu0 0.0
    %2842 = vmatpush2.msra.mxu0 0.0
    %2843 = vmatprep.subr.mxu0 0.0
    %2844 = vmatpush2.msra.mxu0 0.0
    %2845 = vmatprep.subr.mxu0 0.0
    %2846 = vmatpush2.msra.mxu0 0.0
    %2847 = vmatprep.subr.mxu0 0.0
    %2848 = vmatpush2.msra.mxu0 0.0
    %2849 = vmatprep.mubr.f32.mxu0 0.0
    %2850 = vmatmul.mubr.f32.gmra.mxu0 %v2756
    %v2851 = vpop.f32.mrf.mxu0
    %v2852 = vadd.f32 0.0, %v2851
    %v2853 = vpop.f32.mrf.mxu0
    %v2854 = vadd.f32 0.0, %v2853
    %2855 = vmatprep.mubr.f32.mxu0 0.0
    %2856 = vmatmul.mubr.f32.gmra.mxu0 %v2759
    %v2857 = vpop.f32.mrf.mxu0
    %v2858 = vadd.f32 0.0, %v2857
    %v2859 = vpop.f32.mrf.mxu0
    %v2860 = vadd.f32 0.0, %v2859
    %2861 = vdwg.mxu0
    %2862 = vmatprep.subr.mxu0 0.0
    %2863 = vmatpush1.msra.mxu0 0.0
    %2864 = vmatprep.subr.mxu0 0.0
    %2865 = vmatpush1.msra.mxu0 0.0
    %2866 = vmatprep.subr.mxu0 0.0
    %2867 = vmatpush1.msra.mxu0 0.0
    %2868 = vmatprep.subr.mxu0 0.0
    %2869 = vmatpush1.msra.mxu0 0.0
    %2870 = vmatprep.subr.mxu0 0.0
    %2871 = vmatpush1.msra.mxu0 0.0
    %2872 = vmatprep.subr.mxu0 0.0
    %2873 = vmatpush1.msra.mxu0 0.0
    %2874 = vmatprep.subr.mxu0 0.0
    %2875 = vmatpush1.msra.mxu0 0.0
    %2876 = vmatprep.subr.mxu0 0.0
    %2877 = vmatpush1.msra.mxu0 0.0
    %2878 = vmatprep.subr.mxu0 0.0
    %2879 = vmatpush1.msra.mxu0 0.0
    %2880 = vmatprep.subr.mxu0 0.0
    %2881 = vmatpush1.msra.mxu0 0.0
    %2882 = vmatprep.subr.mxu0 0.0
    %2883 = vmatpush1.msra.mxu0 0.0
    %2884 = vmatprep.subr.mxu0 0.0
    %2885 = vmatpush1.msra.mxu0 0.0
    %2886 = vmatprep.subr.mxu0 0.0
    %2887 = vmatpush1.msra.mxu0 0.0
    %2888 = vmatprep.subr.mxu0 0.0
    %2889 = vmatpush1.msra.mxu0 0.0
    %2890 = vmatprep.subr.mxu0 0.0
    %2891 = vmatpush1.msra.mxu0 0.0
    %2892 = vmatprep.subr.mxu0 %v2771
    %2893 = vmatpush1.msra.mxu0 %v2768
    %2894 = vmatprep.subr.mxu0 0.0
    %2895 = vmatpush2.msra.mxu0 0.0
    %2896 = vmatprep.subr.mxu0 0.0
    %2897 = vmatpush2.msra.mxu0 0.0
    %2898 = vmatprep.subr.mxu0 0.0
    %2899 = vmatpush2.msra.mxu0 0.0
    %2900 = vmatprep.subr.mxu0 0.0
    %2901 = vmatpush2.msra.mxu0 0.0
    %2902 = vmatprep.subr.mxu0 0.0
    %2903 = vmatpush2.msra.mxu0 0.0
    %2904 = vmatprep.subr.mxu0 0.0
    %2905 = vmatpush2.msra.mxu0 0.0
    %2906 = vmatprep.subr.mxu0 0.0
    %2907 = vmatpush2.msra.mxu0 0.0
    %2908 = vmatprep.subr.mxu0 0.0
    %2909 = vmatpush2.msra.mxu0 0.0
    %2910 = vmatprep.subr.mxu0 0.0
    %2911 = vmatpush2.msra.mxu0 0.0
    %2912 = vmatprep.subr.mxu0 0.0
    %2913 = vmatpush2.msra.mxu0 0.0
    %2914 = vmatprep.subr.mxu0 0.0
    %2915 = vmatpush2.msra.mxu0 0.0
    %2916 = vmatprep.subr.mxu0 0.0
    %2917 = vmatpush2.msra.mxu0 0.0
    %2918 = vmatprep.subr.mxu0 0.0
    %2919 = vmatpush2.msra.mxu0 0.0
    %2920 = vmatprep.subr.mxu0 0.0
    %2921 = vmatpush2.msra.mxu0 0.0
    %2922 = vmatprep.subr.mxu0 0.0
    %2923 = vmatpush2.msra.mxu0 0.0
    %2924 = vmatprep.subr.mxu0 0.0
    %2925 = vmatpush2.msra.mxu0 0.0
    %2926 = vmatprep.mubr.f32.mxu0 0.0
    %2927 = vmatmul.mubr.f32.gmra.mxu0 %v2756
    %v2928 = vpop.f32.mrf.mxu0
    %v2929 = vadd.f32 0.0, %v2928
    %v2930 = vpop.f32.mrf.mxu0
    %v2931 = vadd.f32 0.0, %v2930
    %2932 = vmatprep.mubr.f32.mxu0 0.0
    %2933 = vmatmul.mubr.f32.gmra.mxu0 %v2759
    %v2934 = vpop.f32.mrf.mxu0
    %v2935 = vadd.f32 0.0, %v2934
    %v2936 = vpop.f32.mrf.mxu0
    %v2937 = vadd.f32 0.0, %v2936
    %2938 = vdwg.mxu0
    %2939 = vmatprep.subr.mxu0 0.0
    %2940 = vmatpush1.msra.mxu0 0.0
    %2941 = vmatprep.subr.mxu0 0.0
    %2942 = vmatpush1.msra.mxu0 0.0
    %2943 = vmatprep.subr.mxu0 0.0
    %2944 = vmatpush1.msra.mxu0 0.0
    %2945 = vmatprep.subr.mxu0 0.0
    %2946 = vmatpush1.msra.mxu0 0.0
    %2947 = vmatprep.subr.mxu0 0.0
    %2948 = vmatpush1.msra.mxu0 0.0
    %2949 = vmatprep.subr.mxu0 0.0
    %2950 = vmatpush1.msra.mxu0 0.0
    %2951 = vmatprep.subr.mxu0 0.0
    %2952 = vmatpush1.msra.mxu0 0.0
    %2953 = vmatprep.subr.mxu0 0.0
    %2954 = vmatpush1.msra.mxu0 0.0
    %2955 = vmatprep.subr.mxu0 0.0
    %2956 = vmatpush1.msra.mxu0 0.0
    %2957 = vmatprep.subr.mxu0 0.0
    %2958 = vmatpush1.msra.mxu0 0.0
    %2959 = vmatprep.subr.mxu0 0.0
    %2960 = vmatpush1.msra.mxu0 0.0
    %2961 = vmatprep.subr.mxu0 0.0
    %2962 = vmatpush1.msra.mxu0 0.0
    %2963 = vmatprep.subr.mxu0 0.0
    %2964 = vmatpush1.msra.mxu0 0.0
    %2965 = vmatprep.subr.mxu0 0.0
    %2966 = vmatpush1.msra.mxu0 0.0
    %2967 = vmatprep.subr.mxu0 0.0
    %2968 = vmatpush1.msra.mxu0 0.0
    %2969 = vmatprep.subr.mxu0 %v2777
    %2970 = vmatpush1.msra.mxu0 %v2774
    %2971 = vmatprep.subr.mxu0 0.0
    %2972 = vmatpush2.msra.mxu0 0.0
    %2973 = vmatprep.subr.mxu0 0.0
    %2974 = vmatpush2.msra.mxu0 0.0
    %2975 = vmatprep.subr.mxu0 0.0
    %2976 = vmatpush2.msra.mxu0 0.0
    %2977 = vmatprep.subr.mxu0 0.0
    %2978 = vmatpush2.msra.mxu0 0.0
    %2979 = vmatprep.subr.mxu0 0.0
    %2980 = vmatpush2.msra.mxu0 0.0
    %2981 = vmatprep.subr.mxu0 0.0
    %2982 = vmatpush2.msra.mxu0 0.0
    %2983 = vmatprep.subr.mxu0 0.0
    %2984 = vmatpush2.msra.mxu0 0.0
    %2985 = vmatprep.subr.mxu0 0.0
    %2986 = vmatpush2.msra.mxu0 0.0
    %2987 = vmatprep.subr.mxu0 0.0
    %2988 = vmatpush2.msra.mxu0 0.0
    %2989 = vmatprep.subr.mxu0 0.0
    %2990 = vmatpush2.msra.mxu0 0.0
    %2991 = vmatprep.subr.mxu0 0.0
    %2992 = vmatpush2.msra.mxu0 0.0
    %2993 = vmatprep.subr.mxu0 0.0
    %2994 = vmatpush2.msra.mxu0 0.0
    %2995 = vmatprep.subr.mxu0 0.0
    %2996 = vmatpush2.msra.mxu0 0.0
    %2997 = vmatprep.subr.mxu0 0.0
    %2998 = vmatpush2.msra.mxu0 0.0
    %2999 = vmatprep.subr.mxu0 0.0
    %3000 = vmatpush2.msra.mxu0 0.0
    %3001 = vmatprep.subr.mxu0 0.0
    %3002 = vmatpush2.msra.mxu0 0.0
    %3003 = vmatprep.mubr.f32.mxu0 0.0
    %3004 = vmatmul.mubr.f32.gmra.mxu0 %v2756
    %v3005 = vpop.f32.mrf.mxu0
    %v3006 = vadd.f32 0.0, %v3005
    %v3007 = vpop.f32.mrf.mxu0
    %v3008 = vadd.f32 0.0, %v3007
    %3009 = vmatprep.mubr.f32.mxu0 0.0
    %3010 = vmatmul.mubr.f32.gmra.mxu0 %v2759
    %v3011 = vpop.f32.mrf.mxu0
    %v3012 = vadd.f32 0.0, %v3011
    %v3013 = vpop.f32.mrf.mxu0
    %v3014 = vadd.f32 0.0, %v3013
    %3015 = vdwg.mxu0
    %3016 = vmatprep.subr.mxu0 0.0
    %3017 = vmatpush1.msra.mxu0 0.0
    %3018 = vmatprep.subr.mxu0 0.0
    %3019 = vmatpush1.msra.mxu0 0.0
    %3020 = vmatprep.subr.mxu0 0.0
    %3021 = vmatpush1.msra.mxu0 0.0
    %3022 = vmatprep.subr.mxu0 0.0
    %3023 = vmatpush1.msra.mxu0 0.0
    %3024 = vmatprep.subr.mxu0 0.0
    %3025 = vmatpush1.msra.mxu0 0.0
    %3026 = vmatprep.subr.mxu0 0.0
    %3027 = vmatpush1.msra.mxu0 0.0
    %3028 = vmatprep.subr.mxu0 0.0
    %3029 = vmatpush1.msra.mxu0 0.0
    %3030 = vmatprep.subr.mxu0 0.0
    %3031 = vmatpush1.msra.mxu0 0.0
    %3032 = vmatprep.subr.mxu0 0.0
    %3033 = vmatpush1.msra.mxu0 0.0
    %3034 = vmatprep.subr.mxu0 0.0
    %3035 = vmatpush1.msra.mxu0 0.0
    %3036 = vmatprep.subr.mxu0 0.0
    %3037 = vmatpush1.msra.mxu0 0.0
    %3038 = vmatprep.subr.mxu0 0.0
    %3039 = vmatpush1.msra.mxu0 0.0
    %3040 = vmatprep.subr.mxu0 0.0
    %3041 = vmatpush1.msra.mxu0 0.0
    %3042 = vmatprep.subr.mxu0 0.0
    %3043 = vmatpush1.msra.mxu0 0.0
    %3044 = vmatprep.subr.mxu0 0.0
    %3045 = vmatpush1.msra.mxu0 0.0
    %3046 = vmatprep.subr.mxu0 %v2783
    %3047 = vmatpush1.msra.mxu0 %v2780
    %3048 = vmatprep.subr.mxu0 0.0
    %3049 = vmatpush2.msra.mxu0 0.0
    %3050 = vmatprep.subr.mxu0 0.0
    %3051 = vmatpush2.msra.mxu0 0.0
    %3052 = vmatprep.subr.mxu0 0.0
    %3053 = vmatpush2.msra.mxu0 0.0
    %3054 = vmatprep.subr.mxu0 0.0
    %3055 = vmatpush2.msra.mxu0 0.0
    %3056 = vmatprep.subr.mxu0 0.0
    %3057 = vmatpush2.msra.mxu0 0.0
    %3058 = vmatprep.subr.mxu0 0.0
    %3059 = vmatpush2.msra.mxu0 0.0
    %3060 = vmatprep.subr.mxu0 0.0
    %3061 = vmatpush2.msra.mxu0 0.0
    %3062 = vmatprep.subr.mxu0 0.0
    %3063 = vmatpush2.msra.mxu0 0.0
    %3064 = vmatprep.subr.mxu0 0.0
    %3065 = vmatpush2.msra.mxu0 0.0
    %3066 = vmatprep.subr.mxu0 0.0
    %3067 = vmatpush2.msra.mxu0 0.0
    %3068 = vmatprep.subr.mxu0 0.0
    %3069 = vmatpush2.msra.mxu0 0.0
    %3070 = vmatprep.subr.mxu0 0.0
    %3071 = vmatpush2.msra.mxu0 0.0
    %3072 = vmatprep.subr.mxu0 0.0
    %3073 = vmatpush2.msra.mxu0 0.0
    %3074 = vmatprep.subr.mxu0 0.0
    %3075 = vmatpush2.msra.mxu0 0.0
    %3076 = vmatprep.subr.mxu0 0.0
    %3077 = vmatpush2.msra.mxu0 0.0
    %3078 = vmatprep.subr.mxu0 0.0
    %3079 = vmatpush2.msra.mxu0 0.0
    %3080 = vmatprep.mubr.f32.mxu0 0.0
    %3081 = vmatmul.mubr.f32.gmra.mxu0 %v2756
    %v3082 = vpop.f32.mrf.mxu0
    %v3083 = vadd.f32 0.0, %v3082
    %v3084 = vpop.f32.mrf.mxu0
    %v3085 = vadd.f32 0.0, %v3084
    %3086 = vmatprep.mubr.f32.mxu0 0.0
    %3087 = vmatmul.mubr.f32.gmra.mxu0 %v2759
    %v3088 = vpop.f32.mrf.mxu0
    %v3089 = vadd.f32 0.0, %v3088
    %v3090 = vpop.f32.mrf.mxu0
    %v3091 = vadd.f32 0.0, %v3090
    %3092 = vdwg.mxu0
    %v3093 = vadd.f32 %v2658, %v2852
    %v3094 = vadd.f32 %v2659, %v2854
    %v3095 = vadd.f32 %v2660, %v2929
    %v3096 = vadd.f32 %v2661, %v2931
    %v3097 = vadd.f32 %v2662, %v3006
    %v3098 = vadd.f32 %v2663, %v3008
    %v3099 = vadd.f32 %v2664, %v3083
    %v3100 = vadd.f32 %v2665, %v3085
    %v3101 = vadd.f32 %v2666, %v2858
    %v3102 = vadd.f32 %v2667, %v2860
    %v3103 = vadd.f32 %v2668, %v2935
    %v3104 = vadd.f32 %v2669, %v2937
    %v3105 = vadd.f32 %v2670, %v3012
    %v3106 = vadd.f32 %v2671, %v3014
    %v3107 = vadd.f32 %v2672, %v3089
    %v3108 = vadd.f32 %v2673, %v3091
    %3109 = vrot.lane.b32.xlu0 %v599, 97
    %v3110 = vpop.permute.xlu0 %3109
    %3111 = vrot.lane.b32.xlu0 %v607, 97
    %v3112 = vpop.permute.xlu0 %3111
    %3113 = vrot.lane.b32.xlu0 %v600, 97
    %v3114 = vpop.permute.xlu0 %3113
    %3115 = vrot.lane.b32.xlu0 %v608, 97
    %v3116 = vpop.permute.xlu0 %3115
    %3117 = vrot.lane.b32.xlu0 %v601, 97
    %v3118 = vpop.permute.xlu0 %3117
    %3119 = vrot.lane.b32.xlu0 %v609, 97
    %v3120 = vpop.permute.xlu0 %3119
    %3121 = vrot.lane.b32.xlu0 %v602, 97
    %v3122 = vpop.permute.xlu0 %3121
    %3123 = vrot.lane.b32.xlu0 %v610, 97
    %v3124 = vpop.permute.xlu0 %3123
    %vm3125 = vcmp.lt.s32.totalorder %v632, 97
    %v3126 = vsel %vm3125, %v3122, %v3124
    %v3127 = vsel %vm3125, %v3120, %v3122
    %v3128 = vsel %vm3125, %v3118, %v3120
    %v3129 = vsel %vm3125, %v3116, %v3118
    %v3130 = vsel %vm3125, %v3114, %v3116
    %v3131 = vsel %vm3125, %v3112, %v3114
    %v3132 = vsel %vm3125, %v3110, %v3112
    %v3133 = vsel %vm3125, %v3124, %v3110
    %s3134 = scalar_lea.vmem %s7, 6
    %v3135 = vld [vmem:[%s3134] ss:$8 sm:$0xf]
    %v3136 = vld [vmem:[%s3134] ss:$8 sm:$0xf0]
    %v3137 = vor.u32 %v3135, %v3136
    %v3139 = vlaneseq
    %v3140 = vshrl.u32 %v3139, 7
    %v3141 = vsub.s32 0, %v3140
    %v3142 = vrot.slane %v3137, %v3141
    %v3143 = vlaneseq
    %v3144 = vshrl.u32 %v3143, 7
    %v3145 = vsub.s32 1, %v3144
    %v3146 = vrot.slane %v3137, %v3145
    %v3147 = vlaneseq
    %v3148 = vshrl.u32 %v3147, 7
    %v3149 = vsub.s32 2, %v3148
    %v3150 = vrot.slane %v3137, %v3149
    %v3151 = vlaneseq
    %v3152 = vshrl.u32 %v3151, 7
    %v3153 = vsub.s32 3, %v3152
    %v3154 = vrot.slane %v3137, %v3153
    %v3155 = vlaneseq
    %v3156 = vshrl.u32 %v3155, 7
    %v3157 = vsub.s32 4, %v3156
    %v3158 = vrot.slane %v3137, %v3157
    %v3159 = vlaneseq
    %v3160 = vshrl.u32 %v3159, 7
    %v3161 = vsub.s32 5, %v3160
    %v3162 = vrot.slane %v3137, %v3161
    %v3163 = vlaneseq
    %v3164 = vshrl.u32 %v3163, 7
    %v3165 = vsub.s32 6, %v3164
    %v3166 = vrot.slane %v3137, %v3165
    %v3167 = vlaneseq
    %v3168 = vshrl.u32 %v3167, 7
    %v3169 = vsub.s32 7, %v3168
    %v3170 = vrot.slane %v3137, %v3169
    %v3179 = vmul.f32 %v3132, %v3142
    %v3180 = vmul.f32 %v3131, %v3146
    %v3181 = vmul.f32 %v3130, %v3150
    %v3182 = vmul.f32 %v3129, %v3154
    %v3183 = vmul.f32 %v3128, %v3158
    %v3184 = vmul.f32 %v3127, %v3162
    %v3185 = vmul.f32 %v3126, %v3166
    %v3186 = vmul.f32 %v3133, %v3170
    %s3187 = scalar_lea.vmem %s1, 96
    %v3188 = vld [vmem:[%s3187] sm:$0xff]
    %v3189 = vld [vmem:[%s3187 + $0x8] sm:$0x3]
    %v3191 = vsel %vm777, %v3188, 0
    %v3194 = vsel %vm777, %v3189, 0
    %v3197 = vsel %vm784, %v3179, 0
    %v3200 = vsel %vm784, %v3180, 0
    %v3203 = vsel %vm784, %v3181, 0
    %v3206 = vsel %vm784, %v3182, 0
    %v3209 = vsel %vm784, %v3183, 0
    %v3212 = vsel %vm784, %v3184, 0
    %v3215 = vsel %vm784, %v3185, 0
    %v3218 = vsel %vm784, %v3186, 0
    %3220 = vmatprep.subr.mxu0 0.0
    %3221 = vmatpush1.msra.mxu0 0.0
    %3222 = vmatprep.subr.mxu0 0.0
    %3223 = vmatpush1.msra.mxu0 0.0
    %3224 = vmatprep.subr.mxu0 0.0
    %3225 = vmatpush1.msra.mxu0 0.0
    %3226 = vmatprep.subr.mxu0 0.0
    %3227 = vmatpush1.msra.mxu0 0.0
    %3228 = vmatprep.subr.mxu0 0.0
    %3229 = vmatpush1.msra.mxu0 0.0
    %3230 = vmatprep.subr.mxu0 0.0
    %3231 = vmatpush1.msra.mxu0 0.0
    %3232 = vmatprep.subr.mxu0 0.0
    %3233 = vmatpush1.msra.mxu0 0.0
    %3234 = vmatprep.subr.mxu0 0.0
    %3235 = vmatpush1.msra.mxu0 0.0
    %3236 = vmatprep.subr.mxu0 0.0
    %3237 = vmatpush1.msra.mxu0 0.0
    %3238 = vmatprep.subr.mxu0 0.0
    %3239 = vmatpush1.msra.mxu0 0.0
    %3240 = vmatprep.subr.mxu0 0.0
    %3241 = vmatpush1.msra.mxu0 0.0
    %3242 = vmatprep.subr.mxu0 0.0
    %3243 = vmatpush1.msra.mxu0 0.0
    %3244 = vmatprep.subr.mxu0 0.0
    %3245 = vmatpush1.msra.mxu0 0.0
    %3246 = vmatprep.subr.mxu0 0.0
    %3247 = vmatpush1.msra.mxu0 0.0
    %3248 = vmatprep.subr.mxu0 0.0
    %3249 = vmatpush1.msra.mxu0 0.0
    %3250 = vmatprep.subr.mxu0 %v3200
    %3251 = vmatpush1.msra.mxu0 %v3197
    %3252 = vmatprep.subr.mxu0 0.0
    %3253 = vmatpush2.msra.mxu0 0.0
    %3254 = vmatprep.subr.mxu0 0.0
    %3255 = vmatpush2.msra.mxu0 0.0
    %3256 = vmatprep.subr.mxu0 0.0
    %3257 = vmatpush2.msra.mxu0 0.0
    %3258 = vmatprep.subr.mxu0 0.0
    %3259 = vmatpush2.msra.mxu0 0.0
    %3260 = vmatprep.subr.mxu0 0.0
    %3261 = vmatpush2.msra.mxu0 0.0
    %3262 = vmatprep.subr.mxu0 0.0
    %3263 = vmatpush2.msra.mxu0 0.0
    %3264 = vmatprep.subr.mxu0 0.0
    %3265 = vmatpush2.msra.mxu0 0.0
    %3266 = vmatprep.subr.mxu0 0.0
    %3267 = vmatpush2.msra.mxu0 0.0
    %3268 = vmatprep.subr.mxu0 0.0
    %3269 = vmatpush2.msra.mxu0 0.0
    %3270 = vmatprep.subr.mxu0 0.0
    %3271 = vmatpush2.msra.mxu0 0.0
    %3272 = vmatprep.subr.mxu0 0.0
    %3273 = vmatpush2.msra.mxu0 0.0
    %3274 = vmatprep.subr.mxu0 0.0
    %3275 = vmatpush2.msra.mxu0 0.0
    %3276 = vmatprep.subr.mxu0 0.0
    %3277 = vmatpush2.msra.mxu0 0.0
    %3278 = vmatprep.subr.mxu0 0.0
    %3279 = vmatpush2.msra.mxu0 0.0
    %3280 = vmatprep.subr.mxu0 0.0
    %3281 = vmatpush2.msra.mxu0 0.0
    %3282 = vmatprep.subr.mxu0 0.0
    %3283 = vmatpush2.msra.mxu0 0.0
    %3284 = vmatprep.mubr.f32.mxu0 0.0
    %3285 = vmatmul.mubr.f32.gmra.mxu0 %v3191
    %v3286 = vpop.f32.mrf.mxu0
    %v3287 = vadd.f32 0.0, %v3286
    %v3288 = vpop.f32.mrf.mxu0
    %v3289 = vadd.f32 0.0, %v3288
    %3290 = vmatprep.mubr.f32.mxu0 0.0
    %3291 = vmatmul.mubr.f32.gmra.mxu0 %v3194
    %v3292 = vpop.f32.mrf.mxu0
    %v3293 = vadd.f32 0.0, %v3292
    %v3294 = vpop.f32.mrf.mxu0
    %v3295 = vadd.f32 0.0, %v3294
    %3296 = vdwg.mxu0
    %3297 = vmatprep.subr.mxu0 0.0
    %3298 = vmatpush1.msra.mxu0 0.0
    %3299 = vmatprep.subr.mxu0 0.0
    %3300 = vmatpush1.msra.mxu0 0.0
    %3301 = vmatprep.subr.mxu0 0.0
    %3302 = vmatpush1.msra.mxu0 0.0
    %3303 = vmatprep.subr.mxu0 0.0
    %3304 = vmatpush1.msra.mxu0 0.0
    %3305 = vmatprep.subr.mxu0 0.0
    %3306 = vmatpush1.msra.mxu0 0.0
    %3307 = vmatprep.subr.mxu0 0.0
    %3308 = vmatpush1.msra.mxu0 0.0
    %3309 = vmatprep.subr.mxu0 0.0
    %3310 = vmatpush1.msra.mxu0 0.0
    %3311 = vmatprep.subr.mxu0 0.0
    %3312 = vmatpush1.msra.mxu0 0.0
    %3313 = vmatprep.subr.mxu0 0.0
    %3314 = vmatpush1.msra.mxu0 0.0
    %3315 = vmatprep.subr.mxu0 0.0
    %3316 = vmatpush1.msra.mxu0 0.0
    %3317 = vmatprep.subr.mxu0 0.0
    %3318 = vmatpush1.msra.mxu0 0.0
    %3319 = vmatprep.subr.mxu0 0.0
    %3320 = vmatpush1.msra.mxu0 0.0
    %3321 = vmatprep.subr.mxu0 0.0
    %3322 = vmatpush1.msra.mxu0 0.0
    %3323 = vmatprep.subr.mxu0 0.0
    %3324 = vmatpush1.msra.mxu0 0.0
    %3325 = vmatprep.subr.mxu0 0.0
    %3326 = vmatpush1.msra.mxu0 0.0
    %3327 = vmatprep.subr.mxu0 %v3206
    %3328 = vmatpush1.msra.mxu0 %v3203
    %3329 = vmatprep.subr.mxu0 0.0
    %3330 = vmatpush2.msra.mxu0 0.0
    %3331 = vmatprep.subr.mxu0 0.0
    %3332 = vmatpush2.msra.mxu0 0.0
    %3333 = vmatprep.subr.mxu0 0.0
    %3334 = vmatpush2.msra.mxu0 0.0
    %3335 = vmatprep.subr.mxu0 0.0
    %3336 = vmatpush2.msra.mxu0 0.0
    %3337 = vmatprep.subr.mxu0 0.0
    %3338 = vmatpush2.msra.mxu0 0.0
    %3339 = vmatprep.subr.mxu0 0.0
    %3340 = vmatpush2.msra.mxu0 0.0
    %3341 = vmatprep.subr.mxu0 0.0
    %3342 = vmatpush2.msra.mxu0 0.0
    %3343 = vmatprep.subr.mxu0 0.0
    %3344 = vmatpush2.msra.mxu0 0.0
    %3345 = vmatprep.subr.mxu0 0.0
    %3346 = vmatpush2.msra.mxu0 0.0
    %3347 = vmatprep.subr.mxu0 0.0
    %3348 = vmatpush2.msra.mxu0 0.0
    %3349 = vmatprep.subr.mxu0 0.0
    %3350 = vmatpush2.msra.mxu0 0.0
    %3351 = vmatprep.subr.mxu0 0.0
    %3352 = vmatpush2.msra.mxu0 0.0
    %3353 = vmatprep.subr.mxu0 0.0
    %3354 = vmatpush2.msra.mxu0 0.0
    %3355 = vmatprep.subr.mxu0 0.0
    %3356 = vmatpush2.msra.mxu0 0.0
    %3357 = vmatprep.subr.mxu0 0.0
    %3358 = vmatpush2.msra.mxu0 0.0
    %3359 = vmatprep.subr.mxu0 0.0
    %3360 = vmatpush2.msra.mxu0 0.0
    %3361 = vmatprep.mubr.f32.mxu0 0.0
    %3362 = vmatmul.mubr.f32.gmra.mxu0 %v3191
    %v3363 = vpop.f32.mrf.mxu0
    %v3364 = vadd.f32 0.0, %v3363
    %v3365 = vpop.f32.mrf.mxu0
    %v3366 = vadd.f32 0.0, %v3365
    %3367 = vmatprep.mubr.f32.mxu0 0.0
    %3368 = vmatmul.mubr.f32.gmra.mxu0 %v3194
    %v3369 = vpop.f32.mrf.mxu0
    %v3370 = vadd.f32 0.0, %v3369
    %v3371 = vpop.f32.mrf.mxu0
    %v3372 = vadd.f32 0.0, %v3371
    %3373 = vdwg.mxu0
    %3374 = vmatprep.subr.mxu0 0.0
    %3375 = vmatpush1.msra.mxu0 0.0
    %3376 = vmatprep.subr.mxu0 0.0
    %3377 = vmatpush1.msra.mxu0 0.0
    %3378 = vmatprep.subr.mxu0 0.0
    %3379 = vmatpush1.msra.mxu0 0.0
    %3380 = vmatprep.subr.mxu0 0.0
    %3381 = vmatpush1.msra.mxu0 0.0
    %3382 = vmatprep.subr.mxu0 0.0
    %3383 = vmatpush1.msra.mxu0 0.0
    %3384 = vmatprep.subr.mxu0 0.0
    %3385 = vmatpush1.msra.mxu0 0.0
    %3386 = vmatprep.subr.mxu0 0.0
    %3387 = vmatpush1.msra.mxu0 0.0
    %3388 = vmatprep.subr.mxu0 0.0
    %3389 = vmatpush1.msra.mxu0 0.0
    %3390 = vmatprep.subr.mxu0 0.0
    %3391 = vmatpush1.msra.mxu0 0.0
    %3392 = vmatprep.subr.mxu0 0.0
    %3393 = vmatpush1.msra.mxu0 0.0
    %3394 = vmatprep.subr.mxu0 0.0
    %3395 = vmatpush1.msra.mxu0 0.0
    %3396 = vmatprep.subr.mxu0 0.0
    %3397 = vmatpush1.msra.mxu0 0.0
    %3398 = vmatprep.subr.mxu0 0.0
    %3399 = vmatpush1.msra.mxu0 0.0
    %3400 = vmatprep.subr.mxu0 0.0
    %3401 = vmatpush1.msra.mxu0 0.0
    %3402 = vmatprep.subr.mxu0 0.0
    %3403 = vmatpush1.msra.mxu0 0.0
    %3404 = vmatprep.subr.mxu0 %v3212
    %3405 = vmatpush1.msra.mxu0 %v3209
    %3406 = vmatprep.subr.mxu0 0.0
    %3407 = vmatpush2.msra.mxu0 0.0
    %3408 = vmatprep.subr.mxu0 0.0
    %3409 = vmatpush2.msra.mxu0 0.0
    %3410 = vmatprep.subr.mxu0 0.0
    %3411 = vmatpush2.msra.mxu0 0.0
    %3412 = vmatprep.subr.mxu0 0.0
    %3413 = vmatpush2.msra.mxu0 0.0
    %3414 = vmatprep.subr.mxu0 0.0
    %3415 = vmatpush2.msra.mxu0 0.0
    %3416 = vmatprep.subr.mxu0 0.0
    %3417 = vmatpush2.msra.mxu0 0.0
    %3418 = vmatprep.subr.mxu0 0.0
    %3419 = vmatpush2.msra.mxu0 0.0
    %3420 = vmatprep.subr.mxu0 0.0
    %3421 = vmatpush2.msra.mxu0 0.0
    %3422 = vmatprep.subr.mxu0 0.0
    %3423 = vmatpush2.msra.mxu0 0.0
    %3424 = vmatprep.subr.mxu0 0.0
    %3425 = vmatpush2.msra.mxu0 0.0
    %3426 = vmatprep.subr.mxu0 0.0
    %3427 = vmatpush2.msra.mxu0 0.0
    %3428 = vmatprep.subr.mxu0 0.0
    %3429 = vmatpush2.msra.mxu0 0.0
    %3430 = vmatprep.subr.mxu0 0.0
    %3431 = vmatpush2.msra.mxu0 0.0
    %3432 = vmatprep.subr.mxu0 0.0
    %3433 = vmatpush2.msra.mxu0 0.0
    %3434 = vmatprep.subr.mxu0 0.0
    %3435 = vmatpush2.msra.mxu0 0.0
    %3436 = vmatprep.subr.mxu0 0.0
    %3437 = vmatpush2.msra.mxu0 0.0
    %3438 = vmatprep.mubr.f32.mxu0 0.0
    %3439 = vmatmul.mubr.f32.gmra.mxu0 %v3191
    %v3440 = vpop.f32.mrf.mxu0
    %v3441 = vadd.f32 0.0, %v3440
    %v3442 = vpop.f32.mrf.mxu0
    %v3443 = vadd.f32 0.0, %v3442
    %3444 = vmatprep.mubr.f32.mxu0 0.0
    %3445 = vmatmul.mubr.f32.gmra.mxu0 %v3194
    %v3446 = vpop.f32.mrf.mxu0
    %v3447 = vadd.f32 0.0, %v3446
    %v3448 = vpop.f32.mrf.mxu0
    %v3449 = vadd.f32 0.0, %v3448
    %3450 = vdwg.mxu0
    %3451 = vmatprep.subr.mxu0 0.0
    %3452 = vmatpush1.msra.mxu0 0.0
    %3453 = vmatprep.subr.mxu0 0.0
    %3454 = vmatpush1.msra.mxu0 0.0
    %3455 = vmatprep.subr.mxu0 0.0
    %3456 = vmatpush1.msra.mxu0 0.0
    %3457 = vmatprep.subr.mxu0 0.0
    %3458 = vmatpush1.msra.mxu0 0.0
    %3459 = vmatprep.subr.mxu0 0.0
    %3460 = vmatpush1.msra.mxu0 0.0
    %3461 = vmatprep.subr.mxu0 0.0
    %3462 = vmatpush1.msra.mxu0 0.0
    %3463 = vmatprep.subr.mxu0 0.0
    %3464 = vmatpush1.msra.mxu0 0.0
    %3465 = vmatprep.subr.mxu0 0.0
    %3466 = vmatpush1.msra.mxu0 0.0
    %3467 = vmatprep.subr.mxu0 0.0
    %3468 = vmatpush1.msra.mxu0 0.0
    %3469 = vmatprep.subr.mxu0 0.0
    %3470 = vmatpush1.msra.mxu0 0.0
    %3471 = vmatprep.subr.mxu0 0.0
    %3472 = vmatpush1.msra.mxu0 0.0
    %3473 = vmatprep.subr.mxu0 0.0
    %3474 = vmatpush1.msra.mxu0 0.0
    %3475 = vmatprep.subr.mxu0 0.0
    %3476 = vmatpush1.msra.mxu0 0.0
    %3477 = vmatprep.subr.mxu0 0.0
    %3478 = vmatpush1.msra.mxu0 0.0
    %3479 = vmatprep.subr.mxu0 0.0
    %3480 = vmatpush1.msra.mxu0 0.0
    %3481 = vmatprep.subr.mxu0 %v3218
    %3482 = vmatpush1.msra.mxu0 %v3215
    %3483 = vmatprep.subr.mxu0 0.0
    %3484 = vmatpush2.msra.mxu0 0.0
    %3485 = vmatprep.subr.mxu0 0.0
    %3486 = vmatpush2.msra.mxu0 0.0
    %3487 = vmatprep.subr.mxu0 0.0
    %3488 = vmatpush2.msra.mxu0 0.0
    %3489 = vmatprep.subr.mxu0 0.0
    %3490 = vmatpush2.msra.mxu0 0.0
    %3491 = vmatprep.subr.mxu0 0.0
    %3492 = vmatpush2.msra.mxu0 0.0
    %3493 = vmatprep.subr.mxu0 0.0
    %3494 = vmatpush2.msra.mxu0 0.0
    %3495 = vmatprep.subr.mxu0 0.0
    %3496 = vmatpush2.msra.mxu0 0.0
    %3497 = vmatprep.subr.mxu0 0.0
    %3498 = vmatpush2.msra.mxu0 0.0
    %3499 = vmatprep.subr.mxu0 0.0
    %3500 = vmatpush2.msra.mxu0 0.0
    %3501 = vmatprep.subr.mxu0 0.0
    %3502 = vmatpush2.msra.mxu0 0.0
    %3503 = vmatprep.subr.mxu0 0.0
    %3504 = vmatpush2.msra.mxu0 0.0
    %3505 = vmatprep.subr.mxu0 0.0
    %3506 = vmatpush2.msra.mxu0 0.0
    %3507 = vmatprep.subr.mxu0 0.0
    %3508 = vmatpush2.msra.mxu0 0.0
    %3509 = vmatprep.subr.mxu0 0.0
    %3510 = vmatpush2.msra.mxu0 0.0
    %3511 = vmatprep.subr.mxu0 0.0
    %3512 = vmatpush2.msra.mxu0 0.0
    %3513 = vmatprep.subr.mxu0 0.0
    %3514 = vmatpush2.msra.mxu0 0.0
    %3515 = vmatprep.mubr.f32.mxu0 0.0
    %3516 = vmatmul.mubr.f32.gmra.mxu0 %v3191
    %v3517 = vpop.f32.mrf.mxu0
    %v3518 = vadd.f32 0.0, %v3517
    %v3519 = vpop.f32.mrf.mxu0
    %v3520 = vadd.f32 0.0, %v3519
    %3521 = vmatprep.mubr.f32.mxu0 0.0
    %3522 = vmatmul.mubr.f32.gmra.mxu0 %v3194
    %v3523 = vpop.f32.mrf.mxu0
    %v3524 = vadd.f32 0.0, %v3523
    %v3525 = vpop.f32.mrf.mxu0
    %v3526 = vadd.f32 0.0, %v3525
    %3527 = vdwg.mxu0
    %v3528 = vadd.f32 %v3093, %v3287
    %v3529 = vadd.f32 %v3094, %v3289
    %v3530 = vadd.f32 %v3095, %v3364
    %v3531 = vadd.f32 %v3096, %v3366
    %v3532 = vadd.f32 %v3097, %v3441
    %v3533 = vadd.f32 %v3098, %v3443
    %v3534 = vadd.f32 %v3099, %v3518
    %v3535 = vadd.f32 %v3100, %v3520
    %v3536 = vadd.f32 %v3101, %v3293
    %v3537 = vadd.f32 %v3102, %v3295
    %v3538 = vadd.f32 %v3103, %v3370
    %v3539 = vadd.f32 %v3104, %v3372
    %v3540 = vadd.f32 %v3105, %v3447
    %v3541 = vadd.f32 %v3106, %v3449
    %v3542 = vadd.f32 %v3107, %v3524
    %v3543 = vadd.f32 %v3108, %v3526
    %3544 = vrot.lane.b32.xlu0 %v599, 96
    %v3545 = vpop.permute.xlu0 %3544
    %3546 = vrot.lane.b32.xlu0 %v607, 96
    %v3547 = vpop.permute.xlu0 %3546
    %3548 = vrot.lane.b32.xlu0 %v600, 96
    %v3549 = vpop.permute.xlu0 %3548
    %3550 = vrot.lane.b32.xlu0 %v608, 96
    %v3551 = vpop.permute.xlu0 %3550
    %3552 = vrot.lane.b32.xlu0 %v601, 96
    %v3553 = vpop.permute.xlu0 %3552
    %3554 = vrot.lane.b32.xlu0 %v609, 96
    %v3555 = vpop.permute.xlu0 %3554
    %3556 = vrot.lane.b32.xlu0 %v602, 96
    %v3557 = vpop.permute.xlu0 %3556
    %3558 = vrot.lane.b32.xlu0 %v610, 96
    %v3559 = vpop.permute.xlu0 %3558
    %vm3560 = vcmp.lt.s32.totalorder %v632, 96
    %v3561 = vsel %vm3560, %v3557, %v3559
    %v3562 = vsel %vm3560, %v3555, %v3557
    %v3563 = vsel %vm3560, %v3553, %v3555
    %v3564 = vsel %vm3560, %v3551, %v3553
    %v3565 = vsel %vm3560, %v3549, %v3551
    %v3566 = vsel %vm3560, %v3547, %v3549
    %v3567 = vsel %vm3560, %v3545, %v3547
    %v3568 = vsel %vm3560, %v3559, %v3545
    %s3569 = scalar_lea.vmem %s7, 7
    %v3570 = vld [vmem:[%s3569] ss:$8 sm:$0xf]
    %v3571 = vld [vmem:[%s3569] ss:$8 sm:$0xf0]
    %v3572 = vor.u32 %v3570, %v3571
    %v3574 = vlaneseq
    %v3575 = vshrl.u32 %v3574, 7
    %v3576 = vsub.s32 0, %v3575
    %v3577 = vrot.slane %v3572, %v3576
    %v3578 = vlaneseq
    %v3579 = vshrl.u32 %v3578, 7
    %v3580 = vsub.s32 1, %v3579
    %v3581 = vrot.slane %v3572, %v3580
    %v3582 = vlaneseq
    %v3583 = vshrl.u32 %v3582, 7
    %v3584 = vsub.s32 2, %v3583
    %v3585 = vrot.slane %v3572, %v3584
    %v3586 = vlaneseq
    %v3587 = vshrl.u32 %v3586, 7
    %v3588 = vsub.s32 3, %v3587
    %v3589 = vrot.slane %v3572, %v3588
    %v3590 = vlaneseq
    %v3591 = vshrl.u32 %v3590, 7
    %v3592 = vsub.s32 4, %v3591
    %v3593 = vrot.slane %v3572, %v3592
    %v3594 = vlaneseq
    %v3595 = vshrl.u32 %v3594, 7
    %v3596 = vsub.s32 5, %v3595
    %v3597 = vrot.slane %v3572, %v3596
    %v3598 = vlaneseq
    %v3599 = vshrl.u32 %v3598, 7
    %v3600 = vsub.s32 6, %v3599
    %v3601 = vrot.slane %v3572, %v3600
    %v3602 = vlaneseq
    %v3603 = vshrl.u32 %v3602, 7
    %v3604 = vsub.s32 7, %v3603
    %v3605 = vrot.slane %v3572, %v3604
    %v3614 = vmul.f32 %v3567, %v3577
    %v3615 = vmul.f32 %v3566, %v3581
    %v3616 = vmul.f32 %v3565, %v3585
    %v3617 = vmul.f32 %v3564, %v3589
    %v3618 = vmul.f32 %v3563, %v3593
    %v3619 = vmul.f32 %v3562, %v3597
    %v3620 = vmul.f32 %v3561, %v3601
    %v3621 = vmul.f32 %v3568, %v3605
    %s3622 = scalar_lea.vmem %s1, 112
    %v3623 = vld [vmem:[%s3622] sm:$0xff]
    %v3624 = vld [vmem:[%s3622 + $0x8] sm:$0x3]
    %v3626 = vsel %vm777, %v3623, 0
    %v3629 = vsel %vm777, %v3624, 0
    %v3632 = vsel %vm784, %v3614, 0
    %v3635 = vsel %vm784, %v3615, 0
    %v3638 = vsel %vm784, %v3616, 0
    %v3641 = vsel %vm784, %v3617, 0
    %v3644 = vsel %vm784, %v3618, 0
    %v3647 = vsel %vm784, %v3619, 0
    %v3650 = vsel %vm784, %v3620, 0
    %v3653 = vsel %vm784, %v3621, 0
    %3655 = vmatprep.subr.mxu0 0.0
    %3656 = vmatpush1.msra.mxu0 0.0
    %3657 = vmatprep.subr.mxu0 0.0
    %3658 = vmatpush1.msra.mxu0 0.0
    %3659 = vmatprep.subr.mxu0 0.0
    %3660 = vmatpush1.msra.mxu0 0.0
    %3661 = vmatprep.subr.mxu0 0.0
    %3662 = vmatpush1.msra.mxu0 0.0
    %3663 = vmatprep.subr.mxu0 0.0
    %3664 = vmatpush1.msra.mxu0 0.0
    %3665 = vmatprep.subr.mxu0 0.0
    %3666 = vmatpush1.msra.mxu0 0.0
    %3667 = vmatprep.subr.mxu0 0.0
    %3668 = vmatpush1.msra.mxu0 0.0
    %3669 = vmatprep.subr.mxu0 0.0
    %3670 = vmatpush1.msra.mxu0 0.0
    %3671 = vmatprep.subr.mxu0 0.0
    %3672 = vmatpush1.msra.mxu0 0.0
    %3673 = vmatprep.subr.mxu0 0.0
    %3674 = vmatpush1.msra.mxu0 0.0
    %3675 = vmatprep.subr.mxu0 0.0
    %3676 = vmatpush1.msra.mxu0 0.0
    %3677 = vmatprep.subr.mxu0 0.0
    %3678 = vmatpush1.msra.mxu0 0.0
    %3679 = vmatprep.subr.mxu0 0.0
    %3680 = vmatpush1.msra.mxu0 0.0
    %3681 = vmatprep.subr.mxu0 0.0
    %3682 = vmatpush1.msra.mxu0 0.0
    %3683 = vmatprep.subr.mxu0 0.0
    %3684 = vmatpush1.msra.mxu0 0.0
    %3685 = vmatprep.subr.mxu0 %v3635
    %3686 = vmatpush1.msra.mxu0 %v3632
    %3687 = vmatprep.subr.mxu0 0.0
    %3688 = vmatpush2.msra.mxu0 0.0
    %3689 = vmatprep.subr.mxu0 0.0
    %3690 = vmatpush2.msra.mxu0 0.0
    %3691 = vmatprep.subr.mxu0 0.0
    %3692 = vmatpush2.msra.mxu0 0.0
    %3693 = vmatprep.subr.mxu0 0.0
    %3694 = vmatpush2.msra.mxu0 0.0
    %3695 = vmatprep.subr.mxu0 0.0
    %3696 = vmatpush2.msra.mxu0 0.0
    %3697 = vmatprep.subr.mxu0 0.0
    %3698 = vmatpush2.msra.mxu0 0.0
    %3699 = vmatprep.subr.mxu0 0.0
    %3700 = vmatpush2.msra.mxu0 0.0
    %3701 = vmatprep.subr.mxu0 0.0
    %3702 = vmatpush2.msra.mxu0 0.0
    %3703 = vmatprep.subr.mxu0 0.0
    %3704 = vmatpush2.msra.mxu0 0.0
    %3705 = vmatprep.subr.mxu0 0.0
    %3706 = vmatpush2.msra.mxu0 0.0
    %3707 = vmatprep.subr.mxu0 0.0
    %3708 = vmatpush2.msra.mxu0 0.0
    %3709 = vmatprep.subr.mxu0 0.0
    %3710 = vmatpush2.msra.mxu0 0.0
    %3711 = vmatprep.subr.mxu0 0.0
    %3712 = vmatpush2.msra.mxu0 0.0
    %3713 = vmatprep.subr.mxu0 0.0
    %3714 = vmatpush2.msra.mxu0 0.0
    %3715 = vmatprep.subr.mxu0 0.0
    %3716 = vmatpush2.msra.mxu0 0.0
    %3717 = vmatprep.subr.mxu0 0.0
    %3718 = vmatpush2.msra.mxu0 0.0
    %3719 = vmatprep.mubr.f32.mxu0 0.0
    %3720 = vmatmul.mubr.f32.gmra.mxu0 %v3626
    %v3721 = vpop.f32.mrf.mxu0
    %v3722 = vadd.f32 0.0, %v3721
    %v3723 = vpop.f32.mrf.mxu0
    %v3724 = vadd.f32 0.0, %v3723
    %3725 = vmatprep.mubr.f32.mxu0 0.0
    %3726 = vmatmul.mubr.f32.gmra.mxu0 %v3629
    %v3727 = vpop.f32.mrf.mxu0
    %v3728 = vadd.f32 0.0, %v3727
    %v3729 = vpop.f32.mrf.mxu0
    %v3730 = vadd.f32 0.0, %v3729
    %3731 = vdwg.mxu0
    %3732 = vmatprep.subr.mxu0 0.0
    %3733 = vmatpush1.msra.mxu0 0.0
    %3734 = vmatprep.subr.mxu0 0.0
    %3735 = vmatpush1.msra.mxu0 0.0
    %3736 = vmatprep.subr.mxu0 0.0
    %3737 = vmatpush1.msra.mxu0 0.0
    %3738 = vmatprep.subr.mxu0 0.0
    %3739 = vmatpush1.msra.mxu0 0.0
    %3740 = vmatprep.subr.mxu0 0.0
    %3741 = vmatpush1.msra.mxu0 0.0
    %3742 = vmatprep.subr.mxu0 0.0
    %3743 = vmatpush1.msra.mxu0 0.0
    %3744 = vmatprep.subr.mxu0 0.0
    %3745 = vmatpush1.msra.mxu0 0.0
    %3746 = vmatprep.subr.mxu0 0.0
    %3747 = vmatpush1.msra.mxu0 0.0
    %3748 = vmatprep.subr.mxu0 0.0
    %3749 = vmatpush1.msra.mxu0 0.0
    %3750 = vmatprep.subr.mxu0 0.0
    %3751 = vmatpush1.msra.mxu0 0.0
    %3752 = vmatprep.subr.mxu0 0.0
    %3753 = vmatpush1.msra.mxu0 0.0
    %3754 = vmatprep.subr.mxu0 0.0
    %3755 = vmatpush1.msra.mxu0 0.0
    %3756 = vmatprep.subr.mxu0 0.0
    %3757 = vmatpush1.msra.mxu0 0.0
    %3758 = vmatprep.subr.mxu0 0.0
    %3759 = vmatpush1.msra.mxu0 0.0
    %3760 = vmatprep.subr.mxu0 0.0
    %3761 = vmatpush1.msra.mxu0 0.0
    %3762 = vmatprep.subr.mxu0 %v3641
    %3763 = vmatpush1.msra.mxu0 %v3638
    %3764 = vmatprep.subr.mxu0 0.0
    %3765 = vmatpush2.msra.mxu0 0.0
    %3766 = vmatprep.subr.mxu0 0.0
    %3767 = vmatpush2.msra.mxu0 0.0
    %3768 = vmatprep.subr.mxu0 0.0
    %3769 = vmatpush2.msra.mxu0 0.0
    %3770 = vmatprep.subr.mxu0 0.0
    %3771 = vmatpush2.msra.mxu0 0.0
    %3772 = vmatprep.subr.mxu0 0.0
    %3773 = vmatpush2.msra.mxu0 0.0
    %3774 = vmatprep.subr.mxu0 0.0
    %3775 = vmatpush2.msra.mxu0 0.0
    %3776 = vmatprep.subr.mxu0 0.0
    %3777 = vmatpush2.msra.mxu0 0.0
    %3778 = vmatprep.subr.mxu0 0.0
    %3779 = vmatpush2.msra.mxu0 0.0
    %3780 = vmatprep.subr.mxu0 0.0
    %3781 = vmatpush2.msra.mxu0 0.0
    %3782 = vmatprep.subr.mxu0 0.0
    %3783 = vmatpush2.msra.mxu0 0.0
    %3784 = vmatprep.subr.mxu0 0.0
    %3785 = vmatpush2.msra.mxu0 0.0
    %3786 = vmatprep.subr.mxu0 0.0
    %3787 = vmatpush2.msra.mxu0 0.0
    %3788 = vmatprep.subr.mxu0 0.0
    %3789 = vmatpush2.msra.mxu0 0.0
    %3790 = vmatprep.subr.mxu0 0.0
    %3791 = vmatpush2.msra.mxu0 0.0
    %3792 = vmatprep.subr.mxu0 0.0
    %3793 = vmatpush2.msra.mxu0 0.0
    %3794 = vmatprep.subr.mxu0 0.0
    %3795 = vmatpush2.msra.mxu0 0.0
    %3796 = vmatprep.mubr.f32.mxu0 0.0
    %3797 = vmatmul.mubr.f32.gmra.mxu0 %v3626
    %v3798 = vpop.f32.mrf.mxu0
    %v3799 = vadd.f32 0.0, %v3798
    %v3800 = vpop.f32.mrf.mxu0
    %v3801 = vadd.f32 0.0, %v3800
    %3802 = vmatprep.mubr.f32.mxu0 0.0
    %3803 = vmatmul.mubr.f32.gmra.mxu0 %v3629
    %v3804 = vpop.f32.mrf.mxu0
    %v3805 = vadd.f32 0.0, %v3804
    %v3806 = vpop.f32.mrf.mxu0
    %v3807 = vadd.f32 0.0, %v3806
    %3808 = vdwg.mxu0
    %3809 = vmatprep.subr.mxu0 0.0
    %3810 = vmatpush1.msra.mxu0 0.0
    %3811 = vmatprep.subr.mxu0 0.0
    %3812 = vmatpush1.msra.mxu0 0.0
    %3813 = vmatprep.subr.mxu0 0.0
    %3814 = vmatpush1.msra.mxu0 0.0
    %3815 = vmatprep.subr.mxu0 0.0
    %3816 = vmatpush1.msra.mxu0 0.0
    %3817 = vmatprep.subr.mxu0 0.0
    %3818 = vmatpush1.msra.mxu0 0.0
    %3819 = vmatprep.subr.mxu0 0.0
    %3820 = vmatpush1.msra.mxu0 0.0
    %3821 = vmatprep.subr.mxu0 0.0
    %3822 = vmatpush1.msra.mxu0 0.0
    %3823 = vmatprep.subr.mxu0 0.0
    %3824 = vmatpush1.msra.mxu0 0.0
    %3825 = vmatprep.subr.mxu0 0.0
    %3826 = vmatpush1.msra.mxu0 0.0
    %3827 = vmatprep.subr.mxu0 0.0
    %3828 = vmatpush1.msra.mxu0 0.0
    %3829 = vmatprep.subr.mxu0 0.0
    %3830 = vmatpush1.msra.mxu0 0.0
    %3831 = vmatprep.subr.mxu0 0.0
    %3832 = vmatpush1.msra.mxu0 0.0
    %3833 = vmatprep.subr.mxu0 0.0
    %3834 = vmatpush1.msra.mxu0 0.0
    %3835 = vmatprep.subr.mxu0 0.0
    %3836 = vmatpush1.msra.mxu0 0.0
    %3837 = vmatprep.subr.mxu0 0.0
    %3838 = vmatpush1.msra.mxu0 0.0
    %3839 = vmatprep.subr.mxu0 %v3647
    %3840 = vmatpush1.msra.mxu0 %v3644
    %3841 = vmatprep.subr.mxu0 0.0
    %3842 = vmatpush2.msra.mxu0 0.0
    %3843 = vmatprep.subr.mxu0 0.0
    %3844 = vmatpush2.msra.mxu0 0.0
    %3845 = vmatprep.subr.mxu0 0.0
    %3846 = vmatpush2.msra.mxu0 0.0
    %3847 = vmatprep.subr.mxu0 0.0
    %3848 = vmatpush2.msra.mxu0 0.0
    %3849 = vmatprep.subr.mxu0 0.0
    %3850 = vmatpush2.msra.mxu0 0.0
    %3851 = vmatprep.subr.mxu0 0.0
    %3852 = vmatpush2.msra.mxu0 0.0
    %3853 = vmatprep.subr.mxu0 0.0
    %3854 = vmatpush2.msra.mxu0 0.0
    %3855 = vmatprep.subr.mxu0 0.0
    %3856 = vmatpush2.msra.mxu0 0.0
    %3857 = vmatprep.subr.mxu0 0.0
    %3858 = vmatpush2.msra.mxu0 0.0
    %3859 = vmatprep.subr.mxu0 0.0
    %3860 = vmatpush2.msra.mxu0 0.0
    %3861 = vmatprep.subr.mxu0 0.0
    %3862 = vmatpush2.msra.mxu0 0.0
    %3863 = vmatprep.subr.mxu0 0.0
    %3864 = vmatpush2.msra.mxu0 0.0
    %3865 = vmatprep.subr.mxu0 0.0
    %3866 = vmatpush2.msra.mxu0 0.0
    %3867 = vmatprep.subr.mxu0 0.0
    %3868 = vmatpush2.msra.mxu0 0.0
    %3869 = vmatprep.subr.mxu0 0.0
    %3870 = vmatpush2.msra.mxu0 0.0
    %3871 = vmatprep.subr.mxu0 0.0
    %3872 = vmatpush2.msra.mxu0 0.0
    %3873 = vmatprep.mubr.f32.mxu0 0.0
    %3874 = vmatmul.mubr.f32.gmra.mxu0 %v3626
    %v3875 = vpop.f32.mrf.mxu0
    %v3876 = vadd.f32 0.0, %v3875
    %v3877 = vpop.f32.mrf.mxu0
    %v3878 = vadd.f32 0.0, %v3877
    %3879 = vmatprep.mubr.f32.mxu0 0.0
    %3880 = vmatmul.mubr.f32.gmra.mxu0 %v3629
    %v3881 = vpop.f32.mrf.mxu0
    %v3882 = vadd.f32 0.0, %v3881
    %v3883 = vpop.f32.mrf.mxu0
    %v3884 = vadd.f32 0.0, %v3883
    %3885 = vdwg.mxu0
    %3886 = vmatprep.subr.mxu0 0.0
    %3887 = vmatpush1.msra.mxu0 0.0
    %3888 = vmatprep.subr.mxu0 0.0
    %3889 = vmatpush1.msra.mxu0 0.0
    %3890 = vmatprep.subr.mxu0 0.0
    %3891 = vmatpush1.msra.mxu0 0.0
    %3892 = vmatprep.subr.mxu0 0.0
    %3893 = vmatpush1.msra.mxu0 0.0
    %3894 = vmatprep.subr.mxu0 0.0
    %3895 = vmatpush1.msra.mxu0 0.0
    %3896 = vmatprep.subr.mxu0 0.0
    %3897 = vmatpush1.msra.mxu0 0.0
    %3898 = vmatprep.subr.mxu0 0.0
    %3899 = vmatpush1.msra.mxu0 0.0
    %3900 = vmatprep.subr.mxu0 0.0
    %3901 = vmatpush1.msra.mxu0 0.0
    %3902 = vmatprep.subr.mxu0 0.0
    %3903 = vmatpush1.msra.mxu0 0.0
    %3904 = vmatprep.subr.mxu0 0.0
    %3905 = vmatpush1.msra.mxu0 0.0
    %3906 = vmatprep.subr.mxu0 0.0
    %3907 = vmatpush1.msra.mxu0 0.0
    %3908 = vmatprep.subr.mxu0 0.0
    %3909 = vmatpush1.msra.mxu0 0.0
    %3910 = vmatprep.subr.mxu0 0.0
    %3911 = vmatpush1.msra.mxu0 0.0
    %3912 = vmatprep.subr.mxu0 0.0
    %3913 = vmatpush1.msra.mxu0 0.0
    %3914 = vmatprep.subr.mxu0 0.0
    %3915 = vmatpush1.msra.mxu0 0.0
    %3916 = vmatprep.subr.mxu0 %v3653
    %3917 = vmatpush1.msra.mxu0 %v3650
    %3918 = vmatprep.subr.mxu0 0.0
    %3919 = vmatpush2.msra.mxu0 0.0
    %3920 = vmatprep.subr.mxu0 0.0
    %3921 = vmatpush2.msra.mxu0 0.0
    %3922 = vmatprep.subr.mxu0 0.0
    %3923 = vmatpush2.msra.mxu0 0.0
    %3924 = vmatprep.subr.mxu0 0.0
    %3925 = vmatpush2.msra.mxu0 0.0
    %3926 = vmatprep.subr.mxu0 0.0
    %3927 = vmatpush2.msra.mxu0 0.0
    %3928 = vmatprep.subr.mxu0 0.0
    %3929 = vmatpush2.msra.mxu0 0.0
    %3930 = vmatprep.subr.mxu0 0.0
    %3931 = vmatpush2.msra.mxu0 0.0
    %3932 = vmatprep.subr.mxu0 0.0
    %3933 = vmatpush2.msra.mxu0 0.0
    %3934 = vmatprep.subr.mxu0 0.0
    %3935 = vmatpush2.msra.mxu0 0.0
    %3936 = vmatprep.subr.mxu0 0.0
    %3937 = vmatpush2.msra.mxu0 0.0
    %3938 = vmatprep.subr.mxu0 0.0
    %3939 = vmatpush2.msra.mxu0 0.0
    %3940 = vmatprep.subr.mxu0 0.0
    %3941 = vmatpush2.msra.mxu0 0.0
    %3942 = vmatprep.subr.mxu0 0.0
    %3943 = vmatpush2.msra.mxu0 0.0
    %3944 = vmatprep.subr.mxu0 0.0
    %3945 = vmatpush2.msra.mxu0 0.0
    %3946 = vmatprep.subr.mxu0 0.0
    %3947 = vmatpush2.msra.mxu0 0.0
    %3948 = vmatprep.subr.mxu0 0.0
    %3949 = vmatpush2.msra.mxu0 0.0
    %3950 = vmatprep.mubr.f32.mxu0 0.0
    %3951 = vmatmul.mubr.f32.gmra.mxu0 %v3626
    %v3952 = vpop.f32.mrf.mxu0
    %v3953 = vadd.f32 0.0, %v3952
    %v3954 = vpop.f32.mrf.mxu0
    %v3955 = vadd.f32 0.0, %v3954
    %3956 = vmatprep.mubr.f32.mxu0 0.0
    %3957 = vmatmul.mubr.f32.gmra.mxu0 %v3629
    %v3958 = vpop.f32.mrf.mxu0
    %v3959 = vadd.f32 0.0, %v3958
    %v3960 = vpop.f32.mrf.mxu0
    %v3961 = vadd.f32 0.0, %v3960
    %3962 = vdwg.mxu0
    %v3963 = vadd.f32 %v3528, %v3722
    %v3964 = vadd.f32 %v3529, %v3724
    %v3965 = vadd.f32 %v3530, %v3799
    %v3966 = vadd.f32 %v3531, %v3801
    %v3967 = vadd.f32 %v3532, %v3876
    %v3968 = vadd.f32 %v3533, %v3878
    %v3969 = vadd.f32 %v3534, %v3953
    %v3970 = vadd.f32 %v3535, %v3955
    %v3971 = vadd.f32 %v3536, %v3728
    %v3972 = vadd.f32 %v3537, %v3730
    %v3973 = vadd.f32 %v3538, %v3805
    %v3974 = vadd.f32 %v3539, %v3807
    %v3975 = vadd.f32 %v3540, %v3882
    %v3976 = vadd.f32 %v3541, %v3884
    %v3977 = vadd.f32 %v3542, %v3959
    %v3978 = vadd.f32 %v3543, %v3961
    %3979 = vrot.lane.b32.xlu0 %v599, 95
    %v3980 = vpop.permute.xlu0 %3979
    %3981 = vrot.lane.b32.xlu0 %v607, 95
    %v3982 = vpop.permute.xlu0 %3981
    %3983 = vrot.lane.b32.xlu0 %v600, 95
    %v3984 = vpop.permute.xlu0 %3983
    %3985 = vrot.lane.b32.xlu0 %v608, 95
    %v3986 = vpop.permute.xlu0 %3985
    %3987 = vrot.lane.b32.xlu0 %v601, 95
    %v3988 = vpop.permute.xlu0 %3987
    %3989 = vrot.lane.b32.xlu0 %v609, 95
    %v3990 = vpop.permute.xlu0 %3989
    %3991 = vrot.lane.b32.xlu0 %v602, 95
    %v3992 = vpop.permute.xlu0 %3991
    %3993 = vrot.lane.b32.xlu0 %v610, 95
    %v3994 = vpop.permute.xlu0 %3993
    %vm3995 = vcmp.lt.s32.totalorder %v632, 95
    %v3996 = vsel %vm3995, %v3992, %v3994
    %v3997 = vsel %vm3995, %v3990, %v3992
    %v3998 = vsel %vm3995, %v3988, %v3990
    %v3999 = vsel %vm3995, %v3986, %v3988
    %v4000 = vsel %vm3995, %v3984, %v3986
    %v4001 = vsel %vm3995, %v3982, %v3984
    %v4002 = vsel %vm3995, %v3980, %v3982
    %v4003 = vsel %vm3995, %v3994, %v3980
    %s4004 = scalar_lea.vmem %s7, 64
    %v4005 = vld [vmem:[%s4004] ss:$8 sm:$0xf]
    %v4006 = vld [vmem:[%s4004] ss:$8 sm:$0xf0]
    %v4007 = vor.u32 %v4005, %v4006
    %v4009 = vlaneseq
    %v4010 = vshrl.u32 %v4009, 7
    %v4011 = vsub.s32 0, %v4010
    %v4012 = vrot.slane %v4007, %v4011
    %v4013 = vlaneseq
    %v4014 = vshrl.u32 %v4013, 7
    %v4015 = vsub.s32 1, %v4014
    %v4016 = vrot.slane %v4007, %v4015
    %v4017 = vlaneseq
    %v4018 = vshrl.u32 %v4017, 7
    %v4019 = vsub.s32 2, %v4018
    %v4020 = vrot.slane %v4007, %v4019
    %v4021 = vlaneseq
    %v4022 = vshrl.u32 %v4021, 7
    %v4023 = vsub.s32 3, %v4022
    %v4024 = vrot.slane %v4007, %v4023
    %v4025 = vlaneseq
    %v4026 = vshrl.u32 %v4025, 7
    %v4027 = vsub.s32 4, %v4026
    %v4028 = vrot.slane %v4007, %v4027
    %v4029 = vlaneseq
    %v4030 = vshrl.u32 %v4029, 7
    %v4031 = vsub.s32 5, %v4030
    %v4032 = vrot.slane %v4007, %v4031
    %v4033 = vlaneseq
    %v4034 = vshrl.u32 %v4033, 7
    %v4035 = vsub.s32 6, %v4034
    %v4036 = vrot.slane %v4007, %v4035
    %v4037 = vlaneseq
    %v4038 = vshrl.u32 %v4037, 7
    %v4039 = vsub.s32 7, %v4038
    %v4040 = vrot.slane %v4007, %v4039
    %v4049 = vmul.f32 %v4002, %v4012
    %v4050 = vmul.f32 %v4001, %v4016
    %v4051 = vmul.f32 %v4000, %v4020
    %v4052 = vmul.f32 %v3999, %v4024
    %v4053 = vmul.f32 %v3998, %v4028
    %v4054 = vmul.f32 %v3997, %v4032
    %v4055 = vmul.f32 %v3996, %v4036
    %v4056 = vmul.f32 %v4003, %v4040
    %s4057 = scalar_lea.vmem %s1, 128
    %v4058 = vld [vmem:[%s4057] sm:$0xff]
    %v4059 = vld [vmem:[%s4057 + $0x8] sm:$0x3]
    %v4061 = vsel %vm777, %v4058, 0
    %v4064 = vsel %vm777, %v4059, 0
    %v4067 = vsel %vm784, %v4049, 0
    %v4070 = vsel %vm784, %v4050, 0
    %v4073 = vsel %vm784, %v4051, 0
    %v4076 = vsel %vm784, %v4052, 0
    %v4079 = vsel %vm784, %v4053, 0
    %v4082 = vsel %vm784, %v4054, 0
    %v4085 = vsel %vm784, %v4055, 0
    %v4088 = vsel %vm784, %v4056, 0
    %4090 = vmatprep.subr.mxu0 0.0
    %4091 = vmatpush1.msra.mxu0 0.0
    %4092 = vmatprep.subr.mxu0 0.0
    %4093 = vmatpush1.msra.mxu0 0.0
    %4094 = vmatprep.subr.mxu0 0.0
    %4095 = vmatpush1.msra.mxu0 0.0
    %4096 = vmatprep.subr.mxu0 0.0
    %4097 = vmatpush1.msra.mxu0 0.0
    %4098 = vmatprep.subr.mxu0 0.0
    %4099 = vmatpush1.msra.mxu0 0.0
    %4100 = vmatprep.subr.mxu0 0.0
    %4101 = vmatpush1.msra.mxu0 0.0
    %4102 = vmatprep.subr.mxu0 0.0
    %4103 = vmatpush1.msra.mxu0 0.0
    %4104 = vmatprep.subr.mxu0 0.0
    %4105 = vmatpush1.msra.mxu0 0.0
    %4106 = vmatprep.subr.mxu0 0.0
    %4107 = vmatpush1.msra.mxu0 0.0
    %4108 = vmatprep.subr.mxu0 0.0
    %4109 = vmatpush1.msra.mxu0 0.0
    %4110 = vmatprep.subr.mxu0 0.0
    %4111 = vmatpush1.msra.mxu0 0.0
    %4112 = vmatprep.subr.mxu0 0.0
    %4113 = vmatpush1.msra.mxu0 0.0
    %4114 = vmatprep.subr.mxu0 0.0
    %4115 = vmatpush1.msra.mxu0 0.0
    %4116 = vmatprep.subr.mxu0 0.0
    %4117 = vmatpush1.msra.mxu0 0.0
    %4118 = vmatprep.subr.mxu0 0.0
    %4119 = vmatpush1.msra.mxu0 0.0
    %4120 = vmatprep.subr.mxu0 %v4070
    %4121 = vmatpush1.msra.mxu0 %v4067
    %4122 = vmatprep.subr.mxu0 0.0
    %4123 = vmatpush2.msra.mxu0 0.0
    %4124 = vmatprep.subr.mxu0 0.0
    %4125 = vmatpush2.msra.mxu0 0.0
    %4126 = vmatprep.subr.mxu0 0.0
    %4127 = vmatpush2.msra.mxu0 0.0
    %4128 = vmatprep.subr.mxu0 0.0
    %4129 = vmatpush2.msra.mxu0 0.0
    %4130 = vmatprep.subr.mxu0 0.0
    %4131 = vmatpush2.msra.mxu0 0.0
    %4132 = vmatprep.subr.mxu0 0.0
    %4133 = vmatpush2.msra.mxu0 0.0
    %4134 = vmatprep.subr.mxu0 0.0
    %4135 = vmatpush2.msra.mxu0 0.0
    %4136 = vmatprep.subr.mxu0 0.0
    %4137 = vmatpush2.msra.mxu0 0.0
    %4138 = vmatprep.subr.mxu0 0.0
    %4139 = vmatpush2.msra.mxu0 0.0
    %4140 = vmatprep.subr.mxu0 0.0
    %4141 = vmatpush2.msra.mxu0 0.0
    %4142 = vmatprep.subr.mxu0 0.0
    %4143 = vmatpush2.msra.mxu0 0.0
    %4144 = vmatprep.subr.mxu0 0.0
    %4145 = vmatpush2.msra.mxu0 0.0
    %4146 = vmatprep.subr.mxu0 0.0
    %4147 = vmatpush2.msra.mxu0 0.0
    %4148 = vmatprep.subr.mxu0 0.0
    %4149 = vmatpush2.msra.mxu0 0.0
    %4150 = vmatprep.subr.mxu0 0.0
    %4151 = vmatpush2.msra.mxu0 0.0
    %4152 = vmatprep.subr.mxu0 0.0
    %4153 = vmatpush2.msra.mxu0 0.0
    %4154 = vmatprep.mubr.f32.mxu0 0.0
    %4155 = vmatmul.mubr.f32.gmra.mxu0 %v4061
    %v4156 = vpop.f32.mrf.mxu0
    %v4157 = vadd.f32 0.0, %v4156
    %v4158 = vpop.f32.mrf.mxu0
    %v4159 = vadd.f32 0.0, %v4158
    %4160 = vmatprep.mubr.f32.mxu0 0.0
    %4161 = vmatmul.mubr.f32.gmra.mxu0 %v4064
    %v4162 = vpop.f32.mrf.mxu0
    %v4163 = vadd.f32 0.0, %v4162
    %v4164 = vpop.f32.mrf.mxu0
    %v4165 = vadd.f32 0.0, %v4164
    %4166 = vdwg.mxu0
    %4167 = vmatprep.subr.mxu0 0.0
    %4168 = vmatpush1.msra.mxu0 0.0
    %4169 = vmatprep.subr.mxu0 0.0
    %4170 = vmatpush1.msra.mxu0 0.0
    %4171 = vmatprep.subr.mxu0 0.0
    %4172 = vmatpush1.msra.mxu0 0.0
    %4173 = vmatprep.subr.mxu0 0.0
    %4174 = vmatpush1.msra.mxu0 0.0
    %4175 = vmatprep.subr.mxu0 0.0
    %4176 = vmatpush1.msra.mxu0 0.0
    %4177 = vmatprep.subr.mxu0 0.0
    %4178 = vmatpush1.msra.mxu0 0.0
    %4179 = vmatprep.subr.mxu0 0.0
    %4180 = vmatpush1.msra.mxu0 0.0
    %4181 = vmatprep.subr.mxu0 0.0
    %4182 = vmatpush1.msra.mxu0 0.0
    %4183 = vmatprep.subr.mxu0 0.0
    %4184 = vmatpush1.msra.mxu0 0.0
    %4185 = vmatprep.subr.mxu0 0.0
    %4186 = vmatpush1.msra.mxu0 0.0
    %4187 = vmatprep.subr.mxu0 0.0
    %4188 = vmatpush1.msra.mxu0 0.0
    %4189 = vmatprep.subr.mxu0 0.0
    %4190 = vmatpush1.msra.mxu0 0.0
    %4191 = vmatprep.subr.mxu0 0.0
    %4192 = vmatpush1.msra.mxu0 0.0
    %4193 = vmatprep.subr.mxu0 0.0
    %4194 = vmatpush1.msra.mxu0 0.0
    %4195 = vmatprep.subr.mxu0 0.0
    %4196 = vmatpush1.msra.mxu0 0.0
    %4197 = vmatprep.subr.mxu0 %v4076
    %4198 = vmatpush1.msra.mxu0 %v4073
    %4199 = vmatprep.subr.mxu0 0.0
    %4200 = vmatpush2.msra.mxu0 0.0
    %4201 = vmatprep.subr.mxu0 0.0
    %4202 = vmatpush2.msra.mxu0 0.0
    %4203 = vmatprep.subr.mxu0 0.0
    %4204 = vmatpush2.msra.mxu0 0.0
    %4205 = vmatprep.subr.mxu0 0.0
    %4206 = vmatpush2.msra.mxu0 0.0
    %4207 = vmatprep.subr.mxu0 0.0
    %4208 = vmatpush2.msra.mxu0 0.0
    %4209 = vmatprep.subr.mxu0 0.0
    %4210 = vmatpush2.msra.mxu0 0.0
    %4211 = vmatprep.subr.mxu0 0.0
    %4212 = vmatpush2.msra.mxu0 0.0
    %4213 = vmatprep.subr.mxu0 0.0
    %4214 = vmatpush2.msra.mxu0 0.0
    %4215 = vmatprep.subr.mxu0 0.0
    %4216 = vmatpush2.msra.mxu0 0.0
    %4217 = vmatprep.subr.mxu0 0.0
    %4218 = vmatpush2.msra.mxu0 0.0
    %4219 = vmatprep.subr.mxu0 0.0
    %4220 = vmatpush2.msra.mxu0 0.0
    %4221 = vmatprep.subr.mxu0 0.0
    %4222 = vmatpush2.msra.mxu0 0.0
    %4223 = vmatprep.subr.mxu0 0.0
    %4224 = vmatpush2.msra.mxu0 0.0
    %4225 = vmatprep.subr.mxu0 0.0
    %4226 = vmatpush2.msra.mxu0 0.0
    %4227 = vmatprep.subr.mxu0 0.0
    %4228 = vmatpush2.msra.mxu0 0.0
    %4229 = vmatprep.subr.mxu0 0.0
    %4230 = vmatpush2.msra.mxu0 0.0
    %4231 = vmatprep.mubr.f32.mxu0 0.0
    %4232 = vmatmul.mubr.f32.gmra.mxu0 %v4061
    %v4233 = vpop.f32.mrf.mxu0
    %v4234 = vadd.f32 0.0, %v4233
    %v4235 = vpop.f32.mrf.mxu0
    %v4236 = vadd.f32 0.0, %v4235
    %4237 = vmatprep.mubr.f32.mxu0 0.0
    %4238 = vmatmul.mubr.f32.gmra.mxu0 %v4064
    %v4239 = vpop.f32.mrf.mxu0
    %v4240 = vadd.f32 0.0, %v4239
    %v4241 = vpop.f32.mrf.mxu0
    %v4242 = vadd.f32 0.0, %v4241
    %4243 = vdwg.mxu0
    %4244 = vmatprep.subr.mxu0 0.0
    %4245 = vmatpush1.msra.mxu0 0.0
    %4246 = vmatprep.subr.mxu0 0.0
    %4247 = vmatpush1.msra.mxu0 0.0
    %4248 = vmatprep.subr.mxu0 0.0
    %4249 = vmatpush1.msra.mxu0 0.0
    %4250 = vmatprep.subr.mxu0 0.0
    %4251 = vmatpush1.msra.mxu0 0.0
    %4252 = vmatprep.subr.mxu0 0.0
    %4253 = vmatpush1.msra.mxu0 0.0
    %4254 = vmatprep.subr.mxu0 0.0
    %4255 = vmatpush1.msra.mxu0 0.0
    %4256 = vmatprep.subr.mxu0 0.0
    %4257 = vmatpush1.msra.mxu0 0.0
    %4258 = vmatprep.subr.mxu0 0.0
    %4259 = vmatpush1.msra.mxu0 0.0
    %4260 = vmatprep.subr.mxu0 0.0
    %4261 = vmatpush1.msra.mxu0 0.0
    %4262 = vmatprep.subr.mxu0 0.0
    %4263 = vmatpush1.msra.mxu0 0.0
    %4264 = vmatprep.subr.mxu0 0.0
    %4265 = vmatpush1.msra.mxu0 0.0
    %4266 = vmatprep.subr.mxu0 0.0
    %4267 = vmatpush1.msra.mxu0 0.0
    %4268 = vmatprep.subr.mxu0 0.0
    %4269 = vmatpush1.msra.mxu0 0.0
    %4270 = vmatprep.subr.mxu0 0.0
    %4271 = vmatpush1.msra.mxu0 0.0
    %4272 = vmatprep.subr.mxu0 0.0
    %4273 = vmatpush1.msra.mxu0 0.0
    %4274 = vmatprep.subr.mxu0 %v4082
    %4275 = vmatpush1.msra.mxu0 %v4079
    %4276 = vmatprep.subr.mxu0 0.0
    %4277 = vmatpush2.msra.mxu0 0.0
    %4278 = vmatprep.subr.mxu0 0.0
    %4279 = vmatpush2.msra.mxu0 0.0
    %4280 = vmatprep.subr.mxu0 0.0
    %4281 = vmatpush2.msra.mxu0 0.0
    %4282 = vmatprep.subr.mxu0 0.0
    %4283 = vmatpush2.msra.mxu0 0.0
    %4284 = vmatprep.subr.mxu0 0.0
    %4285 = vmatpush2.msra.mxu0 0.0
    %4286 = vmatprep.subr.mxu0 0.0
    %4287 = vmatpush2.msra.mxu0 0.0
    %4288 = vmatprep.subr.mxu0 0.0
    %4289 = vmatpush2.msra.mxu0 0.0
    %4290 = vmatprep.subr.mxu0 0.0
    %4291 = vmatpush2.msra.mxu0 0.0
    %4292 = vmatprep.subr.mxu0 0.0
    %4293 = vmatpush2.msra.mxu0 0.0
    %4294 = vmatprep.subr.mxu0 0.0
    %4295 = vmatpush2.msra.mxu0 0.0
    %4296 = vmatprep.subr.mxu0 0.0
    %4297 = vmatpush2.msra.mxu0 0.0
    %4298 = vmatprep.subr.mxu0 0.0
    %4299 = vmatpush2.msra.mxu0 0.0
    %4300 = vmatprep.subr.mxu0 0.0
    %4301 = vmatpush2.msra.mxu0 0.0
    %4302 = vmatprep.subr.mxu0 0.0
    %4303 = vmatpush2.msra.mxu0 0.0
    %4304 = vmatprep.subr.mxu0 0.0
    %4305 = vmatpush2.msra.mxu0 0.0
    %4306 = vmatprep.subr.mxu0 0.0
    %4307 = vmatpush2.msra.mxu0 0.0
    %4308 = vmatprep.mubr.f32.mxu0 0.0
    %4309 = vmatmul.mubr.f32.gmra.mxu0 %v4061
    %v4310 = vpop.f32.mrf.mxu0
    %v4311 = vadd.f32 0.0, %v4310
    %v4312 = vpop.f32.mrf.mxu0
    %v4313 = vadd.f32 0.0, %v4312
    %4314 = vmatprep.mubr.f32.mxu0 0.0
    %4315 = vmatmul.mubr.f32.gmra.mxu0 %v4064
    %v4316 = vpop.f32.mrf.mxu0
    %v4317 = vadd.f32 0.0, %v4316
    %v4318 = vpop.f32.mrf.mxu0
    %v4319 = vadd.f32 0.0, %v4318
    %4320 = vdwg.mxu0
    %4321 = vmatprep.subr.mxu0 0.0
    %4322 = vmatpush1.msra.mxu0 0.0
    %4323 = vmatprep.subr.mxu0 0.0
    %4324 = vmatpush1.msra.mxu0 0.0
    %4325 = vmatprep.subr.mxu0 0.0
    %4326 = vmatpush1.msra.mxu0 0.0
    %4327 = vmatprep.subr.mxu0 0.0
    %4328 = vmatpush1.msra.mxu0 0.0
    %4329 = vmatprep.subr.mxu0 0.0
    %4330 = vmatpush1.msra.mxu0 0.0
    %4331 = vmatprep.subr.mxu0 0.0
    %4332 = vmatpush1.msra.mxu0 0.0
    %4333 = vmatprep.subr.mxu0 0.0
    %4334 = vmatpush1.msra.mxu0 0.0
    %4335 = vmatprep.subr.mxu0 0.0
    %4336 = vmatpush1.msra.mxu0 0.0
    %4337 = vmatprep.subr.mxu0 0.0
    %4338 = vmatpush1.msra.mxu0 0.0
    %4339 = vmatprep.subr.mxu0 0.0
    %4340 = vmatpush1.msra.mxu0 0.0
    %4341 = vmatprep.subr.mxu0 0.0
    %4342 = vmatpush1.msra.mxu0 0.0
    %4343 = vmatprep.subr.mxu0 0.0
    %4344 = vmatpush1.msra.mxu0 0.0
    %4345 = vmatprep.subr.mxu0 0.0
    %4346 = vmatpush1.msra.mxu0 0.0
    %4347 = vmatprep.subr.mxu0 0.0
    %4348 = vmatpush1.msra.mxu0 0.0
    %4349 = vmatprep.subr.mxu0 0.0
    %4350 = vmatpush1.msra.mxu0 0.0
    %4351 = vmatprep.subr.mxu0 %v4088
    %4352 = vmatpush1.msra.mxu0 %v4085
    %4353 = vmatprep.subr.mxu0 0.0
    %4354 = vmatpush2.msra.mxu0 0.0
    %4355 = vmatprep.subr.mxu0 0.0
    %4356 = vmatpush2.msra.mxu0 0.0
    %4357 = vmatprep.subr.mxu0 0.0
    %4358 = vmatpush2.msra.mxu0 0.0
    %4359 = vmatprep.subr.mxu0 0.0
    %4360 = vmatpush2.msra.mxu0 0.0
    %4361 = vmatprep.subr.mxu0 0.0
    %4362 = vmatpush2.msra.mxu0 0.0
    %4363 = vmatprep.subr.mxu0 0.0
    %4364 = vmatpush2.msra.mxu0 0.0
    %4365 = vmatprep.subr.mxu0 0.0
    %4366 = vmatpush2.msra.mxu0 0.0
    %4367 = vmatprep.subr.mxu0 0.0
    %4368 = vmatpush2.msra.mxu0 0.0
    %4369 = vmatprep.subr.mxu0 0.0
    %4370 = vmatpush2.msra.mxu0 0.0
    %4371 = vmatprep.subr.mxu0 0.0
    %4372 = vmatpush2.msra.mxu0 0.0
    %4373 = vmatprep.subr.mxu0 0.0
    %4374 = vmatpush2.msra.mxu0 0.0
    %4375 = vmatprep.subr.mxu0 0.0
    %4376 = vmatpush2.msra.mxu0 0.0
    %4377 = vmatprep.subr.mxu0 0.0
    %4378 = vmatpush2.msra.mxu0 0.0
    %4379 = vmatprep.subr.mxu0 0.0
    %4380 = vmatpush2.msra.mxu0 0.0
    %4381 = vmatprep.subr.mxu0 0.0
    %4382 = vmatpush2.msra.mxu0 0.0
    %4383 = vmatprep.subr.mxu0 0.0
    %4384 = vmatpush2.msra.mxu0 0.0
    %4385 = vmatprep.mubr.f32.mxu0 0.0
    %4386 = vmatmul.mubr.f32.gmra.mxu0 %v4061
    %v4387 = vpop.f32.mrf.mxu0
    %v4388 = vadd.f32 0.0, %v4387
    %v4389 = vpop.f32.mrf.mxu0
    %v4390 = vadd.f32 0.0, %v4389
    %4391 = vmatprep.mubr.f32.mxu0 0.0
    %4392 = vmatmul.mubr.f32.gmra.mxu0 %v4064
    %v4393 = vpop.f32.mrf.mxu0
    %v4394 = vadd.f32 0.0, %v4393
    %v4395 = vpop.f32.mrf.mxu0
    %v4396 = vadd.f32 0.0, %v4395
    %4397 = vdwg.mxu0
    %v4398 = vadd.f32 %v3963, %v4157
    %v4399 = vadd.f32 %v3964, %v4159
    %v4400 = vadd.f32 %v3965, %v4234
    %v4401 = vadd.f32 %v3966, %v4236
    %v4402 = vadd.f32 %v3967, %v4311
    %v4403 = vadd.f32 %v3968, %v4313
    %v4404 = vadd.f32 %v3969, %v4388
    %v4405 = vadd.f32 %v3970, %v4390
    %v4406 = vadd.f32 %v3971, %v4163
    %v4407 = vadd.f32 %v3972, %v4165
    %v4408 = vadd.f32 %v3973, %v4240
    %v4409 = vadd.f32 %v3974, %v4242
    %v4410 = vadd.f32 %v3975, %v4317
    %v4411 = vadd.f32 %v3976, %v4319
    %v4412 = vadd.f32 %v3977, %v4394
    %v4413 = vadd.f32 %v3978, %v4396
    %v4414 = vadd.f32 %v4398, %v4399
    %v4415 = vadd.f32 %v4414, %v4400
    %v4416 = vadd.f32 %v4415, %v4401
    %v4417 = vadd.f32 %v4416, %v4402
    %v4418 = vadd.f32 %v4417, %v4403
    %v4419 = vadd.f32 %v4418, %v4404
    %v4420 = vadd.f32 %v4419, %v4405
    %4421 = vadd.xlane.f32.xlu0 %v4420
    %v4422 = vpop.xlane.xlu0 %4421
    %vm4423 = vcmask 1041408
    %v4424 = vsel %vm4423, %v4406, 0.0
    %v4425 = vsel %vm4423, %v4407, 0.0
    %v4426 = vadd.f32 %v4424, %v4425
    %v4427 = vsel %vm4423, %v4408, 0.0
    %v4428 = vadd.f32 %v4426, %v4427
    %v4429 = vsel %vm4423, %v4409, 0.0
    %v4430 = vadd.f32 %v4428, %v4429
    %v4431 = vsel %vm4423, %v4410, 0.0
    %v4432 = vadd.f32 %v4430, %v4431
    %v4433 = vsel %vm4423, %v4411, 0.0
    %v4434 = vadd.f32 %v4432, %v4433
    %v4435 = vsel %vm4423, %v4412, 0.0
    %v4436 = vadd.f32 %v4434, %v4435
    %v4437 = vsel %vm4423, %v4413, 0.0
    %v4438 = vadd.f32 %v4436, %v4437
    %4439 = vadd.xlane.f32.xlu0 %v4438
    %v4440 = vpop.xlane.xlu0 %4439
    %v4441 = vmul.f32 %v4398, %v4398
    %v4442 = vmul.f32 %v4399, %v4399
    %v4443 = vmul.f32 %v4400, %v4400
    %v4444 = vmul.f32 %v4401, %v4401
    %v4445 = vmul.f32 %v4402, %v4402
    %v4446 = vmul.f32 %v4403, %v4403
    %v4447 = vmul.f32 %v4404, %v4404
    %v4448 = vmul.f32 %v4405, %v4405
    %v4449 = vmul.f32 %v4406, %v4406
    %v4450 = vmul.f32 %v4407, %v4407
    %v4451 = vmul.f32 %v4408, %v4408
    %v4452 = vmul.f32 %v4409, %v4409
    %v4453 = vmul.f32 %v4410, %v4410
    %v4454 = vmul.f32 %v4411, %v4411
    %v4455 = vmul.f32 %v4412, %v4412
    %v4456 = vmul.f32 %v4413, %v4413
    %v4457 = vadd.f32 %v4441, %v4442
    %v4458 = vadd.f32 %v4457, %v4443
    %v4459 = vadd.f32 %v4458, %v4444
    %v4460 = vadd.f32 %v4459, %v4445
    %v4461 = vadd.f32 %v4460, %v4446
    %v4462 = vadd.f32 %v4461, %v4447
    %v4463 = vadd.f32 %v4462, %v4448
    %4464 = vadd.xlane.f32.xlu0 %v4463
    %v4465 = vpop.xlane.xlu0 %4464
    %v4466 = vsel %vm4423, %v4449, 0.0
    %v4467 = vsel %vm4423, %v4450, 0.0
    %v4468 = vadd.f32 %v4466, %v4467
    %v4469 = vsel %vm4423, %v4451, 0.0
    %v4470 = vadd.f32 %v4468, %v4469
    %v4471 = vsel %vm4423, %v4452, 0.0
    %v4472 = vadd.f32 %v4470, %v4471
    %v4473 = vsel %vm4423, %v4453, 0.0
    %v4474 = vadd.f32 %v4472, %v4473
    %v4475 = vsel %vm4423, %v4454, 0.0
    %v4476 = vadd.f32 %v4474, %v4475
    %v4477 = vsel %vm4423, %v4455, 0.0
    %v4478 = vadd.f32 %v4476, %v4477
    %v4479 = vsel %vm4423, %v4456, 0.0
    %v4480 = vadd.f32 %v4478, %v4479
    %4481 = vadd.xlane.f32.xlu0 %v4480
    %v4482 = vpop.xlane.xlu0 %4481
    %v4483 = vmul.f32 %v4422, 0.0009765625
    %v4484 = vmul.f32 %v4440, 0.0009765625
    %v4485 = vmul.f32 %v4465, 0.0009765625
    %v4486 = vmul.f32 %v4482, 0.0009765625
    %v4487 = vmul.f32 %v4483, %v4483
    %v4488 = vmul.f32 %v4484, %v4484
    %v4489 = vsub.f32 %v4485, %v4487
    %v4490 = vsub.f32 %v4486, %v4488
    %v4491 = vmax.f32 %v4489, 0.0
    %v4492 = vmax.f32 %v4490, 0.0
    %v4493 = vsub.f32 %v4398, %v4483
    %v4494 = vsub.f32 %v4399, %v4483
    %v4495 = vsub.f32 %v4400, %v4483
    %v4496 = vsub.f32 %v4401, %v4483
    %v4497 = vsub.f32 %v4402, %v4483
    %v4498 = vsub.f32 %v4403, %v4483
    %v4499 = vsub.f32 %v4404, %v4483
    %v4500 = vsub.f32 %v4405, %v4483
    %v4501 = vsub.f32 %v4406, %v4484
    %v4502 = vsub.f32 %v4407, %v4484
    %v4503 = vsub.f32 %v4408, %v4484
    %v4504 = vsub.f32 %v4409, %v4484
    %v4505 = vsub.f32 %v4410, %v4484
    %v4506 = vsub.f32 %v4411, %v4484
    %v4507 = vsub.f32 %v4412, %v4484
    %v4508 = vsub.f32 %v4413, %v4484
    %v4509 = vadd.f32 %v4491, 1e-05
    %v4510 = vadd.f32 %v4492, 1e-05
    %v4511 = vrsqrt.pop %v4509
    %v4512 = vrsqrt.pop %v4510
    %v4513 = vld [vmem:[%s2] sm:$0xff]
    %v4514 = vld [vmem:[%s2 + $0x8] sm:$0x3]
    %v4515 = vmul.f32 %v4511, %v4513
    %v4516 = vmul.f32 %v4512, %v4514
    %4518 = vset.pattern.permute.xlu0 0
    %4519 = vperm.xlu0 %4518, %v4515
    %v4520 = vpop.permute.xlu0 %4519
    %4523 = vset.pattern.permute.xlu0 0
    %4524 = vperm.xlu0 %4523, %v4516
    %v4525 = vpop.permute.xlu0 %4524
    %v4527 = vmul.f32 %v4493, %v4520
    %v4528 = vmul.f32 %v4494, %v4520
    %v4529 = vmul.f32 %v4495, %v4520
    %v4530 = vmul.f32 %v4496, %v4520
    %v4531 = vmul.f32 %v4497, %v4520
    %v4532 = vmul.f32 %v4498, %v4520
    %v4533 = vmul.f32 %v4499, %v4520
    %v4534 = vmul.f32 %v4500, %v4520
    %v4535 = vmul.f32 %v4501, %v4525
    %v4536 = vmul.f32 %v4502, %v4525
    %v4537 = vmul.f32 %v4503, %v4525
    %v4538 = vmul.f32 %v4504, %v4525
    %v4539 = vmul.f32 %v4505, %v4525
    %v4540 = vmul.f32 %v4506, %v4525
    %v4541 = vmul.f32 %v4507, %v4525
    %v4542 = vmul.f32 %v4508, %v4525
    %v4543 = vld [vmem:[%s3] sm:$0xff]
    %v4544 = vld [vmem:[%s3 + $0x8] sm:$0x3]
    %4546 = vset.pattern.permute.xlu0 0
    %4547 = vperm.xlu0 %4546, %v4543
    %v4548 = vpop.permute.xlu0 %4547
    %4551 = vset.pattern.permute.xlu0 0
    %4552 = vperm.xlu0 %4551, %v4544
    %v4553 = vpop.permute.xlu0 %4552
    %v4555 = vadd.f32 %v4527, %v4548
    %v4556 = vadd.f32 %v4528, %v4548
    %v4557 = vadd.f32 %v4529, %v4548
    %v4558 = vadd.f32 %v4530, %v4548
    %v4559 = vadd.f32 %v4531, %v4548
    %v4560 = vadd.f32 %v4532, %v4548
    %v4561 = vadd.f32 %v4533, %v4548
    %v4562 = vadd.f32 %v4534, %v4548
    %v4563 = vadd.f32 %v4535, %v4553
    %v4564 = vadd.f32 %v4536, %v4553
    %v4565 = vadd.f32 %v4537, %v4553
    %v4566 = vadd.f32 %v4538, %v4553
    %v4567 = vadd.f32 %v4539, %v4553
    %v4568 = vadd.f32 %v4540, %v4553
    %v4569 = vadd.f32 %v4541, %v4553
    %v4570 = vadd.f32 %v4542, %v4553
    %v4571 = vmax.f32 %v4555, 0.0
    %v4572 = vmax.f32 %v4556, 0.0
    %v4573 = vmax.f32 %v4557, 0.0
    %v4574 = vmax.f32 %v4558, 0.0
    %v4575 = vmax.f32 %v4559, 0.0
    %v4576 = vmax.f32 %v4560, 0.0
    %v4577 = vmax.f32 %v4561, 0.0
    %v4578 = vmax.f32 %v4562, 0.0
    %v4579 = vmax.f32 %v4563, 0.0
    %v4580 = vmax.f32 %v4564, 0.0
    %v4581 = vmax.f32 %v4565, 0.0
    %v4582 = vmax.f32 %v4566, 0.0
    %v4583 = vmax.f32 %v4567, 0.0
    %v4584 = vmax.f32 %v4568, 0.0
    %v4585 = vmax.f32 %v4569, 0.0
    %v4586 = vmax.f32 %v4570, 0.0
    %4587 = vrot.lane.b32.xlu0 %v4571, 127
    %v4588 = vpop.permute.xlu0 %4587
    %4589 = vrot.lane.b32.xlu0 %v4579, 127
    %v4590 = vpop.permute.xlu0 %4589
    %4591 = vrot.lane.b32.xlu0 %v4572, 127
    %v4592 = vpop.permute.xlu0 %4591
    %4593 = vrot.lane.b32.xlu0 %v4580, 127
    %v4594 = vpop.permute.xlu0 %4593
    %4595 = vrot.lane.b32.xlu0 %v4573, 127
    %v4596 = vpop.permute.xlu0 %4595
    %4597 = vrot.lane.b32.xlu0 %v4581, 127
    %v4598 = vpop.permute.xlu0 %4597
    %4599 = vrot.lane.b32.xlu0 %v4574, 127
    %v4600 = vpop.permute.xlu0 %4599
    %4601 = vrot.lane.b32.xlu0 %v4582, 127
    %v4602 = vpop.permute.xlu0 %4601
    %4603 = vrot.lane.b32.xlu0 %v4575, 127
    %v4604 = vpop.permute.xlu0 %4603
    %4605 = vrot.lane.b32.xlu0 %v4583, 127
    %v4606 = vpop.permute.xlu0 %4605
    %4607 = vrot.lane.b32.xlu0 %v4576, 127
    %v4608 = vpop.permute.xlu0 %4607
    %4609 = vrot.lane.b32.xlu0 %v4584, 127
    %v4610 = vpop.permute.xlu0 %4609
    %4611 = vrot.lane.b32.xlu0 %v4577, 127
    %v4612 = vpop.permute.xlu0 %4611
    %4613 = vrot.lane.b32.xlu0 %v4585, 127
    %v4614 = vpop.permute.xlu0 %4613
    %4615 = vrot.lane.b32.xlu0 %v4578, 127
    %v4616 = vpop.permute.xlu0 %4615
    %4617 = vrot.lane.b32.xlu0 %v4586, 127
    %v4618 = vpop.permute.xlu0 %4617
    %v4619 = vsel %vm2690, %v4612, %v4616
    %v4620 = vsel %vm2690, %v4614, %v4618
    %v4621 = vsel %vm2690, %v4608, %v4612
    %v4622 = vsel %vm2690, %v4610, %v4614
    %v4623 = vsel %vm2690, %v4604, %v4608
    %v4624 = vsel %vm2690, %v4606, %v4610
    %v4625 = vsel %vm2690, %v4600, %v4604
    %v4626 = vsel %vm2690, %v4602, %v4606
    %v4627 = vsel %vm2690, %v4596, %v4600
    %v4628 = vsel %vm2690, %v4598, %v4602
    %v4629 = vsel %vm2690, %v4592, %v4596
    %v4630 = vsel %vm2690, %v4594, %v4598
    %v4631 = vsel %vm2690, %v4588, %v4592
    %v4632 = vsel %vm2690, %v4590, %v4594
    %v4633 = vsel %vm2690, %v4616, %v4588
    %v4634 = vsel %vm2690, %v4618, %v4590
    %v4635 = vmax.f32 %v4571, %v4631
    %v4636 = vmax.f32 %v4572, %v4629
    %v4637 = vmax.f32 %v4573, %v4627
    %v4638 = vmax.f32 %v4574, %v4625
    %v4639 = vmax.f32 %v4575, %v4623
    %v4640 = vmax.f32 %v4576, %v4621
    %v4641 = vmax.f32 %v4577, %v4619
    %v4642 = vmax.f32 %v4578, %v4633
    %v4643 = vmax.f32 %v4579, %v4632
    %v4644 = vmax.f32 %v4580, %v4630
    %v4645 = vmax.f32 %v4581, %v4628
    %v4646 = vmax.f32 %v4582, %v4626
    %v4647 = vmax.f32 %v4583, %v4624
    %v4648 = vmax.f32 %v4584, %v4622
    %v4649 = vmax.f32 %v4585, %v4620
    %v4650 = vmax.f32 %v4586, %v4634
    %4651 = vrot.lane.b32.xlu0 %v4635, 96
    %v4652 = vpop.permute.xlu0 %4651
    %4653 = vrot.lane.b32.xlu0 %v4643, 96
    %v4654 = vpop.permute.xlu0 %4653
    %4655 = vrot.lane.b32.xlu0 %v4636, 96
    %v4656 = vpop.permute.xlu0 %4655
    %4657 = vrot.lane.b32.xlu0 %v4644, 96
    %v4658 = vpop.permute.xlu0 %4657
    %4659 = vrot.lane.b32.xlu0 %v4637, 96
    %v4660 = vpop.permute.xlu0 %4659
    %4661 = vrot.lane.b32.xlu0 %v4645, 96
    %v4662 = vpop.permute.xlu0 %4661
    %4663 = vrot.lane.b32.xlu0 %v4638, 96
    %v4664 = vpop.permute.xlu0 %4663
    %4665 = vrot.lane.b32.xlu0 %v4646, 96
    %v4666 = vpop.permute.xlu0 %4665
    %4667 = vrot.lane.b32.xlu0 %v4639, 96
    %v4668 = vpop.permute.xlu0 %4667
    %4669 = vrot.lane.b32.xlu0 %v4647, 96
    %v4670 = vpop.permute.xlu0 %4669
    %4671 = vrot.lane.b32.xlu0 %v4640, 96
    %v4672 = vpop.permute.xlu0 %4671
    %4673 = vrot.lane.b32.xlu0 %v4648, 96
    %v4674 = vpop.permute.xlu0 %4673
    %4675 = vrot.lane.b32.xlu0 %v4641, 96
    %v4676 = vpop.permute.xlu0 %4675
    %4677 = vrot.lane.b32.xlu0 %v4649, 96
    %v4678 = vpop.permute.xlu0 %4677
    %4679 = vrot.lane.b32.xlu0 %v4642, 96
    %v4680 = vpop.permute.xlu0 %4679
    %4681 = vrot.lane.b32.xlu0 %v4650, 96
    %v4682 = vpop.permute.xlu0 %4681
    %v4683 = vsel %vm3560, %v4676, %v4680
    %v4684 = vsel %vm3560, %v4678, %v4682
    %v4685 = vsel %vm3560, %v4672, %v4676
    %v4686 = vsel %vm3560, %v4674, %v4678
    %v4687 = vsel %vm3560, %v4668, %v4672
    %v4688 = vsel %vm3560, %v4670, %v4674
    %v4689 = vsel %vm3560, %v4664, %v4668
    %v4690 = vsel %vm3560, %v4666, %v4670
    %v4691 = vsel %vm3560, %v4660, %v4664
    %v4692 = vsel %vm3560, %v4662, %v4666
    %v4693 = vsel %vm3560, %v4656, %v4660
    %v4694 = vsel %vm3560, %v4658, %v4662
    %v4695 = vsel %vm3560, %v4652, %v4656
    %v4696 = vsel %vm3560, %v4654, %v4658
    %v4697 = vsel %vm3560, %v4680, %v4652
    %v4698 = vsel %vm3560, %v4682, %v4654
    %v4699 = vmax.f32 %v4635, %v4695
    %v4700 = vmax.f32 %v4636, %v4693
    %v4701 = vmax.f32 %v4637, %v4691
    %v4702 = vmax.f32 %v4638, %v4689
    %v4703 = vmax.f32 %v4639, %v4687
    %v4704 = vmax.f32 %v4640, %v4685
    %v4705 = vmax.f32 %v4641, %v4683
    %v4706 = vmax.f32 %v4642, %v4697
    %v4707 = vmax.f32 %v4643, %v4696
    %v4708 = vmax.f32 %v4644, %v4694
    %v4709 = vmax.f32 %v4645, %v4692
    %v4710 = vmax.f32 %v4646, %v4690
    %v4711 = vmax.f32 %v4647, %v4688
    %v4712 = vmax.f32 %v4648, %v4686
    %v4713 = vmax.f32 %v4649, %v4684
    %v4714 = vmax.f32 %v4650, %v4698
    %4715 = vrot.lane.b32.xlu0 %v4699, 66
    %v4716 = vpop.permute.xlu0 %4715
    %4717 = vrot.lane.b32.xlu0 %v4707, 66
    %v4718 = vpop.permute.xlu0 %4717
    %4719 = vrot.lane.b32.xlu0 %v4700, 66
    %v4720 = vpop.permute.xlu0 %4719
    %4721 = vrot.lane.b32.xlu0 %v4708, 66
    %v4722 = vpop.permute.xlu0 %4721
    %4723 = vrot.lane.b32.xlu0 %v4701, 66
    %v4724 = vpop.permute.xlu0 %4723
    %4725 = vrot.lane.b32.xlu0 %v4709, 66
    %v4726 = vpop.permute.xlu0 %4725
    %4727 = vrot.lane.b32.xlu0 %v4702, 66
    %v4728 = vpop.permute.xlu0 %4727
    %4729 = vrot.lane.b32.xlu0 %v4710, 66
    %v4730 = vpop.permute.xlu0 %4729
    %4731 = vrot.lane.b32.xlu0 %v4703, 66
    %v4732 = vpop.permute.xlu0 %4731
    %4733 = vrot.lane.b32.xlu0 %v4711, 66
    %v4734 = vpop.permute.xlu0 %4733
    %4735 = vrot.lane.b32.xlu0 %v4704, 66
    %v4736 = vpop.permute.xlu0 %4735
    %4737 = vrot.lane.b32.xlu0 %v4712, 66
    %v4738 = vpop.permute.xlu0 %4737
    %4739 = vrot.lane.b32.xlu0 %v4705, 66
    %v4740 = vpop.permute.xlu0 %4739
    %4741 = vrot.lane.b32.xlu0 %v4713, 66
    %v4742 = vpop.permute.xlu0 %4741
    %4743 = vrot.lane.b32.xlu0 %v4706, 66
    %v4744 = vpop.permute.xlu0 %4743
    %4745 = vrot.lane.b32.xlu0 %v4714, 66
    %v4746 = vpop.permute.xlu0 %4745
    %vm4747 = vcmp.lt.s32.totalorder %v632, 66
    %v4748 = vsel %vm4747, %v4740, %v4744
    %v4749 = vsel %vm4747, %v4742, %v4746
    %v4750 = vsel %vm4747, %v4736, %v4740
    %v4751 = vsel %vm4747, %v4738, %v4742
    %v4752 = vsel %vm4747, %v4732, %v4736
    %v4753 = vsel %vm4747, %v4734, %v4738
    %v4754 = vsel %vm4747, %v4728, %v4732
    %v4755 = vsel %vm4747, %v4730, %v4734
    %v4756 = vsel %vm4747, %v4724, %v4728
    %v4757 = vsel %vm4747, %v4726, %v4730
    %v4758 = vsel %vm4747, %v4720, %v4724
    %v4759 = vsel %vm4747, %v4722, %v4726
    %v4760 = vsel %vm4747, %v4716, %v4720
    %v4761 = vsel %vm4747, %v4718, %v4722
    %v4762 = vsel %vm4747, %v4744, %v4716
    %v4763 = vsel %vm4747, %v4746, %v4718
    %v4764 = vld [vmem:[%s8] ss:$8 sm:$0xf]
    %v4765 = vld [vmem:[%s8] ss:$8 sm:$0xf0]
    %v4766 = vor.u32 %v4764, %v4765
    %v4768 = vlaneseq
    %v4769 = vshrl.u32 %v4768, 7
    %v4770 = vsub.s32 0, %v4769
    %v4771 = vrot.slane %v4766, %v4770
    %v4772 = vlaneseq
    %v4773 = vshrl.u32 %v4772, 7
    %v4774 = vsub.s32 1, %v4773
    %v4775 = vrot.slane %v4766, %v4774
    %v4776 = vlaneseq
    %v4777 = vshrl.u32 %v4776, 7
    %v4778 = vsub.s32 2, %v4777
    %v4779 = vrot.slane %v4766, %v4778
    %v4780 = vlaneseq
    %v4781 = vshrl.u32 %v4780, 7
    %v4782 = vsub.s32 3, %v4781
    %v4783 = vrot.slane %v4766, %v4782
    %v4784 = vlaneseq
    %v4785 = vshrl.u32 %v4784, 7
    %v4786 = vsub.s32 4, %v4785
    %v4787 = vrot.slane %v4766, %v4786
    %v4788 = vlaneseq
    %v4789 = vshrl.u32 %v4788, 7
    %v4790 = vsub.s32 5, %v4789
    %v4791 = vrot.slane %v4766, %v4790
    %v4792 = vlaneseq
    %v4793 = vshrl.u32 %v4792, 7
    %v4794 = vsub.s32 6, %v4793
    %v4795 = vrot.slane %v4766, %v4794
    %v4796 = vlaneseq
    %v4797 = vshrl.u32 %v4796, 7
    %v4798 = vsub.s32 7, %v4797
    %v4799 = vrot.slane %v4766, %v4798
    %v4808 = vmul.f32 %v4762, %v4771
    %v4809 = vmul.f32 %v4760, %v4775
    %v4810 = vmul.f32 %v4758, %v4779
    %v4811 = vmul.f32 %v4756, %v4783
    %v4812 = vmul.f32 %v4754, %v4787
    %v4813 = vmul.f32 %v4752, %v4791
    %v4814 = vmul.f32 %v4750, %v4795
    %v4815 = vmul.f32 %v4748, %v4799
    %v4816 = vmul.f32 %v4763, %v4771
    %v4817 = vmul.f32 %v4761, %v4775
    %v4818 = vmul.f32 %v4759, %v4779
    %v4819 = vmul.f32 %v4757, %v4783
    %v4820 = vmul.f32 %v4755, %v4787
    %v4821 = vmul.f32 %v4753, %v4791
    %v4822 = vmul.f32 %v4751, %v4795
    %v4823 = vmul.f32 %v4749, %v4799
    %v4824 = vld [vmem:[%s4] sm:$0x3]
    %4825 = vrot.lane.b32.xlu0 %v4699, 64
    %v4826 = vpop.permute.xlu0 %4825
    %4827 = vrot.lane.b32.xlu0 %v4707, 64
    %v4828 = vpop.permute.xlu0 %4827
    %4829 = vrot.lane.b32.xlu0 %v4700, 64
    %v4830 = vpop.permute.xlu0 %4829
    %4831 = vrot.lane.b32.xlu0 %v4708, 64
    %v4832 = vpop.permute.xlu0 %4831
    %4833 = vrot.lane.b32.xlu0 %v4701, 64
    %v4834 = vpop.permute.xlu0 %4833
    %4835 = vrot.lane.b32.xlu0 %v4709, 64
    %v4836 = vpop.permute.xlu0 %4835
    %4837 = vrot.lane.b32.xlu0 %v4702, 64
    %v4838 = vpop.permute.xlu0 %4837
    %4839 = vrot.lane.b32.xlu0 %v4710, 64
    %v4840 = vpop.permute.xlu0 %4839
    %4841 = vrot.lane.b32.xlu0 %v4703, 64
    %v4842 = vpop.permute.xlu0 %4841
    %4843 = vrot.lane.b32.xlu0 %v4711, 64
    %v4844 = vpop.permute.xlu0 %4843
    %4845 = vrot.lane.b32.xlu0 %v4704, 64
    %v4846 = vpop.permute.xlu0 %4845
    %4847 = vrot.lane.b32.xlu0 %v4712, 64
    %v4848 = vpop.permute.xlu0 %4847
    %4849 = vrot.lane.b32.xlu0 %v4705, 64
    %v4850 = vpop.permute.xlu0 %4849
    %4851 = vrot.lane.b32.xlu0 %v4713, 64
    %v4852 = vpop.permute.xlu0 %4851
    %4853 = vrot.lane.b32.xlu0 %v4706, 64
    %v4854 = vpop.permute.xlu0 %4853
    %4855 = vrot.lane.b32.xlu0 %v4714, 64
    %v4856 = vpop.permute.xlu0 %4855
    %vm4857 = vcmp.lt.s32.totalorder %v632, 64
    %v4858 = vsel %vm4857, %v4850, %v4854
    %v4859 = vsel %vm4857, %v4852, %v4856
    %v4860 = vsel %vm4857, %v4846, %v4850
    %v4861 = vsel %vm4857, %v4848, %v4852
    %v4862 = vsel %vm4857, %v4842, %v4846
    %v4863 = vsel %vm4857, %v4844, %v4848
    %v4864 = vsel %vm4857, %v4838, %v4842
    %v4865 = vsel %vm4857, %v4840, %v4844
    %v4866 = vsel %vm4857, %v4834, %v4838
    %v4867 = vsel %vm4857, %v4836, %v4840
    %v4868 = vsel %vm4857, %v4830, %v4834
    %v4869 = vsel %vm4857, %v4832, %v4836
    %v4870 = vsel %vm4857, %v4826, %v4830
    %v4871 = vsel %vm4857, %v4828, %v4832
    %v4872 = vsel %vm4857, %v4854, %v4826
    %v4873 = vsel %vm4857, %v4856, %v4828
    %s4874 = scalar_lea.vmem %s8, 1
    %v4875 = vld [vmem:[%s4874] ss:$8 sm:$0xf]
    %v4876 = vld [vmem:[%s4874] ss:$8 sm:$0xf0]
    %v4877 = vor.u32 %v4875, %v4876
    %v4879 = vlaneseq
    %v4880 = vshrl.u32 %v4879, 7
    %v4881 = vsub.s32 0, %v4880
    %v4882 = vrot.slane %v4877, %v4881
    %v4883 = vlaneseq
    %v4884 = vshrl.u32 %v4883, 7
    %v4885 = vsub.s32 1, %v4884
    %v4886 = vrot.slane %v4877, %v4885
    %v4887 = vlaneseq
    %v4888 = vshrl.u32 %v4887, 7
    %v4889 = vsub.s32 2, %v4888
    %v4890 = vrot.slane %v4877, %v4889
    %v4891 = vlaneseq
    %v4892 = vshrl.u32 %v4891, 7
    %v4893 = vsub.s32 3, %v4892
    %v4894 = vrot.slane %v4877, %v4893
    %v4895 = vlaneseq
    %v4896 = vshrl.u32 %v4895, 7
    %v4897 = vsub.s32 4, %v4896
    %v4898 = vrot.slane %v4877, %v4897
    %v4899 = vlaneseq
    %v4900 = vshrl.u32 %v4899, 7
    %v4901 = vsub.s32 5, %v4900
    %v4902 = vrot.slane %v4877, %v4901
    %v4903 = vlaneseq
    %v4904 = vshrl.u32 %v4903, 7
    %v4905 = vsub.s32 6, %v4904
    %v4906 = vrot.slane %v4877, %v4905
    %v4907 = vlaneseq
    %v4908 = vshrl.u32 %v4907, 7
    %v4909 = vsub.s32 7, %v4908
    %v4910 = vrot.slane %v4877, %v4909
    %v4919 = vmul.f32 %v4872, %v4882
    %v4920 = vmul.f32 %v4870, %v4886
    %v4921 = vmul.f32 %v4868, %v4890
    %v4922 = vmul.f32 %v4866, %v4894
    %v4923 = vmul.f32 %v4864, %v4898
    %v4924 = vmul.f32 %v4862, %v4902
    %v4925 = vmul.f32 %v4860, %v4906
    %v4926 = vmul.f32 %v4858, %v4910
    %v4927 = vmul.f32 %v4873, %v4882
    %v4928 = vmul.f32 %v4871, %v4886
    %v4929 = vmul.f32 %v4869, %v4890
    %v4930 = vmul.f32 %v4867, %v4894
    %v4931 = vmul.f32 %v4865, %v4898
    %v4932 = vmul.f32 %v4863, %v4902
    %v4933 = vmul.f32 %v4861, %v4906
    %v4934 = vmul.f32 %v4859, %v4910
    %s4935 = scalar_lea.vmem %s4, 2
    %v4936 = vld [vmem:[%s4935] sm:$0x3]
    %vm4937 = vcmask 80896
    %v4939 = vsel %vm4937, %v4936, 0
    %v4942 = vsel %vm4423, %v4927, 0
    %v4945 = vsel %vm4423, %v4928, 0
    %v4948 = vsel %vm4423, %v4929, 0
    %v4951 = vsel %vm4423, %v4930, 0
    %v4954 = vsel %vm4423, %v4931, 0
    %v4957 = vsel %vm4423, %v4932, 0
    %v4960 = vsel %vm4423, %v4933, 0
    %v4963 = vsel %vm4423, %v4934, 0
    %4965 = vmatprep.subr.mxu0 0.0
    %4966 = vmatpush1.msra.mxu0 0.0
    %4967 = vmatprep.subr.mxu0 0.0
    %4968 = vmatpush1.msra.mxu0 0.0
    %4969 = vmatprep.subr.mxu0 0.0
    %4970 = vmatpush1.msra.mxu0 0.0
    %4971 = vmatprep.subr.mxu0 0.0
    %4972 = vmatpush1.msra.mxu0 0.0
    %4973 = vmatprep.subr.mxu0 0.0
    %4974 = vmatpush1.msra.mxu0 0.0
    %4975 = vmatprep.subr.mxu0 0.0
    %4976 = vmatpush1.msra.mxu0 0.0
    %4977 = vmatprep.subr.mxu0 0.0
    %4978 = vmatpush1.msra.mxu0 0.0
    %4979 = vmatprep.subr.mxu0 0.0
    %4980 = vmatpush1.msra.mxu0 0.0
    %4981 = vmatprep.subr.mxu0 0.0
    %4982 = vmatpush1.msra.mxu0 0.0
    %4983 = vmatprep.subr.mxu0 0.0
    %4984 = vmatpush1.msra.mxu0 0.0
    %4985 = vmatprep.subr.mxu0 0.0
    %4986 = vmatpush1.msra.mxu0 0.0
    %4987 = vmatprep.subr.mxu0 0.0
    %4988 = vmatpush1.msra.mxu0 0.0
    %4989 = vmatprep.subr.mxu0 0.0
    %4990 = vmatpush1.msra.mxu0 0.0
    %4991 = vmatprep.subr.mxu0 0.0
    %4992 = vmatpush1.msra.mxu0 0.0
    %4993 = vmatprep.subr.mxu0 %v4945
    %4994 = vmatpush1.msra.mxu0 %v4942
    %4995 = vmatprep.subr.mxu0 %v4920
    %4996 = vmatpush1.msra.mxu0 %v4919
    %4997 = vmatprep.subr.mxu0 0.0
    %4998 = vmatpush2.msra.mxu0 0.0
    %4999 = vmatprep.subr.mxu0 0.0
    %5000 = vmatpush2.msra.mxu0 0.0
    %5001 = vmatprep.subr.mxu0 0.0
    %5002 = vmatpush2.msra.mxu0 0.0
    %5003 = vmatprep.subr.mxu0 0.0
    %5004 = vmatpush2.msra.mxu0 0.0
    %5005 = vmatprep.subr.mxu0 0.0
    %5006 = vmatpush2.msra.mxu0 0.0
    %5007 = vmatprep.subr.mxu0 0.0
    %5008 = vmatpush2.msra.mxu0 0.0
    %5009 = vmatprep.subr.mxu0 0.0
    %5010 = vmatpush2.msra.mxu0 0.0
    %5011 = vmatprep.subr.mxu0 0.0
    %5012 = vmatpush2.msra.mxu0 0.0
    %5013 = vmatprep.subr.mxu0 0.0
    %5014 = vmatpush2.msra.mxu0 0.0
    %5015 = vmatprep.subr.mxu0 0.0
    %5016 = vmatpush2.msra.mxu0 0.0
    %5017 = vmatprep.subr.mxu0 0.0
    %5018 = vmatpush2.msra.mxu0 0.0
    %5019 = vmatprep.subr.mxu0 0.0
    %5020 = vmatpush2.msra.mxu0 0.0
    %5021 = vmatprep.subr.mxu0 0.0
    %5022 = vmatpush2.msra.mxu0 0.0
    %5023 = vmatprep.subr.mxu0 0.0
    %5024 = vmatpush2.msra.mxu0 0.0
    %5025 = vmatprep.subr.mxu0 0.0
    %5026 = vmatpush2.msra.mxu0 0.0
    %5027 = vmatprep.subr.mxu0 0.0
    %5028 = vmatpush2.msra.mxu0 0.0
    %5029 = vmatprep.mubr.f32.mxu0 0.0
    %5030 = vmatmul.mubr.f32.gmra.mxu0 %v4939
    %v5031 = vpop.f32.mrf.mxu0
    %v5032 = vadd.f32 0.0, %v5031
    %v5033 = vpop.f32.mrf.mxu0
    %v5034 = vadd.f32 0.0, %v5033
    %5035 = vdwg.mxu0
    %5036 = vmatprep.subr.mxu0 0.0
    %5037 = vmatpush1.msra.mxu0 0.0
    %5038 = vmatprep.subr.mxu0 0.0
    %5039 = vmatpush1.msra.mxu0 0.0
    %5040 = vmatprep.subr.mxu0 0.0
    %5041 = vmatpush1.msra.mxu0 0.0
    %5042 = vmatprep.subr.mxu0 0.0
    %5043 = vmatpush1.msra.mxu0 0.0
    %5044 = vmatprep.subr.mxu0 0.0
    %5045 = vmatpush1.msra.mxu0 0.0
    %5046 = vmatprep.subr.mxu0 0.0
    %5047 = vmatpush1.msra.mxu0 0.0
    %5048 = vmatprep.subr.mxu0 0.0
    %5049 = vmatpush1.msra.mxu0 0.0
    %5050 = vmatprep.subr.mxu0 0.0
    %5051 = vmatpush1.msra.mxu0 0.0
    %5052 = vmatprep.subr.mxu0 0.0
    %5053 = vmatpush1.msra.mxu0 0.0
    %5054 = vmatprep.subr.mxu0 0.0
    %5055 = vmatpush1.msra.mxu0 0.0
    %5056 = vmatprep.subr.mxu0 0.0
    %5057 = vmatpush1.msra.mxu0 0.0
    %5058 = vmatprep.subr.mxu0 0.0
    %5059 = vmatpush1.msra.mxu0 0.0
    %5060 = vmatprep.subr.mxu0 0.0
    %5061 = vmatpush1.msra.mxu0 0.0
    %5062 = vmatprep.subr.mxu0 0.0
    %5063 = vmatpush1.msra.mxu0 0.0
    %5064 = vmatprep.subr.mxu0 %v4951
    %5065 = vmatpush1.msra.mxu0 %v4948
    %5066 = vmatprep.subr.mxu0 %v4922
    %5067 = vmatpush1.msra.mxu0 %v4921
    %5068 = vmatprep.subr.mxu0 0.0
    %5069 = vmatpush2.msra.mxu0 0.0
    %5070 = vmatprep.subr.mxu0 0.0
    %5071 = vmatpush2.msra.mxu0 0.0
    %5072 = vmatprep.subr.mxu0 0.0
    %5073 = vmatpush2.msra.mxu0 0.0
    %5074 = vmatprep.subr.mxu0 0.0
    %5075 = vmatpush2.msra.mxu0 0.0
    %5076 = vmatprep.subr.mxu0 0.0
    %5077 = vmatpush2.msra.mxu0 0.0
    %5078 = vmatprep.subr.mxu0 0.0
    %5079 = vmatpush2.msra.mxu0 0.0
    %5080 = vmatprep.subr.mxu0 0.0
    %5081 = vmatpush2.msra.mxu0 0.0
    %5082 = vmatprep.subr.mxu0 0.0
    %5083 = vmatpush2.msra.mxu0 0.0
    %5084 = vmatprep.subr.mxu0 0.0
    %5085 = vmatpush2.msra.mxu0 0.0
    %5086 = vmatprep.subr.mxu0 0.0
    %5087 = vmatpush2.msra.mxu0 0.0
    %5088 = vmatprep.subr.mxu0 0.0
    %5089 = vmatpush2.msra.mxu0 0.0
    %5090 = vmatprep.subr.mxu0 0.0
    %5091 = vmatpush2.msra.mxu0 0.0
    %5092 = vmatprep.subr.mxu0 0.0
    %5093 = vmatpush2.msra.mxu0 0.0
    %5094 = vmatprep.subr.mxu0 0.0
    %5095 = vmatpush2.msra.mxu0 0.0
    %5096 = vmatprep.subr.mxu0 0.0
    %5097 = vmatpush2.msra.mxu0 0.0
    %5098 = vmatprep.subr.mxu0 0.0
    %5099 = vmatpush2.msra.mxu0 0.0
    %5100 = vmatprep.mubr.f32.mxu0 0.0
    %5101 = vmatmul.mubr.f32.gmra.mxu0 %v4939
    %v5102 = vpop.f32.mrf.mxu0
    %v5103 = vadd.f32 0.0, %v5102
    %v5104 = vpop.f32.mrf.mxu0
    %v5105 = vadd.f32 0.0, %v5104
    %5106 = vdwg.mxu0
    %5107 = vmatprep.subr.mxu0 0.0
    %5108 = vmatpush1.msra.mxu0 0.0
    %5109 = vmatprep.subr.mxu0 0.0
    %5110 = vmatpush1.msra.mxu0 0.0
    %5111 = vmatprep.subr.mxu0 0.0
    %5112 = vmatpush1.msra.mxu0 0.0
    %5113 = vmatprep.subr.mxu0 0.0
    %5114 = vmatpush1.msra.mxu0 0.0
    %5115 = vmatprep.subr.mxu0 0.0
    %5116 = vmatpush1.msra.mxu0 0.0
    %5117 = vmatprep.subr.mxu0 0.0
    %5118 = vmatpush1.msra.mxu0 0.0
    %5119 = vmatprep.subr.mxu0 0.0
    %5120 = vmatpush1.msra.mxu0 0.0
    %5121 = vmatprep.subr.mxu0 0.0
    %5122 = vmatpush1.msra.mxu0 0.0
    %5123 = vmatprep.subr.mxu0 0.0
    %5124 = vmatpush1.msra.mxu0 0.0
    %5125 = vmatprep.subr.mxu0 0.0
    %5126 = vmatpush1.msra.mxu0 0.0
    %5127 = vmatprep.subr.mxu0 0.0
    %5128 = vmatpush1.msra.mxu0 0.0
    %5129 = vmatprep.subr.mxu0 0.0
    %5130 = vmatpush1.msra.mxu0 0.0
    %5131 = vmatprep.subr.mxu0 0.0
    %5132 = vmatpush1.msra.mxu0 0.0
    %5133 = vmatprep.subr.mxu0 0.0
    %5134 = vmatpush1.msra.mxu0 0.0
    %5135 = vmatprep.subr.mxu0 %v4957
    %5136 = vmatpush1.msra.mxu0 %v4954
    %5137 = vmatprep.subr.mxu0 %v4924
    %5138 = vmatpush1.msra.mxu0 %v4923
    %5139 = vmatprep.subr.mxu0 0.0
    %5140 = vmatpush2.msra.mxu0 0.0
    %5141 = vmatprep.subr.mxu0 0.0
    %5142 = vmatpush2.msra.mxu0 0.0
    %5143 = vmatprep.subr.mxu0 0.0
    %5144 = vmatpush2.msra.mxu0 0.0
    %5145 = vmatprep.subr.mxu0 0.0
    %5146 = vmatpush2.msra.mxu0 0.0
    %5147 = vmatprep.subr.mxu0 0.0
    %5148 = vmatpush2.msra.mxu0 0.0
    %5149 = vmatprep.subr.mxu0 0.0
    %5150 = vmatpush2.msra.mxu0 0.0
    %5151 = vmatprep.subr.mxu0 0.0
    %5152 = vmatpush2.msra.mxu0 0.0
    %5153 = vmatprep.subr.mxu0 0.0
    %5154 = vmatpush2.msra.mxu0 0.0
    %5155 = vmatprep.subr.mxu0 0.0
    %5156 = vmatpush2.msra.mxu0 0.0
    %5157 = vmatprep.subr.mxu0 0.0
    %5158 = vmatpush2.msra.mxu0 0.0
    %5159 = vmatprep.subr.mxu0 0.0
    %5160 = vmatpush2.msra.mxu0 0.0
    %5161 = vmatprep.subr.mxu0 0.0
    %5162 = vmatpush2.msra.mxu0 0.0
    %5163 = vmatprep.subr.mxu0 0.0
    %5164 = vmatpush2.msra.mxu0 0.0
    %5165 = vmatprep.subr.mxu0 0.0
    %5166 = vmatpush2.msra.mxu0 0.0
    %5167 = vmatprep.subr.mxu0 0.0
    %5168 = vmatpush2.msra.mxu0 0.0
    %5169 = vmatprep.subr.mxu0 0.0
    %5170 = vmatpush2.msra.mxu0 0.0
    %5171 = vmatprep.mubr.f32.mxu0 0.0
    %5172 = vmatmul.mubr.f32.gmra.mxu0 %v4939
    %v5173 = vpop.f32.mrf.mxu0
    %v5174 = vadd.f32 0.0, %v5173
    %v5175 = vpop.f32.mrf.mxu0
    %v5176 = vadd.f32 0.0, %v5175
    %5177 = vdwg.mxu0
    %5178 = vmatprep.subr.mxu0 0.0
    %5179 = vmatpush1.msra.mxu0 0.0
    %5180 = vmatprep.subr.mxu0 0.0
    %5181 = vmatpush1.msra.mxu0 0.0
    %5182 = vmatprep.subr.mxu0 0.0
    %5183 = vmatpush1.msra.mxu0 0.0
    %5184 = vmatprep.subr.mxu0 0.0
    %5185 = vmatpush1.msra.mxu0 0.0
    %5186 = vmatprep.subr.mxu0 0.0
    %5187 = vmatpush1.msra.mxu0 0.0
    %5188 = vmatprep.subr.mxu0 0.0
    %5189 = vmatpush1.msra.mxu0 0.0
    %5190 = vmatprep.subr.mxu0 0.0
    %5191 = vmatpush1.msra.mxu0 0.0
    %5192 = vmatprep.subr.mxu0 0.0
    %5193 = vmatpush1.msra.mxu0 0.0
    %5194 = vmatprep.subr.mxu0 0.0
    %5195 = vmatpush1.msra.mxu0 0.0
    %5196 = vmatprep.subr.mxu0 0.0
    %5197 = vmatpush1.msra.mxu0 0.0
    %5198 = vmatprep.subr.mxu0 0.0
    %5199 = vmatpush1.msra.mxu0 0.0
    %5200 = vmatprep.subr.mxu0 0.0
    %5201 = vmatpush1.msra.mxu0 0.0
    %5202 = vmatprep.subr.mxu0 0.0
    %5203 = vmatpush1.msra.mxu0 0.0
    %5204 = vmatprep.subr.mxu0 0.0
    %5205 = vmatpush1.msra.mxu0 0.0
    %5206 = vmatprep.subr.mxu0 %v4963
    %5207 = vmatpush1.msra.mxu0 %v4960
    %5208 = vmatprep.subr.mxu0 %v4926
    %5209 = vmatpush1.msra.mxu0 %v4925
    %5210 = vmatprep.subr.mxu0 0.0
    %5211 = vmatpush2.msra.mxu0 0.0
    %5212 = vmatprep.subr.mxu0 0.0
    %5213 = vmatpush2.msra.mxu0 0.0
    %5214 = vmatprep.subr.mxu0 0.0
    %5215 = vmatpush2.msra.mxu0 0.0
    %5216 = vmatprep.subr.mxu0 0.0
    %5217 = vmatpush2.msra.mxu0 0.0
    %5218 = vmatprep.subr.mxu0 0.0
    %5219 = vmatpush2.msra.mxu0 0.0
    %5220 = vmatprep.subr.mxu0 0.0
    %5221 = vmatpush2.msra.mxu0 0.0
    %5222 = vmatprep.subr.mxu0 0.0
    %5223 = vmatpush2.msra.mxu0 0.0
    %5224 = vmatprep.subr.mxu0 0.0
    %5225 = vmatpush2.msra.mxu0 0.0
    %5226 = vmatprep.subr.mxu0 0.0
    %5227 = vmatpush2.msra.mxu0 0.0
    %5228 = vmatprep.subr.mxu0 0.0
    %5229 = vmatpush2.msra.mxu0 0.0
    %5230 = vmatprep.subr.mxu0 0.0
    %5231 = vmatpush2.msra.mxu0 0.0
    %5232 = vmatprep.subr.mxu0 0.0
    %5233 = vmatpush2.msra.mxu0 0.0
    %5234 = vmatprep.subr.mxu0 0.0
    %5235 = vmatpush2.msra.mxu0 0.0
    %5236 = vmatprep.subr.mxu0 0.0
    %5237 = vmatpush2.msra.mxu0 0.0
    %5238 = vmatprep.subr.mxu0 0.0
    %5239 = vmatpush2.msra.mxu0 0.0
    %5240 = vmatprep.subr.mxu0 0.0
    %5241 = vmatpush2.msra.mxu0 0.0
    %5242 = vmatprep.mubr.f32.mxu0 0.0
    %5243 = vmatmul.mubr.f32.gmra.mxu0 %v4939
    %v5244 = vpop.f32.mrf.mxu0
    %v5245 = vadd.f32 0.0, %v5244
    %v5246 = vpop.f32.mrf.mxu0
    %v5247 = vadd.f32 0.0, %v5246
    %5248 = vdwg.mxu0
    %v5250 = vsel %vm4937, %v4824, 0
    %v5253 = vsel %vm4423, %v4816, 0
    %v5256 = vsel %vm4423, %v4817, 0
    %v5259 = vsel %vm4423, %v4818, 0
    %v5262 = vsel %vm4423, %v4819, 0
    %v5265 = vsel %vm4423, %v4820, 0
    %v5268 = vsel %vm4423, %v4821, 0
    %v5271 = vsel %vm4423, %v4822, 0
    %v5274 = vsel %vm4423, %v4823, 0
    %5276 = vmatprep.subr.mxu0 0.0
    %5277 = vmatpush1.msra.mxu0 0.0
    %5278 = vmatprep.subr.mxu0 0.0
    %5279 = vmatpush1.msra.mxu0 0.0
    %5280 = vmatprep.subr.mxu0 0.0
    %5281 = vmatpush1.msra.mxu0 0.0
    %5282 = vmatprep.subr.mxu0 0.0
    %5283 = vmatpush1.msra.mxu0 0.0
    %5284 = vmatprep.subr.mxu0 0.0
    %5285 = vmatpush1.msra.mxu0 0.0
    %5286 = vmatprep.subr.mxu0 0.0
    %5287 = vmatpush1.msra.mxu0 0.0
    %5288 = vmatprep.subr.mxu0 0.0
    %5289 = vmatpush1.msra.mxu0 0.0
    %5290 = vmatprep.subr.mxu0 0.0
    %5291 = vmatpush1.msra.mxu0 0.0
    %5292 = vmatprep.subr.mxu0 0.0
    %5293 = vmatpush1.msra.mxu0 0.0
    %5294 = vmatprep.subr.mxu0 0.0
    %5295 = vmatpush1.msra.mxu0 0.0
    %5296 = vmatprep.subr.mxu0 0.0
    %5297 = vmatpush1.msra.mxu0 0.0
    %5298 = vmatprep.subr.mxu0 0.0
    %5299 = vmatpush1.msra.mxu0 0.0
    %5300 = vmatprep.subr.mxu0 0.0
    %5301 = vmatpush1.msra.mxu0 0.0
    %5302 = vmatprep.subr.mxu0 0.0
    %5303 = vmatpush1.msra.mxu0 0.0
    %5304 = vmatprep.subr.mxu0 %v5256
    %5305 = vmatpush1.msra.mxu0 %v5253
    %5306 = vmatprep.subr.mxu0 %v4809
    %5307 = vmatpush1.msra.mxu0 %v4808
    %5308 = vmatprep.subr.mxu0 0.0
    %5309 = vmatpush2.msra.mxu0 0.0
    %5310 = vmatprep.subr.mxu0 0.0
    %5311 = vmatpush2.msra.mxu0 0.0
    %5312 = vmatprep.subr.mxu0 0.0
    %5313 = vmatpush2.msra.mxu0 0.0
    %5314 = vmatprep.subr.mxu0 0.0
    %5315 = vmatpush2.msra.mxu0 0.0
    %5316 = vmatprep.subr.mxu0 0.0
    %5317 = vmatpush2.msra.mxu0 0.0
    %5318 = vmatprep.subr.mxu0 0.0
    %5319 = vmatpush2.msra.mxu0 0.0
    %5320 = vmatprep.subr.mxu0 0.0
    %5321 = vmatpush2.msra.mxu0 0.0
    %5322 = vmatprep.subr.mxu0 0.0
    %5323 = vmatpush2.msra.mxu0 0.0
    %5324 = vmatprep.subr.mxu0 0.0
    %5325 = vmatpush2.msra.mxu0 0.0
    %5326 = vmatprep.subr.mxu0 0.0
    %5327 = vmatpush2.msra.mxu0 0.0
    %5328 = vmatprep.subr.mxu0 0.0
    %5329 = vmatpush2.msra.mxu0 0.0
    %5330 = vmatprep.subr.mxu0 0.0
    %5331 = vmatpush2.msra.mxu0 0.0
    %5332 = vmatprep.subr.mxu0 0.0
    %5333 = vmatpush2.msra.mxu0 0.0
    %5334 = vmatprep.subr.mxu0 0.0
    %5335 = vmatpush2.msra.mxu0 0.0
    %5336 = vmatprep.subr.mxu0 0.0
    %5337 = vmatpush2.msra.mxu0 0.0
    %5338 = vmatprep.subr.mxu0 0.0
    %5339 = vmatpush2.msra.mxu0 0.0
    %5340 = vmatprep.mubr.f32.mxu0 0.0
    %5341 = vmatmul.mubr.f32.gmra.mxu0 %v5250
    %v5342 = vpop.f32.mrf.mxu0
    %v5343 = vadd.f32 %v5032, %v5342
    %v5344 = vpop.f32.mrf.mxu0
    %v5345 = vadd.f32 %v5034, %v5344
    %5346 = vdwg.mxu0
    %5347 = vmatprep.subr.mxu0 0.0
    %5348 = vmatpush1.msra.mxu0 0.0
    %5349 = vmatprep.subr.mxu0 0.0
    %5350 = vmatpush1.msra.mxu0 0.0
    %5351 = vmatprep.subr.mxu0 0.0
    %5352 = vmatpush1.msra.mxu0 0.0
    %5353 = vmatprep.subr.mxu0 0.0
    %5354 = vmatpush1.msra.mxu0 0.0
    %5355 = vmatprep.subr.mxu0 0.0
    %5356 = vmatpush1.msra.mxu0 0.0
    %5357 = vmatprep.subr.mxu0 0.0
    %5358 = vmatpush1.msra.mxu0 0.0
    %5359 = vmatprep.subr.mxu0 0.0
    %5360 = vmatpush1.msra.mxu0 0.0
    %5361 = vmatprep.subr.mxu0 0.0
    %5362 = vmatpush1.msra.mxu0 0.0
    %5363 = vmatprep.subr.mxu0 0.0
    %5364 = vmatpush1.msra.mxu0 0.0
    %5365 = vmatprep.subr.mxu0 0.0
    %5366 = vmatpush1.msra.mxu0 0.0
    %5367 = vmatprep.subr.mxu0 0.0
    %5368 = vmatpush1.msra.mxu0 0.0
    %5369 = vmatprep.subr.mxu0 0.0
    %5370 = vmatpush1.msra.mxu0 0.0
    %5371 = vmatprep.subr.mxu0 0.0
    %5372 = vmatpush1.msra.mxu0 0.0
    %5373 = vmatprep.subr.mxu0 0.0
    %5374 = vmatpush1.msra.mxu0 0.0
    %5375 = vmatprep.subr.mxu0 %v5262
    %5376 = vmatpush1.msra.mxu0 %v5259
    %5377 = vmatprep.subr.mxu0 %v4811
    %5378 = vmatpush1.msra.mxu0 %v4810
    %5379 = vmatprep.subr.mxu0 0.0
    %5380 = vmatpush2.msra.mxu0 0.0
    %5381 = vmatprep.subr.mxu0 0.0
    %5382 = vmatpush2.msra.mxu0 0.0
    %5383 = vmatprep.subr.mxu0 0.0
    %5384 = vmatpush2.msra.mxu0 0.0
    %5385 = vmatprep.subr.mxu0 0.0
    %5386 = vmatpush2.msra.mxu0 0.0
    %5387 = vmatprep.subr.mxu0 0.0
    %5388 = vmatpush2.msra.mxu0 0.0
    %5389 = vmatprep.subr.mxu0 0.0
    %5390 = vmatpush2.msra.mxu0 0.0
    %5391 = vmatprep.subr.mxu0 0.0
    %5392 = vmatpush2.msra.mxu0 0.0
    %5393 = vmatprep.subr.mxu0 0.0
    %5394 = vmatpush2.msra.mxu0 0.0
    %5395 = vmatprep.subr.mxu0 0.0
    %5396 = vmatpush2.msra.mxu0 0.0
    %5397 = vmatprep.subr.mxu0 0.0
    %5398 = vmatpush2.msra.mxu0 0.0
    %5399 = vmatprep.subr.mxu0 0.0
    %5400 = vmatpush2.msra.mxu0 0.0
    %5401 = vmatprep.subr.mxu0 0.0
    %5402 = vmatpush2.msra.mxu0 0.0
    %5403 = vmatprep.subr.mxu0 0.0
    %5404 = vmatpush2.msra.mxu0 0.0
    %5405 = vmatprep.subr.mxu0 0.0
    %5406 = vmatpush2.msra.mxu0 0.0
    %5407 = vmatprep.subr.mxu0 0.0
    %5408 = vmatpush2.msra.mxu0 0.0
    %5409 = vmatprep.subr.mxu0 0.0
    %5410 = vmatpush2.msra.mxu0 0.0
    %5411 = vmatprep.mubr.f32.mxu0 0.0
    %5412 = vmatmul.mubr.f32.gmra.mxu0 %v5250
    %v5413 = vpop.f32.mrf.mxu0
    %v5414 = vadd.f32 %v5103, %v5413
    %v5415 = vpop.f32.mrf.mxu0
    %v5416 = vadd.f32 %v5105, %v5415
    %5417 = vdwg.mxu0
    %5418 = vmatprep.subr.mxu0 0.0
    %5419 = vmatpush1.msra.mxu0 0.0
    %5420 = vmatprep.subr.mxu0 0.0
    %5421 = vmatpush1.msra.mxu0 0.0
    %5422 = vmatprep.subr.mxu0 0.0
    %5423 = vmatpush1.msra.mxu0 0.0
    %5424 = vmatprep.subr.mxu0 0.0
    %5425 = vmatpush1.msra.mxu0 0.0
    %5426 = vmatprep.subr.mxu0 0.0
    %5427 = vmatpush1.msra.mxu0 0.0
    %5428 = vmatprep.subr.mxu0 0.0
    %5429 = vmatpush1.msra.mxu0 0.0
    %5430 = vmatprep.subr.mxu0 0.0
    %5431 = vmatpush1.msra.mxu0 0.0
    %5432 = vmatprep.subr.mxu0 0.0
    %5433 = vmatpush1.msra.mxu0 0.0
    %5434 = vmatprep.subr.mxu0 0.0
    %5435 = vmatpush1.msra.mxu0 0.0
    %5436 = vmatprep.subr.mxu0 0.0
    %5437 = vmatpush1.msra.mxu0 0.0
    %5438 = vmatprep.subr.mxu0 0.0
    %5439 = vmatpush1.msra.mxu0 0.0
    %5440 = vmatprep.subr.mxu0 0.0
    %5441 = vmatpush1.msra.mxu0 0.0
    %5442 = vmatprep.subr.mxu0 0.0
    %5443 = vmatpush1.msra.mxu0 0.0
    %5444 = vmatprep.subr.mxu0 0.0
    %5445 = vmatpush1.msra.mxu0 0.0
    %5446 = vmatprep.subr.mxu0 %v5268
    %5447 = vmatpush1.msra.mxu0 %v5265
    %5448 = vmatprep.subr.mxu0 %v4813
    %5449 = vmatpush1.msra.mxu0 %v4812
    %5450 = vmatprep.subr.mxu0 0.0
    %5451 = vmatpush2.msra.mxu0 0.0
    %5452 = vmatprep.subr.mxu0 0.0
    %5453 = vmatpush2.msra.mxu0 0.0
    %5454 = vmatprep.subr.mxu0 0.0
    %5455 = vmatpush2.msra.mxu0 0.0
    %5456 = vmatprep.subr.mxu0 0.0
    %5457 = vmatpush2.msra.mxu0 0.0
    %5458 = vmatprep.subr.mxu0 0.0
    %5459 = vmatpush2.msra.mxu0 0.0
    %5460 = vmatprep.subr.mxu0 0.0
    %5461 = vmatpush2.msra.mxu0 0.0
    %5462 = vmatprep.subr.mxu0 0.0
    %5463 = vmatpush2.msra.mxu0 0.0
    %5464 = vmatprep.subr.mxu0 0.0
    %5465 = vmatpush2.msra.mxu0 0.0
    %5466 = vmatprep.subr.mxu0 0.0
    %5467 = vmatpush2.msra.mxu0 0.0
    %5468 = vmatprep.subr.mxu0 0.0
    %5469 = vmatpush2.msra.mxu0 0.0
    %5470 = vmatprep.subr.mxu0 0.0
    %5471 = vmatpush2.msra.mxu0 0.0
    %5472 = vmatprep.subr.mxu0 0.0
    %5473 = vmatpush2.msra.mxu0 0.0
    %5474 = vmatprep.subr.mxu0 0.0
    %5475 = vmatpush2.msra.mxu0 0.0
    %5476 = vmatprep.subr.mxu0 0.0
    %5477 = vmatpush2.msra.mxu0 0.0
    %5478 = vmatprep.subr.mxu0 0.0
    %5479 = vmatpush2.msra.mxu0 0.0
    %5480 = vmatprep.subr.mxu0 0.0
    %5481 = vmatpush2.msra.mxu0 0.0
    %5482 = vmatprep.mubr.f32.mxu0 0.0
    %5483 = vmatmul.mubr.f32.gmra.mxu0 %v5250
    %v5484 = vpop.f32.mrf.mxu0
    %v5485 = vadd.f32 %v5174, %v5484
    %v5486 = vpop.f32.mrf.mxu0
    %v5487 = vadd.f32 %v5176, %v5486
    %5488 = vdwg.mxu0
    %5489 = vmatprep.subr.mxu0 0.0
    %5490 = vmatpush1.msra.mxu0 0.0
    %5491 = vmatprep.subr.mxu0 0.0
    %5492 = vmatpush1.msra.mxu0 0.0
    %5493 = vmatprep.subr.mxu0 0.0
    %5494 = vmatpush1.msra.mxu0 0.0
    %5495 = vmatprep.subr.mxu0 0.0
    %5496 = vmatpush1.msra.mxu0 0.0
    %5497 = vmatprep.subr.mxu0 0.0
    %5498 = vmatpush1.msra.mxu0 0.0
    %5499 = vmatprep.subr.mxu0 0.0
    %5500 = vmatpush1.msra.mxu0 0.0
    %5501 = vmatprep.subr.mxu0 0.0
    %5502 = vmatpush1.msra.mxu0 0.0
    %5503 = vmatprep.subr.mxu0 0.0
    %5504 = vmatpush1.msra.mxu0 0.0
    %5505 = vmatprep.subr.mxu0 0.0
    %5506 = vmatpush1.msra.mxu0 0.0
    %5507 = vmatprep.subr.mxu0 0.0
    %5508 = vmatpush1.msra.mxu0 0.0
    %5509 = vmatprep.subr.mxu0 0.0
    %5510 = vmatpush1.msra.mxu0 0.0
    %5511 = vmatprep.subr.mxu0 0.0
    %5512 = vmatpush1.msra.mxu0 0.0
    %5513 = vmatprep.subr.mxu0 0.0
    %5514 = vmatpush1.msra.mxu0 0.0
    %5515 = vmatprep.subr.mxu0 0.0
    %5516 = vmatpush1.msra.mxu0 0.0
    %5517 = vmatprep.subr.mxu0 %v5274
    %5518 = vmatpush1.msra.mxu0 %v5271
    %5519 = vmatprep.subr.mxu0 %v4815
    %5520 = vmatpush1.msra.mxu0 %v4814
    %5521 = vmatprep.subr.mxu0 0.0
    %5522 = vmatpush2.msra.mxu0 0.0
    %5523 = vmatprep.subr.mxu0 0.0
    %5524 = vmatpush2.msra.mxu0 0.0
    %5525 = vmatprep.subr.mxu0 0.0
    %5526 = vmatpush2.msra.mxu0 0.0
    %5527 = vmatprep.subr.mxu0 0.0
    %5528 = vmatpush2.msra.mxu0 0.0
    %5529 = vmatprep.subr.mxu0 0.0
    %5530 = vmatpush2.msra.mxu0 0.0
    %5531 = vmatprep.subr.mxu0 0.0
    %5532 = vmatpush2.msra.mxu0 0.0
    %5533 = vmatprep.subr.mxu0 0.0
    %5534 = vmatpush2.msra.mxu0 0.0
    %5535 = vmatprep.subr.mxu0 0.0
    %5536 = vmatpush2.msra.mxu0 0.0
    %5537 = vmatprep.subr.mxu0 0.0
    %5538 = vmatpush2.msra.mxu0 0.0
    %5539 = vmatprep.subr.mxu0 0.0
    %5540 = vmatpush2.msra.mxu0 0.0
    %5541 = vmatprep.subr.mxu0 0.0
    %5542 = vmatpush2.msra.mxu0 0.0
    %5543 = vmatprep.subr.mxu0 0.0
    %5544 = vmatpush2.msra.mxu0 0.0
    %5545 = vmatprep.subr.mxu0 0.0
    %5546 = vmatpush2.msra.mxu0 0.0
    %5547 = vmatprep.subr.mxu0 0.0
    %5548 = vmatpush2.msra.mxu0 0.0
    %5549 = vmatprep.subr.mxu0 0.0
    %5550 = vmatpush2.msra.mxu0 0.0
    %5551 = vmatprep.subr.mxu0 0.0
    %5552 = vmatpush2.msra.mxu0 0.0
    %5553 = vmatprep.mubr.f32.mxu0 0.0
    %5554 = vmatmul.mubr.f32.gmra.mxu0 %v5250
    %v5555 = vpop.f32.mrf.mxu0
    %v5556 = vadd.f32 %v5245, %v5555
    %v5557 = vpop.f32.mrf.mxu0
    %v5558 = vadd.f32 %v5247, %v5557
    %5559 = vdwg.mxu0
    %5560 = vrot.lane.b32.xlu0 %v4699, 62
    %v5561 = vpop.permute.xlu0 %5560
    %5562 = vrot.lane.b32.xlu0 %v4707, 62
    %v5563 = vpop.permute.xlu0 %5562
    %5564 = vrot.lane.b32.xlu0 %v4700, 62
    %v5565 = vpop.permute.xlu0 %5564
    %5566 = vrot.lane.b32.xlu0 %v4708, 62
    %v5567 = vpop.permute.xlu0 %5566
    %5568 = vrot.lane.b32.xlu0 %v4701, 62
    %v5569 = vpop.permute.xlu0 %5568
    %5570 = vrot.lane.b32.xlu0 %v4709, 62
    %v5571 = vpop.permute.xlu0 %5570
    %5572 = vrot.lane.b32.xlu0 %v4702, 62
    %v5573 = vpop.permute.xlu0 %5572
    %5574 = vrot.lane.b32.xlu0 %v4710, 62
    %v5575 = vpop.permute.xlu0 %5574
    %5576 = vrot.lane.b32.xlu0 %v4703, 62
    %v5577 = vpop.permute.xlu0 %5576
    %5578 = vrot.lane.b32.xlu0 %v4711, 62
    %v5579 = vpop.permute.xlu0 %5578
    %5580 = vrot.lane.b32.xlu0 %v4704, 62
    %v5581 = vpop.permute.xlu0 %5580
    %5582 = vrot.lane.b32.xlu0 %v4712, 62
    %v5583 = vpop.permute.xlu0 %5582
    %5584 = vrot.lane.b32.xlu0 %v4705, 62
    %v5585 = vpop.permute.xlu0 %5584
    %5586 = vrot.lane.b32.xlu0 %v4713, 62
    %v5587 = vpop.permute.xlu0 %5586
    %5588 = vrot.lane.b32.xlu0 %v4706, 62
    %v5589 = vpop.permute.xlu0 %5588
    %5590 = vrot.lane.b32.xlu0 %v4714, 62
    %v5591 = vpop.permute.xlu0 %5590
    %vm5592 = vcmp.lt.s32.totalorder %v632, 62
    %v5593 = vsel %vm5592, %v5585, %v5589
    %v5594 = vsel %vm5592, %v5587, %v5591
    %v5595 = vsel %vm5592, %v5581, %v5585
    %v5596 = vsel %vm5592, %v5583, %v5587
    %v5597 = vsel %vm5592, %v5577, %v5581
    %v5598 = vsel %vm5592, %v5579, %v5583
    %v5599 = vsel %vm5592, %v5573, %v5577
    %v5600 = vsel %vm5592, %v5575, %v5579
    %v5601 = vsel %vm5592, %v5569, %v5573
    %v5602 = vsel %vm5592, %v5571, %v5575
    %v5603 = vsel %vm5592, %v5565, %v5569
    %v5604 = vsel %vm5592, %v5567, %v5571
    %v5605 = vsel %vm5592, %v5561, %v5565
    %v5606 = vsel %vm5592, %v5563, %v5567
    %v5607 = vsel %vm5592, %v5589, %v5561
    %v5608 = vsel %vm5592, %v5591, %v5563
    %s5609 = scalar_lea.vmem %s8, 2
    %v5610 = vld [vmem:[%s5609] ss:$8 sm:$0xf]
    %v5611 = vld [vmem:[%s5609] ss:$8 sm:$0xf0]
    %v5612 = vor.u32 %v5610, %v5611
    %v5614 = vlaneseq
    %v5615 = vshrl.u32 %v5614, 7
    %v5616 = vsub.s32 0, %v5615
    %v5617 = vrot.slane %v5612, %v5616
    %v5618 = vlaneseq
    %v5619 = vshrl.u32 %v5618, 7
    %v5620 = vsub.s32 1, %v5619
    %v5621 = vrot.slane %v5612, %v5620
    %v5622 = vlaneseq
    %v5623 = vshrl.u32 %v5622, 7
    %v5624 = vsub.s32 2, %v5623
    %v5625 = vrot.slane %v5612, %v5624
    %v5626 = vlaneseq
    %v5627 = vshrl.u32 %v5626, 7
    %v5628 = vsub.s32 3, %v5627
    %v5629 = vrot.slane %v5612, %v5628
    %v5630 = vlaneseq
    %v5631 = vshrl.u32 %v5630, 7
    %v5632 = vsub.s32 4, %v5631
    %v5633 = vrot.slane %v5612, %v5632
    %v5634 = vlaneseq
    %v5635 = vshrl.u32 %v5634, 7
    %v5636 = vsub.s32 5, %v5635
    %v5637 = vrot.slane %v5612, %v5636
    %v5638 = vlaneseq
    %v5639 = vshrl.u32 %v5638, 7
    %v5640 = vsub.s32 6, %v5639
    %v5641 = vrot.slane %v5612, %v5640
    %v5642 = vlaneseq
    %v5643 = vshrl.u32 %v5642, 7
    %v5644 = vsub.s32 7, %v5643
    %v5645 = vrot.slane %v5612, %v5644
    %v5654 = vmul.f32 %v5607, %v5617
    %v5655 = vmul.f32 %v5605, %v5621
    %v5656 = vmul.f32 %v5603, %v5625
    %v5657 = vmul.f32 %v5601, %v5629
    %v5658 = vmul.f32 %v5599, %v5633
    %v5659 = vmul.f32 %v5597, %v5637
    %v5660 = vmul.f32 %v5595, %v5641
    %v5661 = vmul.f32 %v5593, %v5645
    %v5662 = vmul.f32 %v5608, %v5617
    %v5663 = vmul.f32 %v5606, %v5621
    %v5664 = vmul.f32 %v5604, %v5625
    %v5665 = vmul.f32 %v5602, %v5629
    %v5666 = vmul.f32 %v5600, %v5633
    %v5667 = vmul.f32 %v5598, %v5637
    %v5668 = vmul.f32 %v5596, %v5641
    %v5669 = vmul.f32 %v5594, %v5645
    %s5670 = scalar_lea.vmem %s4, 4
    %v5671 = vld [vmem:[%s5670] sm:$0x3]
    %v5673 = vsel %vm4937, %v5671, 0
    %v5676 = vsel %vm4423, %v5662, 0
    %v5679 = vsel %vm4423, %v5663, 0
    %v5682 = vsel %vm4423, %v5664, 0
    %v5685 = vsel %vm4423, %v5665, 0
    %v5688 = vsel %vm4423, %v5666, 0
    %v5691 = vsel %vm4423, %v5667, 0
    %v5694 = vsel %vm4423, %v5668, 0
    %v5697 = vsel %vm4423, %v5669, 0
    %5699 = vmatprep.subr.mxu0 0.0
    %5700 = vmatpush1.msra.mxu0 0.0
    %5701 = vmatprep.subr.mxu0 0.0
    %5702 = vmatpush1.msra.mxu0 0.0
    %5703 = vmatprep.subr.mxu0 0.0
    %5704 = vmatpush1.msra.mxu0 0.0
    %5705 = vmatprep.subr.mxu0 0.0
    %5706 = vmatpush1.msra.mxu0 0.0
    %5707 = vmatprep.subr.mxu0 0.0
    %5708 = vmatpush1.msra.mxu0 0.0
    %5709 = vmatprep.subr.mxu0 0.0
    %5710 = vmatpush1.msra.mxu0 0.0
    %5711 = vmatprep.subr.mxu0 0.0
    %5712 = vmatpush1.msra.mxu0 0.0
    %5713 = vmatprep.subr.mxu0 0.0
    %5714 = vmatpush1.msra.mxu0 0.0
    %5715 = vmatprep.subr.mxu0 0.0
    %5716 = vmatpush1.msra.mxu0 0.0
    %5717 = vmatprep.subr.mxu0 0.0
    %5718 = vmatpush1.msra.mxu0 0.0
    %5719 = vmatprep.subr.mxu0 0.0
    %5720 = vmatpush1.msra.mxu0 0.0
    %5721 = vmatprep.subr.mxu0 0.0
    %5722 = vmatpush1.msra.mxu0 0.0
    %5723 = vmatprep.subr.mxu0 0.0
    %5724 = vmatpush1.msra.mxu0 0.0
    %5725 = vmatprep.subr.mxu0 0.0
    %5726 = vmatpush1.msra.mxu0 0.0
    %5727 = vmatprep.subr.mxu0 %v5679
    %5728 = vmatpush1.msra.mxu0 %v5676
    %5729 = vmatprep.subr.mxu0 %v5655
    %5730 = vmatpush1.msra.mxu0 %v5654
    %5731 = vmatprep.subr.mxu0 0.0
    %5732 = vmatpush2.msra.mxu0 0.0
    %5733 = vmatprep.subr.mxu0 0.0
    %5734 = vmatpush2.msra.mxu0 0.0
    %5735 = vmatprep.subr.mxu0 0.0
    %5736 = vmatpush2.msra.mxu0 0.0
    %5737 = vmatprep.subr.mxu0 0.0
    %5738 = vmatpush2.msra.mxu0 0.0
    %5739 = vmatprep.subr.mxu0 0.0
    %5740 = vmatpush2.msra.mxu0 0.0
    %5741 = vmatprep.subr.mxu0 0.0
    %5742 = vmatpush2.msra.mxu0 0.0
    %5743 = vmatprep.subr.mxu0 0.0
    %5744 = vmatpush2.msra.mxu0 0.0
    %5745 = vmatprep.subr.mxu0 0.0
    %5746 = vmatpush2.msra.mxu0 0.0
    %5747 = vmatprep.subr.mxu0 0.0
    %5748 = vmatpush2.msra.mxu0 0.0
    %5749 = vmatprep.subr.mxu0 0.0
    %5750 = vmatpush2.msra.mxu0 0.0
    %5751 = vmatprep.subr.mxu0 0.0
    %5752 = vmatpush2.msra.mxu0 0.0
    %5753 = vmatprep.subr.mxu0 0.0
    %5754 = vmatpush2.msra.mxu0 0.0
    %5755 = vmatprep.subr.mxu0 0.0
    %5756 = vmatpush2.msra.mxu0 0.0
    %5757 = vmatprep.subr.mxu0 0.0
    %5758 = vmatpush2.msra.mxu0 0.0
    %5759 = vmatprep.subr.mxu0 0.0
    %5760 = vmatpush2.msra.mxu0 0.0
    %5761 = vmatprep.subr.mxu0 0.0
    %5762 = vmatpush2.msra.mxu0 0.0
    %5763 = vmatprep.mubr.f32.mxu0 0.0
    %5764 = vmatmul.mubr.f32.gmra.mxu0 %v5673
    %v5765 = vpop.f32.mrf.mxu0
    %v5766 = vadd.f32 0.0, %v5765
    %v5767 = vpop.f32.mrf.mxu0
    %v5768 = vadd.f32 0.0, %v5767
    %5769 = vdwg.mxu0
    %5770 = vmatprep.subr.mxu0 0.0
    %5771 = vmatpush1.msra.mxu0 0.0
    %5772 = vmatprep.subr.mxu0 0.0
    %5773 = vmatpush1.msra.mxu0 0.0
    %5774 = vmatprep.subr.mxu0 0.0
    %5775 = vmatpush1.msra.mxu0 0.0
    %5776 = vmatprep.subr.mxu0 0.0
    %5777 = vmatpush1.msra.mxu0 0.0
    %5778 = vmatprep.subr.mxu0 0.0
    %5779 = vmatpush1.msra.mxu0 0.0
    %5780 = vmatprep.subr.mxu0 0.0
    %5781 = vmatpush1.msra.mxu0 0.0
    %5782 = vmatprep.subr.mxu0 0.0
    %5783 = vmatpush1.msra.mxu0 0.0
    %5784 = vmatprep.subr.mxu0 0.0
    %5785 = vmatpush1.msra.mxu0 0.0
    %5786 = vmatprep.subr.mxu0 0.0
    %5787 = vmatpush1.msra.mxu0 0.0
    %5788 = vmatprep.subr.mxu0 0.0
    %5789 = vmatpush1.msra.mxu0 0.0
    %5790 = vmatprep.subr.mxu0 0.0
    %5791 = vmatpush1.msra.mxu0 0.0
    %5792 = vmatprep.subr.mxu0 0.0
    %5793 = vmatpush1.msra.mxu0 0.0
    %5794 = vmatprep.subr.mxu0 0.0
    %5795 = vmatpush1.msra.mxu0 0.0
    %5796 = vmatprep.subr.mxu0 0.0
    %5797 = vmatpush1.msra.mxu0 0.0
    %5798 = vmatprep.subr.mxu0 %v5685
    %5799 = vmatpush1.msra.mxu0 %v5682
    %5800 = vmatprep.subr.mxu0 %v5657
    %5801 = vmatpush1.msra.mxu0 %v5656
    %5802 = vmatprep.subr.mxu0 0.0
    %5803 = vmatpush2.msra.mxu0 0.0
    %5804 = vmatprep.subr.mxu0 0.0
    %5805 = vmatpush2.msra.mxu0 0.0
    %5806 = vmatprep.subr.mxu0 0.0
    %5807 = vmatpush2.msra.mxu0 0.0
    %5808 = vmatprep.subr.mxu0 0.0
    %5809 = vmatpush2.msra.mxu0 0.0
    %5810 = vmatprep.subr.mxu0 0.0
    %5811 = vmatpush2.msra.mxu0 0.0
    %5812 = vmatprep.subr.mxu0 0.0
    %5813 = vmatpush2.msra.mxu0 0.0
    %5814 = vmatprep.subr.mxu0 0.0
    %5815 = vmatpush2.msra.mxu0 0.0
    %5816 = vmatprep.subr.mxu0 0.0
    %5817 = vmatpush2.msra.mxu0 0.0
    %5818 = vmatprep.subr.mxu0 0.0
    %5819 = vmatpush2.msra.mxu0 0.0
    %5820 = vmatprep.subr.mxu0 0.0
    %5821 = vmatpush2.msra.mxu0 0.0
    %5822 = vmatprep.subr.mxu0 0.0
    %5823 = vmatpush2.msra.mxu0 0.0
    %5824 = vmatprep.subr.mxu0 0.0
    %5825 = vmatpush2.msra.mxu0 0.0
    %5826 = vmatprep.subr.mxu0 0.0
    %5827 = vmatpush2.msra.mxu0 0.0
    %5828 = vmatprep.subr.mxu0 0.0
    %5829 = vmatpush2.msra.mxu0 0.0
    %5830 = vmatprep.subr.mxu0 0.0
    %5831 = vmatpush2.msra.mxu0 0.0
    %5832 = vmatprep.subr.mxu0 0.0
    %5833 = vmatpush2.msra.mxu0 0.0
    %5834 = vmatprep.mubr.f32.mxu0 0.0
    %5835 = vmatmul.mubr.f32.gmra.mxu0 %v5673
    %v5836 = vpop.f32.mrf.mxu0
    %v5837 = vadd.f32 0.0, %v5836
    %v5838 = vpop.f32.mrf.mxu0
    %v5839 = vadd.f32 0.0, %v5838
    %5840 = vdwg.mxu0
    %5841 = vmatprep.subr.mxu0 0.0
    %5842 = vmatpush1.msra.mxu0 0.0
    %5843 = vmatprep.subr.mxu0 0.0
    %5844 = vmatpush1.msra.mxu0 0.0
    %5845 = vmatprep.subr.mxu0 0.0
    %5846 = vmatpush1.msra.mxu0 0.0
    %5847 = vmatprep.subr.mxu0 0.0
    %5848 = vmatpush1.msra.mxu0 0.0
    %5849 = vmatprep.subr.mxu0 0.0
    %5850 = vmatpush1.msra.mxu0 0.0
    %5851 = vmatprep.subr.mxu0 0.0
    %5852 = vmatpush1.msra.mxu0 0.0
    %5853 = vmatprep.subr.mxu0 0.0
    %5854 = vmatpush1.msra.mxu0 0.0
    %5855 = vmatprep.subr.mxu0 0.0
    %5856 = vmatpush1.msra.mxu0 0.0
    %5857 = vmatprep.subr.mxu0 0.0
    %5858 = vmatpush1.msra.mxu0 0.0
    %5859 = vmatprep.subr.mxu0 0.0
    %5860 = vmatpush1.msra.mxu0 0.0
    %5861 = vmatprep.subr.mxu0 0.0
    %5862 = vmatpush1.msra.mxu0 0.0
    %5863 = vmatprep.subr.mxu0 0.0
    %5864 = vmatpush1.msra.mxu0 0.0
    %5865 = vmatprep.subr.mxu0 0.0
    %5866 = vmatpush1.msra.mxu0 0.0
    %5867 = vmatprep.subr.mxu0 0.0
    %5868 = vmatpush1.msra.mxu0 0.0
    %5869 = vmatprep.subr.mxu0 %v5691
    %5870 = vmatpush1.msra.mxu0 %v5688
    %5871 = vmatprep.subr.mxu0 %v5659
    %5872 = vmatpush1.msra.mxu0 %v5658
    %5873 = vmatprep.subr.mxu0 0.0
    %5874 = vmatpush2.msra.mxu0 0.0
    %5875 = vmatprep.subr.mxu0 0.0
    %5876 = vmatpush2.msra.mxu0 0.0
    %5877 = vmatprep.subr.mxu0 0.0
    %5878 = vmatpush2.msra.mxu0 0.0
    %5879 = vmatprep.subr.mxu0 0.0
    %5880 = vmatpush2.msra.mxu0 0.0
    %5881 = vmatprep.subr.mxu0 0.0
    %5882 = vmatpush2.msra.mxu0 0.0
    %5883 = vmatprep.subr.mxu0 0.0
    %5884 = vmatpush2.msra.mxu0 0.0
    %5885 = vmatprep.subr.mxu0 0.0
    %5886 = vmatpush2.msra.mxu0 0.0
    %5887 = vmatprep.subr.mxu0 0.0
    %5888 = vmatpush2.msra.mxu0 0.0
    %5889 = vmatprep.subr.mxu0 0.0
    %5890 = vmatpush2.msra.mxu0 0.0
    %5891 = vmatprep.subr.mxu0 0.0
    %5892 = vmatpush2.msra.mxu0 0.0
    %5893 = vmatprep.subr.mxu0 0.0
    %5894 = vmatpush2.msra.mxu0 0.0
    %5895 = vmatprep.subr.mxu0 0.0
    %5896 = vmatpush2.msra.mxu0 0.0
    %5897 = vmatprep.subr.mxu0 0.0
    %5898 = vmatpush2.msra.mxu0 0.0
    %5899 = vmatprep.subr.mxu0 0.0
    %5900 = vmatpush2.msra.mxu0 0.0
    %5901 = vmatprep.subr.mxu0 0.0
    %5902 = vmatpush2.msra.mxu0 0.0
    %5903 = vmatprep.subr.mxu0 0.0
    %5904 = vmatpush2.msra.mxu0 0.0
    %5905 = vmatprep.mubr.f32.mxu0 0.0
    %5906 = vmatmul.mubr.f32.gmra.mxu0 %v5673
    %v5907 = vpop.f32.mrf.mxu0
    %v5908 = vadd.f32 0.0, %v5907
    %v5909 = vpop.f32.mrf.mxu0
    %v5910 = vadd.f32 0.0, %v5909
    %5911 = vdwg.mxu0
    %5912 = vmatprep.subr.mxu0 0.0
    %5913 = vmatpush1.msra.mxu0 0.0
    %5914 = vmatprep.subr.mxu0 0.0
    %5915 = vmatpush1.msra.mxu0 0.0
    %5916 = vmatprep.subr.mxu0 0.0
    %5917 = vmatpush1.msra.mxu0 0.0
    %5918 = vmatprep.subr.mxu0 0.0
    %5919 = vmatpush1.msra.mxu0 0.0
    %5920 = vmatprep.subr.mxu0 0.0
    %5921 = vmatpush1.msra.mxu0 0.0
    %5922 = vmatprep.subr.mxu0 0.0
    %5923 = vmatpush1.msra.mxu0 0.0
    %5924 = vmatprep.subr.mxu0 0.0
    %5925 = vmatpush1.msra.mxu0 0.0
    %5926 = vmatprep.subr.mxu0 0.0
    %5927 = vmatpush1.msra.mxu0 0.0
    %5928 = vmatprep.subr.mxu0 0.0
    %5929 = vmatpush1.msra.mxu0 0.0
    %5930 = vmatprep.subr.mxu0 0.0
    %5931 = vmatpush1.msra.mxu0 0.0
    %5932 = vmatprep.subr.mxu0 0.0
    %5933 = vmatpush1.msra.mxu0 0.0
    %5934 = vmatprep.subr.mxu0 0.0
    %5935 = vmatpush1.msra.mxu0 0.0
    %5936 = vmatprep.subr.mxu0 0.0
    %5937 = vmatpush1.msra.mxu0 0.0
    %5938 = vmatprep.subr.mxu0 0.0
    %5939 = vmatpush1.msra.mxu0 0.0
    %5940 = vmatprep.subr.mxu0 %v5697
    %5941 = vmatpush1.msra.mxu0 %v5694
    %5942 = vmatprep.subr.mxu0 %v5661
    %5943 = vmatpush1.msra.mxu0 %v5660
    %5944 = vmatprep.subr.mxu0 0.0
    %5945 = vmatpush2.msra.mxu0 0.0
    %5946 = vmatprep.subr.mxu0 0.0
    %5947 = vmatpush2.msra.mxu0 0.0
    %5948 = vmatprep.subr.mxu0 0.0
    %5949 = vmatpush2.msra.mxu0 0.0
    %5950 = vmatprep.subr.mxu0 0.0
    %5951 = vmatpush2.msra.mxu0 0.0
    %5952 = vmatprep.subr.mxu0 0.0
    %5953 = vmatpush2.msra.mxu0 0.0
    %5954 = vmatprep.subr.mxu0 0.0
    %5955 = vmatpush2.msra.mxu0 0.0
    %5956 = vmatprep.subr.mxu0 0.0
    %5957 = vmatpush2.msra.mxu0 0.0
    %5958 = vmatprep.subr.mxu0 0.0
    %5959 = vmatpush2.msra.mxu0 0.0
    %5960 = vmatprep.subr.mxu0 0.0
    %5961 = vmatpush2.msra.mxu0 0.0
    %5962 = vmatprep.subr.mxu0 0.0
    %5963 = vmatpush2.msra.mxu0 0.0
    %5964 = vmatprep.subr.mxu0 0.0
    %5965 = vmatpush2.msra.mxu0 0.0
    %5966 = vmatprep.subr.mxu0 0.0
    %5967 = vmatpush2.msra.mxu0 0.0
    %5968 = vmatprep.subr.mxu0 0.0
    %5969 = vmatpush2.msra.mxu0 0.0
    %5970 = vmatprep.subr.mxu0 0.0
    %5971 = vmatpush2.msra.mxu0 0.0
    %5972 = vmatprep.subr.mxu0 0.0
    %5973 = vmatpush2.msra.mxu0 0.0
    %5974 = vmatprep.subr.mxu0 0.0
    %5975 = vmatpush2.msra.mxu0 0.0
    %5976 = vmatprep.mubr.f32.mxu0 0.0
    %5977 = vmatmul.mubr.f32.gmra.mxu0 %v5673
    %v5978 = vpop.f32.mrf.mxu0
    %v5979 = vadd.f32 0.0, %v5978
    %v5980 = vpop.f32.mrf.mxu0
    %v5981 = vadd.f32 0.0, %v5980
    %5982 = vdwg.mxu0
    %v5983 = vadd.f32 %v5343, %v5766
    %v5984 = vadd.f32 %v5345, %v5768
    %v5985 = vadd.f32 %v5414, %v5837
    %v5986 = vadd.f32 %v5416, %v5839
    %v5987 = vadd.f32 %v5485, %v5908
    %v5988 = vadd.f32 %v5487, %v5910
    %v5989 = vadd.f32 %v5556, %v5979
    %v5990 = vadd.f32 %v5558, %v5981
    %5991 = vrot.lane.b32.xlu0 %v4699, 2
    %v5992 = vpop.permute.xlu0 %5991
    %5993 = vrot.lane.b32.xlu0 %v4707, 2
    %v5994 = vpop.permute.xlu0 %5993
    %5995 = vrot.lane.b32.xlu0 %v4700, 2
    %v5996 = vpop.permute.xlu0 %5995
    %5997 = vrot.lane.b32.xlu0 %v4708, 2
    %v5998 = vpop.permute.xlu0 %5997
    %5999 = vrot.lane.b32.xlu0 %v4701, 2
    %v6000 = vpop.permute.xlu0 %5999
    %6001 = vrot.lane.b32.xlu0 %v4709, 2
    %v6002 = vpop.permute.xlu0 %6001
    %6003 = vrot.lane.b32.xlu0 %v4702, 2
    %v6004 = vpop.permute.xlu0 %6003
    %6005 = vrot.lane.b32.xlu0 %v4710, 2
    %v6006 = vpop.permute.xlu0 %6005
    %6007 = vrot.lane.b32.xlu0 %v4703, 2
    %v6008 = vpop.permute.xlu0 %6007
    %6009 = vrot.lane.b32.xlu0 %v4711, 2
    %v6010 = vpop.permute.xlu0 %6009
    %6011 = vrot.lane.b32.xlu0 %v4704, 2
    %v6012 = vpop.permute.xlu0 %6011
    %6013 = vrot.lane.b32.xlu0 %v4712, 2
    %v6014 = vpop.permute.xlu0 %6013
    %6015 = vrot.lane.b32.xlu0 %v4705, 2
    %v6016 = vpop.permute.xlu0 %6015
    %6017 = vrot.lane.b32.xlu0 %v4713, 2
    %v6018 = vpop.permute.xlu0 %6017
    %6019 = vrot.lane.b32.xlu0 %v4706, 2
    %v6020 = vpop.permute.xlu0 %6019
    %6021 = vrot.lane.b32.xlu0 %v4714, 2
    %v6022 = vpop.permute.xlu0 %6021
    %vm6023 = vcmp.lt.s32.totalorder %v632, 2
    %v6024 = vsel %vm6023, %v6016, %v6020
    %v6025 = vsel %vm6023, %v6018, %v6022
    %v6026 = vsel %vm6023, %v6012, %v6016
    %v6027 = vsel %vm6023, %v6014, %v6018
    %v6028 = vsel %vm6023, %v6008, %v6012
    %v6029 = vsel %vm6023, %v6010, %v6014
    %v6030 = vsel %vm6023, %v6004, %v6008
    %v6031 = vsel %vm6023, %v6006, %v6010
    %v6032 = vsel %vm6023, %v6000, %v6004
    %v6033 = vsel %vm6023, %v6002, %v6006
    %v6034 = vsel %vm6023, %v5996, %v6000
    %v6035 = vsel %vm6023, %v5998, %v6002
    %v6036 = vsel %vm6023, %v5992, %v5996
    %v6037 = vsel %vm6023, %v5994, %v5998
    %v6038 = vsel %vm6023, %v6020, %v5992
    %v6039 = vsel %vm6023, %v6022, %v5994
    %s6040 = scalar_lea.vmem %s8, 3
    %v6041 = vld [vmem:[%s6040] ss:$8 sm:$0xf]
    %v6042 = vld [vmem:[%s6040] ss:$8 sm:$0xf0]
    %v6043 = vor.u32 %v6041, %v6042
    %v6045 = vlaneseq
    %v6046 = vshrl.u32 %v6045, 7
    %v6047 = vsub.s32 0, %v6046
    %v6048 = vrot.slane %v6043, %v6047
    %v6049 = vlaneseq
    %v6050 = vshrl.u32 %v6049, 7
    %v6051 = vsub.s32 1, %v6050
    %v6052 = vrot.slane %v6043, %v6051
    %v6053 = vlaneseq
    %v6054 = vshrl.u32 %v6053, 7
    %v6055 = vsub.s32 2, %v6054
    %v6056 = vrot.slane %v6043, %v6055
    %v6057 = vlaneseq
    %v6058 = vshrl.u32 %v6057, 7
    %v6059 = vsub.s32 3, %v6058
    %v6060 = vrot.slane %v6043, %v6059
    %v6061 = vlaneseq
    %v6062 = vshrl.u32 %v6061, 7
    %v6063 = vsub.s32 4, %v6062
    %v6064 = vrot.slane %v6043, %v6063
    %v6065 = vlaneseq
    %v6066 = vshrl.u32 %v6065, 7
    %v6067 = vsub.s32 5, %v6066
    %v6068 = vrot.slane %v6043, %v6067
    %v6069 = vlaneseq
    %v6070 = vshrl.u32 %v6069, 7
    %v6071 = vsub.s32 6, %v6070
    %v6072 = vrot.slane %v6043, %v6071
    %v6073 = vlaneseq
    %v6074 = vshrl.u32 %v6073, 7
    %v6075 = vsub.s32 7, %v6074
    %v6076 = vrot.slane %v6043, %v6075
    %v6085 = vmul.f32 %v6038, %v6048
    %v6086 = vmul.f32 %v6036, %v6052
    %v6087 = vmul.f32 %v6034, %v6056
    %v6088 = vmul.f32 %v6032, %v6060
    %v6089 = vmul.f32 %v6030, %v6064
    %v6090 = vmul.f32 %v6028, %v6068
    %v6091 = vmul.f32 %v6026, %v6072
    %v6092 = vmul.f32 %v6024, %v6076
    %v6093 = vmul.f32 %v6039, %v6048
    %v6094 = vmul.f32 %v6037, %v6052
    %v6095 = vmul.f32 %v6035, %v6056
    %v6096 = vmul.f32 %v6033, %v6060
    %v6097 = vmul.f32 %v6031, %v6064
    %v6098 = vmul.f32 %v6029, %v6068
    %v6099 = vmul.f32 %v6027, %v6072
    %v6100 = vmul.f32 %v6025, %v6076
    %s6101 = scalar_lea.vmem %s4, 6
    %v6102 = vld [vmem:[%s6101] sm:$0x3]
    %v6104 = vsel %vm4937, %v6102, 0
    %v6107 = vsel %vm4423, %v6093, 0
    %v6110 = vsel %vm4423, %v6094, 0
    %v6113 = vsel %vm4423, %v6095, 0
    %v6116 = vsel %vm4423, %v6096, 0
    %v6119 = vsel %vm4423, %v6097, 0
    %v6122 = vsel %vm4423, %v6098, 0
    %v6125 = vsel %vm4423, %v6099, 0
    %v6128 = vsel %vm4423, %v6100, 0
    %6130 = vmatprep.subr.mxu0 0.0
    %6131 = vmatpush1.msra.mxu0 0.0
    %6132 = vmatprep.subr.mxu0 0.0
    %6133 = vmatpush1.msra.mxu0 0.0
    %6134 = vmatprep.subr.mxu0 0.0
    %6135 = vmatpush1.msra.mxu0 0.0
    %6136 = vmatprep.subr.mxu0 0.0
    %6137 = vmatpush1.msra.mxu0 0.0
    %6138 = vmatprep.subr.mxu0 0.0
    %6139 = vmatpush1.msra.mxu0 0.0
    %6140 = vmatprep.subr.mxu0 0.0
    %6141 = vmatpush1.msra.mxu0 0.0
    %6142 = vmatprep.subr.mxu0 0.0
    %6143 = vmatpush1.msra.mxu0 0.0
    %6144 = vmatprep.subr.mxu0 0.0
    %6145 = vmatpush1.msra.mxu0 0.0
    %6146 = vmatprep.subr.mxu0 0.0
    %6147 = vmatpush1.msra.mxu0 0.0
    %6148 = vmatprep.subr.mxu0 0.0
    %6149 = vmatpush1.msra.mxu0 0.0
    %6150 = vmatprep.subr.mxu0 0.0
    %6151 = vmatpush1.msra.mxu0 0.0
    %6152 = vmatprep.subr.mxu0 0.0
    %6153 = vmatpush1.msra.mxu0 0.0
    %6154 = vmatprep.subr.mxu0 0.0
    %6155 = vmatpush1.msra.mxu0 0.0
    %6156 = vmatprep.subr.mxu0 0.0
    %6157 = vmatpush1.msra.mxu0 0.0
    %6158 = vmatprep.subr.mxu0 %v6110
    %6159 = vmatpush1.msra.mxu0 %v6107
    %6160 = vmatprep.subr.mxu0 %v6086
    %6161 = vmatpush1.msra.mxu0 %v6085
    %6162 = vmatprep.subr.mxu0 0.0
    %6163 = vmatpush2.msra.mxu0 0.0
    %6164 = vmatprep.subr.mxu0 0.0
    %6165 = vmatpush2.msra.mxu0 0.0
    %6166 = vmatprep.subr.mxu0 0.0
    %6167 = vmatpush2.msra.mxu0 0.0
    %6168 = vmatprep.subr.mxu0 0.0
    %6169 = vmatpush2.msra.mxu0 0.0
    %6170 = vmatprep.subr.mxu0 0.0
    %6171 = vmatpush2.msra.mxu0 0.0
    %6172 = vmatprep.subr.mxu0 0.0
    %6173 = vmatpush2.msra.mxu0 0.0
    %6174 = vmatprep.subr.mxu0 0.0
    %6175 = vmatpush2.msra.mxu0 0.0
    %6176 = vmatprep.subr.mxu0 0.0
    %6177 = vmatpush2.msra.mxu0 0.0
    %6178 = vmatprep.subr.mxu0 0.0
    %6179 = vmatpush2.msra.mxu0 0.0
    %6180 = vmatprep.subr.mxu0 0.0
    %6181 = vmatpush2.msra.mxu0 0.0
    %6182 = vmatprep.subr.mxu0 0.0
    %6183 = vmatpush2.msra.mxu0 0.0
    %6184 = vmatprep.subr.mxu0 0.0
    %6185 = vmatpush2.msra.mxu0 0.0
    %6186 = vmatprep.subr.mxu0 0.0
    %6187 = vmatpush2.msra.mxu0 0.0
    %6188 = vmatprep.subr.mxu0 0.0
    %6189 = vmatpush2.msra.mxu0 0.0
    %6190 = vmatprep.subr.mxu0 0.0
    %6191 = vmatpush2.msra.mxu0 0.0
    %6192 = vmatprep.subr.mxu0 0.0
    %6193 = vmatpush2.msra.mxu0 0.0
    %6194 = vmatprep.mubr.f32.mxu0 0.0
    %6195 = vmatmul.mubr.f32.gmra.mxu0 %v6104
    %v6196 = vpop.f32.mrf.mxu0
    %v6197 = vadd.f32 0.0, %v6196
    %v6198 = vpop.f32.mrf.mxu0
    %v6199 = vadd.f32 0.0, %v6198
    %6200 = vdwg.mxu0
    %6201 = vmatprep.subr.mxu0 0.0
    %6202 = vmatpush1.msra.mxu0 0.0
    %6203 = vmatprep.subr.mxu0 0.0
    %6204 = vmatpush1.msra.mxu0 0.0
    %6205 = vmatprep.subr.mxu0 0.0
    %6206 = vmatpush1.msra.mxu0 0.0
    %6207 = vmatprep.subr.mxu0 0.0
    %6208 = vmatpush1.msra.mxu0 0.0
    %6209 = vmatprep.subr.mxu0 0.0
    %6210 = vmatpush1.msra.mxu0 0.0
    %6211 = vmatprep.subr.mxu0 0.0
    %6212 = vmatpush1.msra.mxu0 0.0
    %6213 = vmatprep.subr.mxu0 0.0
    %6214 = vmatpush1.msra.mxu0 0.0
    %6215 = vmatprep.subr.mxu0 0.0
    %6216 = vmatpush1.msra.mxu0 0.0
    %6217 = vmatprep.subr.mxu0 0.0
    %6218 = vmatpush1.msra.mxu0 0.0
    %6219 = vmatprep.subr.mxu0 0.0
    %6220 = vmatpush1.msra.mxu0 0.0
    %6221 = vmatprep.subr.mxu0 0.0
    %6222 = vmatpush1.msra.mxu0 0.0
    %6223 = vmatprep.subr.mxu0 0.0
    %6224 = vmatpush1.msra.mxu0 0.0
    %6225 = vmatprep.subr.mxu0 0.0
    %6226 = vmatpush1.msra.mxu0 0.0
    %6227 = vmatprep.subr.mxu0 0.0
    %6228 = vmatpush1.msra.mxu0 0.0
    %6229 = vmatprep.subr.mxu0 %v6116
    %6230 = vmatpush1.msra.mxu0 %v6113
    %6231 = vmatprep.subr.mxu0 %v6088
    %6232 = vmatpush1.msra.mxu0 %v6087
    %6233 = vmatprep.subr.mxu0 0.0
    %6234 = vmatpush2.msra.mxu0 0.0
    %6235 = vmatprep.subr.mxu0 0.0
    %6236 = vmatpush2.msra.mxu0 0.0
    %6237 = vmatprep.subr.mxu0 0.0
    %6238 = vmatpush2.msra.mxu0 0.0
    %6239 = vmatprep.subr.mxu0 0.0
    %6240 = vmatpush2.msra.mxu0 0.0
    %6241 = vmatprep.subr.mxu0 0.0
    %6242 = vmatpush2.msra.mxu0 0.0
    %6243 = vmatprep.subr.mxu0 0.0
    %6244 = vmatpush2.msra.mxu0 0.0
    %6245 = vmatprep.subr.mxu0 0.0
    %6246 = vmatpush2.msra.mxu0 0.0
    %6247 = vmatprep.subr.mxu0 0.0
    %6248 = vmatpush2.msra.mxu0 0.0
    %6249 = vmatprep.subr.mxu0 0.0
    %6250 = vmatpush2.msra.mxu0 0.0
    %6251 = vmatprep.subr.mxu0 0.0
    %6252 = vmatpush2.msra.mxu0 0.0
    %6253 = vmatprep.subr.mxu0 0.0
    %6254 = vmatpush2.msra.mxu0 0.0
    %6255 = vmatprep.subr.mxu0 0.0
    %6256 = vmatpush2.msra.mxu0 0.0
    %6257 = vmatprep.subr.mxu0 0.0
    %6258 = vmatpush2.msra.mxu0 0.0
    %6259 = vmatprep.subr.mxu0 0.0
    %6260 = vmatpush2.msra.mxu0 0.0
    %6261 = vmatprep.subr.mxu0 0.0
    %6262 = vmatpush2.msra.mxu0 0.0
    %6263 = vmatprep.subr.mxu0 0.0
    %6264 = vmatpush2.msra.mxu0 0.0
    %6265 = vmatprep.mubr.f32.mxu0 0.0
    %6266 = vmatmul.mubr.f32.gmra.mxu0 %v6104
    %v6267 = vpop.f32.mrf.mxu0
    %v6268 = vadd.f32 0.0, %v6267
    %v6269 = vpop.f32.mrf.mxu0
    %v6270 = vadd.f32 0.0, %v6269
    %6271 = vdwg.mxu0
    %6272 = vmatprep.subr.mxu0 0.0
    %6273 = vmatpush1.msra.mxu0 0.0
    %6274 = vmatprep.subr.mxu0 0.0
    %6275 = vmatpush1.msra.mxu0 0.0
    %6276 = vmatprep.subr.mxu0 0.0
    %6277 = vmatpush1.msra.mxu0 0.0
    %6278 = vmatprep.subr.mxu0 0.0
    %6279 = vmatpush1.msra.mxu0 0.0
    %6280 = vmatprep.subr.mxu0 0.0
    %6281 = vmatpush1.msra.mxu0 0.0
    %6282 = vmatprep.subr.mxu0 0.0
    %6283 = vmatpush1.msra.mxu0 0.0
    %6284 = vmatprep.subr.mxu0 0.0
    %6285 = vmatpush1.msra.mxu0 0.0
    %6286 = vmatprep.subr.mxu0 0.0
    %6287 = vmatpush1.msra.mxu0 0.0
    %6288 = vmatprep.subr.mxu0 0.0
    %6289 = vmatpush1.msra.mxu0 0.0
    %6290 = vmatprep.subr.mxu0 0.0
    %6291 = vmatpush1.msra.mxu0 0.0
    %6292 = vmatprep.subr.mxu0 0.0
    %6293 = vmatpush1.msra.mxu0 0.0
    %6294 = vmatprep.subr.mxu0 0.0
    %6295 = vmatpush1.msra.mxu0 0.0
    %6296 = vmatprep.subr.mxu0 0.0
    %6297 = vmatpush1.msra.mxu0 0.0
    %6298 = vmatprep.subr.mxu0 0.0
    %6299 = vmatpush1.msra.mxu0 0.0
    %6300 = vmatprep.subr.mxu0 %v6122
    %6301 = vmatpush1.msra.mxu0 %v6119
    %6302 = vmatprep.subr.mxu0 %v6090
    %6303 = vmatpush1.msra.mxu0 %v6089
    %6304 = vmatprep.subr.mxu0 0.0
    %6305 = vmatpush2.msra.mxu0 0.0
    %6306 = vmatprep.subr.mxu0 0.0
    %6307 = vmatpush2.msra.mxu0 0.0
    %6308 = vmatprep.subr.mxu0 0.0
    %6309 = vmatpush2.msra.mxu0 0.0
    %6310 = vmatprep.subr.mxu0 0.0
    %6311 = vmatpush2.msra.mxu0 0.0
    %6312 = vmatprep.subr.mxu0 0.0
    %6313 = vmatpush2.msra.mxu0 0.0
    %6314 = vmatprep.subr.mxu0 0.0
    %6315 = vmatpush2.msra.mxu0 0.0
    %6316 = vmatprep.subr.mxu0 0.0
    %6317 = vmatpush2.msra.mxu0 0.0
    %6318 = vmatprep.subr.mxu0 0.0
    %6319 = vmatpush2.msra.mxu0 0.0
    %6320 = vmatprep.subr.mxu0 0.0
    %6321 = vmatpush2.msra.mxu0 0.0
    %6322 = vmatprep.subr.mxu0 0.0
    %6323 = vmatpush2.msra.mxu0 0.0
    %6324 = vmatprep.subr.mxu0 0.0
    %6325 = vmatpush2.msra.mxu0 0.0
    %6326 = vmatprep.subr.mxu0 0.0
    %6327 = vmatpush2.msra.mxu0 0.0
    %6328 = vmatprep.subr.mxu0 0.0
    %6329 = vmatpush2.msra.mxu0 0.0
    %6330 = vmatprep.subr.mxu0 0.0
    %6331 = vmatpush2.msra.mxu0 0.0
    %6332 = vmatprep.subr.mxu0 0.0
    %6333 = vmatpush2.msra.mxu0 0.0
    %6334 = vmatprep.subr.mxu0 0.0
    %6335 = vmatpush2.msra.mxu0 0.0
    %6336 = vmatprep.mubr.f32.mxu0 0.0
    %6337 = vmatmul.mubr.f32.gmra.mxu0 %v6104
    %v6338 = vpop.f32.mrf.mxu0
    %v6339 = vadd.f32 0.0, %v6338
    %v6340 = vpop.f32.mrf.mxu0
    %v6341 = vadd.f32 0.0, %v6340
    %6342 = vdwg.mxu0
    %6343 = vmatprep.subr.mxu0 0.0
    %6344 = vmatpush1.msra.mxu0 0.0
    %6345 = vmatprep.subr.mxu0 0.0
    %6346 = vmatpush1.msra.mxu0 0.0
    %6347 = vmatprep.subr.mxu0 0.0
    %6348 = vmatpush1.msra.mxu0 0.0
    %6349 = vmatprep.subr.mxu0 0.0
    %6350 = vmatpush1.msra.mxu0 0.0
    %6351 = vmatprep.subr.mxu0 0.0
    %6352 = vmatpush1.msra.mxu0 0.0
    %6353 = vmatprep.subr.mxu0 0.0
    %6354 = vmatpush1.msra.mxu0 0.0
    %6355 = vmatprep.subr.mxu0 0.0
    %6356 = vmatpush1.msra.mxu0 0.0
    %6357 = vmatprep.subr.mxu0 0.0
    %6358 = vmatpush1.msra.mxu0 0.0
    %6359 = vmatprep.subr.mxu0 0.0
    %6360 = vmatpush1.msra.mxu0 0.0
    %6361 = vmatprep.subr.mxu0 0.0
    %6362 = vmatpush1.msra.mxu0 0.0
    %6363 = vmatprep.subr.mxu0 0.0
    %6364 = vmatpush1.msra.mxu0 0.0
    %6365 = vmatprep.subr.mxu0 0.0
    %6366 = vmatpush1.msra.mxu0 0.0
    %6367 = vmatprep.subr.mxu0 0.0
    %6368 = vmatpush1.msra.mxu0 0.0
    %6369 = vmatprep.subr.mxu0 0.0
    %6370 = vmatpush1.msra.mxu0 0.0
    %6371 = vmatprep.subr.mxu0 %v6128
    %6372 = vmatpush1.msra.mxu0 %v6125
    %6373 = vmatprep.subr.mxu0 %v6092
    %6374 = vmatpush1.msra.mxu0 %v6091
    %6375 = vmatprep.subr.mxu0 0.0
    %6376 = vmatpush2.msra.mxu0 0.0
    %6377 = vmatprep.subr.mxu0 0.0
    %6378 = vmatpush2.msra.mxu0 0.0
    %6379 = vmatprep.subr.mxu0 0.0
    %6380 = vmatpush2.msra.mxu0 0.0
    %6381 = vmatprep.subr.mxu0 0.0
    %6382 = vmatpush2.msra.mxu0 0.0
    %6383 = vmatprep.subr.mxu0 0.0
    %6384 = vmatpush2.msra.mxu0 0.0
    %6385 = vmatprep.subr.mxu0 0.0
    %6386 = vmatpush2.msra.mxu0 0.0
    %6387 = vmatprep.subr.mxu0 0.0
    %6388 = vmatpush2.msra.mxu0 0.0
    %6389 = vmatprep.subr.mxu0 0.0
    %6390 = vmatpush2.msra.mxu0 0.0
    %6391 = vmatprep.subr.mxu0 0.0
    %6392 = vmatpush2.msra.mxu0 0.0
    %6393 = vmatprep.subr.mxu0 0.0
    %6394 = vmatpush2.msra.mxu0 0.0
    %6395 = vmatprep.subr.mxu0 0.0
    %6396 = vmatpush2.msra.mxu0 0.0
    %6397 = vmatprep.subr.mxu0 0.0
    %6398 = vmatpush2.msra.mxu0 0.0
    %6399 = vmatprep.subr.mxu0 0.0
    %6400 = vmatpush2.msra.mxu0 0.0
    %6401 = vmatprep.subr.mxu0 0.0
    %6402 = vmatpush2.msra.mxu0 0.0
    %6403 = vmatprep.subr.mxu0 0.0
    %6404 = vmatpush2.msra.mxu0 0.0
    %6405 = vmatprep.subr.mxu0 0.0
    %6406 = vmatpush2.msra.mxu0 0.0
    %6407 = vmatprep.mubr.f32.mxu0 0.0
    %6408 = vmatmul.mubr.f32.gmra.mxu0 %v6104
    %v6409 = vpop.f32.mrf.mxu0
    %v6410 = vadd.f32 0.0, %v6409
    %v6411 = vpop.f32.mrf.mxu0
    %v6412 = vadd.f32 0.0, %v6411
    %6413 = vdwg.mxu0
    %v6414 = vadd.f32 %v5983, %v6197
    %v6415 = vadd.f32 %v5984, %v6199
    %v6416 = vadd.f32 %v5985, %v6268
    %v6417 = vadd.f32 %v5986, %v6270
    %v6418 = vadd.f32 %v5987, %v6339
    %v6419 = vadd.f32 %v5988, %v6341
    %v6420 = vadd.f32 %v5989, %v6410
    %v6421 = vadd.f32 %v5990, %v6412
    %s6422 = scalar_lea.vmem %s4, 8
    %v6423 = vld [vmem:[%s6422] sm:$0x3]
    %v6425 = vsel %vm4937, %v6423, 0
    %v6428 = vsel %vm4423, %v4707, 0
    %v6431 = vsel %vm4423, %v4708, 0
    %v6434 = vsel %vm4423, %v4709, 0
    %v6437 = vsel %vm4423, %v4710, 0
    %v6440 = vsel %vm4423, %v4711, 0
    %v6443 = vsel %vm4423, %v4712, 0
    %v6446 = vsel %vm4423, %v4713, 0
    %v6449 = vsel %vm4423, %v4714, 0
    %6451 = vmatprep.subr.mxu0 0.0
    %6452 = vmatpush1.msra.mxu0 0.0
    %6453 = vmatprep.subr.mxu0 0.0
    %6454 = vmatpush1.msra.mxu0 0.0
    %6455 = vmatprep.subr.mxu0 0.0
    %6456 = vmatpush1.msra.mxu0 0.0
    %6457 = vmatprep.subr.mxu0 0.0
    %6458 = vmatpush1.msra.mxu0 0.0
    %6459 = vmatprep.subr.mxu0 0.0
    %6460 = vmatpush1.msra.mxu0 0.0
    %6461 = vmatprep.subr.mxu0 0.0
    %6462 = vmatpush1.msra.mxu0 0.0
    %6463 = vmatprep.subr.mxu0 0.0
    %6464 = vmatpush1.msra.mxu0 0.0
    %6465 = vmatprep.subr.mxu0 0.0
    %6466 = vmatpush1.msra.mxu0 0.0
    %6467 = vmatprep.subr.mxu0 0.0
    %6468 = vmatpush1.msra.mxu0 0.0
    %6469 = vmatprep.subr.mxu0 0.0
    %6470 = vmatpush1.msra.mxu0 0.0
    %6471 = vmatprep.subr.mxu0 0.0
    %6472 = vmatpush1.msra.mxu0 0.0
    %6473 = vmatprep.subr.mxu0 0.0
    %6474 = vmatpush1.msra.mxu0 0.0
    %6475 = vmatprep.subr.mxu0 0.0
    %6476 = vmatpush1.msra.mxu0 0.0
    %6477 = vmatprep.subr.mxu0 0.0
    %6478 = vmatpush1.msra.mxu0 0.0
    %6479 = vmatprep.subr.mxu0 %v6431
    %6480 = vmatpush1.msra.mxu0 %v6428
    %6481 = vmatprep.subr.mxu0 %v4700
    %6482 = vmatpush1.msra.mxu0 %v4699
    %6483 = vmatprep.subr.mxu0 0.0
    %6484 = vmatpush2.msra.mxu0 0.0
    %6485 = vmatprep.subr.mxu0 0.0
    %6486 = vmatpush2.msra.mxu0 0.0
    %6487 = vmatprep.subr.mxu0 0.0
    %6488 = vmatpush2.msra.mxu0 0.0
    %6489 = vmatprep.subr.mxu0 0.0
    %6490 = vmatpush2.msra.mxu0 0.0
    %6491 = vmatprep.subr.mxu0 0.0
    %6492 = vmatpush2.msra.mxu0 0.0
    %6493 = vmatprep.subr.mxu0 0.0
    %6494 = vmatpush2.msra.mxu0 0.0
    %6495 = vmatprep.subr.mxu0 0.0
    %6496 = vmatpush2.msra.mxu0 0.0
    %6497 = vmatprep.subr.mxu0 0.0
    %6498 = vmatpush2.msra.mxu0 0.0
    %6499 = vmatprep.subr.mxu0 0.0
    %6500 = vmatpush2.msra.mxu0 0.0
    %6501 = vmatprep.subr.mxu0 0.0
    %6502 = vmatpush2.msra.mxu0 0.0
    %6503 = vmatprep.subr.mxu0 0.0
    %6504 = vmatpush2.msra.mxu0 0.0
    %6505 = vmatprep.subr.mxu0 0.0
    %6506 = vmatpush2.msra.mxu0 0.0
    %6507 = vmatprep.subr.mxu0 0.0
    %6508 = vmatpush2.msra.mxu0 0.0
    %6509 = vmatprep.subr.mxu0 0.0
    %6510 = vmatpush2.msra.mxu0 0.0
    %6511 = vmatprep.subr.mxu0 0.0
    %6512 = vmatpush2.msra.mxu0 0.0
    %6513 = vmatprep.subr.mxu0 0.0
    %6514 = vmatpush2.msra.mxu0 0.0
    %6515 = vmatprep.mubr.f32.mxu0 0.0
    %6516 = vmatmul.mubr.f32.gmra.mxu0 %v6425
    %v6517 = vpop.f32.mrf.mxu0
    %v6518 = vadd.f32 0.0, %v6517
    %v6519 = vpop.f32.mrf.mxu0
    %v6520 = vadd.f32 0.0, %v6519
    %6521 = vdwg.mxu0
    %6522 = vmatprep.subr.mxu0 0.0
    %6523 = vmatpush1.msra.mxu0 0.0
    %6524 = vmatprep.subr.mxu0 0.0
    %6525 = vmatpush1.msra.mxu0 0.0
    %6526 = vmatprep.subr.mxu0 0.0
    %6527 = vmatpush1.msra.mxu0 0.0
    %6528 = vmatprep.subr.mxu0 0.0
    %6529 = vmatpush1.msra.mxu0 0.0
    %6530 = vmatprep.subr.mxu0 0.0
    %6531 = vmatpush1.msra.mxu0 0.0
    %6532 = vmatprep.subr.mxu0 0.0
    %6533 = vmatpush1.msra.mxu0 0.0
    %6534 = vmatprep.subr.mxu0 0.0
    %6535 = vmatpush1.msra.mxu0 0.0
    %6536 = vmatprep.subr.mxu0 0.0
    %6537 = vmatpush1.msra.mxu0 0.0
    %6538 = vmatprep.subr.mxu0 0.0
    %6539 = vmatpush1.msra.mxu0 0.0
    %6540 = vmatprep.subr.mxu0 0.0
    %6541 = vmatpush1.msra.mxu0 0.0
    %6542 = vmatprep.subr.mxu0 0.0
    %6543 = vmatpush1.msra.mxu0 0.0
    %6544 = vmatprep.subr.mxu0 0.0
    %6545 = vmatpush1.msra.mxu0 0.0
    %6546 = vmatprep.subr.mxu0 0.0
    %6547 = vmatpush1.msra.mxu0 0.0
    %6548 = vmatprep.subr.mxu0 0.0
    %6549 = vmatpush1.msra.mxu0 0.0
    %6550 = vmatprep.subr.mxu0 %v6437
    %6551 = vmatpush1.msra.mxu0 %v6434
    %6552 = vmatprep.subr.mxu0 %v4702
    %6553 = vmatpush1.msra.mxu0 %v4701
    %6554 = vmatprep.subr.mxu0 0.0
    %6555 = vmatpush2.msra.mxu0 0.0
    %6556 = vmatprep.subr.mxu0 0.0
    %6557 = vmatpush2.msra.mxu0 0.0
    %6558 = vmatprep.subr.mxu0 0.0
    %6559 = vmatpush2.msra.mxu0 0.0
    %6560 = vmatprep.subr.mxu0 0.0
    %6561 = vmatpush2.msra.mxu0 0.0
    %6562 = vmatprep.subr.mxu0 0.0
    %6563 = vmatpush2.msra.mxu0 0.0
    %6564 = vmatprep.subr.mxu0 0.0
    %6565 = vmatpush2.msra.mxu0 0.0
    %6566 = vmatprep.subr.mxu0 0.0
    %6567 = vmatpush2.msra.mxu0 0.0
    %6568 = vmatprep.subr.mxu0 0.0
    %6569 = vmatpush2.msra.mxu0 0.0
    %6570 = vmatprep.subr.mxu0 0.0
    %6571 = vmatpush2.msra.mxu0 0.0
    %6572 = vmatprep.subr.mxu0 0.0
    %6573 = vmatpush2.msra.mxu0 0.0
    %6574 = vmatprep.subr.mxu0 0.0
    %6575 = vmatpush2.msra.mxu0 0.0
    %6576 = vmatprep.subr.mxu0 0.0
    %6577 = vmatpush2.msra.mxu0 0.0
    %6578 = vmatprep.subr.mxu0 0.0
    %6579 = vmatpush2.msra.mxu0 0.0
    %6580 = vmatprep.subr.mxu0 0.0
    %6581 = vmatpush2.msra.mxu0 0.0
    %6582 = vmatprep.subr.mxu0 0.0
    %6583 = vmatpush2.msra.mxu0 0.0
    %6584 = vmatprep.subr.mxu0 0.0
    %6585 = vmatpush2.msra.mxu0 0.0
    %6586 = vmatprep.mubr.f32.mxu0 0.0
    %6587 = vmatmul.mubr.f32.gmra.mxu0 %v6425
    %v6588 = vpop.f32.mrf.mxu0
    %v6589 = vadd.f32 0.0, %v6588
    %v6590 = vpop.f32.mrf.mxu0
    %v6591 = vadd.f32 0.0, %v6590
    %6592 = vdwg.mxu0
    %6593 = vmatprep.subr.mxu0 0.0
    %6594 = vmatpush1.msra.mxu0 0.0
    %6595 = vmatprep.subr.mxu0 0.0
    %6596 = vmatpush1.msra.mxu0 0.0
    %6597 = vmatprep.subr.mxu0 0.0
    %6598 = vmatpush1.msra.mxu0 0.0
    %6599 = vmatprep.subr.mxu0 0.0
    %6600 = vmatpush1.msra.mxu0 0.0
    %6601 = vmatprep.subr.mxu0 0.0
    %6602 = vmatpush1.msra.mxu0 0.0
    %6603 = vmatprep.subr.mxu0 0.0
    %6604 = vmatpush1.msra.mxu0 0.0
    %6605 = vmatprep.subr.mxu0 0.0
    %6606 = vmatpush1.msra.mxu0 0.0
    %6607 = vmatprep.subr.mxu0 0.0
    %6608 = vmatpush1.msra.mxu0 0.0
    %6609 = vmatprep.subr.mxu0 0.0
    %6610 = vmatpush1.msra.mxu0 0.0
    %6611 = vmatprep.subr.mxu0 0.0
    %6612 = vmatpush1.msra.mxu0 0.0
    %6613 = vmatprep.subr.mxu0 0.0
    %6614 = vmatpush1.msra.mxu0 0.0
    %6615 = vmatprep.subr.mxu0 0.0
    %6616 = vmatpush1.msra.mxu0 0.0
    %6617 = vmatprep.subr.mxu0 0.0
    %6618 = vmatpush1.msra.mxu0 0.0
    %6619 = vmatprep.subr.mxu0 0.0
    %6620 = vmatpush1.msra.mxu0 0.0
    %6621 = vmatprep.subr.mxu0 %v6443
    %6622 = vmatpush1.msra.mxu0 %v6440
    %6623 = vmatprep.subr.mxu0 %v4704
    %6624 = vmatpush1.msra.mxu0 %v4703
    %6625 = vmatprep.subr.mxu0 0.0
    %6626 = vmatpush2.msra.mxu0 0.0
    %6627 = vmatprep.subr.mxu0 0.0
    %6628 = vmatpush2.msra.mxu0 0.0
    %6629 = vmatprep.subr.mxu0 0.0
    %6630 = vmatpush2.msra.mxu0 0.0
    %6631 = vmatprep.subr.mxu0 0.0
    %6632 = vmatpush2.msra.mxu0 0.0
    %6633 = vmatprep.subr.mxu0 0.0
    %6634 = vmatpush2.msra.mxu0 0.0
    %6635 = vmatprep.subr.mxu0 0.0
    %6636 = vmatpush2.msra.mxu0 0.0
    %6637 = vmatprep.subr.mxu0 0.0
    %6638 = vmatpush2.msra.mxu0 0.0
    %6639 = vmatprep.subr.mxu0 0.0
    %6640 = vmatpush2.msra.mxu0 0.0
    %6641 = vmatprep.subr.mxu0 0.0
    %6642 = vmatpush2.msra.mxu0 0.0
    %6643 = vmatprep.subr.mxu0 0.0
    %6644 = vmatpush2.msra.mxu0 0.0
    %6645 = vmatprep.subr.mxu0 0.0
    %6646 = vmatpush2.msra.mxu0 0.0
    %6647 = vmatprep.subr.mxu0 0.0
    %6648 = vmatpush2.msra.mxu0 0.0
    %6649 = vmatprep.subr.mxu0 0.0
    %6650 = vmatpush2.msra.mxu0 0.0
    %6651 = vmatprep.subr.mxu0 0.0
    %6652 = vmatpush2.msra.mxu0 0.0
    %6653 = vmatprep.subr.mxu0 0.0
    %6654 = vmatpush2.msra.mxu0 0.0
    %6655 = vmatprep.subr.mxu0 0.0
    %6656 = vmatpush2.msra.mxu0 0.0
    %6657 = vmatprep.mubr.f32.mxu0 0.0
    %6658 = vmatmul.mubr.f32.gmra.mxu0 %v6425
    %v6659 = vpop.f32.mrf.mxu0
    %v6660 = vadd.f32 0.0, %v6659
    %v6661 = vpop.f32.mrf.mxu0
    %v6662 = vadd.f32 0.0, %v6661
    %6663 = vdwg.mxu0
    %6664 = vmatprep.subr.mxu0 0.0
    %6665 = vmatpush1.msra.mxu0 0.0
    %6666 = vmatprep.subr.mxu0 0.0
    %6667 = vmatpush1.msra.mxu0 0.0
    %6668 = vmatprep.subr.mxu0 0.0
    %6669 = vmatpush1.msra.mxu0 0.0
    %6670 = vmatprep.subr.mxu0 0.0
    %6671 = vmatpush1.msra.mxu0 0.0
    %6672 = vmatprep.subr.mxu0 0.0
    %6673 = vmatpush1.msra.mxu0 0.0
    %6674 = vmatprep.subr.mxu0 0.0
    %6675 = vmatpush1.msra.mxu0 0.0
    %6676 = vmatprep.subr.mxu0 0.0
    %6677 = vmatpush1.msra.mxu0 0.0
    %6678 = vmatprep.subr.mxu0 0.0
    %6679 = vmatpush1.msra.mxu0 0.0
    %6680 = vmatprep.subr.mxu0 0.0
    %6681 = vmatpush1.msra.mxu0 0.0
    %6682 = vmatprep.subr.mxu0 0.0
    %6683 = vmatpush1.msra.mxu0 0.0
    %6684 = vmatprep.subr.mxu0 0.0
    %6685 = vmatpush1.msra.mxu0 0.0
    %6686 = vmatprep.subr.mxu0 0.0
    %6687 = vmatpush1.msra.mxu0 0.0
    %6688 = vmatprep.subr.mxu0 0.0
    %6689 = vmatpush1.msra.mxu0 0.0
    %6690 = vmatprep.subr.mxu0 0.0
    %6691 = vmatpush1.msra.mxu0 0.0
    %6692 = vmatprep.subr.mxu0 %v6449
    %6693 = vmatpush1.msra.mxu0 %v6446
    %6694 = vmatprep.subr.mxu0 %v4706
    %6695 = vmatpush1.msra.mxu0 %v4705
    %6696 = vmatprep.subr.mxu0 0.0
    %6697 = vmatpush2.msra.mxu0 0.0
    %6698 = vmatprep.subr.mxu0 0.0
    %6699 = vmatpush2.msra.mxu0 0.0
    %6700 = vmatprep.subr.mxu0 0.0
    %6701 = vmatpush2.msra.mxu0 0.0
    %6702 = vmatprep.subr.mxu0 0.0
    %6703 = vmatpush2.msra.mxu0 0.0
    %6704 = vmatprep.subr.mxu0 0.0
    %6705 = vmatpush2.msra.mxu0 0.0
    %6706 = vmatprep.subr.mxu0 0.0
    %6707 = vmatpush2.msra.mxu0 0.0
    %6708 = vmatprep.subr.mxu0 0.0
    %6709 = vmatpush2.msra.mxu0 0.0
    %6710 = vmatprep.subr.mxu0 0.0
    %6711 = vmatpush2.msra.mxu0 0.0
    %6712 = vmatprep.subr.mxu0 0.0
    %6713 = vmatpush2.msra.mxu0 0.0
    %6714 = vmatprep.subr.mxu0 0.0
    %6715 = vmatpush2.msra.mxu0 0.0
    %6716 = vmatprep.subr.mxu0 0.0
    %6717 = vmatpush2.msra.mxu0 0.0
    %6718 = vmatprep.subr.mxu0 0.0
    %6719 = vmatpush2.msra.mxu0 0.0
    %6720 = vmatprep.subr.mxu0 0.0
    %6721 = vmatpush2.msra.mxu0 0.0
    %6722 = vmatprep.subr.mxu0 0.0
    %6723 = vmatpush2.msra.mxu0 0.0
    %6724 = vmatprep.subr.mxu0 0.0
    %6725 = vmatpush2.msra.mxu0 0.0
    %6726 = vmatprep.subr.mxu0 0.0
    %6727 = vmatpush2.msra.mxu0 0.0
    %6728 = vmatprep.mubr.f32.mxu0 0.0
    %6729 = vmatmul.mubr.f32.gmra.mxu0 %v6425
    %v6730 = vpop.f32.mrf.mxu0
    %v6731 = vadd.f32 0.0, %v6730
    %v6732 = vpop.f32.mrf.mxu0
    %v6733 = vadd.f32 0.0, %v6732
    %6734 = vdwg.mxu0
    %v6735 = vadd.f32 %v6414, %v6518
    %v6736 = vadd.f32 %v6415, %v6520
    %v6737 = vadd.f32 %v6416, %v6589
    %v6738 = vadd.f32 %v6417, %v6591
    %v6739 = vadd.f32 %v6418, %v6660
    %v6740 = vadd.f32 %v6419, %v6662
    %v6741 = vadd.f32 %v6420, %v6731
    %v6742 = vadd.f32 %v6421, %v6733
    %6743 = vrot.lane.b32.xlu0 %v4699, 126
    %v6744 = vpop.permute.xlu0 %6743
    %6745 = vrot.lane.b32.xlu0 %v4707, 126
    %v6746 = vpop.permute.xlu0 %6745
    %6747 = vrot.lane.b32.xlu0 %v4700, 126
    %v6748 = vpop.permute.xlu0 %6747
    %6749 = vrot.lane.b32.xlu0 %v4708, 126
    %v6750 = vpop.permute.xlu0 %6749
    %6751 = vrot.lane.b32.xlu0 %v4701, 126
    %v6752 = vpop.permute.xlu0 %6751
    %6753 = vrot.lane.b32.xlu0 %v4709, 126
    %v6754 = vpop.permute.xlu0 %6753
    %6755 = vrot.lane.b32.xlu0 %v4702, 126
    %v6756 = vpop.permute.xlu0 %6755
    %6757 = vrot.lane.b32.xlu0 %v4710, 126
    %v6758 = vpop.permute.xlu0 %6757
    %6759 = vrot.lane.b32.xlu0 %v4703, 126
    %v6760 = vpop.permute.xlu0 %6759
    %6761 = vrot.lane.b32.xlu0 %v4711, 126
    %v6762 = vpop.permute.xlu0 %6761
    %6763 = vrot.lane.b32.xlu0 %v4704, 126
    %v6764 = vpop.permute.xlu0 %6763
    %6765 = vrot.lane.b32.xlu0 %v4712, 126
    %v6766 = vpop.permute.xlu0 %6765
    %6767 = vrot.lane.b32.xlu0 %v4705, 126
    %v6768 = vpop.permute.xlu0 %6767
    %6769 = vrot.lane.b32.xlu0 %v4713, 126
    %v6770 = vpop.permute.xlu0 %6769
    %6771 = vrot.lane.b32.xlu0 %v4706, 126
    %v6772 = vpop.permute.xlu0 %6771
    %6773 = vrot.lane.b32.xlu0 %v4714, 126
    %v6774 = vpop.permute.xlu0 %6773
    %vm6775 = vcmp.lt.s32.totalorder %v632, 126
    %v6776 = vsel %vm6775, %v6768, %v6772
    %v6777 = vsel %vm6775, %v6770, %v6774
    %v6778 = vsel %vm6775, %v6764, %v6768
    %v6779 = vsel %vm6775, %v6766, %v6770
    %v6780 = vsel %vm6775, %v6760, %v6764
    %v6781 = vsel %vm6775, %v6762, %v6766
    %v6782 = vsel %vm6775, %v6756, %v6760
    %v6783 = vsel %vm6775, %v6758, %v6762
    %v6784 = vsel %vm6775, %v6752, %v6756
    %v6785 = vsel %vm6775, %v6754, %v6758
    %v6786 = vsel %vm6775, %v6748, %v6752
    %v6787 = vsel %vm6775, %v6750, %v6754
    %v6788 = vsel %vm6775, %v6744, %v6748
    %v6789 = vsel %vm6775, %v6746, %v6750
    %v6790 = vsel %vm6775, %v6772, %v6744
    %v6791 = vsel %vm6775, %v6774, %v6746
    %s6792 = scalar_lea.vmem %s8, 5
    %v6793 = vld [vmem:[%s6792] ss:$8 sm:$0xf]
    %v6794 = vld [vmem:[%s6792] ss:$8 sm:$0xf0]
    %v6795 = vor.u32 %v6793, %v6794
    %v6797 = vlaneseq
    %v6798 = vshrl.u32 %v6797, 7
    %v6799 = vsub.s32 0, %v6798
    %v6800 = vrot.slane %v6795, %v6799
    %v6801 = vlaneseq
    %v6802 = vshrl.u32 %v6801, 7
    %v6803 = vsub.s32 1, %v6802
    %v6804 = vrot.slane %v6795, %v6803
    %v6805 = vlaneseq
    %v6806 = vshrl.u32 %v6805, 7
    %v6807 = vsub.s32 2, %v6806
    %v6808 = vrot.slane %v6795, %v6807
    %v6809 = vlaneseq
    %v6810 = vshrl.u32 %v6809, 7
    %v6811 = vsub.s32 3, %v6810
    %v6812 = vrot.slane %v6795, %v6811
    %v6813 = vlaneseq
    %v6814 = vshrl.u32 %v6813, 7
    %v6815 = vsub.s32 4, %v6814
    %v6816 = vrot.slane %v6795, %v6815
    %v6817 = vlaneseq
    %v6818 = vshrl.u32 %v6817, 7
    %v6819 = vsub.s32 5, %v6818
    %v6820 = vrot.slane %v6795, %v6819
    %v6821 = vlaneseq
    %v6822 = vshrl.u32 %v6821, 7
    %v6823 = vsub.s32 6, %v6822
    %v6824 = vrot.slane %v6795, %v6823
    %v6825 = vlaneseq
    %v6826 = vshrl.u32 %v6825, 7
    %v6827 = vsub.s32 7, %v6826
    %v6828 = vrot.slane %v6795, %v6827
    %v6837 = vmul.f32 %v6788, %v6800
    %v6838 = vmul.f32 %v6786, %v6804
    %v6839 = vmul.f32 %v6784, %v6808
    %v6840 = vmul.f32 %v6782, %v6812
    %v6841 = vmul.f32 %v6780, %v6816
    %v6842 = vmul.f32 %v6778, %v6820
    %v6843 = vmul.f32 %v6776, %v6824
    %v6844 = vmul.f32 %v6790, %v6828
    %v6845 = vmul.f32 %v6789, %v6800
    %v6846 = vmul.f32 %v6787, %v6804
    %v6847 = vmul.f32 %v6785, %v6808
    %v6848 = vmul.f32 %v6783, %v6812
    %v6849 = vmul.f32 %v6781, %v6816
    %v6850 = vmul.f32 %v6779, %v6820
    %v6851 = vmul.f32 %v6777, %v6824
    %v6852 = vmul.f32 %v6791, %v6828
    %s6853 = scalar_lea.vmem %s4, 10
    %v6854 = vld [vmem:[%s6853] sm:$0x3]
    %v6856 = vsel %vm4937, %v6854, 0
    %v6859 = vsel %vm4423, %v6845, 0
    %v6862 = vsel %vm4423, %v6846, 0
    %v6865 = vsel %vm4423, %v6847, 0
    %v6868 = vsel %vm4423, %v6848, 0
    %v6871 = vsel %vm4423, %v6849, 0
    %v6874 = vsel %vm4423, %v6850, 0
    %v6877 = vsel %vm4423, %v6851, 0
    %v6880 = vsel %vm4423, %v6852, 0
    %6882 = vmatprep.subr.mxu0 0.0
    %6883 = vmatpush1.msra.mxu0 0.0
    %6884 = vmatprep.subr.mxu0 0.0
    %6885 = vmatpush1.msra.mxu0 0.0
    %6886 = vmatprep.subr.mxu0 0.0
    %6887 = vmatpush1.msra.mxu0 0.0
    %6888 = vmatprep.subr.mxu0 0.0
    %6889 = vmatpush1.msra.mxu0 0.0
    %6890 = vmatprep.subr.mxu0 0.0
    %6891 = vmatpush1.msra.mxu0 0.0
    %6892 = vmatprep.subr.mxu0 0.0
    %6893 = vmatpush1.msra.mxu0 0.0
    %6894 = vmatprep.subr.mxu0 0.0
    %6895 = vmatpush1.msra.mxu0 0.0
    %6896 = vmatprep.subr.mxu0 0.0
    %6897 = vmatpush1.msra.mxu0 0.0
    %6898 = vmatprep.subr.mxu0 0.0
    %6899 = vmatpush1.msra.mxu0 0.0
    %6900 = vmatprep.subr.mxu0 0.0
    %6901 = vmatpush1.msra.mxu0 0.0
    %6902 = vmatprep.subr.mxu0 0.0
    %6903 = vmatpush1.msra.mxu0 0.0
    %6904 = vmatprep.subr.mxu0 0.0
    %6905 = vmatpush1.msra.mxu0 0.0
    %6906 = vmatprep.subr.mxu0 0.0
    %6907 = vmatpush1.msra.mxu0 0.0
    %6908 = vmatprep.subr.mxu0 0.0
    %6909 = vmatpush1.msra.mxu0 0.0
    %6910 = vmatprep.subr.mxu0 %v6862
    %6911 = vmatpush1.msra.mxu0 %v6859
    %6912 = vmatprep.subr.mxu0 %v6838
    %6913 = vmatpush1.msra.mxu0 %v6837
    %6914 = vmatprep.subr.mxu0 0.0
    %6915 = vmatpush2.msra.mxu0 0.0
    %6916 = vmatprep.subr.mxu0 0.0
    %6917 = vmatpush2.msra.mxu0 0.0
    %6918 = vmatprep.subr.mxu0 0.0
    %6919 = vmatpush2.msra.mxu0 0.0
    %6920 = vmatprep.subr.mxu0 0.0
    %6921 = vmatpush2.msra.mxu0 0.0
    %6922 = vmatprep.subr.mxu0 0.0
    %6923 = vmatpush2.msra.mxu0 0.0
    %6924 = vmatprep.subr.mxu0 0.0
    %6925 = vmatpush2.msra.mxu0 0.0
    %6926 = vmatprep.subr.mxu0 0.0
    %6927 = vmatpush2.msra.mxu0 0.0
    %6928 = vmatprep.subr.mxu0 0.0
    %6929 = vmatpush2.msra.mxu0 0.0
    %6930 = vmatprep.subr.mxu0 0.0
    %6931 = vmatpush2.msra.mxu0 0.0
    %6932 = vmatprep.subr.mxu0 0.0
    %6933 = vmatpush2.msra.mxu0 0.0
    %6934 = vmatprep.subr.mxu0 0.0
    %6935 = vmatpush2.msra.mxu0 0.0
    %6936 = vmatprep.subr.mxu0 0.0
    %6937 = vmatpush2.msra.mxu0 0.0
    %6938 = vmatprep.subr.mxu0 0.0
    %6939 = vmatpush2.msra.mxu0 0.0
    %6940 = vmatprep.subr.mxu0 0.0
    %6941 = vmatpush2.msra.mxu0 0.0
    %6942 = vmatprep.subr.mxu0 0.0
    %6943 = vmatpush2.msra.mxu0 0.0
    %6944 = vmatprep.subr.mxu0 0.0
    %6945 = vmatpush2.msra.mxu0 0.0
    %6946 = vmatprep.mubr.f32.mxu0 0.0
    %6947 = vmatmul.mubr.f32.gmra.mxu0 %v6856
    %v6948 = vpop.f32.mrf.mxu0
    %v6949 = vadd.f32 0.0, %v6948
    %v6950 = vpop.f32.mrf.mxu0
    %v6951 = vadd.f32 0.0, %v6950
    %6952 = vdwg.mxu0
    %6953 = vmatprep.subr.mxu0 0.0
    %6954 = vmatpush1.msra.mxu0 0.0
    %6955 = vmatprep.subr.mxu0 0.0
    %6956 = vmatpush1.msra.mxu0 0.0
    %6957 = vmatprep.subr.mxu0 0.0
    %6958 = vmatpush1.msra.mxu0 0.0
    %6959 = vmatprep.subr.mxu0 0.0
    %6960 = vmatpush1.msra.mxu0 0.0
    %6961 = vmatprep.subr.mxu0 0.0
    %6962 = vmatpush1.msra.mxu0 0.0
    %6963 = vmatprep.subr.mxu0 0.0
    %6964 = vmatpush1.msra.mxu0 0.0
    %6965 = vmatprep.subr.mxu0 0.0
    %6966 = vmatpush1.msra.mxu0 0.0
    %6967 = vmatprep.subr.mxu0 0.0
    %6968 = vmatpush1.msra.mxu0 0.0
    %6969 = vmatprep.subr.mxu0 0.0
    %6970 = vmatpush1.msra.mxu0 0.0
    %6971 = vmatprep.subr.mxu0 0.0
    %6972 = vmatpush1.msra.mxu0 0.0
    %6973 = vmatprep.subr.mxu0 0.0
    %6974 = vmatpush1.msra.mxu0 0.0
    %6975 = vmatprep.subr.mxu0 0.0
    %6976 = vmatpush1.msra.mxu0 0.0
    %6977 = vmatprep.subr.mxu0 0.0
    %6978 = vmatpush1.msra.mxu0 0.0
    %6979 = vmatprep.subr.mxu0 0.0
    %6980 = vmatpush1.msra.mxu0 0.0
    %6981 = vmatprep.subr.mxu0 %v6868
    %6982 = vmatpush1.msra.mxu0 %v6865
    %6983 = vmatprep.subr.mxu0 %v6840
    %6984 = vmatpush1.msra.mxu0 %v6839
    %6985 = vmatprep.subr.mxu0 0.0
    %6986 = vmatpush2.msra.mxu0 0.0
    %6987 = vmatprep.subr.mxu0 0.0
    %6988 = vmatpush2.msra.mxu0 0.0
    %6989 = vmatprep.subr.mxu0 0.0
    %6990 = vmatpush2.msra.mxu0 0.0
    %6991 = vmatprep.subr.mxu0 0.0
    %6992 = vmatpush2.msra.mxu0 0.0
    %6993 = vmatprep.subr.mxu0 0.0
    %6994 = vmatpush2.msra.mxu0 0.0
    %6995 = vmatprep.subr.mxu0 0.0
    %6996 = vmatpush2.msra.mxu0 0.0
    %6997 = vmatprep.subr.mxu0 0.0
    %6998 = vmatpush2.msra.mxu0 0.0
    %6999 = vmatprep.subr.mxu0 0.0
    %7000 = vmatpush2.msra.mxu0 0.0
    %7001 = vmatprep.subr.mxu0 0.0
    %7002 = vmatpush2.msra.mxu0 0.0
    %7003 = vmatprep.subr.mxu0 0.0
    %7004 = vmatpush2.msra.mxu0 0.0
    %7005 = vmatprep.subr.mxu0 0.0
    %7006 = vmatpush2.msra.mxu0 0.0
    %7007 = vmatprep.subr.mxu0 0.0
    %7008 = vmatpush2.msra.mxu0 0.0
    %7009 = vmatprep.subr.mxu0 0.0
    %7010 = vmatpush2.msra.mxu0 0.0
    %7011 = vmatprep.subr.mxu0 0.0
    %7012 = vmatpush2.msra.mxu0 0.0
    %7013 = vmatprep.subr.mxu0 0.0
    %7014 = vmatpush2.msra.mxu0 0.0
    %7015 = vmatprep.subr.mxu0 0.0
    %7016 = vmatpush2.msra.mxu0 0.0
    %7017 = vmatprep.mubr.f32.mxu0 0.0
    %7018 = vmatmul.mubr.f32.gmra.mxu0 %v6856
    %v7019 = vpop.f32.mrf.mxu0
    %v7020 = vadd.f32 0.0, %v7019
    %v7021 = vpop.f32.mrf.mxu0
    %v7022 = vadd.f32 0.0, %v7021
    %7023 = vdwg.mxu0
    %7024 = vmatprep.subr.mxu0 0.0
    %7025 = vmatpush1.msra.mxu0 0.0
    %7026 = vmatprep.subr.mxu0 0.0
    %7027 = vmatpush1.msra.mxu0 0.0
    %7028 = vmatprep.subr.mxu0 0.0
    %7029 = vmatpush1.msra.mxu0 0.0
    %7030 = vmatprep.subr.mxu0 0.0
    %7031 = vmatpush1.msra.mxu0 0.0
    %7032 = vmatprep.subr.mxu0 0.0
    %7033 = vmatpush1.msra.mxu0 0.0
    %7034 = vmatprep.subr.mxu0 0.0
    %7035 = vmatpush1.msra.mxu0 0.0
    %7036 = vmatprep.subr.mxu0 0.0
    %7037 = vmatpush1.msra.mxu0 0.0
    %7038 = vmatprep.subr.mxu0 0.0
    %7039 = vmatpush1.msra.mxu0 0.0
    %7040 = vmatprep.subr.mxu0 0.0
    %7041 = vmatpush1.msra.mxu0 0.0
    %7042 = vmatprep.subr.mxu0 0.0
    %7043 = vmatpush1.msra.mxu0 0.0
    %7044 = vmatprep.subr.mxu0 0.0
    %7045 = vmatpush1.msra.mxu0 0.0
    %7046 = vmatprep.subr.mxu0 0.0
    %7047 = vmatpush1.msra.mxu0 0.0
    %7048 = vmatprep.subr.mxu0 0.0
    %7049 = vmatpush1.msra.mxu0 0.0
    %7050 = vmatprep.subr.mxu0 0.0
    %7051 = vmatpush1.msra.mxu0 0.0
    %7052 = vmatprep.subr.mxu0 %v6874
    %7053 = vmatpush1.msra.mxu0 %v6871
    %7054 = vmatprep.subr.mxu0 %v6842
    %7055 = vmatpush1.msra.mxu0 %v6841
    %7056 = vmatprep.subr.mxu0 0.0
    %7057 = vmatpush2.msra.mxu0 0.0
    %7058 = vmatprep.subr.mxu0 0.0
    %7059 = vmatpush2.msra.mxu0 0.0
    %7060 = vmatprep.subr.mxu0 0.0
    %7061 = vmatpush2.msra.mxu0 0.0
    %7062 = vmatprep.subr.mxu0 0.0
    %7063 = vmatpush2.msra.mxu0 0.0
    %7064 = vmatprep.subr.mxu0 0.0
    %7065 = vmatpush2.msra.mxu0 0.0
    %7066 = vmatprep.subr.mxu0 0.0
    %7067 = vmatpush2.msra.mxu0 0.0
    %7068 = vmatprep.subr.mxu0 0.0
    %7069 = vmatpush2.msra.mxu0 0.0
    %7070 = vmatprep.subr.mxu0 0.0
    %7071 = vmatpush2.msra.mxu0 0.0
    %7072 = vmatprep.subr.mxu0 0.0
    %7073 = vmatpush2.msra.mxu0 0.0
    %7074 = vmatprep.subr.mxu0 0.0
    %7075 = vmatpush2.msra.mxu0 0.0
    %7076 = vmatprep.subr.mxu0 0.0
    %7077 = vmatpush2.msra.mxu0 0.0
    %7078 = vmatprep.subr.mxu0 0.0
    %7079 = vmatpush2.msra.mxu0 0.0
    %7080 = vmatprep.subr.mxu0 0.0
    %7081 = vmatpush2.msra.mxu0 0.0
    %7082 = vmatprep.subr.mxu0 0.0
    %7083 = vmatpush2.msra.mxu0 0.0
    %7084 = vmatprep.subr.mxu0 0.0
    %7085 = vmatpush2.msra.mxu0 0.0
    %7086 = vmatprep.subr.mxu0 0.0
    %7087 = vmatpush2.msra.mxu0 0.0
    %7088 = vmatprep.mubr.f32.mxu0 0.0
    %7089 = vmatmul.mubr.f32.gmra.mxu0 %v6856
    %v7090 = vpop.f32.mrf.mxu0
    %v7091 = vadd.f32 0.0, %v7090
    %v7092 = vpop.f32.mrf.mxu0
    %v7093 = vadd.f32 0.0, %v7092
    %7094 = vdwg.mxu0
    %7095 = vmatprep.subr.mxu0 0.0
    %7096 = vmatpush1.msra.mxu0 0.0
    %7097 = vmatprep.subr.mxu0 0.0
    %7098 = vmatpush1.msra.mxu0 0.0
    %7099 = vmatprep.subr.mxu0 0.0
    %7100 = vmatpush1.msra.mxu0 0.0
    %7101 = vmatprep.subr.mxu0 0.0
    %7102 = vmatpush1.msra.mxu0 0.0
    %7103 = vmatprep.subr.mxu0 0.0
    %7104 = vmatpush1.msra.mxu0 0.0
    %7105 = vmatprep.subr.mxu0 0.0
    %7106 = vmatpush1.msra.mxu0 0.0
    %7107 = vmatprep.subr.mxu0 0.0
    %7108 = vmatpush1.msra.mxu0 0.0
    %7109 = vmatprep.subr.mxu0 0.0
    %7110 = vmatpush1.msra.mxu0 0.0
    %7111 = vmatprep.subr.mxu0 0.0
    %7112 = vmatpush1.msra.mxu0 0.0
    %7113 = vmatprep.subr.mxu0 0.0
    %7114 = vmatpush1.msra.mxu0 0.0
    %7115 = vmatprep.subr.mxu0 0.0
    %7116 = vmatpush1.msra.mxu0 0.0
    %7117 = vmatprep.subr.mxu0 0.0
    %7118 = vmatpush1.msra.mxu0 0.0
    %7119 = vmatprep.subr.mxu0 0.0
    %7120 = vmatpush1.msra.mxu0 0.0
    %7121 = vmatprep.subr.mxu0 0.0
    %7122 = vmatpush1.msra.mxu0 0.0
    %7123 = vmatprep.subr.mxu0 %v6880
    %7124 = vmatpush1.msra.mxu0 %v6877
    %7125 = vmatprep.subr.mxu0 %v6844
    %7126 = vmatpush1.msra.mxu0 %v6843
    %7127 = vmatprep.subr.mxu0 0.0
    %7128 = vmatpush2.msra.mxu0 0.0
    %7129 = vmatprep.subr.mxu0 0.0
    %7130 = vmatpush2.msra.mxu0 0.0
    %7131 = vmatprep.subr.mxu0 0.0
    %7132 = vmatpush2.msra.mxu0 0.0
    %7133 = vmatprep.subr.mxu0 0.0
    %7134 = vmatpush2.msra.mxu0 0.0
    %7135 = vmatprep.subr.mxu0 0.0
    %7136 = vmatpush2.msra.mxu0 0.0
    %7137 = vmatprep.subr.mxu0 0.0
    %7138 = vmatpush2.msra.mxu0 0.0
    %7139 = vmatprep.subr.mxu0 0.0
    %7140 = vmatpush2.msra.mxu0 0.0
    %7141 = vmatprep.subr.mxu0 0.0
    %7142 = vmatpush2.msra.mxu0 0.0
    %7143 = vmatprep.subr.mxu0 0.0
    %7144 = vmatpush2.msra.mxu0 0.0
    %7145 = vmatprep.subr.mxu0 0.0
    %7146 = vmatpush2.msra.mxu0 0.0
    %7147 = vmatprep.subr.mxu0 0.0
    %7148 = vmatpush2.msra.mxu0 0.0
    %7149 = vmatprep.subr.mxu0 0.0
    %7150 = vmatpush2.msra.mxu0 0.0
    %7151 = vmatprep.subr.mxu0 0.0
    %7152 = vmatpush2.msra.mxu0 0.0
    %7153 = vmatprep.subr.mxu0 0.0
    %7154 = vmatpush2.msra.mxu0 0.0
    %7155 = vmatprep.subr.mxu0 0.0
    %7156 = vmatpush2.msra.mxu0 0.0
    %7157 = vmatprep.subr.mxu0 0.0
    %7158 = vmatpush2.msra.mxu0 0.0
    %7159 = vmatprep.mubr.f32.mxu0 0.0
    %7160 = vmatmul.mubr.f32.gmra.mxu0 %v6856
    %v7161 = vpop.f32.mrf.mxu0
    %v7162 = vadd.f32 0.0, %v7161
    %v7163 = vpop.f32.mrf.mxu0
    %v7164 = vadd.f32 0.0, %v7163
    %7165 = vdwg.mxu0
    %v7166 = vadd.f32 %v6735, %v6949
    %v7167 = vadd.f32 %v6736, %v6951
    %v7168 = vadd.f32 %v6737, %v7020
    %v7169 = vadd.f32 %v6738, %v7022
    %v7170 = vadd.f32 %v6739, %v7091
    %v7171 = vadd.f32 %v6740, %v7093
    %v7172 = vadd.f32 %v6741, %v7162
    %v7173 = vadd.f32 %v6742, %v7164
    %s7174 = scalar_lea.vmem %s8, 6
    %v7175 = vld [vmem:[%s7174] ss:$8 sm:$0xf]
    %v7176 = vld [vmem:[%s7174] ss:$8 sm:$0xf0]
    %v7177 = vor.u32 %v7175, %v7176
    %v7179 = vlaneseq
    %v7180 = vshrl.u32 %v7179, 7
    %v7181 = vsub.s32 0, %v7180
    %v7182 = vrot.slane %v7177, %v7181
    %v7183 = vlaneseq
    %v7184 = vshrl.u32 %v7183, 7
    %v7185 = vsub.s32 1, %v7184
    %v7186 = vrot.slane %v7177, %v7185
    %v7187 = vlaneseq
    %v7188 = vshrl.u32 %v7187, 7
    %v7189 = vsub.s32 2, %v7188
    %v7190 = vrot.slane %v7177, %v7189
    %v7191 = vlaneseq
    %v7192 = vshrl.u32 %v7191, 7
    %v7193 = vsub.s32 3, %v7192
    %v7194 = vrot.slane %v7177, %v7193
    %v7195 = vlaneseq
    %v7196 = vshrl.u32 %v7195, 7
    %v7197 = vsub.s32 4, %v7196
    %v7198 = vrot.slane %v7177, %v7197
    %v7199 = vlaneseq
    %v7200 = vshrl.u32 %v7199, 7
    %v7201 = vsub.s32 5, %v7200
    %v7202 = vrot.slane %v7177, %v7201
    %v7203 = vlaneseq
    %v7204 = vshrl.u32 %v7203, 7
    %v7205 = vsub.s32 6, %v7204
    %v7206 = vrot.slane %v7177, %v7205
    %v7207 = vlaneseq
    %v7208 = vshrl.u32 %v7207, 7
    %v7209 = vsub.s32 7, %v7208
    %v7210 = vrot.slane %v7177, %v7209
    %v7219 = vmul.f32 %v4760, %v7182
    %v7220 = vmul.f32 %v4758, %v7186
    %v7221 = vmul.f32 %v4756, %v7190
    %v7222 = vmul.f32 %v4754, %v7194
    %v7223 = vmul.f32 %v4752, %v7198
    %v7224 = vmul.f32 %v4750, %v7202
    %v7225 = vmul.f32 %v4748, %v7206
    %v7226 = vmul.f32 %v4762, %v7210
    %v7227 = vmul.f32 %v4761, %v7182
    %v7228 = vmul.f32 %v4759, %v7186
    %v7229 = vmul.f32 %v4757, %v7190
    %v7230 = vmul.f32 %v4755, %v7194
    %v7231 = vmul.f32 %v4753, %v7198
    %v7232 = vmul.f32 %v4751, %v7202
    %v7233 = vmul.f32 %v4749, %v7206
    %v7234 = vmul.f32 %v4763, %v7210
    %s7235 = scalar_lea.vmem %s4, 12
    %v7236 = vld [vmem:[%s7235] sm:$0x3]
    %v7238 = vsel %vm4937, %v7236, 0
    %v7241 = vsel %vm4423, %v7227, 0
    %v7244 = vsel %vm4423, %v7228, 0
    %v7247 = vsel %vm4423, %v7229, 0
    %v7250 = vsel %vm4423, %v7230, 0
    %v7253 = vsel %vm4423, %v7231, 0
    %v7256 = vsel %vm4423, %v7232, 0
    %v7259 = vsel %vm4423, %v7233, 0
    %v7262 = vsel %vm4423, %v7234, 0
    %7264 = vmatprep.subr.mxu0 0.0
    %7265 = vmatpush1.msra.mxu0 0.0
    %7266 = vmatprep.subr.mxu0 0.0
    %7267 = vmatpush1.msra.mxu0 0.0
    %7268 = vmatprep.subr.mxu0 0.0
    %7269 = vmatpush1.msra.mxu0 0.0
    %7270 = vmatprep.subr.mxu0 0.0
    %7271 = vmatpush1.msra.mxu0 0.0
    %7272 = vmatprep.subr.mxu0 0.0
    %7273 = vmatpush1.msra.mxu0 0.0
    %7274 = vmatprep.subr.mxu0 0.0
    %7275 = vmatpush1.msra.mxu0 0.0
    %7276 = vmatprep.subr.mxu0 0.0
    %7277 = vmatpush1.msra.mxu0 0.0
    %7278 = vmatprep.subr.mxu0 0.0
    %7279 = vmatpush1.msra.mxu0 0.0
    %7280 = vmatprep.subr.mxu0 0.0
    %7281 = vmatpush1.msra.mxu0 0.0
    %7282 = vmatprep.subr.mxu0 0.0
    %7283 = vmatpush1.msra.mxu0 0.0
    %7284 = vmatprep.subr.mxu0 0.0
    %7285 = vmatpush1.msra.mxu0 0.0
    %7286 = vmatprep.subr.mxu0 0.0
    %7287 = vmatpush1.msra.mxu0 0.0
    %7288 = vmatprep.subr.mxu0 0.0
    %7289 = vmatpush1.msra.mxu0 0.0
    %7290 = vmatprep.subr.mxu0 0.0
    %7291 = vmatpush1.msra.mxu0 0.0
    %7292 = vmatprep.subr.mxu0 %v7244
    %7293 = vmatpush1.msra.mxu0 %v7241
    %7294 = vmatprep.subr.mxu0 %v7220
    %7295 = vmatpush1.msra.mxu0 %v7219
    %7296 = vmatprep.subr.mxu0 0.0
    %7297 = vmatpush2.msra.mxu0 0.0
    %7298 = vmatprep.subr.mxu0 0.0
    %7299 = vmatpush2.msra.mxu0 0.0
    %7300 = vmatprep.subr.mxu0 0.0
    %7301 = vmatpush2.msra.mxu0 0.0
    %7302 = vmatprep.subr.mxu0 0.0
    %7303 = vmatpush2.msra.mxu0 0.0
    %7304 = vmatprep.subr.mxu0 0.0
    %7305 = vmatpush2.msra.mxu0 0.0
    %7306 = vmatprep.subr.mxu0 0.0
    %7307 = vmatpush2.msra.mxu0 0.0
    %7308 = vmatprep.subr.mxu0 0.0
    %7309 = vmatpush2.msra.mxu0 0.0
    %7310 = vmatprep.subr.mxu0 0.0
    %7311 = vmatpush2.msra.mxu0 0.0
    %7312 = vmatprep.subr.mxu0 0.0
    %7313 = vmatpush2.msra.mxu0 0.0
    %7314 = vmatprep.subr.mxu0 0.0
    %7315 = vmatpush2.msra.mxu0 0.0
    %7316 = vmatprep.subr.mxu0 0.0
    %7317 = vmatpush2.msra.mxu0 0.0
    %7318 = vmatprep.subr.mxu0 0.0
    %7319 = vmatpush2.msra.mxu0 0.0
    %7320 = vmatprep.subr.mxu0 0.0
    %7321 = vmatpush2.msra.mxu0 0.0
    %7322 = vmatprep.subr.mxu0 0.0
    %7323 = vmatpush2.msra.mxu0 0.0
    %7324 = vmatprep.subr.mxu0 0.0
    %7325 = vmatpush2.msra.mxu0 0.0
    %7326 = vmatprep.subr.mxu0 0.0
    %7327 = vmatpush2.msra.mxu0 0.0
    %7328 = vmatprep.mubr.f32.mxu0 0.0
    %7329 = vmatmul.mubr.f32.gmra.mxu0 %v7238
    %v7330 = vpop.f32.mrf.mxu0
    %v7331 = vadd.f32 0.0, %v7330
    %v7332 = vpop.f32.mrf.mxu0
    %v7333 = vadd.f32 0.0, %v7332
    %7334 = vdwg.mxu0
    %7335 = vmatprep.subr.mxu0 0.0
    %7336 = vmatpush1.msra.mxu0 0.0
    %7337 = vmatprep.subr.mxu0 0.0
    %7338 = vmatpush1.msra.mxu0 0.0
    %7339 = vmatprep.subr.mxu0 0.0
    %7340 = vmatpush1.msra.mxu0 0.0
    %7341 = vmatprep.subr.mxu0 0.0
    %7342 = vmatpush1.msra.mxu0 0.0
    %7343 = vmatprep.subr.mxu0 0.0
    %7344 = vmatpush1.msra.mxu0 0.0
    %7345 = vmatprep.subr.mxu0 0.0
    %7346 = vmatpush1.msra.mxu0 0.0
    %7347 = vmatprep.subr.mxu0 0.0
    %7348 = vmatpush1.msra.mxu0 0.0
    %7349 = vmatprep.subr.mxu0 0.0
    %7350 = vmatpush1.msra.mxu0 0.0
    %7351 = vmatprep.subr.mxu0 0.0
    %7352 = vmatpush1.msra.mxu0 0.0
    %7353 = vmatprep.subr.mxu0 0.0
    %7354 = vmatpush1.msra.mxu0 0.0
    %7355 = vmatprep.subr.mxu0 0.0
    %7356 = vmatpush1.msra.mxu0 0.0
    %7357 = vmatprep.subr.mxu0 0.0
    %7358 = vmatpush1.msra.mxu0 0.0
    %7359 = vmatprep.subr.mxu0 0.0
    %7360 = vmatpush1.msra.mxu0 0.0
    %7361 = vmatprep.subr.mxu0 0.0
    %7362 = vmatpush1.msra.mxu0 0.0
    %7363 = vmatprep.subr.mxu0 %v7250
    %7364 = vmatpush1.msra.mxu0 %v7247
    %7365 = vmatprep.subr.mxu0 %v7222
    %7366 = vmatpush1.msra.mxu0 %v7221
    %7367 = vmatprep.subr.mxu0 0.0
    %7368 = vmatpush2.msra.mxu0 0.0
    %7369 = vmatprep.subr.mxu0 0.0
    %7370 = vmatpush2.msra.mxu0 0.0
    %7371 = vmatprep.subr.mxu0 0.0
    %7372 = vmatpush2.msra.mxu0 0.0
    %7373 = vmatprep.subr.mxu0 0.0
    %7374 = vmatpush2.msra.mxu0 0.0
    %7375 = vmatprep.subr.mxu0 0.0
    %7376 = vmatpush2.msra.mxu0 0.0
    %7377 = vmatprep.subr.mxu0 0.0
    %7378 = vmatpush2.msra.mxu0 0.0
    %7379 = vmatprep.subr.mxu0 0.0
    %7380 = vmatpush2.msra.mxu0 0.0
    %7381 = vmatprep.subr.mxu0 0.0
    %7382 = vmatpush2.msra.mxu0 0.0
    %7383 = vmatprep.subr.mxu0 0.0
    %7384 = vmatpush2.msra.mxu0 0.0
    %7385 = vmatprep.subr.mxu0 0.0
    %7386 = vmatpush2.msra.mxu0 0.0
    %7387 = vmatprep.subr.mxu0 0.0
    %7388 = vmatpush2.msra.mxu0 0.0
    %7389 = vmatprep.subr.mxu0 0.0
    %7390 = vmatpush2.msra.mxu0 0.0
    %7391 = vmatprep.subr.mxu0 0.0
    %7392 = vmatpush2.msra.mxu0 0.0
    %7393 = vmatprep.subr.mxu0 0.0
    %7394 = vmatpush2.msra.mxu0 0.0
    %7395 = vmatprep.subr.mxu0 0.0
    %7396 = vmatpush2.msra.mxu0 0.0
    %7397 = vmatprep.subr.mxu0 0.0
    %7398 = vmatpush2.msra.mxu0 0.0
    %7399 = vmatprep.mubr.f32.mxu0 0.0
    %7400 = vmatmul.mubr.f32.gmra.mxu0 %v7238
    %v7401 = vpop.f32.mrf.mxu0
    %v7402 = vadd.f32 0.0, %v7401
    %v7403 = vpop.f32.mrf.mxu0
    %v7404 = vadd.f32 0.0, %v7403
    %7405 = vdwg.mxu0
    %7406 = vmatprep.subr.mxu0 0.0
    %7407 = vmatpush1.msra.mxu0 0.0
    %7408 = vmatprep.subr.mxu0 0.0
    %7409 = vmatpush1.msra.mxu0 0.0
    %7410 = vmatprep.subr.mxu0 0.0
    %7411 = vmatpush1.msra.mxu0 0.0
    %7412 = vmatprep.subr.mxu0 0.0
    %7413 = vmatpush1.msra.mxu0 0.0
    %7414 = vmatprep.subr.mxu0 0.0
    %7415 = vmatpush1.msra.mxu0 0.0
    %7416 = vmatprep.subr.mxu0 0.0
    %7417 = vmatpush1.msra.mxu0 0.0
    %7418 = vmatprep.subr.mxu0 0.0
    %7419 = vmatpush1.msra.mxu0 0.0
    %7420 = vmatprep.subr.mxu0 0.0
    %7421 = vmatpush1.msra.mxu0 0.0
    %7422 = vmatprep.subr.mxu0 0.0
    %7423 = vmatpush1.msra.mxu0 0.0
    %7424 = vmatprep.subr.mxu0 0.0
    %7425 = vmatpush1.msra.mxu0 0.0
    %7426 = vmatprep.subr.mxu0 0.0
    %7427 = vmatpush1.msra.mxu0 0.0
    %7428 = vmatprep.subr.mxu0 0.0
    %7429 = vmatpush1.msra.mxu0 0.0
    %7430 = vmatprep.subr.mxu0 0.0
    %7431 = vmatpush1.msra.mxu0 0.0
    %7432 = vmatprep.subr.mxu0 0.0
    %7433 = vmatpush1.msra.mxu0 0.0
    %7434 = vmatprep.subr.mxu0 %v7256
    %7435 = vmatpush1.msra.mxu0 %v7253
    %7436 = vmatprep.subr.mxu0 %v7224
    %7437 = vmatpush1.msra.mxu0 %v7223
    %7438 = vmatprep.subr.mxu0 0.0
    %7439 = vmatpush2.msra.mxu0 0.0
    %7440 = vmatprep.subr.mxu0 0.0
    %7441 = vmatpush2.msra.mxu0 0.0
    %7442 = vmatprep.subr.mxu0 0.0
    %7443 = vmatpush2.msra.mxu0 0.0
    %7444 = vmatprep.subr.mxu0 0.0
    %7445 = vmatpush2.msra.mxu0 0.0
    %7446 = vmatprep.subr.mxu0 0.0
    %7447 = vmatpush2.msra.mxu0 0.0
    %7448 = vmatprep.subr.mxu0 0.0
    %7449 = vmatpush2.msra.mxu0 0.0
    %7450 = vmatprep.subr.mxu0 0.0
    %7451 = vmatpush2.msra.mxu0 0.0
    %7452 = vmatprep.subr.mxu0 0.0
    %7453 = vmatpush2.msra.mxu0 0.0
    %7454 = vmatprep.subr.mxu0 0.0
    %7455 = vmatpush2.msra.mxu0 0.0
    %7456 = vmatprep.subr.mxu0 0.0
    %7457 = vmatpush2.msra.mxu0 0.0
    %7458 = vmatprep.subr.mxu0 0.0
    %7459 = vmatpush2.msra.mxu0 0.0
    %7460 = vmatprep.subr.mxu0 0.0
    %7461 = vmatpush2.msra.mxu0 0.0
    %7462 = vmatprep.subr.mxu0 0.0
    %7463 = vmatpush2.msra.mxu0 0.0
    %7464 = vmatprep.subr.mxu0 0.0
    %7465 = vmatpush2.msra.mxu0 0.0
    %7466 = vmatprep.subr.mxu0 0.0
    %7467 = vmatpush2.msra.mxu0 0.0
    %7468 = vmatprep.subr.mxu0 0.0
    %7469 = vmatpush2.msra.mxu0 0.0
    %7470 = vmatprep.mubr.f32.mxu0 0.0
    %7471 = vmatmul.mubr.f32.gmra.mxu0 %v7238
    %v7472 = vpop.f32.mrf.mxu0
    %v7473 = vadd.f32 0.0, %v7472
    %v7474 = vpop.f32.mrf.mxu0
    %v7475 = vadd.f32 0.0, %v7474
    %7476 = vdwg.mxu0
    %7477 = vmatprep.subr.mxu0 0.0
    %7478 = vmatpush1.msra.mxu0 0.0
    %7479 = vmatprep.subr.mxu0 0.0
    %7480 = vmatpush1.msra.mxu0 0.0
    %7481 = vmatprep.subr.mxu0 0.0
    %7482 = vmatpush1.msra.mxu0 0.0
    %7483 = vmatprep.subr.mxu0 0.0
    %7484 = vmatpush1.msra.mxu0 0.0
    %7485 = vmatprep.subr.mxu0 0.0
    %7486 = vmatpush1.msra.mxu0 0.0
    %7487 = vmatprep.subr.mxu0 0.0
    %7488 = vmatpush1.msra.mxu0 0.0
    %7489 = vmatprep.subr.mxu0 0.0
    %7490 = vmatpush1.msra.mxu0 0.0
    %7491 = vmatprep.subr.mxu0 0.0
    %7492 = vmatpush1.msra.mxu0 0.0
    %7493 = vmatprep.subr.mxu0 0.0
    %7494 = vmatpush1.msra.mxu0 0.0
    %7495 = vmatprep.subr.mxu0 0.0
    %7496 = vmatpush1.msra.mxu0 0.0
    %7497 = vmatprep.subr.mxu0 0.0
    %7498 = vmatpush1.msra.mxu0 0.0
    %7499 = vmatprep.subr.mxu0 0.0
    %7500 = vmatpush1.msra.mxu0 0.0
    %7501 = vmatprep.subr.mxu0 0.0
    %7502 = vmatpush1.msra.mxu0 0.0
    %7503 = vmatprep.subr.mxu0 0.0
    %7504 = vmatpush1.msra.mxu0 0.0
    %7505 = vmatprep.subr.mxu0 %v7262
    %7506 = vmatpush1.msra.mxu0 %v7259
    %7507 = vmatprep.subr.mxu0 %v7226
    %7508 = vmatpush1.msra.mxu0 %v7225
    %7509 = vmatprep.subr.mxu0 0.0
    %7510 = vmatpush2.msra.mxu0 0.0
    %7511 = vmatprep.subr.mxu0 0.0
    %7512 = vmatpush2.msra.mxu0 0.0
    %7513 = vmatprep.subr.mxu0 0.0
    %7514 = vmatpush2.msra.mxu0 0.0
    %7515 = vmatprep.subr.mxu0 0.0
    %7516 = vmatpush2.msra.mxu0 0.0
    %7517 = vmatprep.subr.mxu0 0.0
    %7518 = vmatpush2.msra.mxu0 0.0
    %7519 = vmatprep.subr.mxu0 0.0
    %7520 = vmatpush2.msra.mxu0 0.0
    %7521 = vmatprep.subr.mxu0 0.0
    %7522 = vmatpush2.msra.mxu0 0.0
    %7523 = vmatprep.subr.mxu0 0.0
    %7524 = vmatpush2.msra.mxu0 0.0
    %7525 = vmatprep.subr.mxu0 0.0
    %7526 = vmatpush2.msra.mxu0 0.0
    %7527 = vmatprep.subr.mxu0 0.0
    %7528 = vmatpush2.msra.mxu0 0.0
    %7529 = vmatprep.subr.mxu0 0.0
    %7530 = vmatpush2.msra.mxu0 0.0
    %7531 = vmatprep.subr.mxu0 0.0
    %7532 = vmatpush2.msra.mxu0 0.0
    %7533 = vmatprep.subr.mxu0 0.0
    %7534 = vmatpush2.msra.mxu0 0.0
    %7535 = vmatprep.subr.mxu0 0.0
    %7536 = vmatpush2.msra.mxu0 0.0
    %7537 = vmatprep.subr.mxu0 0.0
    %7538 = vmatpush2.msra.mxu0 0.0
    %7539 = vmatprep.subr.mxu0 0.0
    %7540 = vmatpush2.msra.mxu0 0.0
    %7541 = vmatprep.mubr.f32.mxu0 0.0
    %7542 = vmatmul.mubr.f32.gmra.mxu0 %v7238
    %v7543 = vpop.f32.mrf.mxu0
    %v7544 = vadd.f32 0.0, %v7543
    %v7545 = vpop.f32.mrf.mxu0
    %v7546 = vadd.f32 0.0, %v7545
    %7547 = vdwg.mxu0
    %v7548 = vadd.f32 %v7166, %v7331
    %v7549 = vadd.f32 %v7167, %v7333
    %v7550 = vadd.f32 %v7168, %v7402
    %v7551 = vadd.f32 %v7169, %v7404
    %v7552 = vadd.f32 %v7170, %v7473
    %v7553 = vadd.f32 %v7171, %v7475
    %v7554 = vadd.f32 %v7172, %v7544
    %v7555 = vadd.f32 %v7173, %v7546
    %s7556 = scalar_lea.vmem %s8, 7
    %v7557 = vld [vmem:[%s7556] ss:$8 sm:$0xf]
    %v7558 = vld [vmem:[%s7556] ss:$8 sm:$0xf0]
    %v7559 = vor.u32 %v7557, %v7558
    %v7561 = vlaneseq
    %v7562 = vshrl.u32 %v7561, 7
    %v7563 = vsub.s32 0, %v7562
    %v7564 = vrot.slane %v7559, %v7563
    %v7565 = vlaneseq
    %v7566 = vshrl.u32 %v7565, 7
    %v7567 = vsub.s32 1, %v7566
    %v7568 = vrot.slane %v7559, %v7567
    %v7569 = vlaneseq
    %v7570 = vshrl.u32 %v7569, 7
    %v7571 = vsub.s32 2, %v7570
    %v7572 = vrot.slane %v7559, %v7571
    %v7573 = vlaneseq
    %v7574 = vshrl.u32 %v7573, 7
    %v7575 = vsub.s32 3, %v7574
    %v7576 = vrot.slane %v7559, %v7575
    %v7577 = vlaneseq
    %v7578 = vshrl.u32 %v7577, 7
    %v7579 = vsub.s32 4, %v7578
    %v7580 = vrot.slane %v7559, %v7579
    %v7581 = vlaneseq
    %v7582 = vshrl.u32 %v7581, 7
    %v7583 = vsub.s32 5, %v7582
    %v7584 = vrot.slane %v7559, %v7583
    %v7585 = vlaneseq
    %v7586 = vshrl.u32 %v7585, 7
    %v7587 = vsub.s32 6, %v7586
    %v7588 = vrot.slane %v7559, %v7587
    %v7589 = vlaneseq
    %v7590 = vshrl.u32 %v7589, 7
    %v7591 = vsub.s32 7, %v7590
    %v7592 = vrot.slane %v7559, %v7591
    %v7601 = vmul.f32 %v4870, %v7564
    %v7602 = vmul.f32 %v4868, %v7568
    %v7603 = vmul.f32 %v4866, %v7572
    %v7604 = vmul.f32 %v4864, %v7576
    %v7605 = vmul.f32 %v4862, %v7580
    %v7606 = vmul.f32 %v4860, %v7584
    %v7607 = vmul.f32 %v4858, %v7588
    %v7608 = vmul.f32 %v4872, %v7592
    %v7609 = vmul.f32 %v4871, %v7564
    %v7610 = vmul.f32 %v4869, %v7568
    %v7611 = vmul.f32 %v4867, %v7572
    %v7612 = vmul.f32 %v4865, %v7576
    %v7613 = vmul.f32 %v4863, %v7580
    %v7614 = vmul.f32 %v4861, %v7584
    %v7615 = vmul.f32 %v4859, %v7588
    %v7616 = vmul.f32 %v4873, %v7592
    %s7617 = scalar_lea.vmem %s4, 14
    %v7618 = vld [vmem:[%s7617] sm:$0x3]
    %v7620 = vsel %vm4937, %v7618, 0
    %v7623 = vsel %vm4423, %v7609, 0
    %v7626 = vsel %vm4423, %v7610, 0
    %v7629 = vsel %vm4423, %v7611, 0
    %v7632 = vsel %vm4423, %v7612, 0
    %v7635 = vsel %vm4423, %v7613, 0
    %v7638 = vsel %vm4423, %v7614, 0
    %v7641 = vsel %vm4423, %v7615, 0
    %v7644 = vsel %vm4423, %v7616, 0
    %7646 = vmatprep.subr.mxu0 0.0
    %7647 = vmatpush1.msra.mxu0 0.0
    %7648 = vmatprep.subr.mxu0 0.0
    %7649 = vmatpush1.msra.mxu0 0.0
    %7650 = vmatprep.subr.mxu0 0.0
    %7651 = vmatpush1.msra.mxu0 0.0
    %7652 = vmatprep.subr.mxu0 0.0
    %7653 = vmatpush1.msra.mxu0 0.0
    %7654 = vmatprep.subr.mxu0 0.0
    %7655 = vmatpush1.msra.mxu0 0.0
    %7656 = vmatprep.subr.mxu0 0.0
    %7657 = vmatpush1.msra.mxu0 0.0
    %7658 = vmatprep.subr.mxu0 0.0
    %7659 = vmatpush1.msra.mxu0 0.0
    %7660 = vmatprep.subr.mxu0 0.0
    %7661 = vmatpush1.msra.mxu0 0.0
    %7662 = vmatprep.subr.mxu0 0.0
    %7663 = vmatpush1.msra.mxu0 0.0
    %7664 = vmatprep.subr.mxu0 0.0
    %7665 = vmatpush1.msra.mxu0 0.0
    %7666 = vmatprep.subr.mxu0 0.0
    %7667 = vmatpush1.msra.mxu0 0.0
    %7668 = vmatprep.subr.mxu0 0.0
    %7669 = vmatpush1.msra.mxu0 0.0
    %7670 = vmatprep.subr.mxu0 0.0
    %7671 = vmatpush1.msra.mxu0 0.0
    %7672 = vmatprep.subr.mxu0 0.0
    %7673 = vmatpush1.msra.mxu0 0.0
    %7674 = vmatprep.subr.mxu0 %v7626
    %7675 = vmatpush1.msra.mxu0 %v7623
    %7676 = vmatprep.subr.mxu0 %v7602
    %7677 = vmatpush1.msra.mxu0 %v7601
    %7678 = vmatprep.subr.mxu0 0.0
    %7679 = vmatpush2.msra.mxu0 0.0
    %7680 = vmatprep.subr.mxu0 0.0
    %7681 = vmatpush2.msra.mxu0 0.0
    %7682 = vmatprep.subr.mxu0 0.0
    %7683 = vmatpush2.msra.mxu0 0.0
    %7684 = vmatprep.subr.mxu0 0.0
    %7685 = vmatpush2.msra.mxu0 0.0
    %7686 = vmatprep.subr.mxu0 0.0
    %7687 = vmatpush2.msra.mxu0 0.0
    %7688 = vmatprep.subr.mxu0 0.0
    %7689 = vmatpush2.msra.mxu0 0.0
    %7690 = vmatprep.subr.mxu0 0.0
    %7691 = vmatpush2.msra.mxu0 0.0
    %7692 = vmatprep.subr.mxu0 0.0
    %7693 = vmatpush2.msra.mxu0 0.0
    %7694 = vmatprep.subr.mxu0 0.0
    %7695 = vmatpush2.msra.mxu0 0.0
    %7696 = vmatprep.subr.mxu0 0.0
    %7697 = vmatpush2.msra.mxu0 0.0
    %7698 = vmatprep.subr.mxu0 0.0
    %7699 = vmatpush2.msra.mxu0 0.0
    %7700 = vmatprep.subr.mxu0 0.0
    %7701 = vmatpush2.msra.mxu0 0.0
    %7702 = vmatprep.subr.mxu0 0.0
    %7703 = vmatpush2.msra.mxu0 0.0
    %7704 = vmatprep.subr.mxu0 0.0
    %7705 = vmatpush2.msra.mxu0 0.0
    %7706 = vmatprep.subr.mxu0 0.0
    %7707 = vmatpush2.msra.mxu0 0.0
    %7708 = vmatprep.subr.mxu0 0.0
    %7709 = vmatpush2.msra.mxu0 0.0
    %7710 = vmatprep.mubr.f32.mxu0 0.0
    %7711 = vmatmul.mubr.f32.gmra.mxu0 %v7620
    %v7712 = vpop.f32.mrf.mxu0
    %v7713 = vadd.f32 0.0, %v7712
    %v7714 = vpop.f32.mrf.mxu0
    %v7715 = vadd.f32 0.0, %v7714
    %7716 = vdwg.mxu0
    %7717 = vmatprep.subr.mxu0 0.0
    %7718 = vmatpush1.msra.mxu0 0.0
    %7719 = vmatprep.subr.mxu0 0.0
    %7720 = vmatpush1.msra.mxu0 0.0
    %7721 = vmatprep.subr.mxu0 0.0
    %7722 = vmatpush1.msra.mxu0 0.0
    %7723 = vmatprep.subr.mxu0 0.0
    %7724 = vmatpush1.msra.mxu0 0.0
    %7725 = vmatprep.subr.mxu0 0.0
    %7726 = vmatpush1.msra.mxu0 0.0
    %7727 = vmatprep.subr.mxu0 0.0
    %7728 = vmatpush1.msra.mxu0 0.0
    %7729 = vmatprep.subr.mxu0 0.0
    %7730 = vmatpush1.msra.mxu0 0.0
    %7731 = vmatprep.subr.mxu0 0.0
    %7732 = vmatpush1.msra.mxu0 0.0
    %7733 = vmatprep.subr.mxu0 0.0
    %7734 = vmatpush1.msra.mxu0 0.0
    %7735 = vmatprep.subr.mxu0 0.0
    %7736 = vmatpush1.msra.mxu0 0.0
    %7737 = vmatprep.subr.mxu0 0.0
    %7738 = vmatpush1.msra.mxu0 0.0
    %7739 = vmatprep.subr.mxu0 0.0
    %7740 = vmatpush1.msra.mxu0 0.0
    %7741 = vmatprep.subr.mxu0 0.0
    %7742 = vmatpush1.msra.mxu0 0.0
    %7743 = vmatprep.subr.mxu0 0.0
    %7744 = vmatpush1.msra.mxu0 0.0
    %7745 = vmatprep.subr.mxu0 %v7632
    %7746 = vmatpush1.msra.mxu0 %v7629
    %7747 = vmatprep.subr.mxu0 %v7604
    %7748 = vmatpush1.msra.mxu0 %v7603
    %7749 = vmatprep.subr.mxu0 0.0
    %7750 = vmatpush2.msra.mxu0 0.0
    %7751 = vmatprep.subr.mxu0 0.0
    %7752 = vmatpush2.msra.mxu0 0.0
    %7753 = vmatprep.subr.mxu0 0.0
    %7754 = vmatpush2.msra.mxu0 0.0
    %7755 = vmatprep.subr.mxu0 0.0
    %7756 = vmatpush2.msra.mxu0 0.0
    %7757 = vmatprep.subr.mxu0 0.0
    %7758 = vmatpush2.msra.mxu0 0.0
    %7759 = vmatprep.subr.mxu0 0.0
    %7760 = vmatpush2.msra.mxu0 0.0
    %7761 = vmatprep.subr.mxu0 0.0
    %7762 = vmatpush2.msra.mxu0 0.0
    %7763 = vmatprep.subr.mxu0 0.0
    %7764 = vmatpush2.msra.mxu0 0.0
    %7765 = vmatprep.subr.mxu0 0.0
    %7766 = vmatpush2.msra.mxu0 0.0
    %7767 = vmatprep.subr.mxu0 0.0
    %7768 = vmatpush2.msra.mxu0 0.0
    %7769 = vmatprep.subr.mxu0 0.0
    %7770 = vmatpush2.msra.mxu0 0.0
    %7771 = vmatprep.subr.mxu0 0.0
    %7772 = vmatpush2.msra.mxu0 0.0
    %7773 = vmatprep.subr.mxu0 0.0
    %7774 = vmatpush2.msra.mxu0 0.0
    %7775 = vmatprep.subr.mxu0 0.0
    %7776 = vmatpush2.msra.mxu0 0.0
    %7777 = vmatprep.subr.mxu0 0.0
    %7778 = vmatpush2.msra.mxu0 0.0
    %7779 = vmatprep.subr.mxu0 0.0
    %7780 = vmatpush2.msra.mxu0 0.0
    %7781 = vmatprep.mubr.f32.mxu0 0.0
    %7782 = vmatmul.mubr.f32.gmra.mxu0 %v7620
    %v7783 = vpop.f32.mrf.mxu0
    %v7784 = vadd.f32 0.0, %v7783
    %v7785 = vpop.f32.mrf.mxu0
    %v7786 = vadd.f32 0.0, %v7785
    %7787 = vdwg.mxu0
    %7788 = vmatprep.subr.mxu0 0.0
    %7789 = vmatpush1.msra.mxu0 0.0
    %7790 = vmatprep.subr.mxu0 0.0
    %7791 = vmatpush1.msra.mxu0 0.0
    %7792 = vmatprep.subr.mxu0 0.0
    %7793 = vmatpush1.msra.mxu0 0.0
    %7794 = vmatprep.subr.mxu0 0.0
    %7795 = vmatpush1.msra.mxu0 0.0
    %7796 = vmatprep.subr.mxu0 0.0
    %7797 = vmatpush1.msra.mxu0 0.0
    %7798 = vmatprep.subr.mxu0 0.0
    %7799 = vmatpush1.msra.mxu0 0.0
    %7800 = vmatprep.subr.mxu0 0.0
    %7801 = vmatpush1.msra.mxu0 0.0
    %7802 = vmatprep.subr.mxu0 0.0
    %7803 = vmatpush1.msra.mxu0 0.0
    %7804 = vmatprep.subr.mxu0 0.0
    %7805 = vmatpush1.msra.mxu0 0.0
    %7806 = vmatprep.subr.mxu0 0.0
    %7807 = vmatpush1.msra.mxu0 0.0
    %7808 = vmatprep.subr.mxu0 0.0
    %7809 = vmatpush1.msra.mxu0 0.0
    %7810 = vmatprep.subr.mxu0 0.0
    %7811 = vmatpush1.msra.mxu0 0.0
    %7812 = vmatprep.subr.mxu0 0.0
    %7813 = vmatpush1.msra.mxu0 0.0
    %7814 = vmatprep.subr.mxu0 0.0
    %7815 = vmatpush1.msra.mxu0 0.0
    %7816 = vmatprep.subr.mxu0 %v7638
    %7817 = vmatpush1.msra.mxu0 %v7635
    %7818 = vmatprep.subr.mxu0 %v7606
    %7819 = vmatpush1.msra.mxu0 %v7605
    %7820 = vmatprep.subr.mxu0 0.0
    %7821 = vmatpush2.msra.mxu0 0.0
    %7822 = vmatprep.subr.mxu0 0.0
    %7823 = vmatpush2.msra.mxu0 0.0
    %7824 = vmatprep.subr.mxu0 0.0
    %7825 = vmatpush2.msra.mxu0 0.0
    %7826 = vmatprep.subr.mxu0 0.0
    %7827 = vmatpush2.msra.mxu0 0.0
    %7828 = vmatprep.subr.mxu0 0.0
    %7829 = vmatpush2.msra.mxu0 0.0
    %7830 = vmatprep.subr.mxu0 0.0
    %7831 = vmatpush2.msra.mxu0 0.0
    %7832 = vmatprep.subr.mxu0 0.0
    %7833 = vmatpush2.msra.mxu0 0.0
    %7834 = vmatprep.subr.mxu0 0.0
    %7835 = vmatpush2.msra.mxu0 0.0
    %7836 = vmatprep.subr.mxu0 0.0
    %7837 = vmatpush2.msra.mxu0 0.0
    %7838 = vmatprep.subr.mxu0 0.0
    %7839 = vmatpush2.msra.mxu0 0.0
    %7840 = vmatprep.subr.mxu0 0.0
    %7841 = vmatpush2.msra.mxu0 0.0
    %7842 = vmatprep.subr.mxu0 0.0
    %7843 = vmatpush2.msra.mxu0 0.0
    %7844 = vmatprep.subr.mxu0 0.0
    %7845 = vmatpush2.msra.mxu0 0.0
    %7846 = vmatprep.subr.mxu0 0.0
    %7847 = vmatpush2.msra.mxu0 0.0
    %7848 = vmatprep.subr.mxu0 0.0
    %7849 = vmatpush2.msra.mxu0 0.0
    %7850 = vmatprep.subr.mxu0 0.0
    %7851 = vmatpush2.msra.mxu0 0.0
    %7852 = vmatprep.mubr.f32.mxu0 0.0
    %7853 = vmatmul.mubr.f32.gmra.mxu0 %v7620
    %v7854 = vpop.f32.mrf.mxu0
    %v7855 = vadd.f32 0.0, %v7854
    %v7856 = vpop.f32.mrf.mxu0
    %v7857 = vadd.f32 0.0, %v7856
    %7858 = vdwg.mxu0
    %7859 = vmatprep.subr.mxu0 0.0
    %7860 = vmatpush1.msra.mxu0 0.0
    %7861 = vmatprep.subr.mxu0 0.0
    %7862 = vmatpush1.msra.mxu0 0.0
    %7863 = vmatprep.subr.mxu0 0.0
    %7864 = vmatpush1.msra.mxu0 0.0
    %7865 = vmatprep.subr.mxu0 0.0
    %7866 = vmatpush1.msra.mxu0 0.0
    %7867 = vmatprep.subr.mxu0 0.0
    %7868 = vmatpush1.msra.mxu0 0.0
    %7869 = vmatprep.subr.mxu0 0.0
    %7870 = vmatpush1.msra.mxu0 0.0
    %7871 = vmatprep.subr.mxu0 0.0
    %7872 = vmatpush1.msra.mxu0 0.0
    %7873 = vmatprep.subr.mxu0 0.0
    %7874 = vmatpush1.msra.mxu0 0.0
    %7875 = vmatprep.subr.mxu0 0.0
    %7876 = vmatpush1.msra.mxu0 0.0
    %7877 = vmatprep.subr.mxu0 0.0
    %7878 = vmatpush1.msra.mxu0 0.0
    %7879 = vmatprep.subr.mxu0 0.0
    %7880 = vmatpush1.msra.mxu0 0.0
    %7881 = vmatprep.subr.mxu0 0.0
    %7882 = vmatpush1.msra.mxu0 0.0
    %7883 = vmatprep.subr.mxu0 0.0
    %7884 = vmatpush1.msra.mxu0 0.0
    %7885 = vmatprep.subr.mxu0 0.0
    %7886 = vmatpush1.msra.mxu0 0.0
    %7887 = vmatprep.subr.mxu0 %v7644
    %7888 = vmatpush1.msra.mxu0 %v7641
    %7889 = vmatprep.subr.mxu0 %v7608
    %7890 = vmatpush1.msra.mxu0 %v7607
    %7891 = vmatprep.subr.mxu0 0.0
    %7892 = vmatpush2.msra.mxu0 0.0
    %7893 = vmatprep.subr.mxu0 0.0
    %7894 = vmatpush2.msra.mxu0 0.0
    %7895 = vmatprep.subr.mxu0 0.0
    %7896 = vmatpush2.msra.mxu0 0.0
    %7897 = vmatprep.subr.mxu0 0.0
    %7898 = vmatpush2.msra.mxu0 0.0
    %7899 = vmatprep.subr.mxu0 0.0
    %7900 = vmatpush2.msra.mxu0 0.0
    %7901 = vmatprep.subr.mxu0 0.0
    %7902 = vmatpush2.msra.mxu0 0.0
    %7903 = vmatprep.subr.mxu0 0.0
    %7904 = vmatpush2.msra.mxu0 0.0
    %7905 = vmatprep.subr.mxu0 0.0
    %7906 = vmatpush2.msra.mxu0 0.0
    %7907 = vmatprep.subr.mxu0 0.0
    %7908 = vmatpush2.msra.mxu0 0.0
    %7909 = vmatprep.subr.mxu0 0.0
    %7910 = vmatpush2.msra.mxu0 0.0
    %7911 = vmatprep.subr.mxu0 0.0
    %7912 = vmatpush2.msra.mxu0 0.0
    %7913 = vmatprep.subr.mxu0 0.0
    %7914 = vmatpush2.msra.mxu0 0.0
    %7915 = vmatprep.subr.mxu0 0.0
    %7916 = vmatpush2.msra.mxu0 0.0
    %7917 = vmatprep.subr.mxu0 0.0
    %7918 = vmatpush2.msra.mxu0 0.0
    %7919 = vmatprep.subr.mxu0 0.0
    %7920 = vmatpush2.msra.mxu0 0.0
    %7921 = vmatprep.subr.mxu0 0.0
    %7922 = vmatpush2.msra.mxu0 0.0
    %7923 = vmatprep.mubr.f32.mxu0 0.0
    %7924 = vmatmul.mubr.f32.gmra.mxu0 %v7620
    %v7925 = vpop.f32.mrf.mxu0
    %v7926 = vadd.f32 0.0, %v7925
    %v7927 = vpop.f32.mrf.mxu0
    %v7928 = vadd.f32 0.0, %v7927
    %7929 = vdwg.mxu0
    %v7930 = vadd.f32 %v7548, %v7713
    %v7931 = vadd.f32 %v7549, %v7715
    %v7932 = vadd.f32 %v7550, %v7784
    %v7933 = vadd.f32 %v7551, %v7786
    %v7934 = vadd.f32 %v7552, %v7855
    %v7935 = vadd.f32 %v7553, %v7857
    %v7936 = vadd.f32 %v7554, %v7926
    %v7937 = vadd.f32 %v7555, %v7928
    %s7938 = scalar_lea.vmem %s8, 64
    %v7939 = vld [vmem:[%s7938] ss:$8 sm:$0xf]
    %v7940 = vld [vmem:[%s7938] ss:$8 sm:$0xf0]
    %v7941 = vor.u32 %v7939, %v7940
    %v7943 = vlaneseq
    %v7944 = vshrl.u32 %v7943, 7
    %v7945 = vsub.s32 0, %v7944
    %v7946 = vrot.slane %v7941, %v7945
    %v7947 = vlaneseq
    %v7948 = vshrl.u32 %v7947, 7
    %v7949 = vsub.s32 1, %v7948
    %v7950 = vrot.slane %v7941, %v7949
    %v7951 = vlaneseq
    %v7952 = vshrl.u32 %v7951, 7
    %v7953 = vsub.s32 2, %v7952
    %v7954 = vrot.slane %v7941, %v7953
    %v7955 = vlaneseq
    %v7956 = vshrl.u32 %v7955, 7
    %v7957 = vsub.s32 3, %v7956
    %v7958 = vrot.slane %v7941, %v7957
    %v7959 = vlaneseq
    %v7960 = vshrl.u32 %v7959, 7
    %v7961 = vsub.s32 4, %v7960
    %v7962 = vrot.slane %v7941, %v7961
    %v7963 = vlaneseq
    %v7964 = vshrl.u32 %v7963, 7
    %v7965 = vsub.s32 5, %v7964
    %v7966 = vrot.slane %v7941, %v7965
    %v7967 = vlaneseq
    %v7968 = vshrl.u32 %v7967, 7
    %v7969 = vsub.s32 6, %v7968
    %v7970 = vrot.slane %v7941, %v7969
    %v7971 = vlaneseq
    %v7972 = vshrl.u32 %v7971, 7
    %v7973 = vsub.s32 7, %v7972
    %v7974 = vrot.slane %v7941, %v7973
    %v7983 = vmul.f32 %v5605, %v7946
    %v7984 = vmul.f32 %v5603, %v7950
    %v7985 = vmul.f32 %v5601, %v7954
    %v7986 = vmul.f32 %v5599, %v7958
    %v7987 = vmul.f32 %v5597, %v7962
    %v7988 = vmul.f32 %v5595, %v7966
    %v7989 = vmul.f32 %v5593, %v7970
    %v7990 = vmul.f32 %v5607, %v7974
    %v7991 = vmul.f32 %v5606, %v7946
    %v7992 = vmul.f32 %v5604, %v7950
    %v7993 = vmul.f32 %v5602, %v7954
    %v7994 = vmul.f32 %v5600, %v7958
    %v7995 = vmul.f32 %v5598, %v7962
    %v7996 = vmul.f32 %v5596, %v7966
    %v7997 = vmul.f32 %v5594, %v7970
    %v7998 = vmul.f32 %v5608, %v7974
    %s7999 = scalar_lea.vmem %s4, 16
    %v8000 = vld [vmem:[%s7999] sm:$0x3]
    %v8002 = vsel %vm4937, %v8000, 0
    %v8005 = vsel %vm4423, %v7991, 0
    %v8008 = vsel %vm4423, %v7992, 0
    %v8011 = vsel %vm4423, %v7993, 0
    %v8014 = vsel %vm4423, %v7994, 0
    %v8017 = vsel %vm4423, %v7995, 0
    %v8020 = vsel %vm4423, %v7996, 0
    %v8023 = vsel %vm4423, %v7997, 0
    %v8026 = vsel %vm4423, %v7998, 0
    %8028 = vmatprep.subr.mxu0 0.0
    %8029 = vmatpush1.msra.mxu0 0.0
    %8030 = vmatprep.subr.mxu0 0.0
    %8031 = vmatpush1.msra.mxu0 0.0
    %8032 = vmatprep.subr.mxu0 0.0
    %8033 = vmatpush1.msra.mxu0 0.0
    %8034 = vmatprep.subr.mxu0 0.0
    %8035 = vmatpush1.msra.mxu0 0.0
    %8036 = vmatprep.subr.mxu0 0.0
    %8037 = vmatpush1.msra.mxu0 0.0
    %8038 = vmatprep.subr.mxu0 0.0
    %8039 = vmatpush1.msra.mxu0 0.0
    %8040 = vmatprep.subr.mxu0 0.0
    %8041 = vmatpush1.msra.mxu0 0.0
    %8042 = vmatprep.subr.mxu0 0.0
    %8043 = vmatpush1.msra.mxu0 0.0
    %8044 = vmatprep.subr.mxu0 0.0
    %8045 = vmatpush1.msra.mxu0 0.0
    %8046 = vmatprep.subr.mxu0 0.0
    %8047 = vmatpush1.msra.mxu0 0.0
    %8048 = vmatprep.subr.mxu0 0.0
    %8049 = vmatpush1.msra.mxu0 0.0
    %8050 = vmatprep.subr.mxu0 0.0
    %8051 = vmatpush1.msra.mxu0 0.0
    %8052 = vmatprep.subr.mxu0 0.0
    %8053 = vmatpush1.msra.mxu0 0.0
    %8054 = vmatprep.subr.mxu0 0.0
    %8055 = vmatpush1.msra.mxu0 0.0
    %8056 = vmatprep.subr.mxu0 %v8008
    %8057 = vmatpush1.msra.mxu0 %v8005
    %8058 = vmatprep.subr.mxu0 %v7984
    %8059 = vmatpush1.msra.mxu0 %v7983
    %8060 = vmatprep.subr.mxu0 0.0
    %8061 = vmatpush2.msra.mxu0 0.0
    %8062 = vmatprep.subr.mxu0 0.0
    %8063 = vmatpush2.msra.mxu0 0.0
    %8064 = vmatprep.subr.mxu0 0.0
    %8065 = vmatpush2.msra.mxu0 0.0
    %8066 = vmatprep.subr.mxu0 0.0
    %8067 = vmatpush2.msra.mxu0 0.0
    %8068 = vmatprep.subr.mxu0 0.0
    %8069 = vmatpush2.msra.mxu0 0.0
    %8070 = vmatprep.subr.mxu0 0.0
    %8071 = vmatpush2.msra.mxu0 0.0
    %8072 = vmatprep.subr.mxu0 0.0
    %8073 = vmatpush2.msra.mxu0 0.0
    %8074 = vmatprep.subr.mxu0 0.0
    %8075 = vmatpush2.msra.mxu0 0.0
    %8076 = vmatprep.subr.mxu0 0.0
    %8077 = vmatpush2.msra.mxu0 0.0
    %8078 = vmatprep.subr.mxu0 0.0
    %8079 = vmatpush2.msra.mxu0 0.0
    %8080 = vmatprep.subr.mxu0 0.0
    %8081 = vmatpush2.msra.mxu0 0.0
    %8082 = vmatprep.subr.mxu0 0.0
    %8083 = vmatpush2.msra.mxu0 0.0
    %8084 = vmatprep.subr.mxu0 0.0
    %8085 = vmatpush2.msra.mxu0 0.0
    %8086 = vmatprep.subr.mxu0 0.0
    %8087 = vmatpush2.msra.mxu0 0.0
    %8088 = vmatprep.subr.mxu0 0.0
    %8089 = vmatpush2.msra.mxu0 0.0
    %8090 = vmatprep.subr.mxu0 0.0
    %8091 = vmatpush2.msra.mxu0 0.0
    %8092 = vmatprep.mubr.f32.mxu0 0.0
    %8093 = vmatmul.mubr.f32.gmra.mxu0 %v8002
    %v8094 = vpop.f32.mrf.mxu0
    %v8095 = vadd.f32 0.0, %v8094
    %v8096 = vpop.f32.mrf.mxu0
    %v8097 = vadd.f32 0.0, %v8096
    %8098 = vdwg.mxu0
    %8099 = vmatprep.subr.mxu0 0.0
    %8100 = vmatpush1.msra.mxu0 0.0
    %8101 = vmatprep.subr.mxu0 0.0
    %8102 = vmatpush1.msra.mxu0 0.0
    %8103 = vmatprep.subr.mxu0 0.0
    %8104 = vmatpush1.msra.mxu0 0.0
    %8105 = vmatprep.subr.mxu0 0.0
    %8106 = vmatpush1.msra.mxu0 0.0
    %8107 = vmatprep.subr.mxu0 0.0
    %8108 = vmatpush1.msra.mxu0 0.0
    %8109 = vmatprep.subr.mxu0 0.0
    %8110 = vmatpush1.msra.mxu0 0.0
    %8111 = vmatprep.subr.mxu0 0.0
    %8112 = vmatpush1.msra.mxu0 0.0
    %8113 = vmatprep.subr.mxu0 0.0
    %8114 = vmatpush1.msra.mxu0 0.0
    %8115 = vmatprep.subr.mxu0 0.0
    %8116 = vmatpush1.msra.mxu0 0.0
    %8117 = vmatprep.subr.mxu0 0.0
    %8118 = vmatpush1.msra.mxu0 0.0
    %8119 = vmatprep.subr.mxu0 0.0
    %8120 = vmatpush1.msra.mxu0 0.0
    %8121 = vmatprep.subr.mxu0 0.0
    %8122 = vmatpush1.msra.mxu0 0.0
    %8123 = vmatprep.subr.mxu0 0.0
    %8124 = vmatpush1.msra.mxu0 0.0
    %8125 = vmatprep.subr.mxu0 0.0
    %8126 = vmatpush1.msra.mxu0 0.0
    %8127 = vmatprep.subr.mxu0 %v8014
    %8128 = vmatpush1.msra.mxu0 %v8011
    %8129 = vmatprep.subr.mxu0 %v7986
    %8130 = vmatpush1.msra.mxu0 %v7985
    %8131 = vmatprep.subr.mxu0 0.0
    %8132 = vmatpush2.msra.mxu0 0.0
    %8133 = vmatprep.subr.mxu0 0.0
    %8134 = vmatpush2.msra.mxu0 0.0
    %8135 = vmatprep.subr.mxu0 0.0
    %8136 = vmatpush2.msra.mxu0 0.0
    %8137 = vmatprep.subr.mxu0 0.0
    %8138 = vmatpush2.msra.mxu0 0.0
    %8139 = vmatprep.subr.mxu0 0.0
    %8140 = vmatpush2.msra.mxu0 0.0
    %8141 = vmatprep.subr.mxu0 0.0
    %8142 = vmatpush2.msra.mxu0 0.0
    %8143 = vmatprep.subr.mxu0 0.0
    %8144 = vmatpush2.msra.mxu0 0.0
    %8145 = vmatprep.subr.mxu0 0.0
    %8146 = vmatpush2.msra.mxu0 0.0
    %8147 = vmatprep.subr.mxu0 0.0
    %8148 = vmatpush2.msra.mxu0 0.0
    %8149 = vmatprep.subr.mxu0 0.0
    %8150 = vmatpush2.msra.mxu0 0.0
    %8151 = vmatprep.subr.mxu0 0.0
    %8152 = vmatpush2.msra.mxu0 0.0
    %8153 = vmatprep.subr.mxu0 0.0
    %8154 = vmatpush2.msra.mxu0 0.0
    %8155 = vmatprep.subr.mxu0 0.0
    %8156 = vmatpush2.msra.mxu0 0.0
    %8157 = vmatprep.subr.mxu0 0.0
    %8158 = vmatpush2.msra.mxu0 0.0
    %8159 = vmatprep.subr.mxu0 0.0
    %8160 = vmatpush2.msra.mxu0 0.0
    %8161 = vmatprep.subr.mxu0 0.0
    %8162 = vmatpush2.msra.mxu0 0.0
    %8163 = vmatprep.mubr.f32.mxu0 0.0
    %8164 = vmatmul.mubr.f32.gmra.mxu0 %v8002
    %v8165 = vpop.f32.mrf.mxu0
    %v8166 = vadd.f32 0.0, %v8165
    %v8167 = vpop.f32.mrf.mxu0
    %v8168 = vadd.f32 0.0, %v8167
    %8169 = vdwg.mxu0
    %8170 = vmatprep.subr.mxu0 0.0
    %8171 = vmatpush1.msra.mxu0 0.0
    %8172 = vmatprep.subr.mxu0 0.0
    %8173 = vmatpush1.msra.mxu0 0.0
    %8174 = vmatprep.subr.mxu0 0.0
    %8175 = vmatpush1.msra.mxu0 0.0
    %8176 = vmatprep.subr.mxu0 0.0
    %8177 = vmatpush1.msra.mxu0 0.0
    %8178 = vmatprep.subr.mxu0 0.0
    %8179 = vmatpush1.msra.mxu0 0.0
    %8180 = vmatprep.subr.mxu0 0.0
    %8181 = vmatpush1.msra.mxu0 0.0
    %8182 = vmatprep.subr.mxu0 0.0
    %8183 = vmatpush1.msra.mxu0 0.0
    %8184 = vmatprep.subr.mxu0 0.0
    %8185 = vmatpush1.msra.mxu0 0.0
    %8186 = vmatprep.subr.mxu0 0.0
    %8187 = vmatpush1.msra.mxu0 0.0
    %8188 = vmatprep.subr.mxu0 0.0
    %8189 = vmatpush1.msra.mxu0 0.0
    %8190 = vmatprep.subr.mxu0 0.0
    %8191 = vmatpush1.msra.mxu0 0.0
    %8192 = vmatprep.subr.mxu0 0.0
    %8193 = vmatpush1.msra.mxu0 0.0
    %8194 = vmatprep.subr.mxu0 0.0
    %8195 = vmatpush1.msra.mxu0 0.0
    %8196 = vmatprep.subr.mxu0 0.0
    %8197 = vmatpush1.msra.mxu0 0.0
    %8198 = vmatprep.subr.mxu0 %v8020
    %8199 = vmatpush1.msra.mxu0 %v8017
    %8200 = vmatprep.subr.mxu0 %v7988
    %8201 = vmatpush1.msra.mxu0 %v7987
    %8202 = vmatprep.subr.mxu0 0.0
    %8203 = vmatpush2.msra.mxu0 0.0
    %8204 = vmatprep.subr.mxu0 0.0
    %8205 = vmatpush2.msra.mxu0 0.0
    %8206 = vmatprep.subr.mxu0 0.0
    %8207 = vmatpush2.msra.mxu0 0.0
    %8208 = vmatprep.subr.mxu0 0.0
    %8209 = vmatpush2.msra.mxu0 0.0
    %8210 = vmatprep.subr.mxu0 0.0
    %8211 = vmatpush2.msra.mxu0 0.0
    %8212 = vmatprep.subr.mxu0 0.0
    %8213 = vmatpush2.msra.mxu0 0.0
    %8214 = vmatprep.subr.mxu0 0.0
    %8215 = vmatpush2.msra.mxu0 0.0
    %8216 = vmatprep.subr.mxu0 0.0
    %8217 = vmatpush2.msra.mxu0 0.0
    %8218 = vmatprep.subr.mxu0 0.0
    %8219 = vmatpush2.msra.mxu0 0.0
    %8220 = vmatprep.subr.mxu0 0.0
    %8221 = vmatpush2.msra.mxu0 0.0
    %8222 = vmatprep.subr.mxu0 0.0
    %8223 = vmatpush2.msra.mxu0 0.0
    %8224 = vmatprep.subr.mxu0 0.0
    %8225 = vmatpush2.msra.mxu0 0.0
    %8226 = vmatprep.subr.mxu0 0.0
    %8227 = vmatpush2.msra.mxu0 0.0
    %8228 = vmatprep.subr.mxu0 0.0
    %8229 = vmatpush2.msra.mxu0 0.0
    %8230 = vmatprep.subr.mxu0 0.0
    %8231 = vmatpush2.msra.mxu0 0.0
    %8232 = vmatprep.subr.mxu0 0.0
    %8233 = vmatpush2.msra.mxu0 0.0
    %8234 = vmatprep.mubr.f32.mxu0 0.0
    %8235 = vmatmul.mubr.f32.gmra.mxu0 %v8002
    %v8236 = vpop.f32.mrf.mxu0
    %v8237 = vadd.f32 0.0, %v8236
    %v8238 = vpop.f32.mrf.mxu0
    %v8239 = vadd.f32 0.0, %v8238
    %8240 = vdwg.mxu0
    %8241 = vmatprep.subr.mxu0 0.0
    %8242 = vmatpush1.msra.mxu0 0.0
    %8243 = vmatprep.subr.mxu0 0.0
    %8244 = vmatpush1.msra.mxu0 0.0
    %8245 = vmatprep.subr.mxu0 0.0
    %8246 = vmatpush1.msra.mxu0 0.0
    %8247 = vmatprep.subr.mxu0 0.0
    %8248 = vmatpush1.msra.mxu0 0.0
    %8249 = vmatprep.subr.mxu0 0.0
    %8250 = vmatpush1.msra.mxu0 0.0
    %8251 = vmatprep.subr.mxu0 0.0
    %8252 = vmatpush1.msra.mxu0 0.0
    %8253 = vmatprep.subr.mxu0 0.0
    %8254 = vmatpush1.msra.mxu0 0.0
    %8255 = vmatprep.subr.mxu0 0.0
    %8256 = vmatpush1.msra.mxu0 0.0
    %8257 = vmatprep.subr.mxu0 0.0
    %8258 = vmatpush1.msra.mxu0 0.0
    %8259 = vmatprep.subr.mxu0 0.0
    %8260 = vmatpush1.msra.mxu0 0.0
    %8261 = vmatprep.subr.mxu0 0.0
    %8262 = vmatpush1.msra.mxu0 0.0
    %8263 = vmatprep.subr.mxu0 0.0
    %8264 = vmatpush1.msra.mxu0 0.0
    %8265 = vmatprep.subr.mxu0 0.0
    %8266 = vmatpush1.msra.mxu0 0.0
    %8267 = vmatprep.subr.mxu0 0.0
    %8268 = vmatpush1.msra.mxu0 0.0
    %8269 = vmatprep.subr.mxu0 %v8026
    %8270 = vmatpush1.msra.mxu0 %v8023
    %8271 = vmatprep.subr.mxu0 %v7990
    %8272 = vmatpush1.msra.mxu0 %v7989
    %8273 = vmatprep.subr.mxu0 0.0
    %8274 = vmatpush2.msra.mxu0 0.0
    %8275 = vmatprep.subr.mxu0 0.0
    %8276 = vmatpush2.msra.mxu0 0.0
    %8277 = vmatprep.subr.mxu0 0.0
    %8278 = vmatpush2.msra.mxu0 0.0
    %8279 = vmatprep.subr.mxu0 0.0
    %8280 = vmatpush2.msra.mxu0 0.0
    %8281 = vmatprep.subr.mxu0 0.0
    %8282 = vmatpush2.msra.mxu0 0.0
    %8283 = vmatprep.subr.mxu0 0.0
    %8284 = vmatpush2.msra.mxu0 0.0
    %8285 = vmatprep.subr.mxu0 0.0
    %8286 = vmatpush2.msra.mxu0 0.0
    %8287 = vmatprep.subr.mxu0 0.0
    %8288 = vmatpush2.msra.mxu0 0.0
    %8289 = vmatprep.subr.mxu0 0.0
    %8290 = vmatpush2.msra.mxu0 0.0
    %8291 = vmatprep.subr.mxu0 0.0
    %8292 = vmatpush2.msra.mxu0 0.0
    %8293 = vmatprep.subr.mxu0 0.0
    %8294 = vmatpush2.msra.mxu0 0.0
    %8295 = vmatprep.subr.mxu0 0.0
    %8296 = vmatpush2.msra.mxu0 0.0
    %8297 = vmatprep.subr.mxu0 0.0
    %8298 = vmatpush2.msra.mxu0 0.0
    %8299 = vmatprep.subr.mxu0 0.0
    %8300 = vmatpush2.msra.mxu0 0.0
    %8301 = vmatprep.subr.mxu0 0.0
    %8302 = vmatpush2.msra.mxu0 0.0
    %8303 = vmatprep.subr.mxu0 0.0
    %8304 = vmatpush2.msra.mxu0 0.0
    %8305 = vmatprep.mubr.f32.mxu0 0.0
    %8306 = vmatmul.mubr.f32.gmra.mxu0 %v8002
    %v8307 = vpop.f32.mrf.mxu0
    %v8308 = vadd.f32 0.0, %v8307
    %v8309 = vpop.f32.mrf.mxu0
    %v8310 = vadd.f32 0.0, %v8309
    %8311 = vdwg.mxu0
    %v8312 = vadd.f32 %v7930, %v8095
    %v8313 = vadd.f32 %v7931, %v8097
    %v8314 = vadd.f32 %v7932, %v8166
    %v8315 = vadd.f32 %v7933, %v8168
    %v8316 = vadd.f32 %v7934, %v8237
    %v8317 = vadd.f32 %v7935, %v8239
    %v8318 = vadd.f32 %v7936, %v8308
    %v8319 = vadd.f32 %v7937, %v8310
    %v8320 = vld [vmem:[%s9] sm:$0xff]
    %v8322 = vlaneseq
    %v8323 = vshrl.u32 %v8322, 7
    %v8324 = vsub.s32 0, %v8323
    %v8325 = vrot.slane %v8320, %v8324
    %v8326 = vlaneseq
    %v8327 = vshrl.u32 %v8326, 7
    %v8328 = vsub.s32 1, %v8327
    %v8329 = vrot.slane %v8320, %v8328
    %v8330 = vlaneseq
    %v8331 = vshrl.u32 %v8330, 7
    %v8332 = vsub.s32 2, %v8331
    %v8333 = vrot.slane %v8320, %v8332
    %v8334 = vlaneseq
    %v8335 = vshrl.u32 %v8334, 7
    %v8336 = vsub.s32 3, %v8335
    %v8337 = vrot.slane %v8320, %v8336
    %v8338 = vlaneseq
    %v8339 = vshrl.u32 %v8338, 7
    %v8340 = vsub.s32 4, %v8339
    %v8341 = vrot.slane %v8320, %v8340
    %v8342 = vlaneseq
    %v8343 = vshrl.u32 %v8342, 7
    %v8344 = vsub.s32 5, %v8343
    %v8345 = vrot.slane %v8320, %v8344
    %v8346 = vlaneseq
    %v8347 = vshrl.u32 %v8346, 7
    %v8348 = vsub.s32 6, %v8347
    %v8349 = vrot.slane %v8320, %v8348
    %v8350 = vlaneseq
    %v8351 = vshrl.u32 %v8350, 7
    %v8352 = vsub.s32 7, %v8351
    %v8353 = vrot.slane %v8320, %v8352
    %v8362 = vmul.f32 %v8312, %v8325
    %v8363 = vmul.f32 %v8313, %v8329
    %v8364 = vmul.f32 %v8314, %v8333
    %v8365 = vmul.f32 %v8315, %v8337
    %v8366 = vmul.f32 %v8316, %v8341
    %v8367 = vmul.f32 %v8317, %v8345
    %v8368 = vmul.f32 %v8318, %v8349
    %v8369 = vmul.f32 %v8319, %v8353
    %v8370 = vsel %vm4423, %v8362, 0.0
    %v8371 = vsel %vm4423, %v8363, 0.0
    %v8372 = vadd.f32 %v8370, %v8371
    %v8373 = vsel %vm4423, %v8364, 0.0
    %v8374 = vadd.f32 %v8372, %v8373
    %v8375 = vsel %vm4423, %v8365, 0.0
    %v8376 = vadd.f32 %v8374, %v8375
    %v8377 = vsel %vm4423, %v8366, 0.0
    %v8378 = vadd.f32 %v8376, %v8377
    %v8379 = vsel %vm4423, %v8367, 0.0
    %v8380 = vadd.f32 %v8378, %v8379
    %v8381 = vsel %vm4423, %v8368, 0.0
    %v8382 = vadd.f32 %v8380, %v8381
    %v8383 = vsel %vm4423, %v8369, 0.0
    %v8384 = vadd.f32 %v8382, %v8383
    %8385 = vadd.xlane.f32.xlu0 %v8384
    %v8386 = vpop.xlane.xlu0 %8385
    %v8387 = vmul.f32 %v8362, %v8362
    %v8388 = vmul.f32 %v8363, %v8363
    %v8389 = vmul.f32 %v8364, %v8364
    %v8390 = vmul.f32 %v8365, %v8365
    %v8391 = vmul.f32 %v8366, %v8366
    %v8392 = vmul.f32 %v8367, %v8367
    %v8393 = vmul.f32 %v8368, %v8368
    %v8394 = vmul.f32 %v8369, %v8369
    %v8395 = vsel %vm4423, %v8387, 0.0
    %v8396 = vsel %vm4423, %v8388, 0.0
    %v8397 = vadd.f32 %v8395, %v8396
    %v8398 = vsel %vm4423, %v8389, 0.0
    %v8399 = vadd.f32 %v8397, %v8398
    %v8400 = vsel %vm4423, %v8390, 0.0
    %v8401 = vadd.f32 %v8399, %v8400
    %v8402 = vsel %vm4423, %v8391, 0.0
    %v8403 = vadd.f32 %v8401, %v8402
    %v8404 = vsel %vm4423, %v8392, 0.0
    %v8405 = vadd.f32 %v8403, %v8404
    %v8406 = vsel %vm4423, %v8393, 0.0
    %v8407 = vadd.f32 %v8405, %v8406
    %v8408 = vsel %vm4423, %v8394, 0.0
    %v8409 = vadd.f32 %v8407, %v8408
    %8410 = vadd.xlane.f32.xlu0 %v8409
    %v8411 = vpop.xlane.xlu0 %8410
    %v8412 = vmul.f32 %v8386, 0.00390625
    %v8413 = vmul.f32 %v8411, 0.00390625
    %v8414 = vmul.f32 %v8412, %v8412
    %v8415 = vsub.f32 %v8413, %v8414
    %v8416 = vmax.f32 %v8415, 0.0
    %v8417 = vsub.f32 %v8312, %v8412
    %v8418 = vsub.f32 %v8313, %v8412
    %v8419 = vsub.f32 %v8314, %v8412
    %v8420 = vsub.f32 %v8315, %v8412
    %v8421 = vsub.f32 %v8316, %v8412
    %v8422 = vsub.f32 %v8317, %v8412
    %v8423 = vsub.f32 %v8318, %v8412
    %v8424 = vsub.f32 %v8319, %v8412
    %v8425 = vadd.f32 %v8416, 1e-05
    %v8426 = vrsqrt.pop %v8425
    %v8427 = vld [vmem:[%s5] sm:$0x3]
    %v8428 = vmul.f32 %v8426, %v8427
    %8430 = vset.pattern.permute.xlu0 0
    %8431 = vperm.xlu0 %8430, %v8428
    %v8432 = vpop.permute.xlu0 %8431
    %v8434 = vmul.f32 %v8417, %v8432
    %v8435 = vmul.f32 %v8418, %v8432
    %v8436 = vmul.f32 %v8419, %v8432
    %v8437 = vmul.f32 %v8420, %v8432
    %v8438 = vmul.f32 %v8421, %v8432
    %v8439 = vmul.f32 %v8422, %v8432
    %v8440 = vmul.f32 %v8423, %v8432
    %v8441 = vmul.f32 %v8424, %v8432
    %v8442 = vld [vmem:[%s6] sm:$0x3]
    %8444 = vset.pattern.permute.xlu0 0
    %8445 = vperm.xlu0 %8444, %v8442
    %v8446 = vpop.permute.xlu0 %8445
    %v8448 = vadd.f32 %v8434, %v8446
    %v8449 = vadd.f32 %v8435, %v8446
    %v8450 = vadd.f32 %v8436, %v8446
    %v8451 = vadd.f32 %v8437, %v8446
    %v8452 = vadd.f32 %v8438, %v8446
    %v8453 = vadd.f32 %v8439, %v8446
    %v8454 = vadd.f32 %v8440, %v8446
    %v8455 = vadd.f32 %v8441, %v8446
    %v8456 = vmax.f32 %v8448, 0.0
    %v8457 = vmax.f32 %v8449, 0.0
    %v8458 = vmax.f32 %v8450, 0.0
    %v8459 = vmax.f32 %v8451, 0.0
    %v8460 = vmax.f32 %v8452, 0.0
    %v8461 = vmax.f32 %v8453, 0.0
    %v8462 = vmax.f32 %v8454, 0.0
    %v8463 = vmax.f32 %v8455, 0.0
    %8464 = vrot.lane.b32.xlu0 %v8456, 126
    %v8465 = vpop.permute.xlu0 %8464
    %8466 = vrot.lane.b32.xlu0 %v8457, 126
    %v8467 = vpop.permute.xlu0 %8466
    %8468 = vrot.lane.b32.xlu0 %v8458, 126
    %v8469 = vpop.permute.xlu0 %8468
    %8470 = vrot.lane.b32.xlu0 %v8459, 126
    %v8471 = vpop.permute.xlu0 %8470
    %8472 = vrot.lane.b32.xlu0 %v8460, 126
    %v8473 = vpop.permute.xlu0 %8472
    %8474 = vrot.lane.b32.xlu0 %v8461, 126
    %v8475 = vpop.permute.xlu0 %8474
    %8476 = vrot.lane.b32.xlu0 %v8462, 126
    %v8477 = vpop.permute.xlu0 %8476
    %8478 = vrot.lane.b32.xlu0 %v8463, 126
    %v8479 = vpop.permute.xlu0 %8478
    %v8480 = vsel %vm6775, %v8477, %v8479
    %v8481 = vsel %vm6775, %v8475, %v8477
    %v8482 = vsel %vm6775, %v8473, %v8475
    %v8483 = vsel %vm6775, %v8471, %v8473
    %v8484 = vsel %vm6775, %v8469, %v8471
    %v8485 = vsel %vm6775, %v8467, %v8469
    %v8486 = vsel %vm6775, %v8465, %v8467
    %v8487 = vsel %vm6775, %v8479, %v8465
    %v8488 = vmax.f32 %v8456, %v8486
    %v8489 = vmax.f32 %v8457, %v8485
    %v8490 = vmax.f32 %v8458, %v8484
    %v8491 = vmax.f32 %v8459, %v8483
    %v8492 = vmax.f32 %v8460, %v8482
    %v8493 = vmax.f32 %v8461, %v8481
    %v8494 = vmax.f32 %v8462, %v8480
    %v8495 = vmax.f32 %v8463, %v8487
    %8496 = vrot.lane.b32.xlu0 %v8488, 64
    %v8497 = vpop.permute.xlu0 %8496
    %8498 = vrot.lane.b32.xlu0 %v8489, 64
    %v8499 = vpop.permute.xlu0 %8498
    %8500 = vrot.lane.b32.xlu0 %v8490, 64
    %v8501 = vpop.permute.xlu0 %8500
    %8502 = vrot.lane.b32.xlu0 %v8491, 64
    %v8503 = vpop.permute.xlu0 %8502
    %8504 = vrot.lane.b32.xlu0 %v8492, 64
    %v8505 = vpop.permute.xlu0 %8504
    %8506 = vrot.lane.b32.xlu0 %v8493, 64
    %v8507 = vpop.permute.xlu0 %8506
    %8508 = vrot.lane.b32.xlu0 %v8494, 64
    %v8509 = vpop.permute.xlu0 %8508
    %8510 = vrot.lane.b32.xlu0 %v8495, 64
    %v8511 = vpop.permute.xlu0 %8510
    %v8512 = vsel %vm4857, %v8509, %v8511
    %v8513 = vsel %vm4857, %v8507, %v8509
    %v8514 = vsel %vm4857, %v8505, %v8507
    %v8515 = vsel %vm4857, %v8503, %v8505
    %v8516 = vsel %vm4857, %v8501, %v8503
    %v8517 = vsel %vm4857, %v8499, %v8501
    %v8518 = vsel %vm4857, %v8497, %v8499
    %v8519 = vsel %vm4857, %v8511, %v8497
    %v8520 = vmax.f32 %v8488, %v8518
    %v8521 = vmax.f32 %v8489, %v8517
    %v8522 = vmax.f32 %v8490, %v8516
    %v8523 = vmax.f32 %v8491, %v8515
    %v8524 = vmax.f32 %v8492, %v8514
    %v8525 = vmax.f32 %v8493, %v8513
    %v8526 = vmax.f32 %v8494, %v8512
    %v8527 = vmax.f32 %v8495, %v8519
    %s8528 = smul.u32 2, 1024
    %s8529 = smul.u32 %s8528, 1
    %s8530 = sshll.u32 %s8529, 4
    %8531 = dma.done [#allocation3], %s8530
    %v8532 = vld [vmem:[#allocation2] sm:$0xff]
    %v8533 = vld [vmem:[#allocation2 + $0x8] sm:$0xff]
    %v8534 = vld [vmem:[#allocation2 + $0x10] sm:$0xff]
    %v8535 = vld [vmem:[#allocation2 + $0x18] sm:$0xff]
    %v8536 = vld [vmem:[#allocation2 + $0x20] sm:$0xff]
    %v8537 = vld [vmem:[#allocation2 + $0x28] sm:$0xff]
    %v8538 = vld [vmem:[#allocation2 + $0x30] sm:$0xff]
    %v8539 = vld [vmem:[#allocation2 + $0x38] sm:$0xff]
    %v8540 = vld [vmem:[#allocation2 + $0x40] sm:$0xff]
    %v8541 = vld [vmem:[#allocation2 + $0x48] sm:$0xff]
    %v8542 = vld [vmem:[#allocation2 + $0x50] sm:$0xff]
    %v8543 = vld [vmem:[#allocation2 + $0x58] sm:$0xff]
    %v8544 = vld [vmem:[#allocation2 + $0x60] sm:$0xff]
    %v8545 = vld [vmem:[#allocation2 + $0x68] sm:$0xff]
    %v8546 = vld [vmem:[#allocation2 + $0x70] sm:$0xff]
    %v8547 = vld [vmem:[#allocation2 + $0x78] sm:$0xff]
    %v8548 = vld [vmem:[#allocation2 + $0x80] sm:$0xff]
    %v8549 = vld [vmem:[#allocation2 + $0x88] sm:$0xff]
    %v8550 = vld [vmem:[#allocation2 + $0x90] sm:$0xff]
    %v8551 = vld [vmem:[#allocation2 + $0x98] sm:$0xff]
    %v8552 = vld [vmem:[#allocation2 + $0xa0] sm:$0xff]
    %v8553 = vld [vmem:[#allocation2 + $0xa8] sm:$0xff]
    %v8554 = vld [vmem:[#allocation2 + $0xb0] sm:$0xff]
    %v8555 = vld [vmem:[#allocation2 + $0xb8] sm:$0xff]
    %v8556 = vld [vmem:[#allocation2 + $0xc0] sm:$0xff]
    %v8557 = vld [vmem:[#allocation2 + $0xc8] sm:$0xff]
    %v8558 = vld [vmem:[#allocation2 + $0xd0] sm:$0xff]
    %v8559 = vld [vmem:[#allocation2 + $0xd8] sm:$0xff]
    %v8560 = vld [vmem:[#allocation2 + $0xe0] sm:$0xff]
    %v8561 = vld [vmem:[#allocation2 + $0xe8] sm:$0xff]
    %v8562 = vld [vmem:[#allocation2 + $0xf0] sm:$0xff]
    %v8563 = vld [vmem:[#allocation2 + $0xf8] sm:$0xff]
    %v8564 = vld [vmem:[#allocation2 + $0x100] sm:$0xff]
    %v8565 = vld [vmem:[#allocation2 + $0x108] sm:$0xff]
    %v8566 = vld [vmem:[#allocation2 + $0x110] sm:$0xff]
    %v8567 = vld [vmem:[#allocation2 + $0x118] sm:$0xff]
    %v8568 = vld [vmem:[#allocation2 + $0x120] sm:$0xff]
    %v8569 = vld [vmem:[#allocation2 + $0x128] sm:$0xff]
    %v8570 = vld [vmem:[#allocation2 + $0x130] sm:$0xff]
    %v8571 = vld [vmem:[#allocation2 + $0x138] sm:$0xff]
    %v8572 = vld [vmem:[#allocation2 + $0x140] sm:$0xff]
    %v8573 = vld [vmem:[#allocation2 + $0x148] sm:$0xff]
    %v8574 = vld [vmem:[#allocation2 + $0x150] sm:$0xff]
    %v8575 = vld [vmem:[#allocation2 + $0x158] sm:$0xff]
    %v8576 = vld [vmem:[#allocation2 + $0x160] sm:$0xff]
    %v8577 = vld [vmem:[#allocation2 + $0x168] sm:$0xff]
    %v8578 = vld [vmem:[#allocation2 + $0x170] sm:$0xff]
    %v8579 = vld [vmem:[#allocation2 + $0x178] sm:$0xff]
    %v8580 = vld [vmem:[#allocation2 + $0x180] sm:$0xff]
    %v8581 = vld [vmem:[#allocation2 + $0x188] sm:$0xff]
    %v8582 = vld [vmem:[#allocation2 + $0x190] sm:$0xff]
    %v8583 = vld [vmem:[#allocation2 + $0x198] sm:$0xff]
    %v8584 = vld [vmem:[#allocation2 + $0x1a0] sm:$0xff]
    %v8585 = vld [vmem:[#allocation2 + $0x1a8] sm:$0xff]
    %v8586 = vld [vmem:[#allocation2 + $0x1b0] sm:$0xff]
    %v8587 = vld [vmem:[#allocation2 + $0x1b8] sm:$0xff]
    %v8588 = vld [vmem:[#allocation2 + $0x1c0] sm:$0xff]
    %v8589 = vld [vmem:[#allocation2 + $0x1c8] sm:$0xff]
    %v8590 = vld [vmem:[#allocation2 + $0x1d0] sm:$0xff]
    %v8591 = vld [vmem:[#allocation2 + $0x1d8] sm:$0xff]
    %v8592 = vld [vmem:[#allocation2 + $0x1e0] sm:$0xff]
    %v8593 = vld [vmem:[#allocation2 + $0x1e8] sm:$0xff]
    %v8594 = vld [vmem:[#allocation2 + $0x1f0] sm:$0xff]
    %v8595 = vld [vmem:[#allocation2 + $0x1f8] sm:$0xff]
    %v8596 = vld [vmem:[#allocation2 + $0x200] sm:$0xff]
    %v8597 = vld [vmem:[#allocation2 + $0x208] sm:$0xff]
    %v8598 = vld [vmem:[#allocation2 + $0x210] sm:$0xff]
    %v8599 = vld [vmem:[#allocation2 + $0x218] sm:$0xff]
    %v8600 = vld [vmem:[#allocation2 + $0x220] sm:$0xff]
    %v8601 = vld [vmem:[#allocation2 + $0x228] sm:$0xff]
    %v8602 = vld [vmem:[#allocation2 + $0x230] sm:$0xff]
    %v8603 = vld [vmem:[#allocation2 + $0x238] sm:$0xff]
    %v8604 = vld [vmem:[#allocation2 + $0x240] sm:$0xff]
    %v8605 = vld [vmem:[#allocation2 + $0x248] sm:$0xff]
    %v8606 = vld [vmem:[#allocation2 + $0x250] sm:$0xff]
    %v8607 = vld [vmem:[#allocation2 + $0x258] sm:$0xff]
    %v8608 = vld [vmem:[#allocation2 + $0x260] sm:$0xff]
    %v8609 = vld [vmem:[#allocation2 + $0x268] sm:$0xff]
    %v8610 = vld [vmem:[#allocation2 + $0x270] sm:$0xff]
    %v8611 = vld [vmem:[#allocation2 + $0x278] sm:$0xff]
    %v8612 = vld [vmem:[#allocation2 + $0x280] sm:$0xff]
    %v8613 = vld [vmem:[#allocation2 + $0x288] sm:$0xff]
    %v8614 = vld [vmem:[#allocation2 + $0x290] sm:$0xff]
    %v8615 = vld [vmem:[#allocation2 + $0x298] sm:$0xff]
    %v8616 = vld [vmem:[#allocation2 + $0x2a0] sm:$0xff]
    %v8617 = vld [vmem:[#allocation2 + $0x2a8] sm:$0xff]
    %v8618 = vld [vmem:[#allocation2 + $0x2b0] sm:$0xff]
    %v8619 = vld [vmem:[#allocation2 + $0x2b8] sm:$0xff]
    %v8620 = vld [vmem:[#allocation2 + $0x2c0] sm:$0xff]
    %v8621 = vld [vmem:[#allocation2 + $0x2c8] sm:$0xff]
    %v8622 = vld [vmem:[#allocation2 + $0x2d0] sm:$0xff]
    %v8623 = vld [vmem:[#allocation2 + $0x2d8] sm:$0xff]
    %v8624 = vld [vmem:[#allocation2 + $0x2e0] sm:$0xff]
    %v8625 = vld [vmem:[#allocation2 + $0x2e8] sm:$0xff]
    %v8626 = vld [vmem:[#allocation2 + $0x2f0] sm:$0xff]
    %v8627 = vld [vmem:[#allocation2 + $0x2f8] sm:$0xff]
    %v8628 = vld [vmem:[#allocation2 + $0x300] sm:$0xff]
    %v8629 = vld [vmem:[#allocation2 + $0x308] sm:$0xff]
    %v8630 = vld [vmem:[#allocation2 + $0x310] sm:$0xff]
    %v8631 = vld [vmem:[#allocation2 + $0x318] sm:$0xff]
    %v8632 = vld [vmem:[#allocation2 + $0x320] sm:$0xff]
    %v8633 = vld [vmem:[#allocation2 + $0x328] sm:$0xff]
    %v8634 = vld [vmem:[#allocation2 + $0x330] sm:$0xff]
    %v8635 = vld [vmem:[#allocation2 + $0x338] sm:$0xff]
    %v8636 = vld [vmem:[#allocation2 + $0x340] sm:$0xff]
    %v8637 = vld [vmem:[#allocation2 + $0x348] sm:$0xff]
    %v8638 = vld [vmem:[#allocation2 + $0x350] sm:$0xff]
    %v8639 = vld [vmem:[#allocation2 + $0x358] sm:$0xff]
    %v8640 = vld [vmem:[#allocation2 + $0x360] sm:$0xff]
    %v8641 = vld [vmem:[#allocation2 + $0x368] sm:$0xff]
    %v8642 = vld [vmem:[#allocation2 + $0x370] sm:$0xff]
    %v8643 = vld [vmem:[#allocation2 + $0x378] sm:$0xff]
    %v8644 = vld [vmem:[#allocation2 + $0x380] sm:$0xff]
    %v8645 = vld [vmem:[#allocation2 + $0x388] sm:$0xff]
    %v8646 = vld [vmem:[#allocation2 + $0x390] sm:$0xff]
    %v8647 = vld [vmem:[#allocation2 + $0x398] sm:$0xff]
    %v8648 = vld [vmem:[#allocation2 + $0x3a0] sm:$0xff]
    %v8649 = vld [vmem:[#allocation2 + $0x3a8] sm:$0xff]
    %v8650 = vld [vmem:[#allocation2 + $0x3b0] sm:$0xff]
    %v8651 = vld [vmem:[#allocation2 + $0x3b8] sm:$0xff]
    %v8652 = vld [vmem:[#allocation2 + $0x3c0] sm:$0xff]
    %v8653 = vld [vmem:[#allocation2 + $0x3c8] sm:$0xff]
    %v8654 = vld [vmem:[#allocation2 + $0x3d0] sm:$0xff]
    %v8655 = vld [vmem:[#allocation2 + $0x3d8] sm:$0xff]
    %v8656 = vld [vmem:[#allocation2 + $0x3e0] sm:$0xff]
    %v8657 = vld [vmem:[#allocation2 + $0x3e8] sm:$0xff]
    %v8658 = vld [vmem:[#allocation2 + $0x3f0] sm:$0xff]
    %v8659 = vld [vmem:[#allocation2 + $0x3f8] sm:$0xff]
    %s8660 = scalar_lea.vmem [#allocation2], 1024
    %v8661 = vld [vmem:[%s8660] sm:$0xff]
    %v8662 = vld [vmem:[%s8660 + $0x8] sm:$0xff]
    %v8663 = vld [vmem:[%s8660 + $0x10] sm:$0xff]
    %v8664 = vld [vmem:[%s8660 + $0x18] sm:$0xff]
    %v8665 = vld [vmem:[%s8660 + $0x20] sm:$0xff]
    %v8666 = vld [vmem:[%s8660 + $0x28] sm:$0xff]
    %v8667 = vld [vmem:[%s8660 + $0x30] sm:$0xff]
    %v8668 = vld [vmem:[%s8660 + $0x38] sm:$0xff]
    %v8669 = vld [vmem:[%s8660 + $0x40] sm:$0xff]
    %v8670 = vld [vmem:[%s8660 + $0x48] sm:$0xff]
    %v8671 = vld [vmem:[%s8660 + $0x50] sm:$0xff]
    %v8672 = vld [vmem:[%s8660 + $0x58] sm:$0xff]
    %v8673 = vld [vmem:[%s8660 + $0x60] sm:$0xff]
    %v8674 = vld [vmem:[%s8660 + $0x68] sm:$0xff]
    %v8675 = vld [vmem:[%s8660 + $0x70] sm:$0xff]
    %v8676 = vld [vmem:[%s8660 + $0x78] sm:$0xff]
    %v8677 = vld [vmem:[%s8660 + $0x80] sm:$0xff]
    %v8678 = vld [vmem:[%s8660 + $0x88] sm:$0xff]
    %v8679 = vld [vmem:[%s8660 + $0x90] sm:$0xff]
    %v8680 = vld [vmem:[%s8660 + $0x98] sm:$0xff]
    %v8681 = vld [vmem:[%s8660 + $0xa0] sm:$0xff]
    %v8682 = vld [vmem:[%s8660 + $0xa8] sm:$0xff]
    %v8683 = vld [vmem:[%s8660 + $0xb0] sm:$0xff]
    %v8684 = vld [vmem:[%s8660 + $0xb8] sm:$0xff]
    %v8685 = vld [vmem:[%s8660 + $0xc0] sm:$0xff]
    %v8686 = vld [vmem:[%s8660 + $0xc8] sm:$0xff]
    %v8687 = vld [vmem:[%s8660 + $0xd0] sm:$0xff]
    %v8688 = vld [vmem:[%s8660 + $0xd8] sm:$0xff]
    %v8689 = vld [vmem:[%s8660 + $0xe0] sm:$0xff]
    %v8690 = vld [vmem:[%s8660 + $0xe8] sm:$0xff]
    %v8691 = vld [vmem:[%s8660 + $0xf0] sm:$0xff]
    %v8692 = vld [vmem:[%s8660 + $0xf8] sm:$0xff]
    %v8693 = vld [vmem:[%s8660 + $0x100] sm:$0xff]
    %v8694 = vld [vmem:[%s8660 + $0x108] sm:$0xff]
    %v8695 = vld [vmem:[%s8660 + $0x110] sm:$0xff]
    %v8696 = vld [vmem:[%s8660 + $0x118] sm:$0xff]
    %v8697 = vld [vmem:[%s8660 + $0x120] sm:$0xff]
    %v8698 = vld [vmem:[%s8660 + $0x128] sm:$0xff]
    %v8699 = vld [vmem:[%s8660 + $0x130] sm:$0xff]
    %v8700 = vld [vmem:[%s8660 + $0x138] sm:$0xff]
    %v8701 = vld [vmem:[%s8660 + $0x140] sm:$0xff]
    %v8702 = vld [vmem:[%s8660 + $0x148] sm:$0xff]
    %v8703 = vld [vmem:[%s8660 + $0x150] sm:$0xff]
    %v8704 = vld [vmem:[%s8660 + $0x158] sm:$0xff]
    %v8705 = vld [vmem:[%s8660 + $0x160] sm:$0xff]
    %v8706 = vld [vmem:[%s8660 + $0x168] sm:$0xff]
    %v8707 = vld [vmem:[%s8660 + $0x170] sm:$0xff]
    %v8708 = vld [vmem:[%s8660 + $0x178] sm:$0xff]
    %v8709 = vld [vmem:[%s8660 + $0x180] sm:$0xff]
    %v8710 = vld [vmem:[%s8660 + $0x188] sm:$0xff]
    %v8711 = vld [vmem:[%s8660 + $0x190] sm:$0xff]
    %v8712 = vld [vmem:[%s8660 + $0x198] sm:$0xff]
    %v8713 = vld [vmem:[%s8660 + $0x1a0] sm:$0xff]
    %v8714 = vld [vmem:[%s8660 + $0x1a8] sm:$0xff]
    %v8715 = vld [vmem:[%s8660 + $0x1b0] sm:$0xff]
    %v8716 = vld [vmem:[%s8660 + $0x1b8] sm:$0xff]
    %v8717 = vld [vmem:[%s8660 + $0x1c0] sm:$0xff]
    %v8718 = vld [vmem:[%s8660 + $0x1c8] sm:$0xff]
    %v8719 = vld [vmem:[%s8660 + $0x1d0] sm:$0xff]
    %v8720 = vld [vmem:[%s8660 + $0x1d8] sm:$0xff]
    %v8721 = vld [vmem:[%s8660 + $0x1e0] sm:$0xff]
    %v8722 = vld [vmem:[%s8660 + $0x1e8] sm:$0xff]
    %v8723 = vld [vmem:[%s8660 + $0x1f0] sm:$0xff]
    %v8724 = vld [vmem:[%s8660 + $0x1f8] sm:$0xff]
    %v8725 = vld [vmem:[%s8660 + $0x200] sm:$0xff]
    %v8726 = vld [vmem:[%s8660 + $0x208] sm:$0xff]
    %v8727 = vld [vmem:[%s8660 + $0x210] sm:$0xff]
    %v8728 = vld [vmem:[%s8660 + $0x218] sm:$0xff]
    %v8729 = vld [vmem:[%s8660 + $0x220] sm:$0xff]
    %v8730 = vld [vmem:[%s8660 + $0x228] sm:$0xff]
    %v8731 = vld [vmem:[%s8660 + $0x230] sm:$0xff]
    %v8732 = vld [vmem:[%s8660 + $0x238] sm:$0xff]
    %v8733 = vld [vmem:[%s8660 + $0x240] sm:$0xff]
    %v8734 = vld [vmem:[%s8660 + $0x248] sm:$0xff]
    %v8735 = vld [vmem:[%s8660 + $0x250] sm:$0xff]
    %v8736 = vld [vmem:[%s8660 + $0x258] sm:$0xff]
    %v8737 = vld [vmem:[%s8660 + $0x260] sm:$0xff]
    %v8738 = vld [vmem:[%s8660 + $0x268] sm:$0xff]
    %v8739 = vld [vmem:[%s8660 + $0x270] sm:$0xff]
    %v8740 = vld [vmem:[%s8660 + $0x278] sm:$0xff]
    %v8741 = vld [vmem:[%s8660 + $0x280] sm:$0xff]
    %v8742 = vld [vmem:[%s8660 + $0x288] sm:$0xff]
    %v8743 = vld [vmem:[%s8660 + $0x290] sm:$0xff]
    %v8744 = vld [vmem:[%s8660 + $0x298] sm:$0xff]
    %v8745 = vld [vmem:[%s8660 + $0x2a0] sm:$0xff]
    %v8746 = vld [vmem:[%s8660 + $0x2a8] sm:$0xff]
    %v8747 = vld [vmem:[%s8660 + $0x2b0] sm:$0xff]
    %v8748 = vld [vmem:[%s8660 + $0x2b8] sm:$0xff]
    %v8749 = vld [vmem:[%s8660 + $0x2c0] sm:$0xff]
    %v8750 = vld [vmem:[%s8660 + $0x2c8] sm:$0xff]
    %v8751 = vld [vmem:[%s8660 + $0x2d0] sm:$0xff]
    %v8752 = vld [vmem:[%s8660 + $0x2d8] sm:$0xff]
    %v8753 = vld [vmem:[%s8660 + $0x2e0] sm:$0xff]
    %v8754 = vld [vmem:[%s8660 + $0x2e8] sm:$0xff]
    %v8755 = vld [vmem:[%s8660 + $0x2f0] sm:$0xff]
    %v8756 = vld [vmem:[%s8660 + $0x2f8] sm:$0xff]
    %v8757 = vld [vmem:[%s8660 + $0x300] sm:$0xff]
    %v8758 = vld [vmem:[%s8660 + $0x308] sm:$0xff]
    %v8759 = vld [vmem:[%s8660 + $0x310] sm:$0xff]
    %v8760 = vld [vmem:[%s8660 + $0x318] sm:$0xff]
    %v8761 = vld [vmem:[%s8660 + $0x320] sm:$0xff]
    %v8762 = vld [vmem:[%s8660 + $0x328] sm:$0xff]
    %v8763 = vld [vmem:[%s8660 + $0x330] sm:$0xff]
    %v8764 = vld [vmem:[%s8660 + $0x338] sm:$0xff]
    %v8765 = vld [vmem:[%s8660 + $0x340] sm:$0xff]
    %v8766 = vld [vmem:[%s8660 + $0x348] sm:$0xff]
    %v8767 = vld [vmem:[%s8660 + $0x350] sm:$0xff]
    %v8768 = vld [vmem:[%s8660 + $0x358] sm:$0xff]
    %v8769 = vld [vmem:[%s8660 + $0x360] sm:$0xff]
    %v8770 = vld [vmem:[%s8660 + $0x368] sm:$0xff]
    %v8771 = vld [vmem:[%s8660 + $0x370] sm:$0xff]
    %v8772 = vld [vmem:[%s8660 + $0x378] sm:$0xff]
    %v8773 = vld [vmem:[%s8660 + $0x380] sm:$0xff]
    %v8774 = vld [vmem:[%s8660 + $0x388] sm:$0xff]
    %v8775 = vld [vmem:[%s8660 + $0x390] sm:$0xff]
    %v8776 = vld [vmem:[%s8660 + $0x398] sm:$0xff]
    %v8777 = vld [vmem:[%s8660 + $0x3a0] sm:$0xff]
    %v8778 = vld [vmem:[%s8660 + $0x3a8] sm:$0xff]
    %v8779 = vld [vmem:[%s8660 + $0x3b0] sm:$0xff]
    %v8780 = vld [vmem:[%s8660 + $0x3b8] sm:$0xff]
    %v8781 = vld [vmem:[%s8660 + $0x3c0] sm:$0xff]
    %v8782 = vld [vmem:[%s8660 + $0x3c8] sm:$0xff]
    %v8783 = vld [vmem:[%s8660 + $0x3d0] sm:$0xff]
    %v8784 = vld [vmem:[%s8660 + $0x3d8] sm:$0xff]
    %v8785 = vld [vmem:[%s8660 + $0x3e0] sm:$0xff]
    %v8786 = vld [vmem:[%s8660 + $0x3e8] sm:$0xff]
    %v8787 = vld [vmem:[%s8660 + $0x3f0] sm:$0xff]
    %v8788 = vld [vmem:[%s8660 + $0x3f8] sm:$0xff]
    %v8797 = vrot.slane %v8520, 1
    %v8798 = vrot.slane %v8521, 1
    %v8799 = vrot.slane %v8522, 1
    %v8800 = vrot.slane %v8523, 1
    %v8801 = vrot.slane %v8524, 1
    %v8802 = vrot.slane %v8525, 1
    %v8803 = vrot.slane %v8526, 1
    %v8804 = vrot.slane %v8527, 1
    %8813 = vmatprep.subr.mxu0 0.0
    %8814 = vmatpush1.msra.mxu0 %v8676
    %8815 = vmatprep.subr.mxu0 0.0
    %8816 = vmatpush1.msra.mxu0 %v8675
    %8817 = vmatprep.subr.mxu0 0.0
    %8818 = vmatpush1.msra.mxu0 %v8674
    %8819 = vmatprep.subr.mxu0 0.0
    %8820 = vmatpush1.msra.mxu0 %v8673
    %8821 = vmatprep.subr.mxu0 0.0
    %8822 = vmatpush1.msra.mxu0 %v8672
    %8823 = vmatprep.subr.mxu0 0.0
    %8824 = vmatpush1.msra.mxu0 %v8671
    %8825 = vmatprep.subr.mxu0 0.0
    %8826 = vmatpush1.msra.mxu0 %v8670
    %8827 = vmatprep.subr.mxu0 0.0
    %8828 = vmatpush1.msra.mxu0 %v8669
    %8829 = vmatprep.subr.mxu0 0.0
    %8830 = vmatpush1.msra.mxu0 %v8668
    %8831 = vmatprep.subr.mxu0 0.0
    %8832 = vmatpush1.msra.mxu0 %v8667
    %8833 = vmatprep.subr.mxu0 0.0
    %8834 = vmatpush1.msra.mxu0 %v8666
    %8835 = vmatprep.subr.mxu0 0.0
    %8836 = vmatpush1.msra.mxu0 %v8665
    %8837 = vmatprep.subr.mxu0 0.0
    %8838 = vmatpush1.msra.mxu0 %v8664
    %8839 = vmatprep.subr.mxu0 0.0
    %8840 = vmatpush1.msra.mxu0 %v8663
    %8841 = vmatprep.subr.mxu0 0.0
    %8842 = vmatpush1.msra.mxu0 %v8662
    %8843 = vmatprep.subr.mxu0 0.0
    %8844 = vmatpush1.msra.mxu0 %v8661
    %8845 = vmatprep.subr.mxu0 0.0
    %8846 = vmatpush2.msra.mxu0 %v8692
    %8847 = vmatprep.subr.mxu0 0.0
    %8848 = vmatpush2.msra.mxu0 %v8691
    %8849 = vmatprep.subr.mxu0 0.0
    %8850 = vmatpush2.msra.mxu0 %v8690
    %8851 = vmatprep.subr.mxu0 0.0
    %8852 = vmatpush2.msra.mxu0 %v8689
    %8853 = vmatprep.subr.mxu0 0.0
    %8854 = vmatpush2.msra.mxu0 %v8688
    %8855 = vmatprep.subr.mxu0 0.0
    %8856 = vmatpush2.msra.mxu0 %v8687
    %8857 = vmatprep.subr.mxu0 0.0
    %8858 = vmatpush2.msra.mxu0 %v8686
    %8859 = vmatprep.subr.mxu0 0.0
    %8860 = vmatpush2.msra.mxu0 %v8685
    %8861 = vmatprep.subr.mxu0 0.0
    %8862 = vmatpush2.msra.mxu0 %v8684
    %8863 = vmatprep.subr.mxu0 0.0
    %8864 = vmatpush2.msra.mxu0 %v8683
    %8865 = vmatprep.subr.mxu0 0.0
    %8866 = vmatpush2.msra.mxu0 %v8682
    %8867 = vmatprep.subr.mxu0 0.0
    %8868 = vmatpush2.msra.mxu0 %v8681
    %8869 = vmatprep.subr.mxu0 0.0
    %8870 = vmatpush2.msra.mxu0 %v8680
    %8871 = vmatprep.subr.mxu0 0.0
    %8872 = vmatpush2.msra.mxu0 %v8679
    %8873 = vmatprep.subr.mxu0 0.0
    %8874 = vmatpush2.msra.mxu0 %v8678
    %8875 = vmatprep.subr.mxu0 0.0
    %8876 = vmatpush2.msra.mxu0 %v8677
    %8877 = vmatprep.mubr.f32.mxu0 %v8798
    %8878 = vmatmul.mubr.f32.gmra.mxu0 %v8797
    %v8879 = vpop.f32.mrf.mxu0
    %v8880 = vadd.f32 0.0, %v8879
    %v8881 = vpop.f32.mrf.mxu0
    %8882 = vdwg.mxu0
    %8883 = vmatprep.subr.mxu0 0.0
    %8884 = vmatpush1.msra.mxu0 %v8708
    %8885 = vmatprep.subr.mxu0 0.0
    %8886 = vmatpush1.msra.mxu0 %v8707
    %8887 = vmatprep.subr.mxu0 0.0
    %8888 = vmatpush1.msra.mxu0 %v8706
    %8889 = vmatprep.subr.mxu0 0.0
    %8890 = vmatpush1.msra.mxu0 %v8705
    %8891 = vmatprep.subr.mxu0 0.0
    %8892 = vmatpush1.msra.mxu0 %v8704
    %8893 = vmatprep.subr.mxu0 0.0
    %8894 = vmatpush1.msra.mxu0 %v8703
    %8895 = vmatprep.subr.mxu0 0.0
    %8896 = vmatpush1.msra.mxu0 %v8702
    %8897 = vmatprep.subr.mxu0 0.0
    %8898 = vmatpush1.msra.mxu0 %v8701
    %8899 = vmatprep.subr.mxu0 0.0
    %8900 = vmatpush1.msra.mxu0 %v8700
    %8901 = vmatprep.subr.mxu0 0.0
    %8902 = vmatpush1.msra.mxu0 %v8699
    %8903 = vmatprep.subr.mxu0 0.0
    %8904 = vmatpush1.msra.mxu0 %v8698
    %8905 = vmatprep.subr.mxu0 0.0
    %8906 = vmatpush1.msra.mxu0 %v8697
    %8907 = vmatprep.subr.mxu0 0.0
    %8908 = vmatpush1.msra.mxu0 %v8696
    %8909 = vmatprep.subr.mxu0 0.0
    %8910 = vmatpush1.msra.mxu0 %v8695
    %8911 = vmatprep.subr.mxu0 0.0
    %8912 = vmatpush1.msra.mxu0 %v8694
    %8913 = vmatprep.subr.mxu0 0.0
    %8914 = vmatpush1.msra.mxu0 %v8693
    %8915 = vmatprep.subr.mxu0 0.0
    %8916 = vmatpush2.msra.mxu0 %v8724
    %8917 = vmatprep.subr.mxu0 0.0
    %8918 = vmatpush2.msra.mxu0 %v8723
    %8919 = vmatprep.subr.mxu0 0.0
    %8920 = vmatpush2.msra.mxu0 %v8722
    %8921 = vmatprep.subr.mxu0 0.0
    %8922 = vmatpush2.msra.mxu0 %v8721
    %8923 = vmatprep.subr.mxu0 0.0
    %8924 = vmatpush2.msra.mxu0 %v8720
    %8925 = vmatprep.subr.mxu0 0.0
    %8926 = vmatpush2.msra.mxu0 %v8719
    %8927 = vmatprep.subr.mxu0 0.0
    %8928 = vmatpush2.msra.mxu0 %v8718
    %8929 = vmatprep.subr.mxu0 0.0
    %8930 = vmatpush2.msra.mxu0 %v8717
    %8931 = vmatprep.subr.mxu0 0.0
    %8932 = vmatpush2.msra.mxu0 %v8716
    %8933 = vmatprep.subr.mxu0 0.0
    %8934 = vmatpush2.msra.mxu0 %v8715
    %8935 = vmatprep.subr.mxu0 0.0
    %8936 = vmatpush2.msra.mxu0 %v8714
    %8937 = vmatprep.subr.mxu0 0.0
    %8938 = vmatpush2.msra.mxu0 %v8713
    %8939 = vmatprep.subr.mxu0 0.0
    %8940 = vmatpush2.msra.mxu0 %v8712
    %8941 = vmatprep.subr.mxu0 0.0
    %8942 = vmatpush2.msra.mxu0 %v8711
    %8943 = vmatprep.subr.mxu0 0.0
    %8944 = vmatpush2.msra.mxu0 %v8710
    %8945 = vmatprep.subr.mxu0 0.0
    %8946 = vmatpush2.msra.mxu0 %v8709
    %8947 = vmatprep.mubr.f32.mxu0 %v8800
    %8948 = vmatmul.mubr.f32.gmra.mxu0 %v8799
    %v8949 = vpop.f32.mrf.mxu0
    %v8950 = vadd.f32 %v8880, %v8949
    %v8951 = vpop.f32.mrf.mxu0
    %8952 = vdwg.mxu0
    %8953 = vmatprep.subr.mxu0 0.0
    %8954 = vmatpush1.msra.mxu0 %v8740
    %8955 = vmatprep.subr.mxu0 0.0
    %8956 = vmatpush1.msra.mxu0 %v8739
    %8957 = vmatprep.subr.mxu0 0.0
    %8958 = vmatpush1.msra.mxu0 %v8738
    %8959 = vmatprep.subr.mxu0 0.0
    %8960 = vmatpush1.msra.mxu0 %v8737
    %8961 = vmatprep.subr.mxu0 0.0
    %8962 = vmatpush1.msra.mxu0 %v8736
    %8963 = vmatprep.subr.mxu0 0.0
    %8964 = vmatpush1.msra.mxu0 %v8735
    %8965 = vmatprep.subr.mxu0 0.0
    %8966 = vmatpush1.msra.mxu0 %v8734
    %8967 = vmatprep.subr.mxu0 0.0
    %8968 = vmatpush1.msra.mxu0 %v8733
    %8969 = vmatprep.subr.mxu0 0.0
    %8970 = vmatpush1.msra.mxu0 %v8732
    %8971 = vmatprep.subr.mxu0 0.0
    %8972 = vmatpush1.msra.mxu0 %v8731
    %8973 = vmatprep.subr.mxu0 0.0
    %8974 = vmatpush1.msra.mxu0 %v8730
    %8975 = vmatprep.subr.mxu0 0.0
    %8976 = vmatpush1.msra.mxu0 %v8729
    %8977 = vmatprep.subr.mxu0 0.0
    %8978 = vmatpush1.msra.mxu0 %v8728
    %8979 = vmatprep.subr.mxu0 0.0
    %8980 = vmatpush1.msra.mxu0 %v8727
    %8981 = vmatprep.subr.mxu0 0.0
    %8982 = vmatpush1.msra.mxu0 %v8726
    %8983 = vmatprep.subr.mxu0 0.0
    %8984 = vmatpush1.msra.mxu0 %v8725
    %8985 = vmatprep.subr.mxu0 0.0
    %8986 = vmatpush2.msra.mxu0 %v8756
    %8987 = vmatprep.subr.mxu0 0.0
    %8988 = vmatpush2.msra.mxu0 %v8755
    %8989 = vmatprep.subr.mxu0 0.0
    %8990 = vmatpush2.msra.mxu0 %v8754
    %8991 = vmatprep.subr.mxu0 0.0
    %8992 = vmatpush2.msra.mxu0 %v8753
    %8993 = vmatprep.subr.mxu0 0.0
    %8994 = vmatpush2.msra.mxu0 %v8752
    %8995 = vmatprep.subr.mxu0 0.0
    %8996 = vmatpush2.msra.mxu0 %v8751
    %8997 = vmatprep.subr.mxu0 0.0
    %8998 = vmatpush2.msra.mxu0 %v8750
    %8999 = vmatprep.subr.mxu0 0.0
    %9000 = vmatpush2.msra.mxu0 %v8749
    %9001 = vmatprep.subr.mxu0 0.0
    %9002 = vmatpush2.msra.mxu0 %v8748
    %9003 = vmatprep.subr.mxu0 0.0
    %9004 = vmatpush2.msra.mxu0 %v8747
    %9005 = vmatprep.subr.mxu0 0.0
    %9006 = vmatpush2.msra.mxu0 %v8746
    %9007 = vmatprep.subr.mxu0 0.0
    %9008 = vmatpush2.msra.mxu0 %v8745
    %9009 = vmatprep.subr.mxu0 0.0
    %9010 = vmatpush2.msra.mxu0 %v8744
    %9011 = vmatprep.subr.mxu0 0.0
    %9012 = vmatpush2.msra.mxu0 %v8743
    %9013 = vmatprep.subr.mxu0 0.0
    %9014 = vmatpush2.msra.mxu0 %v8742
    %9015 = vmatprep.subr.mxu0 0.0
    %9016 = vmatpush2.msra.mxu0 %v8741
    %9017 = vmatprep.mubr.f32.mxu0 %v8802
    %9018 = vmatmul.mubr.f32.gmra.mxu0 %v8801
    %v9019 = vpop.f32.mrf.mxu0
    %v9020 = vadd.f32 %v8950, %v9019
    %v9021 = vpop.f32.mrf.mxu0
    %9022 = vdwg.mxu0
    %9023 = vmatprep.subr.mxu0 0.0
    %9024 = vmatpush1.msra.mxu0 %v8772
    %9025 = vmatprep.subr.mxu0 0.0
    %9026 = vmatpush1.msra.mxu0 %v8771
    %9027 = vmatprep.subr.mxu0 0.0
    %9028 = vmatpush1.msra.mxu0 %v8770
    %9029 = vmatprep.subr.mxu0 0.0
    %9030 = vmatpush1.msra.mxu0 %v8769
    %9031 = vmatprep.subr.mxu0 0.0
    %9032 = vmatpush1.msra.mxu0 %v8768
    %9033 = vmatprep.subr.mxu0 0.0
    %9034 = vmatpush1.msra.mxu0 %v8767
    %9035 = vmatprep.subr.mxu0 0.0
    %9036 = vmatpush1.msra.mxu0 %v8766
    %9037 = vmatprep.subr.mxu0 0.0
    %9038 = vmatpush1.msra.mxu0 %v8765
    %9039 = vmatprep.subr.mxu0 0.0
    %9040 = vmatpush1.msra.mxu0 %v8764
    %9041 = vmatprep.subr.mxu0 0.0
    %9042 = vmatpush1.msra.mxu0 %v8763
    %9043 = vmatprep.subr.mxu0 0.0
    %9044 = vmatpush1.msra.mxu0 %v8762
    %9045 = vmatprep.subr.mxu0 0.0
    %9046 = vmatpush1.msra.mxu0 %v8761
    %9047 = vmatprep.subr.mxu0 0.0
    %9048 = vmatpush1.msra.mxu0 %v8760
    %9049 = vmatprep.subr.mxu0 0.0
    %9050 = vmatpush1.msra.mxu0 %v8759
    %9051 = vmatprep.subr.mxu0 0.0
    %9052 = vmatpush1.msra.mxu0 %v8758
    %9053 = vmatprep.subr.mxu0 0.0
    %9054 = vmatpush1.msra.mxu0 %v8757
    %9055 = vmatprep.subr.mxu0 0.0
    %9056 = vmatpush2.msra.mxu0 %v8788
    %9057 = vmatprep.subr.mxu0 0.0
    %9058 = vmatpush2.msra.mxu0 %v8787
    %9059 = vmatprep.subr.mxu0 0.0
    %9060 = vmatpush2.msra.mxu0 %v8786
    %9061 = vmatprep.subr.mxu0 0.0
    %9062 = vmatpush2.msra.mxu0 %v8785
    %9063 = vmatprep.subr.mxu0 0.0
    %9064 = vmatpush2.msra.mxu0 %v8784
    %9065 = vmatprep.subr.mxu0 0.0
    %9066 = vmatpush2.msra.mxu0 %v8783
    %9067 = vmatprep.subr.mxu0 0.0
    %9068 = vmatpush2.msra.mxu0 %v8782
    %9069 = vmatprep.subr.mxu0 0.0
    %9070 = vmatpush2.msra.mxu0 %v8781
    %9071 = vmatprep.subr.mxu0 0.0
    %9072 = vmatpush2.msra.mxu0 %v8780
    %9073 = vmatprep.subr.mxu0 0.0
    %9074 = vmatpush2.msra.mxu0 %v8779
    %9075 = vmatprep.subr.mxu0 0.0
    %9076 = vmatpush2.msra.mxu0 %v8778
    %9077 = vmatprep.subr.mxu0 0.0
    %9078 = vmatpush2.msra.mxu0 %v8777
    %9079 = vmatprep.subr.mxu0 0.0
    %9080 = vmatpush2.msra.mxu0 %v8776
    %9081 = vmatprep.subr.mxu0 0.0
    %9082 = vmatpush2.msra.mxu0 %v8775
    %9083 = vmatprep.subr.mxu0 0.0
    %9084 = vmatpush2.msra.mxu0 %v8774
    %9085 = vmatprep.subr.mxu0 0.0
    %9086 = vmatpush2.msra.mxu0 %v8773
    %9087 = vmatprep.mubr.f32.mxu0 %v8804
    %9088 = vmatmul.mubr.f32.gmra.mxu0 %v8803
    %v9089 = vpop.f32.mrf.mxu0
    %v9090 = vadd.f32 %v9020, %v9089
    %v9091 = vpop.f32.mrf.mxu0
    %9092 = vdwg.mxu0
    %9093 = vmatprep.subr.mxu0 0.0
    %9094 = vmatpush1.msra.mxu0 %v8547
    %9095 = vmatprep.subr.mxu0 0.0
    %9096 = vmatpush1.msra.mxu0 %v8546
    %9097 = vmatprep.subr.mxu0 0.0
    %9098 = vmatpush1.msra.mxu0 %v8545
    %9099 = vmatprep.subr.mxu0 0.0
    %9100 = vmatpush1.msra.mxu0 %v8544
    %9101 = vmatprep.subr.mxu0 0.0
    %9102 = vmatpush1.msra.mxu0 %v8543
    %9103 = vmatprep.subr.mxu0 0.0
    %9104 = vmatpush1.msra.mxu0 %v8542
    %9105 = vmatprep.subr.mxu0 0.0
    %9106 = vmatpush1.msra.mxu0 %v8541
    %9107 = vmatprep.subr.mxu0 0.0
    %9108 = vmatpush1.msra.mxu0 %v8540
    %9109 = vmatprep.subr.mxu0 0.0
    %9110 = vmatpush1.msra.mxu0 %v8539
    %9111 = vmatprep.subr.mxu0 0.0
    %9112 = vmatpush1.msra.mxu0 %v8538
    %9113 = vmatprep.subr.mxu0 0.0
    %9114 = vmatpush1.msra.mxu0 %v8537
    %9115 = vmatprep.subr.mxu0 0.0
    %9116 = vmatpush1.msra.mxu0 %v8536
    %9117 = vmatprep.subr.mxu0 0.0
    %9118 = vmatpush1.msra.mxu0 %v8535
    %9119 = vmatprep.subr.mxu0 0.0
    %9120 = vmatpush1.msra.mxu0 %v8534
    %9121 = vmatprep.subr.mxu0 0.0
    %9122 = vmatpush1.msra.mxu0 %v8533
    %9123 = vmatprep.subr.mxu0 0.0
    %9124 = vmatpush1.msra.mxu0 %v8532
    %9125 = vmatprep.subr.mxu0 0.0
    %9126 = vmatpush2.msra.mxu0 %v8563
    %9127 = vmatprep.subr.mxu0 0.0
    %9128 = vmatpush2.msra.mxu0 %v8562
    %9129 = vmatprep.subr.mxu0 0.0
    %9130 = vmatpush2.msra.mxu0 %v8561
    %9131 = vmatprep.subr.mxu0 0.0
    %9132 = vmatpush2.msra.mxu0 %v8560
    %9133 = vmatprep.subr.mxu0 0.0
    %9134 = vmatpush2.msra.mxu0 %v8559
    %9135 = vmatprep.subr.mxu0 0.0
    %9136 = vmatpush2.msra.mxu0 %v8558
    %9137 = vmatprep.subr.mxu0 0.0
    %9138 = vmatpush2.msra.mxu0 %v8557
    %9139 = vmatprep.subr.mxu0 0.0
    %9140 = vmatpush2.msra.mxu0 %v8556
    %9141 = vmatprep.subr.mxu0 0.0
    %9142 = vmatpush2.msra.mxu0 %v8555
    %9143 = vmatprep.subr.mxu0 0.0
    %9144 = vmatpush2.msra.mxu0 %v8554
    %9145 = vmatprep.subr.mxu0 0.0
    %9146 = vmatpush2.msra.mxu0 %v8553
    %9147 = vmatprep.subr.mxu0 0.0
    %9148 = vmatpush2.msra.mxu0 %v8552
    %9149 = vmatprep.subr.mxu0 0.0
    %9150 = vmatpush2.msra.mxu0 %v8551
    %9151 = vmatprep.subr.mxu0 0.0
    %9152 = vmatpush2.msra.mxu0 %v8550
    %9153 = vmatprep.subr.mxu0 0.0
    %9154 = vmatpush2.msra.mxu0 %v8549
    %9155 = vmatprep.subr.mxu0 0.0
    %9156 = vmatpush2.msra.mxu0 %v8548
    %9157 = vmatprep.mubr.f32.mxu0 %v8521
    %9158 = vmatmul.mubr.f32.gmra.mxu0 %v8520
    %v9159 = vpop.f32.mrf.mxu0
    %v9160 = vadd.f32 %v9090, %v9159
    %v9161 = vpop.f32.mrf.mxu0
    %9162 = vdwg.mxu0
    %9163 = vmatprep.subr.mxu0 0.0
    %9164 = vmatpush1.msra.mxu0 %v8579
    %9165 = vmatprep.subr.mxu0 0.0
    %9166 = vmatpush1.msra.mxu0 %v8578
    %9167 = vmatprep.subr.mxu0 0.0
    %9168 = vmatpush1.msra.mxu0 %v8577
    %9169 = vmatprep.subr.mxu0 0.0
    %9170 = vmatpush1.msra.mxu0 %v8576
    %9171 = vmatprep.subr.mxu0 0.0
    %9172 = vmatpush1.msra.mxu0 %v8575
    %9173 = vmatprep.subr.mxu0 0.0
    %9174 = vmatpush1.msra.mxu0 %v8574
    %9175 = vmatprep.subr.mxu0 0.0
    %9176 = vmatpush1.msra.mxu0 %v8573
    %9177 = vmatprep.subr.mxu0 0.0
    %9178 = vmatpush1.msra.mxu0 %v8572
    %9179 = vmatprep.subr.mxu0 0.0
    %9180 = vmatpush1.msra.mxu0 %v8571
    %9181 = vmatprep.subr.mxu0 0.0
    %9182 = vmatpush1.msra.mxu0 %v8570
    %9183 = vmatprep.subr.mxu0 0.0
    %9184 = vmatpush1.msra.mxu0 %v8569
    %9185 = vmatprep.subr.mxu0 0.0
    %9186 = vmatpush1.msra.mxu0 %v8568
    %9187 = vmatprep.subr.mxu0 0.0
    %9188 = vmatpush1.msra.mxu0 %v8567
    %9189 = vmatprep.subr.mxu0 0.0
    %9190 = vmatpush1.msra.mxu0 %v8566
    %9191 = vmatprep.subr.mxu0 0.0
    %9192 = vmatpush1.msra.mxu0 %v8565
    %9193 = vmatprep.subr.mxu0 0.0
    %9194 = vmatpush1.msra.mxu0 %v8564
    %9195 = vmatprep.subr.mxu0 0.0
    %9196 = vmatpush2.msra.mxu0 %v8595
    %9197 = vmatprep.subr.mxu0 0.0
    %9198 = vmatpush2.msra.mxu0 %v8594
    %9199 = vmatprep.subr.mxu0 0.0
    %9200 = vmatpush2.msra.mxu0 %v8593
    %9201 = vmatprep.subr.mxu0 0.0
    %9202 = vmatpush2.msra.mxu0 %v8592
    %9203 = vmatprep.subr.mxu0 0.0
    %9204 = vmatpush2.msra.mxu0 %v8591
    %9205 = vmatprep.subr.mxu0 0.0
    %9206 = vmatpush2.msra.mxu0 %v8590
    %9207 = vmatprep.subr.mxu0 0.0
    %9208 = vmatpush2.msra.mxu0 %v8589
    %9209 = vmatprep.subr.mxu0 0.0
    %9210 = vmatpush2.msra.mxu0 %v8588
    %9211 = vmatprep.subr.mxu0 0.0
    %9212 = vmatpush2.msra.mxu0 %v8587
    %9213 = vmatprep.subr.mxu0 0.0
    %9214 = vmatpush2.msra.mxu0 %v8586
    %9215 = vmatprep.subr.mxu0 0.0
    %9216 = vmatpush2.msra.mxu0 %v8585
    %9217 = vmatprep.subr.mxu0 0.0
    %9218 = vmatpush2.msra.mxu0 %v8584
    %9219 = vmatprep.subr.mxu0 0.0
    %9220 = vmatpush2.msra.mxu0 %v8583
    %9221 = vmatprep.subr.mxu0 0.0
    %9222 = vmatpush2.msra.mxu0 %v8582
    %9223 = vmatprep.subr.mxu0 0.0
    %9224 = vmatpush2.msra.mxu0 %v8581
    %9225 = vmatprep.subr.mxu0 0.0
    %9226 = vmatpush2.msra.mxu0 %v8580
    %9227 = vmatprep.mubr.f32.mxu0 %v8523
    %9228 = vmatmul.mubr.f32.gmra.mxu0 %v8522
    %v9229 = vpop.f32.mrf.mxu0
    %v9230 = vadd.f32 %v9160, %v9229
    %v9231 = vpop.f32.mrf.mxu0
    %9232 = vdwg.mxu0
    %9233 = vmatprep.subr.mxu0 0.0
    %9234 = vmatpush1.msra.mxu0 %v8611
    %9235 = vmatprep.subr.mxu0 0.0
    %9236 = vmatpush1.msra.mxu0 %v8610
    %9237 = vmatprep.subr.mxu0 0.0
    %9238 = vmatpush1.msra.mxu0 %v8609
    %9239 = vmatprep.subr.mxu0 0.0
    %9240 = vmatpush1.msra.mxu0 %v8608
    %9241 = vmatprep.subr.mxu0 0.0
    %9242 = vmatpush1.msra.mxu0 %v8607
    %9243 = vmatprep.subr.mxu0 0.0
    %9244 = vmatpush1.msra.mxu0 %v8606
    %9245 = vmatprep.subr.mxu0 0.0
    %9246 = vmatpush1.msra.mxu0 %v8605
    %9247 = vmatprep.subr.mxu0 0.0
    %9248 = vmatpush1.msra.mxu0 %v8604
    %9249 = vmatprep.subr.mxu0 0.0
    %9250 = vmatpush1.msra.mxu0 %v8603
    %9251 = vmatprep.subr.mxu0 0.0
    %9252 = vmatpush1.msra.mxu0 %v8602
    %9253 = vmatprep.subr.mxu0 0.0
    %9254 = vmatpush1.msra.mxu0 %v8601
    %9255 = vmatprep.subr.mxu0 0.0
    %9256 = vmatpush1.msra.mxu0 %v8600
    %9257 = vmatprep.subr.mxu0 0.0
    %9258 = vmatpush1.msra.mxu0 %v8599
    %9259 = vmatprep.subr.mxu0 0.0
    %9260 = vmatpush1.msra.mxu0 %v8598
    %9261 = vmatprep.subr.mxu0 0.0
    %9262 = vmatpush1.msra.mxu0 %v8597
    %9263 = vmatprep.subr.mxu0 0.0
    %9264 = vmatpush1.msra.mxu0 %v8596
    %9265 = vmatprep.subr.mxu0 0.0
    %9266 = vmatpush2.msra.mxu0 %v8627
    %9267 = vmatprep.subr.mxu0 0.0
    %9268 = vmatpush2.msra.mxu0 %v8626
    %9269 = vmatprep.subr.mxu0 0.0
    %9270 = vmatpush2.msra.mxu0 %v8625
    %9271 = vmatprep.subr.mxu0 0.0
    %9272 = vmatpush2.msra.mxu0 %v8624
    %9273 = vmatprep.subr.mxu0 0.0
    %9274 = vmatpush2.msra.mxu0 %v8623
    %9275 = vmatprep.subr.mxu0 0.0
    %9276 = vmatpush2.msra.mxu0 %v8622
    %9277 = vmatprep.subr.mxu0 0.0
    %9278 = vmatpush2.msra.mxu0 %v8621
    %9279 = vmatprep.subr.mxu0 0.0
    %9280 = vmatpush2.msra.mxu0 %v8620
    %9281 = vmatprep.subr.mxu0 0.0
    %9282 = vmatpush2.msra.mxu0 %v8619
    %9283 = vmatprep.subr.mxu0 0.0
    %9284 = vmatpush2.msra.mxu0 %v8618
    %9285 = vmatprep.subr.mxu0 0.0
    %9286 = vmatpush2.msra.mxu0 %v8617
    %9287 = vmatprep.subr.mxu0 0.0
    %9288 = vmatpush2.msra.mxu0 %v8616
    %9289 = vmatprep.subr.mxu0 0.0
    %9290 = vmatpush2.msra.mxu0 %v8615
    %9291 = vmatprep.subr.mxu0 0.0
    %9292 = vmatpush2.msra.mxu0 %v8614
    %9293 = vmatprep.subr.mxu0 0.0
    %9294 = vmatpush2.msra.mxu0 %v8613
    %9295 = vmatprep.subr.mxu0 0.0
    %9296 = vmatpush2.msra.mxu0 %v8612
    %9297 = vmatprep.mubr.f32.mxu0 %v8525
    %9298 = vmatmul.mubr.f32.gmra.mxu0 %v8524
    %v9299 = vpop.f32.mrf.mxu0
    %v9300 = vadd.f32 %v9230, %v9299
    %v9301 = vpop.f32.mrf.mxu0
    %9302 = vdwg.mxu0
    %9303 = vmatprep.subr.mxu0 0.0
    %9304 = vmatpush1.msra.mxu0 %v8643
    %9305 = vmatprep.subr.mxu0 0.0
    %9306 = vmatpush1.msra.mxu0 %v8642
    %9307 = vmatprep.subr.mxu0 0.0
    %9308 = vmatpush1.msra.mxu0 %v8641
    %9309 = vmatprep.subr.mxu0 0.0
    %9310 = vmatpush1.msra.mxu0 %v8640
    %9311 = vmatprep.subr.mxu0 0.0
    %9312 = vmatpush1.msra.mxu0 %v8639
    %9313 = vmatprep.subr.mxu0 0.0
    %9314 = vmatpush1.msra.mxu0 %v8638
    %9315 = vmatprep.subr.mxu0 0.0
    %9316 = vmatpush1.msra.mxu0 %v8637
    %9317 = vmatprep.subr.mxu0 0.0
    %9318 = vmatpush1.msra.mxu0 %v8636
    %9319 = vmatprep.subr.mxu0 0.0
    %9320 = vmatpush1.msra.mxu0 %v8635
    %9321 = vmatprep.subr.mxu0 0.0
    %9322 = vmatpush1.msra.mxu0 %v8634
    %9323 = vmatprep.subr.mxu0 0.0
    %9324 = vmatpush1.msra.mxu0 %v8633
    %9325 = vmatprep.subr.mxu0 0.0
    %9326 = vmatpush1.msra.mxu0 %v8632
    %9327 = vmatprep.subr.mxu0 0.0
    %9328 = vmatpush1.msra.mxu0 %v8631
    %9329 = vmatprep.subr.mxu0 0.0
    %9330 = vmatpush1.msra.mxu0 %v8630
    %9331 = vmatprep.subr.mxu0 0.0
    %9332 = vmatpush1.msra.mxu0 %v8629
    %9333 = vmatprep.subr.mxu0 0.0
    %9334 = vmatpush1.msra.mxu0 %v8628
    %9335 = vmatprep.subr.mxu0 0.0
    %9336 = vmatpush2.msra.mxu0 %v8659
    %9337 = vmatprep.subr.mxu0 0.0
    %9338 = vmatpush2.msra.mxu0 %v8658
    %9339 = vmatprep.subr.mxu0 0.0
    %9340 = vmatpush2.msra.mxu0 %v8657
    %9341 = vmatprep.subr.mxu0 0.0
    %9342 = vmatpush2.msra.mxu0 %v8656
    %9343 = vmatprep.subr.mxu0 0.0
    %9344 = vmatpush2.msra.mxu0 %v8655
    %9345 = vmatprep.subr.mxu0 0.0
    %9346 = vmatpush2.msra.mxu0 %v8654
    %9347 = vmatprep.subr.mxu0 0.0
    %9348 = vmatpush2.msra.mxu0 %v8653
    %9349 = vmatprep.subr.mxu0 0.0
    %9350 = vmatpush2.msra.mxu0 %v8652
    %9351 = vmatprep.subr.mxu0 0.0
    %9352 = vmatpush2.msra.mxu0 %v8651
    %9353 = vmatprep.subr.mxu0 0.0
    %9354 = vmatpush2.msra.mxu0 %v8650
    %9355 = vmatprep.subr.mxu0 0.0
    %9356 = vmatpush2.msra.mxu0 %v8649
    %9357 = vmatprep.subr.mxu0 0.0
    %9358 = vmatpush2.msra.mxu0 %v8648
    %9359 = vmatprep.subr.mxu0 0.0
    %9360 = vmatpush2.msra.mxu0 %v8647
    %9361 = vmatprep.subr.mxu0 0.0
    %9362 = vmatpush2.msra.mxu0 %v8646
    %9363 = vmatprep.subr.mxu0 0.0
    %9364 = vmatpush2.msra.mxu0 %v8645
    %9365 = vmatprep.subr.mxu0 0.0
    %9366 = vmatpush2.msra.mxu0 %v8644
    %9367 = vmatprep.mubr.f32.mxu0 %v8527
    %9368 = vmatmul.mubr.f32.gmra.mxu0 %v8526
    %v9369 = vpop.f32.mrf.mxu0
    %v9370 = vadd.f32 %v9300, %v9369
    %v9371 = vpop.f32.mrf.mxu0
    %9372 = vdwg.mxu0
    %v9373 = vld [vmem:[%s11] sm:$0x1]
    %v9374 = vadd.f32 %v9370, %v9373
    %v9375 = vld [vmem:[%s12] sm:$0xff]
    %v9376 = vld [vmem:[%s12 + $0x8] sm:$0xff]
    %v9377 = vld [vmem:[%s12 + $0x10] sm:$0xff]
    %v9378 = vld [vmem:[%s12 + $0x18] sm:$0xff]
    %v9379 = vld [vmem:[%s13] sm:$0x1]
    %vm9380 = vcmask 261120
    %v9382 = vsel %vm9380, %v9374, 0
    %9384 = vmatprep.subr.mxu0 0.0
    %9385 = vmatpush1.msra.mxu0 0.0
    %9386 = vmatprep.subr.mxu0 0.0
    %9387 = vmatpush1.msra.mxu0 0.0
    %9388 = vmatprep.subr.mxu0 0.0
    %9389 = vmatpush1.msra.mxu0 0.0
    %9390 = vmatprep.subr.mxu0 0.0
    %9391 = vmatpush1.msra.mxu0 0.0
    %9392 = vmatprep.subr.mxu0 0.0
    %9393 = vmatpush1.msra.mxu0 0.0
    %9394 = vmatprep.subr.mxu0 0.0
    %9395 = vmatpush1.msra.mxu0 0.0
    %9396 = vmatprep.subr.mxu0 0.0
    %9397 = vmatpush1.msra.mxu0 0.0
    %9398 = vmatprep.subr.mxu0 0.0
    %9399 = vmatpush1.msra.mxu0 0.0
    %9400 = vmatprep.subr.mxu0 0.0
    %9401 = vmatpush1.msra.mxu0 0.0
    %9402 = vmatprep.subr.mxu0 0.0
    %9403 = vmatpush1.msra.mxu0 0.0
    %9404 = vmatprep.subr.mxu0 0.0
    %9405 = vmatpush1.msra.mxu0 0.0
    %9406 = vmatprep.subr.mxu0 0.0
    %9407 = vmatpush1.msra.mxu0 0.0
    %9408 = vmatprep.subr.mxu0 0.0
    %9409 = vmatpush1.msra.mxu0 %v9378
    %9410 = vmatprep.subr.mxu0 0.0
    %9411 = vmatpush1.msra.mxu0 %v9377
    %9412 = vmatprep.subr.mxu0 0.0
    %9413 = vmatpush1.msra.mxu0 %v9376
    %9414 = vmatprep.subr.mxu0 0.0
    %9415 = vmatpush1.msra.mxu0 %v9375
    %9416 = vmatprep.subr.mxu0 0.0
    %9417 = vmatpush2.msra.mxu0 0.0
    %9418 = vmatprep.subr.mxu0 0.0
    %9419 = vmatpush2.msra.mxu0 0.0
    %9420 = vmatprep.subr.mxu0 0.0
    %9421 = vmatpush2.msra.mxu0 0.0
    %9422 = vmatprep.subr.mxu0 0.0
    %9423 = vmatpush2.msra.mxu0 0.0
    %9424 = vmatprep.subr.mxu0 0.0
    %9425 = vmatpush2.msra.mxu0 0.0
    %9426 = vmatprep.subr.mxu0 0.0
    %9427 = vmatpush2.msra.mxu0 0.0
    %9428 = vmatprep.subr.mxu0 0.0
    %9429 = vmatpush2.msra.mxu0 0.0
    %9430 = vmatprep.subr.mxu0 0.0
    %9431 = vmatpush2.msra.mxu0 0.0
    %9432 = vmatprep.subr.mxu0 0.0
    %9433 = vmatpush2.msra.mxu0 0.0
    %9434 = vmatprep.subr.mxu0 0.0
    %9435 = vmatpush2.msra.mxu0 0.0
    %9436 = vmatprep.subr.mxu0 0.0
    %9437 = vmatpush2.msra.mxu0 0.0
    %9438 = vmatprep.subr.mxu0 0.0
    %9439 = vmatpush2.msra.mxu0 0.0
    %9440 = vmatprep.subr.mxu0 0.0
    %9441 = vmatpush2.msra.mxu0 0.0
    %9442 = vmatprep.subr.mxu0 0.0
    %9443 = vmatpush2.msra.mxu0 0.0
    %9444 = vmatprep.subr.mxu0 0.0
    %9445 = vmatpush2.msra.mxu0 0.0
    %9446 = vmatprep.subr.mxu0 0.0
    %9447 = vmatpush2.msra.mxu0 0.0
    %9448 = vmatprep.mubr.f32.mxu0 0.0
    %9449 = vmatmul.mubr.f32.gmra.mxu0 %v9382
    %v9450 = vpop.f32.mrf.mxu0
    %v9451 = vadd.f32 %v9379, %v9450
    %v9452 = vpop.f32.mrf.mxu0
    %9453 = vdwg.mxu0
    %vm9454 = vcmask 73728
    %9455 = vst.msk [vmem:[#allocation4] sm:$0x1] %vm9454, %v9451
    // Predicated region
    $region88: #{test_model1_forward.1} parent=1 // pred_check
      _
    $region89: #{test_model1_forward.1} parent=1 // pred_check_branch
      %9457 = sbr.rel (0) target = $region91
    $region90: #{test_model1_forward.1} parent=1 // pred_region
      %s9459 = ssub.s32 16, 16
      %9460 = vsyncadd [#allocation5], %s9459
      %s9462 = sshll.u32 [#allocation4], 4
      %s9463 = int_to_ptr.vmem [resolvable:$true] %s9462
      %9465 = dma.vmem_to_hbm [thread:$0]  %s9463, 16, %s14, [#allocation5]
    $region91: #{test_model1_forward.1} parent=1 // pred_fallthru
      _
    // Predicated region
    $region92: #{test_model1_forward.1} parent=1 // pred_check
      _
    $region93: #{test_model1_forward.1} parent=1 // pred_check_branch
      %9467 = sbr.rel (0) target = $region95
    $region94: #{test_model1_forward.1} parent=1 // pred_region
      %9468 = dma.done [#allocation5], 16
    $region95: #{test_model1_forward.1} parent=1 // pred_fallthru
      _
    %9469 = vsyncpa [#allocation5], 1
  %9470 = vsyncmov [#allocation3]
  %s9471 = vpop.sfrf %9470
  %p9472 = scmp.eq.s32.totalorder %s9471, 0
  %p9473 = pneg %p9472
  %9475 = shalt.err (%p9473)

</llo_original>
